<compile_context>
chip_gen: v6e
topology: v6e:2x2x1
jax: 0.10.0
libtpu: 0.0.40
codegen_flags: <defaults>
</compile_context>

<pallas_src>
import functools

import jax
import jax.numpy as jnp
from jax import lax
from jax.experimental import pallas as pl
from jax.experimental.pallas import tpu as pltpu


def _bn_relu_gconv_kernel(x_ref, scale_ref, shift_ref, w_ref, o_ref, zpad_ref):
    """Fused BN(affine) + ReLU + 3x3 grouped conv for a block of group-pairs.

    x_ref    : (1, PP, H, W, 2*Cin)    raw input, two groups packed on the lane axis
    scale_ref: (PP, 1, 1, 2*Cin)       gamma / sqrt(var + eps)
    shift_ref: (PP, 1, 1, 2*Cin)       beta - mean * scale
    w_ref    : (2*PP, 3, 3, Cin, Cout) per-group conv weights
    o_ref    : (1, PP, H, W, 2*Cout)
    zpad_ref : (H+3, W+1, 2*Cin)       zero-padded scratch (W+1 == 8, sublane aligned)
    """
    PP = x_ref.shape[1]
    H, W = x_ref.shape[2], x_ref.shape[3]
    Cp = x_ref.shape[4]
    Cin = w_ref.shape[3]
    Cout = w_ref.shape[4]
    assert Cp == 2 * Cin
    Ws = W + 1                      # padded width (== 8, sublane aligned)
    rows = zpad_ref.shape[0] * Ws   # flattened padded-image rows
    acc_rows = H * Ws               # 56 = output rows incl. one junk column

    # Zero the halo once per grid step; the interior is fully overwritten for
    # every pair, so the halo (and the wrap column) stays zero.  This replaces
    # the glue-side jnp.pad + mask input of the previous version.
    zpad_ref[...] = jnp.zeros_like(zpad_ref)

    for p in range(PP):                                    # group-pairs in this block
        xb = x_ref[0, p]                                   # (H, W, 2*Cin)
        act = jnp.maximum(xb * scale_ref[p] + shift_ref[p], 0.0)
        zpad_ref[1:1 + H, 1:1 + W, :] = act

        # Flatten (H+3, Ws) -> rows.  Since Ws == 8 this reshape is layout-free.
        # Row i*Ws + j is padded pixel (i, j); "column Ws" of row i aliases
        # column 0 of row i+1, which is always zero, so the right halo comes for
        # free and every 3x3 tap is a contiguous acc_rows-row slice.
        z = zpad_ref[...].reshape(rows, Cp)

        halves = []
        for j in range(2):                                 # the two groups of the pair
            zg = z[:, j * Cin:(j + 1) * Cin]               # (rows, Cin)
            acc = jnp.zeros((acc_rows, Cout), jnp.float32)
            for kh in range(3):
                for kw in range(3):
                    d = kh * Ws + kw
                    acc = acc + jnp.dot(zg[d:d + acc_rows, :],
                                        w_ref[2 * p + j, kh, kw],
                                        preferred_element_type=jnp.float32)
            # (acc_rows, Cout) -> (H, Ws, Cout) is free; drop the junk column.
            halves.append(acc.reshape(H, Ws, Cout)[:, :W, :])

        # Lane-dense store: last dim == 2*Cout == 128.
        o_ref[0, p] = jnp.concatenate(halves, axis=-1).astype(o_ref.dtype)


def bn_relu_grouped_conv(x, gamma, beta, weight, *, groups, eps=1e-5):
    """x: (N, C, H, W) fp32 NCHW; weight: (C_out, C_in // groups, 3, 3) OIHW."""
    N, C, H, W = x.shape
    G = groups
    Cin = C // G
    Cout = weight.shape[0] // G
    assert C % G == 0 and weight.shape[0] % G == 0
    assert weight.shape[1] == Cin and weight.shape[2:] == (3, 3)
    assert (W + 1) % 8 == 0, "kernel assumes W + 1 is a multiple of 8 (W = 7, 15, ...)"
    assert G % 2 == 0, "groups are packed in pairs along the 128-lane axis"

    GP = G // 2                                  # group pairs
    # ~8 groups (4 pairs) per grid step keeps per-step VMEM small while leaving
    # >= 2 parallel steps so v7x's two TensorCores both get work.
    if GP % 4 == 0:
        nsteps = 4
    elif GP % 2 == 0:
        nsteps = 2
    else:
        nsteps = 1
    PP = GP // nsteps

    # --- BatchNorm training-mode batch statistics: single pass over x
    #     (mean and E[x^2] computed together; biased var as PyTorch uses). ---
    mean = jnp.mean(x, axis=(0, 2, 3))
    mean_sq = jnp.mean(x * x, axis=(0, 2, 3))
    var = jnp.maximum(mean_sq - mean * mean, 0.0)
    scale = gamma * lax.rsqrt(var + eps)
    shift = beta - mean * scale
    scale_p = scale.reshape(GP, 1, 1, 2 * Cin)
    shift_p = shift.reshape(GP, 1, 1, 2 * Cin)

    # --- layout: NCHW -> (N, GP, H, W, 2*Cin): channels-last, 2 groups / 128 lanes ---
    xg = x.reshape(N, GP, 2, Cin, H, W).transpose(0, 1, 4, 5, 2, 3)
    xg = xg.reshape(N, GP, H, W, 2 * Cin)
    # weight OIHW -> (G, 3, 3, Cin, Cout).  One-time re-layout of constants; in a
    # real model this should be hoisted out of the hot path / cached at init.
    wg = weight.reshape(G, Cout, Cin, 3, 3).transpose(0, 3, 4, 2, 1)
    # TODO(synk): optionally store `wg` as bfloat16 to halve the dominant HBM
    # stream (kept fp32 here to preserve full numerical margin vs. PyTorch).

    out = pl.pallas_call(
        _bn_relu_gconv_kernel,
        out_shape=jax.ShapeDtypeStruct((N, GP, H, W, 2 * Cout), x.dtype),
        grid_spec=pltpu.PrefetchScalarGridSpec(
            num_scalar_prefetch=0,
            grid=(N, nsteps),
            in_specs=[
                pl.BlockSpec((1, PP, H, W, 2 * Cin),
                             lambda n, s: (n, s, 0, 0, 0)),
                pl.BlockSpec((PP, 1, 1, 2 * Cin), lambda n, s: (s, 0, 0, 0)),
                pl.BlockSpec((PP, 1, 1, 2 * Cin), lambda n, s: (s, 0, 0, 0)),
                pl.BlockSpec((2 * PP, 3, 3, Cin, Cout),
                             lambda n, s: (s, 0, 0, 0, 0)),
            ],
            out_specs=pl.BlockSpec((1, PP, H, W, 2 * Cout),
                                   lambda n, s: (n, s, 0, 0, 0)),
            scratch_shapes=[pltpu.VMEM((H + 3, W + 1, 2 * Cin), jnp.float32)],
        ),
        compiler_params=pltpu.CompilerParams(
            dimension_semantics=("parallel", "parallel")),
    )(xg, scale_p, shift_p, wg)

    # (N, GP, H, W, 2*Cout) -> NCHW
    out = out.reshape(N, GP, H, W, 2, Cout).transpose(0, 1, 4, 5, 2, 3)
    return out.reshape(N, G * Cout, H, W)


def reference(x, gamma, beta, weight, *, groups, eps=1e-5):
    mean = x.mean(axis=(0, 2, 3), keepdims=True)
    var = ((x - mean) ** 2).mean(axis=(0, 2, 3), keepdims=True)
    a = (x - mean) / jnp.sqrt(var + eps)
    a = a * gamma[None, :, None, None] + beta[None, :, None, None]
    a = jnp.maximum(a, 0.0)
    return lax.conv_general_dilated(
        a, weight, window_strides=(1, 1), padding=((1, 1), (1, 1)),
        dimension_numbers=("NCHW", "OIHW", "NCHW"),
        feature_group_count=groups, precision=lax.Precision.HIGHEST)


if __name__ == "__main__":
    N, C, H, W = 1, 2048, 7, 7
    GROUPS = 32
    CIN_G = C // GROUPS

    key = jax.random.PRNGKey(0)
    k1, k2, k3, k4 = jax.random.split(key, 4)
    x323 = jax.random.normal(k1, (N, C, H, W), jnp.float32)
    # deterministic synthetic parameters (shapes from the module __init__)
    gamma = 1.0 + 0.1 * jax.random.normal(k2, (C,), jnp.float32)
    beta = 0.1 * jax.random.normal(k3, (C,), jnp.float32)
    conv_w = jax.random.normal(k4, (C, CIN_G, 3, 3), jnp.float32) / jnp.sqrt(
        CIN_G * 9.0)

    fwd = jax.jit(functools.partial(bn_relu_grouped_conv, groups=GROUPS))
    out = jax.block_until_ready(fwd(x323, gamma, beta, conv_w))

    ref = jax.block_until_ready(
        reference(x323, gamma, beta, conv_w, groups=GROUPS))
    assert out.shape == (N, C, H, W)
    max_err = float(jnp.max(jnp.abs(out - ref)))
    assert max_err < 1e-2, f"max abs error too large: {max_err}"

    print("KERNEL_OK")
</pallas_src>

<mosaic_0001>
module attributes {stable_mosaic.version = 11 : i64} {
  func.func @_bn_relu_gconv_kernel(%arg0: i32, %arg1: i32, %arg2: memref<1x4x7x7x128xf32, #tpu.memory_space<vmem>>, %arg3: memref<4x1x1x128xf32, #tpu.memory_space<vmem>>, %arg4: memref<4x1x1x128xf32, #tpu.memory_space<vmem>>, %arg5: memref<8x3x3x64x64xf32, #tpu.memory_space<vmem>>, %arg6: memref<1x4x7x7x128xf32, #tpu.memory_space<vmem>>, %arg7: memref<10x8x128xf32, #tpu.memory_space<vmem>>) attributes {dimension_semantics = [#tpu.dimension_semantics<parallel>, #tpu.dimension_semantics<parallel>], iteration_bounds = array<i64: 1, 4>, scalar_prefetch = 0 : i64, scratch_operands = 1 : i64, tpu.core_type = #tpu.core_type<tc>, window_params = [{transform_indices = @transform_0, window_bounds = array<i64: 1, 4, 7, 7, 128>}, {transform_indices = @transform_1, window_bounds = array<i64: 4, 1, 1, 128>}, {transform_indices = @transform_2, window_bounds = array<i64: 4, 1, 1, 128>}, {transform_indices = @transform_3, window_bounds = array<i64: 8, 3, 3, 64, 64>}, {transform_indices = @transform_4, window_bounds = array<i64: 1, 4, 7, 7, 128>}]} {
    %cst = arith.constant 0.000000e+00 : f32
    %0 = vector.broadcast %cst : f32 to vector<10x8x128xf32>
    %c0 = arith.constant 0 : index
    %c0_0 = arith.constant 0 : index
    %c0_1 = arith.constant 0 : index
    %1 = vector.load %arg7[%c0, %c0_0, %c0_1] : memref<10x8x128xf32, #tpu.memory_space<vmem>>, vector<10x8x128xf32>
    tpu.vector_store %arg7[%c0, %c0_0, %c0_1], %0 {strides = array<i32>} : memref<10x8x128xf32, #tpu.memory_space<vmem>>, vector<10x8x128xf32>,
    %c0_2 = arith.constant 0 : index
    %c0_3 = arith.constant 0 : index
    %c0_4 = arith.constant 0 : index
    %c0_5 = arith.constant 0 : index
    %c0_6 = arith.constant 0 : index
    %2 = vector.load %arg2[%c0_2, %c0_3, %c0_4, %c0_5, %c0_6] : memref<1x4x7x7x128xf32, #tpu.memory_space<vmem>>, vector<1x1x7x7x128xf32>
    %3 = vector.shape_cast %2 : vector<1x1x7x7x128xf32> to vector<7x7x128xf32>
    %c0_7 = arith.constant 0 : index
    %c0_8 = arith.constant 0 : index
    %c0_9 = arith.constant 0 : index
    %c0_10 = arith.constant 0 : index
    %4 = vector.load %arg3[%c0_7, %c0_8, %c0_9, %c0_10] : memref<4x1x1x128xf32, #tpu.memory_space<vmem>>, vector<1x1x1x128xf32>
    %5 = vector.shape_cast %4 : vector<1x1x1x128xf32> to vector<1x1x128xf32>
    %6 = vector.broadcast %5 : vector<1x1x128xf32> to vector<7x7x128xf32>
    %7 = arith.mulf %3, %6 : vector<7x7x128xf32>
    %c0_11 = arith.constant 0 : index
    %c0_12 = arith.constant 0 : index
    %c0_13 = arith.constant 0 : index
    %c0_14 = arith.constant 0 : index
    %8 = vector.load %arg4[%c0_11, %c0_12, %c0_13, %c0_14] : memref<4x1x1x128xf32, #tpu.memory_space<vmem>>, vector<1x1x1x128xf32>
    %9 = vector.shape_cast %8 : vector<1x1x1x128xf32> to vector<1x1x128xf32>
    %10 = vector.broadcast %9 : vector<1x1x128xf32> to vector<7x7x128xf32>
    %11 = arith.addf %7, %10 : vector<7x7x128xf32>
    %cst_15 = arith.constant 0.000000e+00 : f32
    %12 = vector.broadcast %cst_15 : f32 to vector<7x7x128xf32>
    %13 = arith.maximumf %11, %12 : vector<7x7x128xf32>
    %c1 = arith.constant 1 : index
    %c1_16 = arith.constant 1 : index
    %c0_17 = arith.constant 0 : index
    %14 = vector.load %arg7[%c1, %c1_16, %c0_17] : memref<10x8x128xf32, #tpu.memory_space<vmem>>, vector<7x7x128xf32>
    tpu.vector_store %arg7[%c1, %c1_16, %c0_17], %13 {strides = array<i32>} : memref<10x8x128xf32, #tpu.memory_space<vmem>>, vector<7x7x128xf32>,
    %c0_18 = arith.constant 0 : index
    %c0_19 = arith.constant 0 : index
    %c0_20 = arith.constant 0 : index
    %15 = vector.load %arg7[%c0_18, %c0_19, %c0_20] : memref<10x8x128xf32, #tpu.memory_space<vmem>>, vector<10x8x128xf32>
    %16 = vector.shape_cast %15 : vector<10x8x128xf32> to vector<80x128xf32>
    %17 = vector.extract_strided_slice %16 {offsets = [0, 0], sizes = [80, 64], strides = [1, 1]} : vector<80x128xf32> to vector<80x64xf32>
    %cst_21 = arith.constant 0.000000e+00 : f32
    %18 = vector.broadcast %cst_21 : f32 to vector<56x64xf32>
    %19 = vector.extract_strided_slice %17 {offsets = [0, 0], sizes = [56, 64], strides = [1, 1]} : vector<80x64xf32> to vector<56x64xf32>
    %c0_22 = arith.constant 0 : index
    %c0_23 = arith.constant 0 : index
    %c0_24 = arith.constant 0 : index
    %c0_25 = arith.constant 0 : index
    %c0_26 = arith.constant 0 : index
    %20 = vector.load %arg5[%c0_22, %c0_23, %c0_24, %c0_25, %c0_26] : memref<8x3x3x64x64xf32, #tpu.memory_space<vmem>>, vector<1x1x1x64x64xf32>
    %21 = vector.shape_cast %20 : vector<1x1x1x64x64xf32> to vector<64x64xf32>
    %cst_27 = arith.constant dense<0.000000e+00> : vector<56x64xf32>
    %22 = tpu.matmul %19, %21, %cst_27 {dimension_numbers = #tpu.dot_dimension_numbers<[1], [0], [0], [1], [0, 0, 1, 1], [], []>} : vector<56x64xf32>, vector<64x64xf32>, vector<56x64xf32> -> vector<56x64xf32>
    %23 = arith.addf %18, %22 : vector<56x64xf32>
    %24 = vector.extract_strided_slice %17 {offsets = [1, 0], sizes = [56, 64], strides = [1, 1]} : vector<80x64xf32> to vector<56x64xf32>
    %c0_28 = arith.constant 0 : index
    %c0_29 = arith.constant 0 : index
    %c1_30 = arith.constant 1 : index
    %c0_31 = arith.constant 0 : index
    %c0_32 = arith.constant 0 : index
    %25 = vector.load %arg5[%c0_28, %c0_29, %c1_30, %c0_31, %c0_32] : memref<8x3x3x64x64xf32, #tpu.memory_space<vmem>>, vector<1x1x1x64x64xf32>
    %26 = vector.shape_cast %25 : vector<1x1x1x64x64xf32> to vector<64x64xf32>
    %cst_33 = arith.constant dense<0.000000e+00> : vector<56x64xf32>
    %27 = tpu.matmul %24, %26, %cst_33 {dimension_numbers = #tpu.dot_dimension_numbers<[1], [0], [0], [1], [0, 0, 1, 1], [], []>} : vector<56x64xf32>, vector<64x64xf32>, vector<56x64xf32> -> vector<56x64xf32>
    %28 = arith.addf %23, %27 : vector<56x64xf32>
    %29 = vector.extract_strided_slice %17 {offsets = [2, 0], sizes = [56, 64], strides = [1, 1]} : vector<80x64xf32> to vector<56x64xf32>
    %c0_34 = arith.constant 0 : index
    %c0_35 = arith.constant 0 : index
    %c2 = arith.constant 2 : index
    %c0_36 = arith.constant 0 : index
    %c0_37 = arith.constant 0 : index
    %30 = vector.load %arg5[%c0_34, %c0_35, %c2, %c0_36, %c0_37] : memref<8x3x3x64x64xf32, #tpu.memory_space<vmem>>, vector<1x1x1x64x64xf32>
    %31 = vector.shape_cast %30 : vector<1x1x1x64x64xf32> to vector<64x64xf32>
    %cst_38 = arith.constant dense<0.000000e+00> : vector<56x64xf32>
    %32 = tpu.matmul %29, %31, %cst_38 {dimension_numbers = #tpu.dot_dimension_numbers<[1], [0], [0], [1], [0, 0, 1, 1], [], []>} : vector<56x64xf32>, vector<64x64xf32>, vector<56x64xf32> -> vector<56x64xf32>
    %33 = arith.addf %28, %32 : vector<56x64xf32>
    %34 = vector.extract_strided_slice %17 {offsets = [8, 0], sizes = [56, 64], strides = [1, 1]} : vector<80x64xf32> to vector<56x64xf32>
    %c0_39 = arith.constant 0 : index
    %c1_40 = arith.constant 1 : index
    %c0_41 = arith.constant 0 : index
    %c0_42 = arith.constant 0 : index
    %c0_43 = arith.constant 0 : index
    %35 = vector.load %arg5[%c0_39, %c1_40, %c0_41, %c0_42, %c0_43] : memref<8x3x3x64x64xf32, #tpu.memory_space<vmem>>, vector<1x1x1x64x64xf32>
    %36 = vector.shape_cast %35 : vector<1x1x1x64x64xf32> to vector<64x64xf32>
    %cst_44 = arith.constant dense<0.000000e+00> : vector<56x64xf32>
    %37 = tpu.matmul %34, %36, %cst_44 {dimension_numbers = #tpu.dot_dimension_numbers<[1], [0], [0], [1], [0, 0, 1, 1], [], []>} : vector<56x64xf32>, vector<64x64xf32>, vector<56x64xf32> -> vector<56x64xf32>
    %38 = arith.addf %33, %37 : vector<56x64xf32>
    %39 = vector.extract_strided_slice %17 {offsets = [9, 0], sizes = [56, 64], strides = [1, 1]} : vector<80x64xf32> to vector<56x64xf32>
    %c0_45 = arith.constant 0 : index
    %c1_46 = arith.constant 1 : index
    %c1_47 = arith.constant 1 : index
    %c0_48 = arith.constant 0 : index
    %c0_49 = arith.constant 0 : index
    %40 = vector.load %arg5[%c0_45, %c1_46, %c1_47, %c0_48, %c0_49] : memref<8x3x3x64x64xf32, #tpu.memory_space<vmem>>, vector<1x1x1x64x64xf32>
    %41 = vector.shape_cast %40 : vector<1x1x1x64x64xf32> to vector<64x64xf32>
    %cst_50 = arith.constant dense<0.000000e+00> : vector<56x64xf32>
    %42 = tpu.matmul %39, %41, %cst_50 {dimension_numbers = #tpu.dot_dimension_numbers<[1], [0], [0], [1], [0, 0, 1, 1], [], []>} : vector<56x64xf32>, vector<64x64xf32>, vector<56x64xf32> -> vector<56x64xf32>
    %43 = arith.addf %38, %42 : vector<56x64xf32>
    %44 = vector.extract_strided_slice %17 {offsets = [10, 0], sizes = [56, 64], strides = [1, 1]} : vector<80x64xf32> to vector<56x64xf32>
    %c0_51 = arith.constant 0 : index
    %c1_52 = arith.constant 1 : index
    %c2_53 = arith.constant 2 : index
    %c0_54 = arith.constant 0 : index
    %c0_55 = arith.constant 0 : index
    %45 = vector.load %arg5[%c0_51, %c1_52, %c2_53, %c0_54, %c0_55] : memref<8x3x3x64x64xf32, #tpu.memory_space<vmem>>, vector<1x1x1x64x64xf32>
    %46 = vector.shape_cast %45 : vector<1x1x1x64x64xf32> to vector<64x64xf32>
    %cst_56 = arith.constant dense<0.000000e+00> : vector<56x64xf32>
    %47 = tpu.matmul %44, %46, %cst_56 {dimension_numbers = #tpu.dot_dimension_numbers<[1], [0], [0], [1], [0, 0, 1, 1], [], []>} : vector<56x64xf32>, vector<64x64xf32>, vector<56x64xf32> -> vector<56x64xf32>
    %48 = arith.addf %43, %47 : vector<56x64xf32>
    %49 = vector.extract_strided_slice %17 {offsets = [16, 0], sizes = [56, 64], strides = [1, 1]} : vector<80x64xf32> to vector<56x64xf32>
    %c0_57 = arith.constant 0 : index
    %c2_58 = arith.constant 2 : index
    %c0_59 = arith.constant 0 : index
    %c0_60 = arith.constant 0 : index
    %c0_61 = arith.constant 0 : index
    %50 = vector.load %arg5[%c0_57, %c2_58, %c0_59, %c0_60, %c0_61] : memref<8x3x3x64x64xf32, #tpu.memory_space<vmem>>, vector<1x1x1x64x64xf32>
    %51 = vector.shape_cast %50 : vector<1x1x1x64x64xf32> to vector<64x64xf32>
    %cst_62 = arith.constant dense<0.000000e+00> : vector<56x64xf32>
    %52 = tpu.matmul %49, %51, %cst_62 {dimension_numbers = #tpu.dot_dimension_numbers<[1], [0], [0], [1], [0, 0, 1, 1], [], []>} : vector<56x64xf32>, vector<64x64xf32>, vector<56x64xf32> -> vector<56x64xf32>
    %53 = arith.addf %48, %52 : vector<56x64xf32>
    %54 = vector.extract_strided_slice %17 {offsets = [17, 0], sizes = [56, 64], strides = [1, 1]} : vector<80x64xf32> to vector<56x64xf32>
    %c0_63 = arith.constant 0 : index
    %c2_64 = arith.constant 2 : index
    %c1_65 = arith.constant 1 : index
    %c0_66 = arith.constant 0 : index
    %c0_67 = arith.constant 0 : index
    %55 = vector.load %arg5[%c0_63, %c2_64, %c1_65, %c0_66, %c0_67] : memref<8x3x3x64x64xf32, #tpu.memory_space<vmem>>, vector<1x1x1x64x64xf32>
    %56 = vector.shape_cast %55 : vector<1x1x1x64x64xf32> to vector<64x64xf32>
    %cst_68 = arith.constant dense<0.000000e+00> : vector<56x64xf32>
    %57 = tpu.matmul %54, %56, %cst_68 {dimension_numbers = #tpu.dot_dimension_numbers<[1], [0], [0], [1], [0, 0, 1, 1], [], []>} : vector<56x64xf32>, vector<64x64xf32>, vector<56x64xf32> -> vector<56x64xf32>
    %58 = arith.addf %53, %57 : vector<56x64xf32>
    %59 = vector.extract_strided_slice %17 {offsets = [18, 0], sizes = [56, 64], strides = [1, 1]} : vector<80x64xf32> to vector<56x64xf32>
    %c0_69 = arith.constant 0 : index
    %c2_70 = arith.constant 2 : index
    %c2_71 = arith.constant 2 : index
    %c0_72 = arith.constant 0 : index
    %c0_73 = arith.constant 0 : index
    %60 = vector.load %arg5[%c0_69, %c2_70, %c2_71, %c0_72, %c0_73] : memref<8x3x3x64x64xf32, #tpu.memory_space<vmem>>, vector<1x1x1x64x64xf32>
    %61 = vector.shape_cast %60 : vector<1x1x1x64x64xf32> to vector<64x64xf32>
    %cst_74 = arith.constant dense<0.000000e+00> : vector<56x64xf32>
    %62 = tpu.matmul %59, %61, %cst_74 {dimension_numbers = #tpu.dot_dimension_numbers<[1], [0], [0], [1], [0, 0, 1, 1], [], []>} : vector<56x64xf32>, vector<64x64xf32>, vector<56x64xf32> -> vector<56x64xf32>
    %63 = arith.addf %58, %62 : vector<56x64xf32>
    %64 = vector.shape_cast %63 : vector<56x64xf32> to vector<7x8x64xf32>
    %65 = vector.extract_strided_slice %64 {offsets = [0, 0, 0], sizes = [7, 7, 64], strides = [1, 1, 1]} : vector<7x8x64xf32> to vector<7x7x64xf32>
    %66 = vector.extract_strided_slice %16 {offsets = [0, 64], sizes = [80, 64], strides = [1, 1]} : vector<80x128xf32> to vector<80x64xf32>
    %cst_75 = arith.constant 0.000000e+00 : f32
    %67 = vector.broadcast %cst_75 : f32 to vector<56x64xf32>
    %68 = vector.extract_strided_slice %66 {offsets = [0, 0], sizes = [56, 64], strides = [1, 1]} : vector<80x64xf32> to vector<56x64xf32>
    %c1_76 = arith.constant 1 : index
    %c0_77 = arith.constant 0 : index
    %c0_78 = arith.constant 0 : index
    %c0_79 = arith.constant 0 : index
    %c0_80 = arith.constant 0 : index
    %69 = vector.load %arg5[%c1_76, %c0_77, %c0_78, %c0_79, %c0_80] : memref<8x3x3x64x64xf32, #tpu.memory_space<vmem>>, vector<1x1x1x64x64xf32>
    %70 = vector.shape_cast %69 : vector<1x1x1x64x64xf32> to vector<64x64xf32>
    %cst_81 = arith.constant dense<0.000000e+00> : vector<56x64xf32>
    %71 = tpu.matmul %68, %70, %cst_81 {dimension_numbers = #tpu.dot_dimension_numbers<[1], [0], [0], [1], [0, 0, 1, 1], [], []>} : vector<56x64xf32>, vector<64x64xf32>, vector<56x64xf32> -> vector<56x64xf32>
    %72 = arith.addf %67, %71 : vector<56x64xf32>
    %73 = vector.extract_strided_slice %66 {offsets = [1, 0], sizes = [56, 64], strides = [1, 1]} : vector<80x64xf32> to vector<56x64xf32>
    %c1_82 = arith.constant 1 : index
    %c0_83 = arith.constant 0 : index
    %c1_84 = arith.constant 1 : index
    %c0_85 = arith.constant 0 : index
    %c0_86 = arith.constant 0 : index
    %74 = vector.load %arg5[%c1_82, %c0_83, %c1_84, %c0_85, %c0_86] : memref<8x3x3x64x64xf32, #tpu.memory_space<vmem>>, vector<1x1x1x64x64xf32>
    %75 = vector.shape_cast %74 : vector<1x1x1x64x64xf32> to vector<64x64xf32>
    %cst_87 = arith.constant dense<0.000000e+00> : vector<56x64xf32>
    %76 = tpu.matmul %73, %75, %cst_87 {dimension_numbers = #tpu.dot_dimension_numbers<[1], [0], [0], [1], [0, 0, 1, 1], [], []>} : vector<56x64xf32>, vector<64x64xf32>, vector<56x64xf32> -> vector<56x64xf32>
    %77 = arith.addf %72, %76 : vector<56x64xf32>
    %78 = vector.extract_strided_slice %66 {offsets = [2, 0], sizes = [56, 64], strides = [1, 1]} : vector<80x64xf32> to vector<56x64xf32>
    %c1_88 = arith.constant 1 : index
    %c0_89 = arith.constant 0 : index
    %c2_90 = arith.constant 2 : index
    %c0_91 = arith.constant 0 : index
    %c0_92 = arith.constant 0 : index
    %79 = vector.load %arg5[%c1_88, %c0_89, %c2_90, %c0_91, %c0_92] : memref<8x3x3x64x64xf32, #tpu.memory_space<vmem>>, vector<1x1x1x64x64xf32>
    %80 = vector.shape_cast %79 : vector<1x1x1x64x64xf32> to vector<64x64xf32>
    %cst_93 = arith.constant dense<0.000000e+00> : vector<56x64xf32>
    %81 = tpu.matmul %78, %80, %cst_93 {dimension_numbers = #tpu.dot_dimension_numbers<[1], [0], [0], [1], [0, 0, 1, 1], [], []>} : vector<56x64xf32>, vector<64x64xf32>, vector<56x64xf32> -> vector<56x64xf32>
    %82 = arith.addf %77, %81 : vector<56x64xf32>
    %83 = vector.extract_strided_slice %66 {offsets = [8, 0], sizes = [56, 64], strides = [1, 1]} : vector<80x64xf32> to vector<56x64xf32>
    %c1_94 = arith.constant 1 : index
    %c1_95 = arith.constant 1 : index
    %c0_96 = arith.constant 0 : index
    %c0_97 = arith.constant 0 : index
    %c0_98 = arith.constant 0 : index
    %84 = vector.load %arg5[%c1_94, %c1_95, %c0_96, %c0_97, %c0_98] : memref<8x3x3x64x64xf32, #tpu.memory_space<vmem>>, vector<1x1x1x64x64xf32>
    %85 = vector.shape_cast %84 : vector<1x1x1x64x64xf32> to vector<64x64xf32>
    %cst_99 = arith.constant dense<0.000000e+00> : vector<56x64xf32>
    %86 = tpu.matmul %83, %85, %cst_99 {dimension_numbers = #tpu.dot_dimension_numbers<[1], [0], [0], [1], [0, 0, 1, 1], [], []>} : vector<56x64xf32>, vector<64x64xf32>, vector<56x64xf32> -> vector<56x64xf32>
    %87 = arith.addf %82, %86 : vector<56x64xf32>
    %88 = vector.extract_strided_slice %66 {offsets = [9, 0], sizes = [56, 64], strides = [1, 1]} : vector<80x64xf32> to vector<56x64xf32>
    %c1_100 = arith.constant 1 : index
    %c1_101 = arith.constant 1 : index
    %c1_102 = arith.constant 1 : index
    %c0_103 = arith.constant 0 : index
    %c0_104 = arith.constant 0 : index
    %89 = vector.load %arg5[%c1_100, %c1_101, %c1_102, %c0_103, %c0_104] : memref<8x3x3x64x64xf32, #tpu.memory_space<vmem>>, vector<1x1x1x64x64xf32>
    %90 = vector.shape_cast %89 : vector<1x1x1x64x64xf32> to vector<64x64xf32>
    %cst_105 = arith.constant dense<0.000000e+00> : vector<56x64xf32>
    %91 = tpu.matmul %88, %90, %cst_105 {dimension_numbers = #tpu.dot_dimension_numbers<[1], [0], [0], [1], [0, 0, 1, 1], [], []>} : vector<56x64xf32>, vector<64x64xf32>, vector<56x64xf32> -> vector<56x64xf32>
    %92 = arith.addf %87, %91 : vector<56x64xf32>
    %93 = vector.extract_strided_slice %66 {offsets = [10, 0], sizes = [56, 64], strides = [1, 1]} : vector<80x64xf32> to vector<56x64xf32>
    %c1_106 = arith.constant 1 : index
    %c1_107 = arith.constant 1 : index
    %c2_108 = arith.constant 2 : index
    %c0_109 = arith.constant 0 : index
    %c0_110 = arith.constant 0 : index
    %94 = vector.load %arg5[%c1_106, %c1_107, %c2_108, %c0_109, %c0_110] : memref<8x3x3x64x64xf32, #tpu.memory_space<vmem>>, vector<1x1x1x64x64xf32>
    %95 = vector.shape_cast %94 : vector<1x1x1x64x64xf32> to vector<64x64xf32>
    %cst_111 = arith.constant dense<0.000000e+00> : vector<56x64xf32>
    %96 = tpu.matmul %93, %95, %cst_111 {dimension_numbers = #tpu.dot_dimension_numbers<[1], [0], [0], [1], [0, 0, 1, 1], [], []>} : vector<56x64xf32>, vector<64x64xf32>, vector<56x64xf32> -> vector<56x64xf32>
    %97 = arith.addf %92, %96 : vector<56x64xf32>
    %98 = vector.extract_strided_slice %66 {offsets = [16, 0], sizes = [56, 64], strides = [1, 1]} : vector<80x64xf32> to vector<56x64xf32>
    %c1_112 = arith.constant 1 : index
    %c2_113 = arith.constant 2 : index
    %c0_114 = arith.constant 0 : index
    %c0_115 = arith.constant 0 : index
    %c0_116 = arith.constant 0 : index
    %99 = vector.load %arg5[%c1_112, %c2_113, %c0_114, %c0_115, %c0_116] : memref<8x3x3x64x64xf32, #tpu.memory_space<vmem>>, vector<1x1x1x64x64xf32>
    %100 = vector.shape_cast %99 : vector<1x1x1x64x64xf32> to vector<64x64xf32>
    %cst_117 = arith.constant dense<0.000000e+00> : vector<56x64xf32>
    %101 = tpu.matmul %98, %100, %cst_117 {dimension_numbers = #tpu.dot_dimension_numbers<[1], [0], [0], [1], [0, 0, 1, 1], [], []>} : vector<56x64xf32>, vector<64x64xf32>, vector<56x64xf32> -> vector<56x64xf32>
    %102 = arith.addf %97, %101 : vector<56x64xf32>
    %103 = vector.extract_strided_slice %66 {offsets = [17, 0], sizes = [56, 64], strides = [1, 1]} : vector<80x64xf32> to vector<56x64xf32>
    %c1_118 = arith.constant 1 : index
    %c2_119 = arith.constant 2 : index
    %c1_120 = arith.constant 1 : index
    %c0_121 = arith.constant 0 : index
    %c0_122 = arith.constant 0 : index
    %104 = vector.load %arg5[%c1_118, %c2_119, %c1_120, %c0_121, %c0_122] : memref<8x3x3x64x64xf32, #tpu.memory_space<vmem>>, vector<1x1x1x64x64xf32>
    %105 = vector.shape_cast %104 : vector<1x1x1x64x64xf32> to vector<64x64xf32>
    %cst_123 = arith.constant dense<0.000000e+00> : vector<56x64xf32>
    %106 = tpu.matmul %103, %105, %cst_123 {dimension_numbers = #tpu.dot_dimension_numbers<[1], [0], [0], [1], [0, 0, 1, 1], [], []>} : vector<56x64xf32>, vector<64x64xf32>, vector<56x64xf32> -> vector<56x64xf32>
    %107 = arith.addf %102, %106 : vector<56x64xf32>
    %108 = vector.extract_strided_slice %66 {offsets = [18, 0], sizes = [56, 64], strides = [1, 1]} : vector<80x64xf32> to vector<56x64xf32>
    %c1_124 = arith.constant 1 : index
    %c2_125 = arith.constant 2 : index
    %c2_126 = arith.constant 2 : index
    %c0_127 = arith.constant 0 : index
    %c0_128 = arith.constant 0 : index
    %109 = vector.load %arg5[%c1_124, %c2_125, %c2_126, %c0_127, %c0_128] : memref<8x3x3x64x64xf32, #tpu.memory_space<vmem>>, vector<1x1x1x64x64xf32>
    %110 = vector.shape_cast %109 : vector<1x1x1x64x64xf32> to vector<64x64xf32>
    %cst_129 = arith.constant dense<0.000000e+00> : vector<56x64xf32>
    %111 = tpu.matmul %108, %110, %cst_129 {dimension_numbers = #tpu.dot_dimension_numbers<[1], [0], [0], [1], [0, 0, 1, 1], [], []>} : vector<56x64xf32>, vector<64x64xf32>, vector<56x64xf32> -> vector<56x64xf32>
    %112 = arith.addf %107, %111 : vector<56x64xf32>
    %113 = vector.shape_cast %112 : vector<56x64xf32> to vector<7x8x64xf32>
    %114 = vector.extract_strided_slice %113 {offsets = [0, 0, 0], sizes = [7, 7, 64], strides = [1, 1, 1]} : vector<7x8x64xf32> to vector<7x7x64xf32>
    %115 = tpu.concatenate %65, %114 in 2 : vector<7x7x64xf32>, vector<7x7x64xf32> -> vector<7x7x128xf32>
    %c0_130 = arith.constant 0 : index
    %c0_131 = arith.constant 0 : index
    %c0_132 = arith.constant 0 : index
    %c0_133 = arith.constant 0 : index
    %c0_134 = arith.constant 0 : index
    %116 = vector.load %arg6[%c0_130, %c0_131, %c0_132, %c0_133, %c0_134] : memref<1x4x7x7x128xf32, #tpu.memory_space<vmem>>, vector<1x1x7x7x128xf32>
    %117 = vector.shape_cast %116 : vector<1x1x7x7x128xf32> to vector<7x7x128xf32>
    %118 = vector.shape_cast %115 : vector<7x7x128xf32> to vector<1x1x7x7x128xf32>
    tpu.vector_store %arg6[%c0_130, %c0_131, %c0_132, %c0_133, %c0_134], %118 {strides = array<i32>} : memref<1x4x7x7x128xf32, #tpu.memory_space<vmem>>, vector<1x1x7x7x128xf32>,
    %c0_135 = arith.constant 0 : index
    %c1_136 = arith.constant 1 : index
    %c0_137 = arith.constant 0 : index
    %c0_138 = arith.constant 0 : index
    %c0_139 = arith.constant 0 : index
    %119 = vector.load %arg2[%c0_135, %c1_136, %c0_137, %c0_138, %c0_139] : memref<1x4x7x7x128xf32, #tpu.memory_space<vmem>>, vector<1x1x7x7x128xf32>
    %120 = vector.shape_cast %119 : vector<1x1x7x7x128xf32> to vector<7x7x128xf32>
    %c1_140 = arith.constant 1 : index
    %c0_141 = arith.constant 0 : index
    %c0_142 = arith.constant 0 : index
    %c0_143 = arith.constant 0 : index
    %121 = vector.load %arg3[%c1_140, %c0_141, %c0_142, %c0_143] : memref<4x1x1x128xf32, #tpu.memory_space<vmem>>, vector<1x1x1x128xf32>
    %122 = vector.shape_cast %121 : vector<1x1x1x128xf32> to vector<1x1x128xf32>
    %123 = vector.broadcast %122 : vector<1x1x128xf32> to vector<7x7x128xf32>
    %124 = arith.mulf %120, %123 : vector<7x7x128xf32>
    %c1_144 = arith.constant 1 : index
    %c0_145 = arith.constant 0 : index
    %c0_146 = arith.constant 0 : index
    %c0_147 = arith.constant 0 : index
    %125 = vector.load %arg4[%c1_144, %c0_145, %c0_146, %c0_147] : memref<4x1x1x128xf32, #tpu.memory_space<vmem>>, vector<1x1x1x128xf32>
    %126 = vector.shape_cast %125 : vector<1x1x1x128xf32> to vector<1x1x128xf32>
    %127 = vector.broadcast %126 : vector<1x1x128xf32> to vector<7x7x128xf32>
    %128 = arith.addf %124, %127 : vector<7x7x128xf32>
    %cst_148 = arith.constant 0.000000e+00 : f32
    %129 = vector.broadcast %cst_148 : f32 to vector<7x7x128xf32>
    %130 = arith.maximumf %128, %129 : vector<7x7x128xf32>
    %c1_149 = arith.constant 1 : index
    %c1_150 = arith.constant 1 : index
    %c0_151 = arith.constant 0 : index
    %131 = vector.load %arg7[%c1_149, %c1_150, %c0_151] : memref<10x8x128xf32, #tpu.memory_space<vmem>>, vector<7x7x128xf32>
    tpu.vector_store %arg7[%c1_149, %c1_150, %c0_151], %130 {strides = array<i32>} : memref<10x8x128xf32, #tpu.memory_space<vmem>>, vector<7x7x128xf32>,
    %c0_152 = arith.constant 0 : index
    %c0_153 = arith.constant 0 : index
    %c0_154 = arith.constant 0 : index
    %132 = vector.load %arg7[%c0_152, %c0_153, %c0_154] : memref<10x8x128xf32, #tpu.memory_space<vmem>>, vector<10x8x128xf32>
    %133 = vector.shape_cast %132 : vector<10x8x128xf32> to vector<80x128xf32>
    %134 = vector.extract_strided_slice %133 {offsets = [0, 0], sizes = [80, 64], strides = [1, 1]} : vector<80x128xf32> to vector<80x64xf32>
    %cst_155 = arith.constant 0.000000e+00 : f32
    %135 = vector.broadcast %cst_155 : f32 to vector<56x64xf32>
    %136 = vector.extract_strided_slice %134 {offsets = [0, 0], sizes = [56, 64], strides = [1, 1]} : vector<80x64xf32> to vector<56x64xf32>
    %c2_156 = arith.constant 2 : index
    %c0_157 = arith.constant 0 : index
    %c0_158 = arith.constant 0 : index
    %c0_159 = arith.constant 0 : index
    %c0_160 = arith.constant 0 : index
    %137 = vector.load %arg5[%c2_156, %c0_157, %c0_158, %c0_159, %c0_160] : memref<8x3x3x64x64xf32, #tpu.memory_space<vmem>>, vector<1x1x1x64x64xf32>
    %138 = vector.shape_cast %137 : vector<1x1x1x64x64xf32> to vector<64x64xf32>
    %cst_161 = arith.constant dense<0.000000e+00> : vector<56x64xf32>
    %139 = tpu.matmul %136, %138, %cst_161 {dimension_numbers = #tpu.dot_dimension_numbers<[1], [0], [0], [1], [0, 0, 1, 1], [], []>} : vector<56x64xf32>, vector<64x64xf32>, vector<56x64xf32> -> vector<56x64xf32>
    %140 = arith.addf %135, %139 : vector<56x64xf32>
    %141 = vector.extract_strided_slice %134 {offsets = [1, 0], sizes = [56, 64], strides = [1, 1]} : vector<80x64xf32> to vector<56x64xf32>
    %c2_162 = arith.constant 2 : index
    %c0_163 = arith.constant 0 : index
    %c1_164 = arith.constant 1 : index
    %c0_165 = arith.constant 0 : index
    %c0_166 = arith.constant 0 : index
    %142 = vector.load %arg5[%c2_162, %c0_163, %c1_164, %c0_165, %c0_166] : memref<8x3x3x64x64xf32, #tpu.memory_space<vmem>>, vector<1x1x1x64x64xf32>
    %143 = vector.shape_cast %142 : vector<1x1x1x64x64xf32> to vector<64x64xf32>
    %cst_167 = arith.constant dense<0.000000e+00> : vector<56x64xf32>
    %144 = tpu.matmul %141, %143, %cst_167 {dimension_numbers = #tpu.dot_dimension_numbers<[1], [0], [0], [1], [0, 0, 1, 1], [], []>} : vector<56x64xf32>, vector<64x64xf32>, vector<56x64xf32> -> vector<56x64xf32>
    %145 = arith.addf %140, %144 : vector<56x64xf32>
    %146 = vector.extract_strided_slice %134 {offsets = [2, 0], sizes = [56, 64], strides = [1, 1]} : vector<80x64xf32> to vector<56x64xf32>
    %c2_168 = arith.constant 2 : index
    %c0_169 = arith.constant 0 : index
    %c2_170 = arith.constant 2 : index
    %c0_171 = arith.constant 0 : index
    %c0_172 = arith.constant 0 : index
    %147 = vector.load %arg5[%c2_168, %c0_169, %c2_170, %c0_171, %c0_172] : memref<8x3x3x64x64xf32, #tpu.memory_space<vmem>>, vector<1x1x1x64x64xf32>
    %148 = vector.shape_cast %147 : vector<1x1x1x64x64xf32> to vector<64x64xf32>
    %cst_173 = arith.constant dense<0.000000e+00> : vector<56x64xf32>
    %149 = tpu.matmul %146, %148, %cst_173 {dimension_numbers = #tpu.dot_dimension_numbers<[1], [0], [0], [1], [0, 0, 1, 1], [], []>} : vector<56x64xf32>, vector<64x64xf32>, vector<56x64xf32> -> vector<56x64xf32>
    %150 = arith.addf %145, %149 : vector<56x64xf32>
    %151 = vector.extract_strided_slice %134 {offsets = [8, 0], sizes = [56, 64], strides = [1, 1]} : vector<80x64xf32> to vector<56x64xf32>
    %c2_174 = arith.constant 2 : index
    %c1_175 = arith.constant 1 : index
    %c0_176 = arith.constant 0 : index
    %c0_177 = arith.constant 0 : index
    %c0_178 = arith.constant 0 : index
    %152 = vector.load %arg5[%c2_174, %c1_175, %c0_176, %c0_177, %c0_178] : memref<8x3x3x64x64xf32, #tpu.memory_space<vmem>>, vector<1x1x1x64x64xf32>
    %153 = vector.shape_cast %152 : vector<1x1x1x64x64xf32> to vector<64x64xf32>
    %cst_179 = arith.constant dense<0.000000e+00> : vector<56x64xf32>
    %154 = tpu.matmul %151, %153, %cst_179 {dimension_numbers = #tpu.dot_dimension_numbers<[1], [0], [0], [1], [0, 0, 1, 1], [], []>} : vector<56x64xf32>, vector<64x64xf32>, vector<56x64xf32> -> vector<56x64xf32>
    %155 = arith.addf %150, %154 : vector<56x64xf32>
    %156 = vector.extract_strided_slice %134 {offsets = [9, 0], sizes = [56, 64], strides = [1, 1]} : vector<80x64xf32> to vector<56x64xf32>
    %c2_180 = arith.constant 2 : index
    %c1_181 = arith.constant 1 : index
    %c1_182 = arith.constant 1 : index
    %c0_183 = arith.constant 0 : index
    %c0_184 = arith.constant 0 : index
    %157 = vector.load %arg5[%c2_180, %c1_181, %c1_182, %c0_183, %c0_184] : memref<8x3x3x64x64xf32, #tpu.memory_space<vmem>>, vector<1x1x1x64x64xf32>
    %158 = vector.shape_cast %157 : vector<1x1x1x64x64xf32> to vector<64x64xf32>
    %cst_185 = arith.constant dense<0.000000e+00> : vector<56x64xf32>
    %159 = tpu.matmul %156, %158, %cst_185 {dimension_numbers = #tpu.dot_dimension_numbers<[1], [0], [0], [1], [0, 0, 1, 1], [], []>} : vector<56x64xf32>, vector<64x64xf32>, vector<56x64xf32> -> vector<56x64xf32>
    %160 = arith.addf %155, %159 : vector<56x64xf32>
    %161 = vector.extract_strided_slice %134 {offsets = [10, 0], sizes = [56, 64], strides = [1, 1]} : vector<80x64xf32> to vector<56x64xf32>
    %c2_186 = arith.constant 2 : index
    %c1_187 = arith.constant 1 : index
    %c2_188 = arith.constant 2 : index
    %c0_189 = arith.constant 0 : index
    %c0_190 = arith.constant 0 : index
    %162 = vector.load %arg5[%c2_186, %c1_187, %c2_188, %c0_189, %c0_190] : memref<8x3x3x64x64xf32, #tpu.memory_space<vmem>>, vector<1x1x1x64x64xf32>
    %163 = vector.shape_cast %162 : vector<1x1x1x64x64xf32> to vector<64x64xf32>
    %cst_191 = arith.constant dense<0.000000e+00> : vector<56x64xf32>
    %164 = tpu.matmul %161, %163, %cst_191 {dimension_numbers = #tpu.dot_dimension_numbers<[1], [0], [0], [1], [0, 0, 1, 1], [], []>} : vector<56x64xf32>, vector<64x64xf32>, vector<56x64xf32> -> vector<56x64xf32>
    %165 = arith.addf %160, %164 : vector<56x64xf32>
    %166 = vector.extract_strided_slice %134 {offsets = [16, 0], sizes = [56, 64], strides = [1, 1]} : vector<80x64xf32> to vector<56x64xf32>
    %c2_192 = arith.constant 2 : index
    %c2_193 = arith.constant 2 : index
    %c0_194 = arith.constant 0 : index
    %c0_195 = arith.constant 0 : index
    %c0_196 = arith.constant 0 : index
    %167 = vector.load %arg5[%c2_192, %c2_193, %c0_194, %c0_195, %c0_196] : memref<8x3x3x64x64xf32, #tpu.memory_space<vmem>>, vector<1x1x1x64x64xf32>
    %168 = vector.shape_cast %167 : vector<1x1x1x64x64xf32> to vector<64x64xf32>
    %cst_197 = arith.constant dense<0.000000e+00> : vector<56x64xf32>
    %169 = tpu.matmul %166, %168, %cst_197 {dimension_numbers = #tpu.dot_dimension_numbers<[1], [0], [0], [1], [0, 0, 1, 1], [], []>} : vector<56x64xf32>, vector<64x64xf32>, vector<56x64xf32> -> vector<56x64xf32>
    %170 = arith.addf %165, %169 : vector<56x64xf32>
    %171 = vector.extract_strided_slice %134 {offsets = [17, 0], sizes = [56, 64], strides = [1, 1]} : vector<80x64xf32> to vector<56x64xf32>
    %c2_198 = arith.constant 2 : index
    %c2_199 = arith.constant 2 : index
    %c1_200 = arith.constant 1 : index
    %c0_201 = arith.constant 0 : index
    %c0_202 = arith.constant 0 : index
    %172 = vector.load %arg5[%c2_198, %c2_199, %c1_200, %c0_201, %c0_202] : memref<8x3x3x64x64xf32, #tpu.memory_space<vmem>>, vector<1x1x1x64x64xf32>
    %173 = vector.shape_cast %172 : vector<1x1x1x64x64xf32> to vector<64x64xf32>
    %cst_203 = arith.constant dense<0.000000e+00> : vector<56x64xf32>
    %174 = tpu.matmul %171, %173, %cst_203 {dimension_numbers = #tpu.dot_dimension_numbers<[1], [0], [0], [1], [0, 0, 1, 1], [], []>} : vector<56x64xf32>, vector<64x64xf32>, vector<56x64xf32> -> vector<56x64xf32>
    %175 = arith.addf %170, %174 : vector<56x64xf32>
    %176 = vector.extract_strided_slice %134 {offsets = [18, 0], sizes = [56, 64], strides = [1, 1]} : vector<80x64xf32> to vector<56x64xf32>
    %c2_204 = arith.constant 2 : index
    %c2_205 = arith.constant 2 : index
    %c2_206 = arith.constant 2 : index
    %c0_207 = arith.constant 0 : index
    %c0_208 = arith.constant 0 : index
    %177 = vector.load %arg5[%c2_204, %c2_205, %c2_206, %c0_207, %c0_208] : memref<8x3x3x64x64xf32, #tpu.memory_space<vmem>>, vector<1x1x1x64x64xf32>
    %178 = vector.shape_cast %177 : vector<1x1x1x64x64xf32> to vector<64x64xf32>
    %cst_209 = arith.constant dense<0.000000e+00> : vector<56x64xf32>
    %179 = tpu.matmul %176, %178, %cst_209 {dimension_numbers = #tpu.dot_dimension_numbers<[1], [0], [0], [1], [0, 0, 1, 1], [], []>} : vector<56x64xf32>, vector<64x64xf32>, vector<56x64xf32> -> vector<56x64xf32>
    %180 = arith.addf %175, %179 : vector<56x64xf32>
    %181 = vector.shape_cast %180 : vector<56x64xf32> to vector<7x8x64xf32>
    %182 = vector.extract_strided_slice %181 {offsets = [0, 0, 0], sizes = [7, 7, 64], strides = [1, 1, 1]} : vector<7x8x64xf32> to vector<7x7x64xf32>
    %183 = vector.extract_strided_slice %133 {offsets = [0, 64], sizes = [80, 64], strides = [1, 1]} : vector<80x128xf32> to vector<80x64xf32>
    %cst_210 = arith.constant 0.000000e+00 : f32
    %184 = vector.broadcast %cst_210 : f32 to vector<56x64xf32>
    %185 = vector.extract_strided_slice %183 {offsets = [0, 0], sizes = [56, 64], strides = [1, 1]} : vector<80x64xf32> to vector<56x64xf32>
    %c3 = arith.constant 3 : index
    %c0_211 = arith.constant 0 : index
    %c0_212 = arith.constant 0 : index
    %c0_213 = arith.constant 0 : index
    %c0_214 = arith.constant 0 : index
    %186 = vector.load %arg5[%c3, %c0_211, %c0_212, %c0_213, %c0_214] : memref<8x3x3x64x64xf32, #tpu.memory_space<vmem>>, vector<1x1x1x64x64xf32>
    %187 = vector.shape_cast %186 : vector<1x1x1x64x64xf32> to vector<64x64xf32>
    %cst_215 = arith.constant dense<0.000000e+00> : vector<56x64xf32>
    %188 = tpu.matmul %185, %187, %cst_215 {dimension_numbers = #tpu.dot_dimension_numbers<[1], [0], [0], [1], [0, 0, 1, 1], [], []>} : vector<56x64xf32>, vector<64x64xf32>, vector<56x64xf32> -> vector<56x64xf32>
    %189 = arith.addf %184, %188 : vector<56x64xf32>
    %190 = vector.extract_strided_slice %183 {offsets = [1, 0], sizes = [56, 64], strides = [1, 1]} : vector<80x64xf32> to vector<56x64xf32>
    %c3_216 = arith.constant 3 : index
    %c0_217 = arith.constant 0 : index
    %c1_218 = arith.constant 1 : index
    %c0_219 = arith.constant 0 : index
    %c0_220 = arith.constant 0 : index
    %191 = vector.load %arg5[%c3_216, %c0_217, %c1_218, %c0_219, %c0_220] : memref<8x3x3x64x64xf32, #tpu.memory_space<vmem>>, vector<1x1x1x64x64xf32>
    %192 = vector.shape_cast %191 : vector<1x1x1x64x64xf32> to vector<64x64xf32>
    %cst_221 = arith.constant dense<0.000000e+00> : vector<56x64xf32>
    %193 = tpu.matmul %190, %192, %cst_221 {dimension_numbers = #tpu.dot_dimension_numbers<[1], [0], [0], [1], [0, 0, 1, 1], [], []>} : vector<56x64xf32>, vector<64x64xf32>, vector<56x64xf32> -> vector<56x64xf32>
    %194 = arith.addf %189, %193 : vector<56x64xf32>
    %195 = vector.extract_strided_slice %183 {offsets = [2, 0], sizes = [56, 64], strides = [1, 1]} : vector<80x64xf32> to vector<56x64xf32>
    %c3_222 = arith.constant 3 : index
    %c0_223 = arith.constant 0 : index
    %c2_224 = arith.constant 2 : index
    %c0_225 = arith.constant 0 : index
    %c0_226 = arith.constant 0 : index
    %196 = vector.load %arg5[%c3_222, %c0_223, %c2_224, %c0_225, %c0_226] : memref<8x3x3x64x64xf32, #tpu.memory_space<vmem>>, vector<1x1x1x64x64xf32>
    %197 = vector.shape_cast %196 : vector<1x1x1x64x64xf32> to vector<64x64xf32>
    %cst_227 = arith.constant dense<0.000000e+00> : vector<56x64xf32>
    %198 = tpu.matmul %195, %197, %cst_227 {dimension_numbers = #tpu.dot_dimension_numbers<[1], [0], [0], [1], [0, 0, 1, 1], [], []>} : vector<56x64xf32>, vector<64x64xf32>, vector<56x64xf32> -> vector<56x64xf32>
    %199 = arith.addf %194, %198 : vector<56x64xf32>
    %200 = vector.extract_strided_slice %183 {offsets = [8, 0], sizes = [56, 64], strides = [1, 1]} : vector<80x64xf32> to vector<56x64xf32>
    %c3_228 = arith.constant 3 : index
    %c1_229 = arith.constant 1 : index
    %c0_230 = arith.constant 0 : index
    %c0_231 = arith.constant 0 : index
    %c0_232 = arith.constant 0 : index
    %201 = vector.load %arg5[%c3_228, %c1_229, %c0_230, %c0_231, %c0_232] : memref<8x3x3x64x64xf32, #tpu.memory_space<vmem>>, vector<1x1x1x64x64xf32>
    %202 = vector.shape_cast %201 : vector<1x1x1x64x64xf32> to vector<64x64xf32>
    %cst_233 = arith.constant dense<0.000000e+00> : vector<56x64xf32>
    %203 = tpu.matmul %200, %202, %cst_233 {dimension_numbers = #tpu.dot_dimension_numbers<[1], [0], [0], [1], [0, 0, 1, 1], [], []>} : vector<56x64xf32>, vector<64x64xf32>, vector<56x64xf32> -> vector<56x64xf32>
    %204 = arith.addf %199, %203 : vector<56x64xf32>
    %205 = vector.extract_strided_slice %183 {offsets = [9, 0], sizes = [56, 64], strides = [1, 1]} : vector<80x64xf32> to vector<56x64xf32>
    %c3_234 = arith.constant 3 : index
    %c1_235 = arith.constant 1 : index
    %c1_236 = arith.constant 1 : index
    %c0_237 = arith.constant 0 : index
    %c0_238 = arith.constant 0 : index
    %206 = vector.load %arg5[%c3_234, %c1_235, %c1_236, %c0_237, %c0_238] : memref<8x3x3x64x64xf32, #tpu.memory_space<vmem>>, vector<1x1x1x64x64xf32>
    %207 = vector.shape_cast %206 : vector<1x1x1x64x64xf32> to vector<64x64xf32>
    %cst_239 = arith.constant dense<0.000000e+00> : vector<56x64xf32>
    %208 = tpu.matmul %205, %207, %cst_239 {dimension_numbers = #tpu.dot_dimension_numbers<[1], [0], [0], [1], [0, 0, 1, 1], [], []>} : vector<56x64xf32>, vector<64x64xf32>, vector<56x64xf32> -> vector<56x64xf32>
    %209 = arith.addf %204, %208 : vector<56x64xf32>
    %210 = vector.extract_strided_slice %183 {offsets = [10, 0], sizes = [56, 64], strides = [1, 1]} : vector<80x64xf32> to vector<56x64xf32>
    %c3_240 = arith.constant 3 : index
    %c1_241 = arith.constant 1 : index
    %c2_242 = arith.constant 2 : index
    %c0_243 = arith.constant 0 : index
    %c0_244 = arith.constant 0 : index
    %211 = vector.load %arg5[%c3_240, %c1_241, %c2_242, %c0_243, %c0_244] : memref<8x3x3x64x64xf32, #tpu.memory_space<vmem>>, vector<1x1x1x64x64xf32>
    %212 = vector.shape_cast %211 : vector<1x1x1x64x64xf32> to vector<64x64xf32>
    %cst_245 = arith.constant dense<0.000000e+00> : vector<56x64xf32>
    %213 = tpu.matmul %210, %212, %cst_245 {dimension_numbers = #tpu.dot_dimension_numbers<[1], [0], [0], [1], [0, 0, 1, 1], [], []>} : vector<56x64xf32>, vector<64x64xf32>, vector<56x64xf32> -> vector<56x64xf32>
    %214 = arith.addf %209, %213 : vector<56x64xf32>
    %215 = vector.extract_strided_slice %183 {offsets = [16, 0], sizes = [56, 64], strides = [1, 1]} : vector<80x64xf32> to vector<56x64xf32>
    %c3_246 = arith.constant 3 : index
    %c2_247 = arith.constant 2 : index
    %c0_248 = arith.constant 0 : index
    %c0_249 = arith.constant 0 : index
    %c0_250 = arith.constant 0 : index
    %216 = vector.load %arg5[%c3_246, %c2_247, %c0_248, %c0_249, %c0_250] : memref<8x3x3x64x64xf32, #tpu.memory_space<vmem>>, vector<1x1x1x64x64xf32>
    %217 = vector.shape_cast %216 : vector<1x1x1x64x64xf32> to vector<64x64xf32>
    %cst_251 = arith.constant dense<0.000000e+00> : vector<56x64xf32>
    %218 = tpu.matmul %215, %217, %cst_251 {dimension_numbers = #tpu.dot_dimension_numbers<[1], [0], [0], [1], [0, 0, 1, 1], [], []>} : vector<56x64xf32>, vector<64x64xf32>, vector<56x64xf32> -> vector<56x64xf32>
    %219 = arith.addf %214, %218 : vector<56x64xf32>
    %220 = vector.extract_strided_slice %183 {offsets = [17, 0], sizes = [56, 64], strides = [1, 1]} : vector<80x64xf32> to vector<56x64xf32>
    %c3_252 = arith.constant 3 : index
    %c2_253 = arith.constant 2 : index
    %c1_254 = arith.constant 1 : index
    %c0_255 = arith.constant 0 : index
    %c0_256 = arith.constant 0 : index
    %221 = vector.load %arg5[%c3_252, %c2_253, %c1_254, %c0_255, %c0_256] : memref<8x3x3x64x64xf32, #tpu.memory_space<vmem>>, vector<1x1x1x64x64xf32>
    %222 = vector.shape_cast %221 : vector<1x1x1x64x64xf32> to vector<64x64xf32>
    %cst_257 = arith.constant dense<0.000000e+00> : vector<56x64xf32>
    %223 = tpu.matmul %220, %222, %cst_257 {dimension_numbers = #tpu.dot_dimension_numbers<[1], [0], [0], [1], [0, 0, 1, 1], [], []>} : vector<56x64xf32>, vector<64x64xf32>, vector<56x64xf32> -> vector<56x64xf32>
    %224 = arith.addf %219, %223 : vector<56x64xf32>
    %225 = vector.extract_strided_slice %183 {offsets = [18, 0], sizes = [56, 64], strides = [1, 1]} : vector<80x64xf32> to vector<56x64xf32>
    %c3_258 = arith.constant 3 : index
    %c2_259 = arith.constant 2 : index
    %c2_260 = arith.constant 2 : index
    %c0_261 = arith.constant 0 : index
    %c0_262 = arith.constant 0 : index
    %226 = vector.load %arg5[%c3_258, %c2_259, %c2_260, %c0_261, %c0_262] : memref<8x3x3x64x64xf32, #tpu.memory_space<vmem>>, vector<1x1x1x64x64xf32>
    %227 = vector.shape_cast %226 : vector<1x1x1x64x64xf32> to vector<64x64xf32>
    %cst_263 = arith.constant dense<0.000000e+00> : vector<56x64xf32>
    %228 = tpu.matmul %225, %227, %cst_263 {dimension_numbers = #tpu.dot_dimension_numbers<[1], [0], [0], [1], [0, 0, 1, 1], [], []>} : vector<56x64xf32>, vector<64x64xf32>, vector<56x64xf32> -> vector<56x64xf32>
    %229 = arith.addf %224, %228 : vector<56x64xf32>
    %230 = vector.shape_cast %229 : vector<56x64xf32> to vector<7x8x64xf32>
    %231 = vector.extract_strided_slice %230 {offsets = [0, 0, 0], sizes = [7, 7, 64], strides = [1, 1, 1]} : vector<7x8x64xf32> to vector<7x7x64xf32>
    %232 = tpu.concatenate %182, %231 in 2 : vector<7x7x64xf32>, vector<7x7x64xf32> -> vector<7x7x128xf32>
    %c0_264 = arith.constant 0 : index
    %c1_265 = arith.constant 1 : index
    %c0_266 = arith.constant 0 : index
    %c0_267 = arith.constant 0 : index
    %c0_268 = arith.constant 0 : index
    %233 = vector.load %arg6[%c0_264, %c1_265, %c0_266, %c0_267, %c0_268] : memref<1x4x7x7x128xf32, #tpu.memory_space<vmem>>, vector<1x1x7x7x128xf32>
    %234 = vector.shape_cast %233 : vector<1x1x7x7x128xf32> to vector<7x7x128xf32>
    %235 = vector.shape_cast %232 : vector<7x7x128xf32> to vector<1x1x7x7x128xf32>
    tpu.vector_store %arg6[%c0_264, %c1_265, %c0_266, %c0_267, %c0_268], %235 {strides = array<i32>} : memref<1x4x7x7x128xf32, #tpu.memory_space<vmem>>, vector<1x1x7x7x128xf32>,
    %c0_269 = arith.constant 0 : index
    %c2_270 = arith.constant 2 : index
    %c0_271 = arith.constant 0 : index
    %c0_272 = arith.constant 0 : index
    %c0_273 = arith.constant 0 : index
    %236 = vector.load %arg2[%c0_269, %c2_270, %c0_271, %c0_272, %c0_273] : memref<1x4x7x7x128xf32, #tpu.memory_space<vmem>>, vector<1x1x7x7x128xf32>
    %237 = vector.shape_cast %236 : vector<1x1x7x7x128xf32> to vector<7x7x128xf32>
    %c2_274 = arith.constant 2 : index
    %c0_275 = arith.constant 0 : index
    %c0_276 = arith.constant 0 : index
    %c0_277 = arith.constant 0 : index
    %238 = vector.load %arg3[%c2_274, %c0_275, %c0_276, %c0_277] : memref<4x1x1x128xf32, #tpu.memory_space<vmem>>, vector<1x1x1x128xf32>
    %239 = vector.shape_cast %238 : vector<1x1x1x128xf32> to vector<1x1x128xf32>
    %240 = vector.broadcast %239 : vector<1x1x128xf32> to vector<7x7x128xf32>
    %241 = arith.mulf %237, %240 : vector<7x7x128xf32>
    %c2_278 = arith.constant 2 : index
    %c0_279 = arith.constant 0 : index
    %c0_280 = arith.constant 0 : index
    %c0_281 = arith.constant 0 : index
    %242 = vector.load %arg4[%c2_278, %c0_279, %c0_280, %c0_281] : memref<4x1x1x128xf32, #tpu.memory_space<vmem>>, vector<1x1x1x128xf32>
    %243 = vector.shape_cast %242 : vector<1x1x1x128xf32> to vector<1x1x128xf32>
    %244 = vector.broadcast %243 : vector<1x1x128xf32> to vector<7x7x128xf32>
    %245 = arith.addf %241, %244 : vector<7x7x128xf32>
    %cst_282 = arith.constant 0.000000e+00 : f32
    %246 = vector.broadcast %cst_282 : f32 to vector<7x7x128xf32>
    %247 = arith.maximumf %245, %246 : vector<7x7x128xf32>
    %c1_283 = arith.constant 1 : index
    %c1_284 = arith.constant 1 : index
    %c0_285 = arith.constant 0 : index
    %248 = vector.load %arg7[%c1_283, %c1_284, %c0_285] : memref<10x8x128xf32, #tpu.memory_space<vmem>>, vector<7x7x128xf32>
    tpu.vector_store %arg7[%c1_283, %c1_284, %c0_285], %247 {strides = array<i32>} : memref<10x8x128xf32, #tpu.memory_space<vmem>>, vector<7x7x128xf32>,
    %c0_286 = arith.constant 0 : index
    %c0_287 = arith.constant 0 : index
    %c0_288 = arith.constant 0 : index
    %249 = vector.load %arg7[%c0_286, %c0_287, %c0_288] : memref<10x8x128xf32, #tpu.memory_space<vmem>>, vector<10x8x128xf32>
    %250 = vector.shape_cast %249 : vector<10x8x128xf32> to vector<80x128xf32>
    %251 = vector.extract_strided_slice %250 {offsets = [0, 0], sizes = [80, 64], strides = [1, 1]} : vector<80x128xf32> to vector<80x64xf32>
    %cst_289 = arith.constant 0.000000e+00 : f32
    %252 = vector.broadcast %cst_289 : f32 to vector<56x64xf32>
    %253 = vector.extract_strided_slice %251 {offsets = [0, 0], sizes = [56, 64], strides = [1, 1]} : vector<80x64xf32> to vector<56x64xf32>
    %c4 = arith.constant 4 : index
    %c0_290 = arith.constant 0 : index
    %c0_291 = arith.constant 0 : index
    %c0_292 = arith.constant 0 : index
    %c0_293 = arith.constant 0 : index
    %254 = vector.load %arg5[%c4, %c0_290, %c0_291, %c0_292, %c0_293] : memref<8x3x3x64x64xf32, #tpu.memory_space<vmem>>, vector<1x1x1x64x64xf32>
    %255 = vector.shape_cast %254 : vector<1x1x1x64x64xf32> to vector<64x64xf32>
    %cst_294 = arith.constant dense<0.000000e+00> : vector<56x64xf32>
    %256 = tpu.matmul %253, %255, %cst_294 {dimension_numbers = #tpu.dot_dimension_numbers<[1], [0], [0], [1], [0, 0, 1, 1], [], []>} : vector<56x64xf32>, vector<64x64xf32>, vector<56x64xf32> -> vector<56x64xf32>
    %257 = arith.addf %252, %256 : vector<56x64xf32>
    %258 = vector.extract_strided_slice %251 {offsets = [1, 0], sizes = [56, 64], strides = [1, 1]} : vector<80x64xf32> to vector<56x64xf32>
    %c4_295 = arith.constant 4 : index
    %c0_296 = arith.constant 0 : index
    %c1_297 = arith.constant 1 : index
    %c0_298 = arith.constant 0 : index
    %c0_299 = arith.constant 0 : index
    %259 = vector.load %arg5[%c4_295, %c0_296, %c1_297, %c0_298, %c0_299] : memref<8x3x3x64x64xf32, #tpu.memory_space<vmem>>, vector<1x1x1x64x64xf32>
    %260 = vector.shape_cast %259 : vector<1x1x1x64x64xf32> to vector<64x64xf32>
    %cst_300 = arith.constant dense<0.000000e+00> : vector<56x64xf32>
    %261 = tpu.matmul %258, %260, %cst_300 {dimension_numbers = #tpu.dot_dimension_numbers<[1], [0], [0], [1], [0, 0, 1, 1], [], []>} : vector<56x64xf32>, vector<64x64xf32>, vector<56x64xf32> -> vector<56x64xf32>
    %262 = arith.addf %257, %261 : vector<56x64xf32>
    %263 = vector.extract_strided_slice %251 {offsets = [2, 0], sizes = [56, 64], strides = [1, 1]} : vector<80x64xf32> to vector<56x64xf32>
    %c4_301 = arith.constant 4 : index
    %c0_302 = arith.constant 0 : index
    %c2_303 = arith.constant 2 : index
    %c0_304 = arith.constant 0 : index
    %c0_305 = arith.constant 0 : index
    %264 = vector.load %arg5[%c4_301, %c0_302, %c2_303, %c0_304, %c0_305] : memref<8x3x3x64x64xf32, #tpu.memory_space<vmem>>, vector<1x1x1x64x64xf32>
    %265 = vector.shape_cast %264 : vector<1x1x1x64x64xf32> to vector<64x64xf32>
    %cst_306 = arith.constant dense<0.000000e+00> : vector<56x64xf32>
    %266 = tpu.matmul %263, %265, %cst_306 {dimension_numbers = #tpu.dot_dimension_numbers<[1], [0], [0], [1], [0, 0, 1, 1], [], []>} : vector<56x64xf32>, vector<64x64xf32>, vector<56x64xf32> -> vector<56x64xf32>
    %267 = arith.addf %262, %266 : vector<56x64xf32>
    %268 = vector.extract_strided_slice %251 {offsets = [8, 0], sizes = [56, 64], strides = [1, 1]} : vector<80x64xf32> to vector<56x64xf32>
    %c4_307 = arith.constant 4 : index
    %c1_308 = arith.constant 1 : index
    %c0_309 = arith.constant 0 : index
    %c0_310 = arith.constant 0 : index
    %c0_311 = arith.constant 0 : index
    %269 = vector.load %arg5[%c4_307, %c1_308, %c0_309, %c0_310, %c0_311] : memref<8x3x3x64x64xf32, #tpu.memory_space<vmem>>, vector<1x1x1x64x64xf32>
    %270 = vector.shape_cast %269 : vector<1x1x1x64x64xf32> to vector<64x64xf32>
    %cst_312 = arith.constant dense<0.000000e+00> : vector<56x64xf32>
    %271 = tpu.matmul %268, %270, %cst_312 {dimension_numbers = #tpu.dot_dimension_numbers<[1], [0], [0], [1], [0, 0, 1, 1], [], []>} : vector<56x64xf32>, vector<64x64xf32>, vector<56x64xf32> -> vector<56x64xf32>
    %272 = arith.addf %267, %271 : vector<56x64xf32>
    %273 = vector.extract_strided_slice %251 {offsets = [9, 0], sizes = [56, 64], strides = [1, 1]} : vector<80x64xf32> to vector<56x64xf32>
    %c4_313 = arith.constant 4 : index
    %c1_314 = arith.constant 1 : index
    %c1_315 = arith.constant 1 : index
    %c0_316 = arith.constant 0 : index
    %c0_317 = arith.constant 0 : index
    %274 = vector.load %arg5[%c4_313, %c1_314, %c1_315, %c0_316, %c0_317] : memref<8x3x3x64x64xf32, #tpu.memory_space<vmem>>, vector<1x1x1x64x64xf32>
    %275 = vector.shape_cast %274 : vector<1x1x1x64x64xf32> to vector<64x64xf32>
    %cst_318 = arith.constant dense<0.000000e+00> : vector<56x64xf32>
    %276 = tpu.matmul %273, %275, %cst_318 {dimension_numbers = #tpu.dot_dimension_numbers<[1], [0], [0], [1], [0, 0, 1, 1], [], []>} : vector<56x64xf32>, vector<64x64xf32>, vector<56x64xf32> -> vector<56x64xf32>
    %277 = arith.addf %272, %276 : vector<56x64xf32>
    %278 = vector.extract_strided_slice %251 {offsets = [10, 0], sizes = [56, 64], strides = [1, 1]} : vector<80x64xf32> to vector<56x64xf32>
    %c4_319 = arith.constant 4 : index
    %c1_320 = arith.constant 1 : index
    %c2_321 = arith.constant 2 : index
    %c0_322 = arith.constant 0 : index
    %c0_323 = arith.constant 0 : index
    %279 = vector.load %arg5[%c4_319, %c1_320, %c2_321, %c0_322, %c0_323] : memref<8x3x3x64x64xf32, #tpu.memory_space<vmem>>, vector<1x1x1x64x64xf32>
    %280 = vector.shape_cast %279 : vector<1x1x1x64x64xf32> to vector<64x64xf32>
    %cst_324 = arith.constant dense<0.000000e+00> : vector<56x64xf32>
    %281 = tpu.matmul %278, %280, %cst_324 {dimension_numbers = #tpu.dot_dimension_numbers<[1], [0], [0], [1], [0, 0, 1, 1], [], []>} : vector<56x64xf32>, vector<64x64xf32>, vector<56x64xf32> -> vector<56x64xf32>
    %282 = arith.addf %277, %281 : vector<56x64xf32>
    %283 = vector.extract_strided_slice %251 {offsets = [16, 0], sizes = [56, 64], strides = [1, 1]} : vector<80x64xf32> to vector<56x64xf32>
    %c4_325 = arith.constant 4 : index
    %c2_326 = arith.constant 2 : index
    %c0_327 = arith.constant 0 : index
    %c0_328 = arith.constant 0 : index
    %c0_329 = arith.constant 0 : index
    %284 = vector.load %arg5[%c4_325, %c2_326, %c0_327, %c0_328, %c0_329] : memref<8x3x3x64x64xf32, #tpu.memory_space<vmem>>, vector<1x1x1x64x64xf32>
    %285 = vector.shape_cast %284 : vector<1x1x1x64x64xf32> to vector<64x64xf32>
    %cst_330 = arith.constant dense<0.000000e+00> : vector<56x64xf32>
    %286 = tpu.matmul %283, %285, %cst_330 {dimension_numbers = #tpu.dot_dimension_numbers<[1], [0], [0], [1], [0, 0, 1, 1], [], []>} : vector<56x64xf32>, vector<64x64xf32>, vector<56x64xf32> -> vector<56x64xf32>
    %287 = arith.addf %282, %286 : vector<56x64xf32>
    %288 = vector.extract_strided_slice %251 {offsets = [17, 0], sizes = [56, 64], strides = [1, 1]} : vector<80x64xf32> to vector<56x64xf32>
    %c4_331 = arith.constant 4 : index
    %c2_332 = arith.constant 2 : index
    %c1_333 = arith.constant 1 : index
    %c0_334 = arith.constant 0 : index
    %c0_335 = arith.constant 0 : index
    %289 = vector.load %arg5[%c4_331, %c2_332, %c1_333, %c0_334, %c0_335] : memref<8x3x3x64x64xf32, #tpu.memory_space<vmem>>, vector<1x1x1x64x64xf32>
    %290 = vector.shape_cast %289 : vector<1x1x1x64x64xf32> to vector<64x64xf32>
    %cst_336 = arith.constant dense<0.000000e+00> : vector<56x64xf32>
    %291 = tpu.matmul %288, %290, %cst_336 {dimension_numbers = #tpu.dot_dimension_numbers<[1], [0], [0], [1], [0, 0, 1, 1], [], []>} : vector<56x64xf32>, vector<64x64xf32>, vector<56x64xf32> -> vector<56x64xf32>
    %292 = arith.addf %287, %291 : vector<56x64xf32>
    %293 = vector.extract_strided_slice %251 {offsets = [18, 0], sizes = [56, 64], strides = [1, 1]} : vector<80x64xf32> to vector<56x64xf32>
    %c4_337 = arith.constant 4 : index
    %c2_338 = arith.constant 2 : index
    %c2_339 = arith.constant 2 : index
    %c0_340 = arith.constant 0 : index
    %c0_341 = arith.constant 0 : index
    %294 = vector.load %arg5[%c4_337, %c2_338, %c2_339, %c0_340, %c0_341] : memref<8x3x3x64x64xf32, #tpu.memory_space<vmem>>, vector<1x1x1x64x64xf32>
    %295 = vector.shape_cast %294 : vector<1x1x1x64x64xf32> to vector<64x64xf32>
    %cst_342 = arith.constant dense<0.000000e+00> : vector<56x64xf32>
    %296 = tpu.matmul %293, %295, %cst_342 {dimension_numbers = #tpu.dot_dimension_numbers<[1], [0], [0], [1], [0, 0, 1, 1], [], []>} : vector<56x64xf32>, vector<64x64xf32>, vector<56x64xf32> -> vector<56x64xf32>
    %297 = arith.addf %292, %296 : vector<56x64xf32>
    %298 = vector.shape_cast %297 : vector<56x64xf32> to vector<7x8x64xf32>
    %299 = vector.extract_strided_slice %298 {offsets = [0, 0, 0], sizes = [7, 7, 64], strides = [1, 1, 1]} : vector<7x8x64xf32> to vector<7x7x64xf32>
    %300 = vector.extract_strided_slice %250 {offsets = [0, 64], sizes = [80, 64], strides = [1, 1]} : vector<80x128xf32> to vector<80x64xf32>
    %cst_343 = arith.constant 0.000000e+00 : f32
    %301 = vector.broadcast %cst_343 : f32 to vector<56x64xf32>
    %302 = vector.extract_strided_slice %300 {offsets = [0, 0], sizes = [56, 64], strides = [1, 1]} : vector<80x64xf32> to vector<56x64xf32>
    %c5 = arith.constant 5 : index
    %c0_344 = arith.constant 0 : index
    %c0_345 = arith.constant 0 : index
    %c0_346 = arith.constant 0 : index
    %c0_347 = arith.constant 0 : index
    %303 = vector.load %arg5[%c5, %c0_344, %c0_345, %c0_346, %c0_347] : memref<8x3x3x64x64xf32, #tpu.memory_space<vmem>>, vector<1x1x1x64x64xf32>
    %304 = vector.shape_cast %303 : vector<1x1x1x64x64xf32> to vector<64x64xf32>
    %cst_348 = arith.constant dense<0.000000e+00> : vector<56x64xf32>
    %305 = tpu.matmul %302, %304, %cst_348 {dimension_numbers = #tpu.dot_dimension_numbers<[1], [0], [0], [1], [0, 0, 1, 1], [], []>} : vector<56x64xf32>, vector<64x64xf32>, vector<56x64xf32> -> vector<56x64xf32>
    %306 = arith.addf %301, %305 : vector<56x64xf32>
    %307 = vector.extract_strided_slice %300 {offsets = [1, 0], sizes = [56, 64], strides = [1, 1]} : vector<80x64xf32> to vector<56x64xf32>
    %c5_349 = arith.constant 5 : index
    %c0_350 = arith.constant 0 : index
    %c1_351 = arith.constant 1 : index
    %c0_352 = arith.constant 0 : index
    %c0_353 = arith.constant 0 : index
    %308 = vector.load %arg5[%c5_349, %c0_350, %c1_351, %c0_352, %c0_353] : memref<8x3x3x64x64xf32, #tpu.memory_space<vmem>>, vector<1x1x1x64x64xf32>
    %309 = vector.shape_cast %308 : vector<1x1x1x64x64xf32> to vector<64x64xf32>
    %cst_354 = arith.constant dense<0.000000e+00> : vector<56x64xf32>
    %310 = tpu.matmul %307, %309, %cst_354 {dimension_numbers = #tpu.dot_dimension_numbers<[1], [0], [0], [1], [0, 0, 1, 1], [], []>} : vector<56x64xf32>, vector<64x64xf32>, vector<56x64xf32> -> vector<56x64xf32>
    %311 = arith.addf %306, %310 : vector<56x64xf32>
    %312 = vector.extract_strided_slice %300 {offsets = [2, 0], sizes = [56, 64], strides = [1, 1]} : vector<80x64xf32> to vector<56x64xf32>
    %c5_355 = arith.constant 5 : index
    %c0_356 = arith.constant 0 : index
    %c2_357 = arith.constant 2 : index
    %c0_358 = arith.constant 0 : index
    %c0_359 = arith.constant 0 : index
    %313 = vector.load %arg5[%c5_355, %c0_356, %c2_357, %c0_358, %c0_359] : memref<8x3x3x64x64xf32, #tpu.memory_space<vmem>>, vector<1x1x1x64x64xf32>
    %314 = vector.shape_cast %313 : vector<1x1x1x64x64xf32> to vector<64x64xf32>
    %cst_360 = arith.constant dense<0.000000e+00> : vector<56x64xf32>
    %315 = tpu.matmul %312, %314, %cst_360 {dimension_numbers = #tpu.dot_dimension_numbers<[1], [0], [0], [1], [0, 0, 1, 1], [], []>} : vector<56x64xf32>, vector<64x64xf32>, vector<56x64xf32> -> vector<56x64xf32>
    %316 = arith.addf %311, %315 : vector<56x64xf32>
    %317 = vector.extract_strided_slice %300 {offsets = [8, 0], sizes = [56, 64], strides = [1, 1]} : vector<80x64xf32> to vector<56x64xf32>
    %c5_361 = arith.constant 5 : index
    %c1_362 = arith.constant 1 : index
    %c0_363 = arith.constant 0 : index
    %c0_364 = arith.constant 0 : index
    %c0_365 = arith.constant 0 : index
    %318 = vector.load %arg5[%c5_361, %c1_362, %c0_363, %c0_364, %c0_365] : memref<8x3x3x64x64xf32, #tpu.memory_space<vmem>>, vector<1x1x1x64x64xf32>
    %319 = vector.shape_cast %318 : vector<1x1x1x64x64xf32> to vector<64x64xf32>
    %cst_366 = arith.constant dense<0.000000e+00> : vector<56x64xf32>
    %320 = tpu.matmul %317, %319, %cst_366 {dimension_numbers = #tpu.dot_dimension_numbers<[1], [0], [0], [1], [0, 0, 1, 1], [], []>} : vector<56x64xf32>, vector<64x64xf32>, vector<56x64xf32> -> vector<56x64xf32>
    %321 = arith.addf %316, %320 : vector<56x64xf32>
    %322 = vector.extract_strided_slice %300 {offsets = [9, 0], sizes = [56, 64], strides = [1, 1]} : vector<80x64xf32> to vector<56x64xf32>
    %c5_367 = arith.constant 5 : index
    %c1_368 = arith.constant 1 : index
    %c1_369 = arith.constant 1 : index
    %c0_370 = arith.constant 0 : index
    %c0_371 = arith.constant 0 : index
    %323 = vector.load %arg5[%c5_367, %c1_368, %c1_369, %c0_370, %c0_371] : memref<8x3x3x64x64xf32, #tpu.memory_space<vmem>>, vector<1x1x1x64x64xf32>
    %324 = vector.shape_cast %323 : vector<1x1x1x64x64xf32> to vector<64x64xf32>
    %cst_372 = arith.constant dense<0.000000e+00> : vector<56x64xf32>
    %325 = tpu.matmul %322, %324, %cst_372 {dimension_numbers = #tpu.dot_dimension_numbers<[1], [0], [0], [1], [0, 0, 1, 1], [], []>} : vector<56x64xf32>, vector<64x64xf32>, vector<56x64xf32> -> vector<56x64xf32>
    %326 = arith.addf %321, %325 : vector<56x64xf32>
    %327 = vector.extract_strided_slice %300 {offsets = [10, 0], sizes = [56, 64], strides = [1, 1]} : vector<80x64xf32> to vector<56x64xf32>
    %c5_373 = arith.constant 5 : index
    %c1_374 = arith.constant 1 : index
    %c2_375 = arith.constant 2 : index
    %c0_376 = arith.constant 0 : index
    %c0_377 = arith.constant 0 : index
    %328 = vector.load %arg5[%c5_373, %c1_374, %c2_375, %c0_376, %c0_377] : memref<8x3x3x64x64xf32, #tpu.memory_space<vmem>>, vector<1x1x1x64x64xf32>
    %329 = vector.shape_cast %328 : vector<1x1x1x64x64xf32> to vector<64x64xf32>
    %cst_378 = arith.constant dense<0.000000e+00> : vector<56x64xf32>
    %330 = tpu.matmul %327, %329, %cst_378 {dimension_numbers = #tpu.dot_dimension_numbers<[1], [0], [0], [1], [0, 0, 1, 1], [], []>} : vector<56x64xf32>, vector<64x64xf32>, vector<56x64xf32> -> vector<56x64xf32>
    %331 = arith.addf %326, %330 : vector<56x64xf32>
    %332 = vector.extract_strided_slice %300 {offsets = [16, 0], sizes = [56, 64], strides = [1, 1]} : vector<80x64xf32> to vector<56x64xf32>
    %c5_379 = arith.constant 5 : index
    %c2_380 = arith.constant 2 : index
    %c0_381 = arith.constant 0 : index
    %c0_382 = arith.constant 0 : index
    %c0_383 = arith.constant 0 : index
    %333 = vector.load %arg5[%c5_379, %c2_380, %c0_381, %c0_382, %c0_383] : memref<8x3x3x64x64xf32, #tpu.memory_space<vmem>>, vector<1x1x1x64x64xf32>
    %334 = vector.shape_cast %333 : vector<1x1x1x64x64xf32> to vector<64x64xf32>
    %cst_384 = arith.constant dense<0.000000e+00> : vector<56x64xf32>
    %335 = tpu.matmul %332, %334, %cst_384 {dimension_numbers = #tpu.dot_dimension_numbers<[1], [0], [0], [1], [0, 0, 1, 1], [], []>} : vector<56x64xf32>, vector<64x64xf32>, vector<56x64xf32> -> vector<56x64xf32>
    %336 = arith.addf %331, %335 : vector<56x64xf32>
    %337 = vector.extract_strided_slice %300 {offsets = [17, 0], sizes = [56, 64], strides = [1, 1]} : vector<80x64xf32> to vector<56x64xf32>
    %c5_385 = arith.constant 5 : index
    %c2_386 = arith.constant 2 : index
    %c1_387 = arith.constant 1 : index
    %c0_388 = arith.constant 0 : index
    %c0_389 = arith.constant 0 : index
    %338 = vector.load %arg5[%c5_385, %c2_386, %c1_387, %c0_388, %c0_389] : memref<8x3x3x64x64xf32, #tpu.memory_space<vmem>>, vector<1x1x1x64x64xf32>
    %339 = vector.shape_cast %338 : vector<1x1x1x64x64xf32> to vector<64x64xf32>
    %cst_390 = arith.constant dense<0.000000e+00> : vector<56x64xf32>
    %340 = tpu.matmul %337, %339, %cst_390 {dimension_numbers = #tpu.dot_dimension_numbers<[1], [0], [0], [1], [0, 0, 1, 1], [], []>} : vector<56x64xf32>, vector<64x64xf32>, vector<56x64xf32> -> vector<56x64xf32>
    %341 = arith.addf %336, %340 : vector<56x64xf32>
    %342 = vector.extract_strided_slice %300 {offsets = [18, 0], sizes = [56, 64], strides = [1, 1]} : vector<80x64xf32> to vector<56x64xf32>
    %c5_391 = arith.constant 5 : index
    %c2_392 = arith.constant 2 : index
    %c2_393 = arith.constant 2 : index
    %c0_394 = arith.constant 0 : index
    %c0_395 = arith.constant 0 : index
    %343 = vector.load %arg5[%c5_391, %c2_392, %c2_393, %c0_394, %c0_395] : memref<8x3x3x64x64xf32, #tpu.memory_space<vmem>>, vector<1x1x1x64x64xf32>
    %344 = vector.shape_cast %343 : vector<1x1x1x64x64xf32> to vector<64x64xf32>
    %cst_396 = arith.constant dense<0.000000e+00> : vector<56x64xf32>
    %345 = tpu.matmul %342, %344, %cst_396 {dimension_numbers = #tpu.dot_dimension_numbers<[1], [0], [0], [1], [0, 0, 1, 1], [], []>} : vector<56x64xf32>, vector<64x64xf32>, vector<56x64xf32> -> vector<56x64xf32>
    %346 = arith.addf %341, %345 : vector<56x64xf32>
    %347 = vector.shape_cast %346 : vector<56x64xf32> to vector<7x8x64xf32>
    %348 = vector.extract_strided_slice %347 {offsets = [0, 0, 0], sizes = [7, 7, 64], strides = [1, 1, 1]} : vector<7x8x64xf32> to vector<7x7x64xf32>
    %349 = tpu.concatenate %299, %348 in 2 : vector<7x7x64xf32>, vector<7x7x64xf32> -> vector<7x7x128xf32>
    %c0_397 = arith.constant 0 : index
    %c2_398 = arith.constant 2 : index
    %c0_399 = arith.constant 0 : index
    %c0_400 = arith.constant 0 : index
    %c0_401 = arith.constant 0 : index
    %350 = vector.load %arg6[%c0_397, %c2_398, %c0_399, %c0_400, %c0_401] : memref<1x4x7x7x128xf32, #tpu.memory_space<vmem>>, vector<1x1x7x7x128xf32>
    %351 = vector.shape_cast %350 : vector<1x1x7x7x128xf32> to vector<7x7x128xf32>
    %352 = vector.shape_cast %349 : vector<7x7x128xf32> to vector<1x1x7x7x128xf32>
    tpu.vector_store %arg6[%c0_397, %c2_398, %c0_399, %c0_400, %c0_401], %352 {strides = array<i32>} : memref<1x4x7x7x128xf32, #tpu.memory_space<vmem>>, vector<1x1x7x7x128xf32>,
    %c0_402 = arith.constant 0 : index
    %c3_403 = arith.constant 3 : index
    %c0_404 = arith.constant 0 : index
    %c0_405 = arith.constant 0 : index
    %c0_406 = arith.constant 0 : index
    %353 = vector.load %arg2[%c0_402, %c3_403, %c0_404, %c0_405, %c0_406] : memref<1x4x7x7x128xf32, #tpu.memory_space<vmem>>, vector<1x1x7x7x128xf32>
    %354 = vector.shape_cast %353 : vector<1x1x7x7x128xf32> to vector<7x7x128xf32>
    %c3_407 = arith.constant 3 : index
    %c0_408 = arith.constant 0 : index
    %c0_409 = arith.constant 0 : index
    %c0_410 = arith.constant 0 : index
    %355 = vector.load %arg3[%c3_407, %c0_408, %c0_409, %c0_410] : memref<4x1x1x128xf32, #tpu.memory_space<vmem>>, vector<1x1x1x128xf32>
    %356 = vector.shape_cast %355 : vector<1x1x1x128xf32> to vector<1x1x128xf32>
    %357 = vector.broadcast %356 : vector<1x1x128xf32> to vector<7x7x128xf32>
    %358 = arith.mulf %354, %357 : vector<7x7x128xf32>
    %c3_411 = arith.constant 3 : index
    %c0_412 = arith.constant 0 : index
    %c0_413 = arith.constant 0 : index
    %c0_414 = arith.constant 0 : index
    %359 = vector.load %arg4[%c3_411, %c0_412, %c0_413, %c0_414] : memref<4x1x1x128xf32, #tpu.memory_space<vmem>>, vector<1x1x1x128xf32>
    %360 = vector.shape_cast %359 : vector<1x1x1x128xf32> to vector<1x1x128xf32>
    %361 = vector.broadcast %360 : vector<1x1x128xf32> to vector<7x7x128xf32>
    %362 = arith.addf %358, %361 : vector<7x7x128xf32>
    %cst_415 = arith.constant 0.000000e+00 : f32
    %363 = vector.broadcast %cst_415 : f32 to vector<7x7x128xf32>
    %364 = arith.maximumf %362, %363 : vector<7x7x128xf32>
    %c1_416 = arith.constant 1 : index
    %c1_417 = arith.constant 1 : index
    %c0_418 = arith.constant 0 : index
    %365 = vector.load %arg7[%c1_416, %c1_417, %c0_418] : memref<10x8x128xf32, #tpu.memory_space<vmem>>, vector<7x7x128xf32>
    tpu.vector_store %arg7[%c1_416, %c1_417, %c0_418], %364 {strides = array<i32>} : memref<10x8x128xf32, #tpu.memory_space<vmem>>, vector<7x7x128xf32>,
    %c0_419 = arith.constant 0 : index
    %c0_420 = arith.constant 0 : index
    %c0_421 = arith.constant 0 : index
    %366 = vector.load %arg7[%c0_419, %c0_420, %c0_421] : memref<10x8x128xf32, #tpu.memory_space<vmem>>, vector<10x8x128xf32>
    %367 = vector.shape_cast %366 : vector<10x8x128xf32> to vector<80x128xf32>
    %368 = vector.extract_strided_slice %367 {offsets = [0, 0], sizes = [80, 64], strides = [1, 1]} : vector<80x128xf32> to vector<80x64xf32>
    %cst_422 = arith.constant 0.000000e+00 : f32
    %369 = vector.broadcast %cst_422 : f32 to vector<56x64xf32>
    %370 = vector.extract_strided_slice %368 {offsets = [0, 0], sizes = [56, 64], strides = [1, 1]} : vector<80x64xf32> to vector<56x64xf32>
    %c6 = arith.constant 6 : index
    %c0_423 = arith.constant 0 : index
    %c0_424 = arith.constant 0 : index
    %c0_425 = arith.constant 0 : index
    %c0_426 = arith.constant 0 : index
    %371 = vector.load %arg5[%c6, %c0_423, %c0_424, %c0_425, %c0_426] : memref<8x3x3x64x64xf32, #tpu.memory_space<vmem>>, vector<1x1x1x64x64xf32>
    %372 = vector.shape_cast %371 : vector<1x1x1x64x64xf32> to vector<64x64xf32>
    %cst_427 = arith.constant dense<0.000000e+00> : vector<56x64xf32>
    %373 = tpu.matmul %370, %372, %cst_427 {dimension_numbers = #tpu.dot_dimension_numbers<[1], [0], [0], [1], [0, 0, 1, 1], [], []>} : vector<56x64xf32>, vector<64x64xf32>, vector<56x64xf32> -> vector<56x64xf32>
    %374 = arith.addf %369, %373 : vector<56x64xf32>
    %375 = vector.extract_strided_slice %368 {offsets = [1, 0], sizes = [56, 64], strides = [1, 1]} : vector<80x64xf32> to vector<56x64xf32>
    %c6_428 = arith.constant 6 : index
    %c0_429 = arith.constant 0 : index
    %c1_430 = arith.constant 1 : index
    %c0_431 = arith.constant 0 : index
    %c0_432 = arith.constant 0 : index
    %376 = vector.load %arg5[%c6_428, %c0_429, %c1_430, %c0_431, %c0_432] : memref<8x3x3x64x64xf32, #tpu.memory_space<vmem>>, vector<1x1x1x64x64xf32>
    %377 = vector.shape_cast %376 : vector<1x1x1x64x64xf32> to vector<64x64xf32>
    %cst_433 = arith.constant dense<0.000000e+00> : vector<56x64xf32>
    %378 = tpu.matmul %375, %377, %cst_433 {dimension_numbers = #tpu.dot_dimension_numbers<[1], [0], [0], [1], [0, 0, 1, 1], [], []>} : vector<56x64xf32>, vector<64x64xf32>, vector<56x64xf32> -> vector<56x64xf32>
    %379 = arith.addf %374, %378 : vector<56x64xf32>
    %380 = vector.extract_strided_slice %368 {offsets = [2, 0], sizes = [56, 64], strides = [1, 1]} : vector<80x64xf32> to vector<56x64xf32>
    %c6_434 = arith.constant 6 : index
    %c0_435 = arith.constant 0 : index
    %c2_436 = arith.constant 2 : index
    %c0_437 = arith.constant 0 : index
    %c0_438 = arith.constant 0 : index
    %381 = vector.load %arg5[%c6_434, %c0_435, %c2_436, %c0_437, %c0_438] : memref<8x3x3x64x64xf32, #tpu.memory_space<vmem>>, vector<1x1x1x64x64xf32>
    %382 = vector.shape_cast %381 : vector<1x1x1x64x64xf32> to vector<64x64xf32>
    %cst_439 = arith.constant dense<0.000000e+00> : vector<56x64xf32>
    %383 = tpu.matmul %380, %382, %cst_439 {dimension_numbers = #tpu.dot_dimension_numbers<[1], [0], [0], [1], [0, 0, 1, 1], [], []>} : vector<56x64xf32>, vector<64x64xf32>, vector<56x64xf32> -> vector<56x64xf32>
    %384 = arith.addf %379, %383 : vector<56x64xf32>
    %385 = vector.extract_strided_slice %368 {offsets = [8, 0], sizes = [56, 64], strides = [1, 1]} : vector<80x64xf32> to vector<56x64xf32>
    %c6_440 = arith.constant 6 : index
    %c1_441 = arith.constant 1 : index
    %c0_442 = arith.constant 0 : index
    %c0_443 = arith.constant 0 : index
    %c0_444 = arith.constant 0 : index
    %386 = vector.load %arg5[%c6_440, %c1_441, %c0_442, %c0_443, %c0_444] : memref<8x3x3x64x64xf32, #tpu.memory_space<vmem>>, vector<1x1x1x64x64xf32>
    %387 = vector.shape_cast %386 : vector<1x1x1x64x64xf32> to vector<64x64xf32>
    %cst_445 = arith.constant dense<0.000000e+00> : vector<56x64xf32>
    %388 = tpu.matmul %385, %387, %cst_445 {dimension_numbers = #tpu.dot_dimension_numbers<[1], [0], [0], [1], [0, 0, 1, 1], [], []>} : vector<56x64xf32>, vector<64x64xf32>, vector<56x64xf32> -> vector<56x64xf32>
    %389 = arith.addf %384, %388 : vector<56x64xf32>
    %390 = vector.extract_strided_slice %368 {offsets = [9, 0], sizes = [56, 64], strides = [1, 1]} : vector<80x64xf32> to vector<56x64xf32>
    %c6_446 = arith.constant 6 : index
    %c1_447 = arith.constant 1 : index
    %c1_448 = arith.constant 1 : index
    %c0_449 = arith.constant 0 : index
    %c0_450 = arith.constant 0 : index
    %391 = vector.load %arg5[%c6_446, %c1_447, %c1_448, %c0_449, %c0_450] : memref<8x3x3x64x64xf32, #tpu.memory_space<vmem>>, vector<1x1x1x64x64xf32>
    %392 = vector.shape_cast %391 : vector<1x1x1x64x64xf32> to vector<64x64xf32>
    %cst_451 = arith.constant dense<0.000000e+00> : vector<56x64xf32>
    %393 = tpu.matmul %390, %392, %cst_451 {dimension_numbers = #tpu.dot_dimension_numbers<[1], [0], [0], [1], [0, 0, 1, 1], [], []>} : vector<56x64xf32>, vector<64x64xf32>, vector<56x64xf32> -> vector<56x64xf32>
    %394 = arith.addf %389, %393 : vector<56x64xf32>
    %395 = vector.extract_strided_slice %368 {offsets = [10, 0], sizes = [56, 64], strides = [1, 1]} : vector<80x64xf32> to vector<56x64xf32>
    %c6_452 = arith.constant 6 : index
    %c1_453 = arith.constant 1 : index
    %c2_454 = arith.constant 2 : index
    %c0_455 = arith.constant 0 : index
    %c0_456 = arith.constant 0 : index
    %396 = vector.load %arg5[%c6_452, %c1_453, %c2_454, %c0_455, %c0_456] : memref<8x3x3x64x64xf32, #tpu.memory_space<vmem>>, vector<1x1x1x64x64xf32>
    %397 = vector.shape_cast %396 : vector<1x1x1x64x64xf32> to vector<64x64xf32>
    %cst_457 = arith.constant dense<0.000000e+00> : vector<56x64xf32>
    %398 = tpu.matmul %395, %397, %cst_457 {dimension_numbers = #tpu.dot_dimension_numbers<[1], [0], [0], [1], [0, 0, 1, 1], [], []>} : vector<56x64xf32>, vector<64x64xf32>, vector<56x64xf32> -> vector<56x64xf32>
    %399 = arith.addf %394, %398 : vector<56x64xf32>
    %400 = vector.extract_strided_slice %368 {offsets = [16, 0], sizes = [56, 64], strides = [1, 1]} : vector<80x64xf32> to vector<56x64xf32>
    %c6_458 = arith.constant 6 : index
    %c2_459 = arith.constant 2 : index
    %c0_460 = arith.constant 0 : index
    %c0_461 = arith.constant 0 : index
    %c0_462 = arith.constant 0 : index
    %401 = vector.load %arg5[%c6_458, %c2_459, %c0_460, %c0_461, %c0_462] : memref<8x3x3x64x64xf32, #tpu.memory_space<vmem>>, vector<1x1x1x64x64xf32>
    %402 = vector.shape_cast %401 : vector<1x1x1x64x64xf32> to vector<64x64xf32>
    %cst_463 = arith.constant dense<0.000000e+00> : vector<56x64xf32>
    %403 = tpu.matmul %400, %402, %cst_463 {dimension_numbers = #tpu.dot_dimension_numbers<[1], [0], [0], [1], [0, 0, 1, 1], [], []>} : vector<56x64xf32>, vector<64x64xf32>, vector<56x64xf32> -> vector<56x64xf32>
    %404 = arith.addf %399, %403 : vector<56x64xf32>
    %405 = vector.extract_strided_slice %368 {offsets = [17, 0], sizes = [56, 64], strides = [1, 1]} : vector<80x64xf32> to vector<56x64xf32>
    %c6_464 = arith.constant 6 : index
    %c2_465 = arith.constant 2 : index
    %c1_466 = arith.constant 1 : index
    %c0_467 = arith.constant 0 : index
    %c0_468 = arith.constant 0 : index
    %406 = vector.load %arg5[%c6_464, %c2_465, %c1_466, %c0_467, %c0_468] : memref<8x3x3x64x64xf32, #tpu.memory_space<vmem>>, vector<1x1x1x64x64xf32>
    %407 = vector.shape_cast %406 : vector<1x1x1x64x64xf32> to vector<64x64xf32>
    %cst_469 = arith.constant dense<0.000000e+00> : vector<56x64xf32>
    %408 = tpu.matmul %405, %407, %cst_469 {dimension_numbers = #tpu.dot_dimension_numbers<[1], [0], [0], [1], [0, 0, 1, 1], [], []>} : vector<56x64xf32>, vector<64x64xf32>, vector<56x64xf32> -> vector<56x64xf32>
    %409 = arith.addf %404, %408 : vector<56x64xf32>
    %410 = vector.extract_strided_slice %368 {offsets = [18, 0], sizes = [56, 64], strides = [1, 1]} : vector<80x64xf32> to vector<56x64xf32>
    %c6_470 = arith.constant 6 : index
    %c2_471 = arith.constant 2 : index
    %c2_472 = arith.constant 2 : index
    %c0_473 = arith.constant 0 : index
    %c0_474 = arith.constant 0 : index
    %411 = vector.load %arg5[%c6_470, %c2_471, %c2_472, %c0_473, %c0_474] : memref<8x3x3x64x64xf32, #tpu.memory_space<vmem>>, vector<1x1x1x64x64xf32>
    %412 = vector.shape_cast %411 : vector<1x1x1x64x64xf32> to vector<64x64xf32>
    %cst_475 = arith.constant dense<0.000000e+00> : vector<56x64xf32>
    %413 = tpu.matmul %410, %412, %cst_475 {dimension_numbers = #tpu.dot_dimension_numbers<[1], [0], [0], [1], [0, 0, 1, 1], [], []>} : vector<56x64xf32>, vector<64x64xf32>, vector<56x64xf32> -> vector<56x64xf32>
    %414 = arith.addf %409, %413 : vector<56x64xf32>
    %415 = vector.shape_cast %414 : vector<56x64xf32> to vector<7x8x64xf32>
    %416 = vector.extract_strided_slice %415 {offsets = [0, 0, 0], sizes = [7, 7, 64], strides = [1, 1, 1]} : vector<7x8x64xf32> to vector<7x7x64xf32>
    %417 = vector.extract_strided_slice %367 {offsets = [0, 64], sizes = [80, 64], strides = [1, 1]} : vector<80x128xf32> to vector<80x64xf32>
    %cst_476 = arith.constant 0.000000e+00 : f32
    %418 = vector.broadcast %cst_476 : f32 to vector<56x64xf32>
    %419 = vector.extract_strided_slice %417 {offsets = [0, 0], sizes = [56, 64], strides = [1, 1]} : vector<80x64xf32> to vector<56x64xf32>
    %c7 = arith.constant 7 : index
    %c0_477 = arith.constant 0 : index
    %c0_478 = arith.constant 0 : index
    %c0_479 = arith.constant 0 : index
    %c0_480 = arith.constant 0 : index
    %420 = vector.load %arg5[%c7, %c0_477, %c0_478, %c0_479, %c0_480] : memref<8x3x3x64x64xf32, #tpu.memory_space<vmem>>, vector<1x1x1x64x64xf32>
    %421 = vector.shape_cast %420 : vector<1x1x1x64x64xf32> to vector<64x64xf32>
    %cst_481 = arith.constant dense<0.000000e+00> : vector<56x64xf32>
    %422 = tpu.matmul %419, %421, %cst_481 {dimension_numbers = #tpu.dot_dimension_numbers<[1], [0], [0], [1], [0, 0, 1, 1], [], []>} : vector<56x64xf32>, vector<64x64xf32>, vector<56x64xf32> -> vector<56x64xf32>
    %423 = arith.addf %418, %422 : vector<56x64xf32>
    %424 = vector.extract_strided_slice %417 {offsets = [1, 0], sizes = [56, 64], strides = [1, 1]} : vector<80x64xf32> to vector<56x64xf32>
    %c7_482 = arith.constant 7 : index
    %c0_483 = arith.constant 0 : index
    %c1_484 = arith.constant 1 : index
    %c0_485 = arith.constant 0 : index
    %c0_486 = arith.constant 0 : index
    %425 = vector.load %arg5[%c7_482, %c0_483, %c1_484, %c0_485, %c0_486] : memref<8x3x3x64x64xf32, #tpu.memory_space<vmem>>, vector<1x1x1x64x64xf32>
    %426 = vector.shape_cast %425 : vector<1x1x1x64x64xf32> to vector<64x64xf32>
    %cst_487 = arith.constant dense<0.000000e+00> : vector<56x64xf32>
    %427 = tpu.matmul %424, %426, %cst_487 {dimension_numbers = #tpu.dot_dimension_numbers<[1], [0], [0], [1], [0, 0, 1, 1], [], []>} : vector<56x64xf32>, vector<64x64xf32>, vector<56x64xf32> -> vector<56x64xf32>
    %428 = arith.addf %423, %427 : vector<56x64xf32>
    %429 = vector.extract_strided_slice %417 {offsets = [2, 0], sizes = [56, 64], strides = [1, 1]} : vector<80x64xf32> to vector<56x64xf32>
    %c7_488 = arith.constant 7 : index
    %c0_489 = arith.constant 0 : index
    %c2_490 = arith.constant 2 : index
    %c0_491 = arith.constant 0 : index
    %c0_492 = arith.constant 0 : index
    %430 = vector.load %arg5[%c7_488, %c0_489, %c2_490, %c0_491, %c0_492] : memref<8x3x3x64x64xf32, #tpu.memory_space<vmem>>, vector<1x1x1x64x64xf32>
    %431 = vector.shape_cast %430 : vector<1x1x1x64x64xf32> to vector<64x64xf32>
    %cst_493 = arith.constant dense<0.000000e+00> : vector<56x64xf32>
    %432 = tpu.matmul %429, %431, %cst_493 {dimension_numbers = #tpu.dot_dimension_numbers<[1], [0], [0], [1], [0, 0, 1, 1], [], []>} : vector<56x64xf32>, vector<64x64xf32>, vector<56x64xf32> -> vector<56x64xf32>
    %433 = arith.addf %428, %432 : vector<56x64xf32>
    %434 = vector.extract_strided_slice %417 {offsets = [8, 0], sizes = [56, 64], strides = [1, 1]} : vector<80x64xf32> to vector<56x64xf32>
    %c7_494 = arith.constant 7 : index
    %c1_495 = arith.constant 1 : index
    %c0_496 = arith.constant 0 : index
    %c0_497 = arith.constant 0 : index
    %c0_498 = arith.constant 0 : index
    %435 = vector.load %arg5[%c7_494, %c1_495, %c0_496, %c0_497, %c0_498] : memref<8x3x3x64x64xf32, #tpu.memory_space<vmem>>, vector<1x1x1x64x64xf32>
    %436 = vector.shape_cast %435 : vector<1x1x1x64x64xf32> to vector<64x64xf32>
    %cst_499 = arith.constant dense<0.000000e+00> : vector<56x64xf32>
    %437 = tpu.matmul %434, %436, %cst_499 {dimension_numbers = #tpu.dot_dimension_numbers<[1], [0], [0], [1], [0, 0, 1, 1], [], []>} : vector<56x64xf32>, vector<64x64xf32>, vector<56x64xf32> -> vector<56x64xf32>
    %438 = arith.addf %433, %437 : vector<56x64xf32>
    %439 = vector.extract_strided_slice %417 {offsets = [9, 0], sizes = [56, 64], strides = [1, 1]} : vector<80x64xf32> to vector<56x64xf32>
    %c7_500 = arith.constant 7 : index
    %c1_501 = arith.constant 1 : index
    %c1_502 = arith.constant 1 : index
    %c0_503 = arith.constant 0 : index
    %c0_504 = arith.constant 0 : index
    %440 = vector.load %arg5[%c7_500, %c1_501, %c1_502, %c0_503, %c0_504] : memref<8x3x3x64x64xf32, #tpu.memory_space<vmem>>, vector<1x1x1x64x64xf32>
    %441 = vector.shape_cast %440 : vector<1x1x1x64x64xf32> to vector<64x64xf32>
    %cst_505 = arith.constant dense<0.000000e+00> : vector<56x64xf32>
    %442 = tpu.matmul %439, %441, %cst_505 {dimension_numbers = #tpu.dot_dimension_numbers<[1], [0], [0], [1], [0, 0, 1, 1], [], []>} : vector<56x64xf32>, vector<64x64xf32>, vector<56x64xf32> -> vector<56x64xf32>
    %443 = arith.addf %438, %442 : vector<56x64xf32>
    %444 = vector.extract_strided_slice %417 {offsets = [10, 0], sizes = [56, 64], strides = [1, 1]} : vector<80x64xf32> to vector<56x64xf32>
    %c7_506 = arith.constant 7 : index
    %c1_507 = arith.constant 1 : index
    %c2_508 = arith.constant 2 : index
    %c0_509 = arith.constant 0 : index
    %c0_510 = arith.constant 0 : index
    %445 = vector.load %arg5[%c7_506, %c1_507, %c2_508, %c0_509, %c0_510] : memref<8x3x3x64x64xf32, #tpu.memory_space<vmem>>, vector<1x1x1x64x64xf32>
    %446 = vector.shape_cast %445 : vector<1x1x1x64x64xf32> to vector<64x64xf32>
    %cst_511 = arith.constant dense<0.000000e+00> : vector<56x64xf32>
    %447 = tpu.matmul %444, %446, %cst_511 {dimension_numbers = #tpu.dot_dimension_numbers<[1], [0], [0], [1], [0, 0, 1, 1], [], []>} : vector<56x64xf32>, vector<64x64xf32>, vector<56x64xf32> -> vector<56x64xf32>
    %448 = arith.addf %443, %447 : vector<56x64xf32>
    %449 = vector.extract_strided_slice %417 {offsets = [16, 0], sizes = [56, 64], strides = [1, 1]} : vector<80x64xf32> to vector<56x64xf32>
    %c7_512 = arith.constant 7 : index
    %c2_513 = arith.constant 2 : index
    %c0_514 = arith.constant 0 : index
    %c0_515 = arith.constant 0 : index
    %c0_516 = arith.constant 0 : index
    %450 = vector.load %arg5[%c7_512, %c2_513, %c0_514, %c0_515, %c0_516] : memref<8x3x3x64x64xf32, #tpu.memory_space<vmem>>, vector<1x1x1x64x64xf32>
    %451 = vector.shape_cast %450 : vector<1x1x1x64x64xf32> to vector<64x64xf32>
    %cst_517 = arith.constant dense<0.000000e+00> : vector<56x64xf32>
    %452 = tpu.matmul %449, %451, %cst_517 {dimension_numbers = #tpu.dot_dimension_numbers<[1], [0], [0], [1], [0, 0, 1, 1], [], []>} : vector<56x64xf32>, vector<64x64xf32>, vector<56x64xf32> -> vector<56x64xf32>
    %453 = arith.addf %448, %452 : vector<56x64xf32>
    %454 = vector.extract_strided_slice %417 {offsets = [17, 0], sizes = [56, 64], strides = [1, 1]} : vector<80x64xf32> to vector<56x64xf32>
    %c7_518 = arith.constant 7 : index
    %c2_519 = arith.constant 2 : index
    %c1_520 = arith.constant 1 : index
    %c0_521 = arith.constant 0 : index
    %c0_522 = arith.constant 0 : index
    %455 = vector.load %arg5[%c7_518, %c2_519, %c1_520, %c0_521, %c0_522] : memref<8x3x3x64x64xf32, #tpu.memory_space<vmem>>, vector<1x1x1x64x64xf32>
    %456 = vector.shape_cast %455 : vector<1x1x1x64x64xf32> to vector<64x64xf32>
    %cst_523 = arith.constant dense<0.000000e+00> : vector<56x64xf32>
    %457 = tpu.matmul %454, %456, %cst_523 {dimension_numbers = #tpu.dot_dimension_numbers<[1], [0], [0], [1], [0, 0, 1, 1], [], []>} : vector<56x64xf32>, vector<64x64xf32>, vector<56x64xf32> -> vector<56x64xf32>
    %458 = arith.addf %453, %457 : vector<56x64xf32>
    %459 = vector.extract_strided_slice %417 {offsets = [18, 0], sizes = [56, 64], strides = [1, 1]} : vector<80x64xf32> to vector<56x64xf32>
    %c7_524 = arith.constant 7 : index
    %c2_525 = arith.constant 2 : index
    %c2_526 = arith.constant 2 : index
    %c0_527 = arith.constant 0 : index
    %c0_528 = arith.constant 0 : index
    %460 = vector.load %arg5[%c7_524, %c2_525, %c2_526, %c0_527, %c0_528] : memref<8x3x3x64x64xf32, #tpu.memory_space<vmem>>, vector<1x1x1x64x64xf32>
    %461 = vector.shape_cast %460 : vector<1x1x1x64x64xf32> to vector<64x64xf32>
    %cst_529 = arith.constant dense<0.000000e+00> : vector<56x64xf32>
    %462 = tpu.matmul %459, %461, %cst_529 {dimension_numbers = #tpu.dot_dimension_numbers<[1], [0], [0], [1], [0, 0, 1, 1], [], []>} : vector<56x64xf32>, vector<64x64xf32>, vector<56x64xf32> -> vector<56x64xf32>
    %463 = arith.addf %458, %462 : vector<56x64xf32>
    %464 = vector.shape_cast %463 : vector<56x64xf32> to vector<7x8x64xf32>
    %465 = vector.extract_strided_slice %464 {offsets = [0, 0, 0], sizes = [7, 7, 64], strides = [1, 1, 1]} : vector<7x8x64xf32> to vector<7x7x64xf32>
    %466 = tpu.concatenate %416, %465 in 2 : vector<7x7x64xf32>, vector<7x7x64xf32> -> vector<7x7x128xf32>
    %c0_530 = arith.constant 0 : index
    %c3_531 = arith.constant 3 : index
    %c0_532 = arith.constant 0 : index
    %c0_533 = arith.constant 0 : index
    %c0_534 = arith.constant 0 : index
    %467 = vector.load %arg6[%c0_530, %c3_531, %c0_532, %c0_533, %c0_534] : memref<1x4x7x7x128xf32, #tpu.memory_space<vmem>>, vector<1x1x7x7x128xf32>
    %468 = vector.shape_cast %467 : vector<1x1x7x7x128xf32> to vector<7x7x128xf32>
    %469 = vector.shape_cast %466 : vector<7x7x128xf32> to vector<1x1x7x7x128xf32>
    tpu.vector_store %arg6[%c0_530, %c3_531, %c0_532, %c0_533, %c0_534], %469 {strides = array<i32>} : memref<1x4x7x7x128xf32, #tpu.memory_space<vmem>>, vector<1x1x7x7x128xf32>,
    return
  }
  func.func @transform_0(%arg0: i32, %arg1: i32) -> (i32, i32, i32, i32, i32) {
    %c0_i32 = arith.constant 0 : i32
    %c0_i32_0 = arith.constant 0 : i32
    %c0_i32_1 = arith.constant 0 : i32
    %c0_i32_2 = arith.constant 0 : i32
    return %arg0, %arg1, %c0_i32, %c0_i32_0, %c0_i32_1 : i32, i32, i32, i32, i32
  }
  func.func @transform_1(%arg0: i32, %arg1: i32) -> (i32, i32, i32, i32) {
    %c0_i32 = arith.constant 0 : i32
    %c0_i32_0 = arith.constant 0 : i32
    %c0_i32_1 = arith.constant 0 : i32
    %c0_i32_2 = arith.constant 0 : i32
    return %arg1, %c0_i32, %c0_i32_0, %c0_i32_1 : i32, i32, i32, i32
  }
  func.func @transform_2(%arg0: i32, %arg1: i32) -> (i32, i32, i32, i32) {
    %c0_i32 = arith.constant 0 : i32
    %c0_i32_0 = arith.constant 0 : i32
    %c0_i32_1 = arith.constant 0 : i32
    %c0_i32_2 = arith.constant 0 : i32
    return %arg1, %c0_i32, %c0_i32_0, %c0_i32_1 : i32, i32, i32, i32
  }
  func.func @transform_3(%arg0: i32, %arg1: i32) -> (i32, i32, i32, i32, i32) {
    %c0_i32 = arith.constant 0 : i32
    %c0_i32_0 = arith.constant 0 : i32
    %c0_i32_1 = arith.constant 0 : i32
    %c0_i32_2 = arith.constant 0 : i32
    %c0_i32_3 = arith.constant 0 : i32
    return %arg1, %c0_i32, %c0_i32_0, %c0_i32_1, %c0_i32_2 : i32, i32, i32, i32, i32
  }
  func.func @transform_4(%arg0: i32, %arg1: i32) -> (i32, i32, i32, i32, i32) {
    %c0_i32 = arith.constant 0 : i32
    %c0_i32_0 = arith.constant 0 : i32
    %c0_i32_1 = arith.constant 0 : i32
    %c0_i32_2 = arith.constant 0 : i32
    return %arg0, %arg1, %c0_i32, %c0_i32_0, %c0_i32_1 : i32, i32, i32, i32, i32
  }
}

</mosaic_0001>

<llo_original>
// kernel: bn_relu_grouped_conv.1
$region0: #{bn_relu_grouped_conv.1}
  #allocation0 [shape = 'u32[]', space=smem, size = 0x4, offset = 0x4, fixed_abs, tag = 'smem constant byte address 0x4 - core index']
  #allocation1 [shape = 'u32[144,128]{1,0:T(1,128)}', space=vmem, size = 0x12000, scoped, tag = 'internal scratch']
  #allocation2 [shape = 'f32[10,8,128]{2,1,0:T(8,128)}', space=vmem, size = 0xa000, scoped, tag = 'scratch operand']
  %s0 = inlined_call_operand.vmem [shape: f32[1,16,7,7,128], index: 0, kind: input, shape index: {}]
  %s1 = inlined_call_operand.vmem [shape: f32[16,1,1,128], index: 1, kind: input, shape index: {}]
  %s2 = inlined_call_operand.vmem [shape: f32[16,1,1,128], index: 2, kind: input, shape index: {}]
  %s3 = inlined_call_operand.vmem [shape: f32[32,3,3,64,64], index: 3, kind: input, shape index: {}]
  %s4 = inlined_call_operand.vmem [shape: f32[1,16,7,7,128], index: 4, kind: output, shape index: {}]
  %s5 = sld [smem:[#allocation0]]
  $region49: #{bn_relu_grouped_conv.1} parent=0
    _
  %s7 = ssub.s32 1, %s5
  %s8 = scalar_select 0, %s7, %s5
  loop: start=0, step=1, limit=6
  $region2: #{bn_relu_grouped_conv.1} parent=0 // loop_pre_header
    _
  $region3: #{bn_relu_grouped_conv.1} parent=0 // loop_header
    %s10 = sphi 0, %s14
    %p11 = scmp.ge.s32.totalorder %s10, 6
    %s17 = sphi 0, %s29
    %s18 = sphi 0, %s25
    %s19 = sphi 0, %s17
    %s20 = sphi 0, %s18
    %s21 = sphi 0, %s19
    %s22 = sphi 0, %s20
    %s34 = sphi 0, %s36
    %s37 = sphi 0, %s34
    %s38 = sphi 0, %s37
    %s54 = sphi 0, %s38
    %s60 = sphi 0, %s62
    %s63 = sphi 0, %s60
    %s64 = sphi 0, %s63
    %s80 = sphi 0, %s64
    %s86 = sphi 0, %s88
    %s89 = sphi 0, %s86
    %s90 = sphi 0, %s89
    %s106 = sphi 0, %s90
    %s112 = sphi 0, %s114
    %s115 = sphi 0, %s112
    %s116 = sphi 0, %s115
    %s132 = sphi 0, %s116
    %s140 = sphi 0, %s142
    %s143 = sphi 0, %s140
    %s144 = sphi 0, %s143
    %s160 = sphi 0, %s144
  $region4: #{bn_relu_grouped_conv.1} parent=0 // loop_header_branch
    %13 = sbr.rel (%p11) target = $region8
  $region5: #{bn_relu_grouped_conv.1} parent=0 // loop_body
    %s15 = ssub.s32 %s10, 1
    %s16 = ssub.s32 %s10, 2
    %s23 = sadd.s32 1, %s18
    %p24 = scmp.ge.s32.totalorder %s23, 4
    %s25 = scalar_select %p24, 0, %s23
    %s26 = sadd.s32 1, %s17
    %s27 = scalar_select %p24, %s26, %s17
    %p28 = scmp.ge.s32.totalorder %s27, 1
    %s29 = scalar_select %p28, 0, %s27
    %s30 = ssub.s32 %s17, %s29
    %s31 = ssub.s32 %s18, %s25
    %s32 = sor.u32 %s30, %s31
    %p33 = scmp.eq.s32.totalorder %s32, 0
    %s35 = sadd.s32 %s34, 1
    %s36 = scalar_select %p33, %s34, %s35
    %p39 = pneg %p33
    %p40 = scmp.eq.s32.totalorder %s10, 3
    %p41 = por %p39, %p40
    %p42 = scmp.ne.s32.totalorder %s34, %s37
    %p43 = scmp.eq.s32.totalorder %s10, 0
    %p44 = por %p42, %p43
    %p45 = scmp.ne.s32.totalorder %s34, %s37
    %p46 = scmp.eq.s32.totalorder %s15, 3
    %p47 = por %p45, %p46
    %p48 = scmp.ne.s32.totalorder %s37, %s38
    %p49 = scmp.eq.s32.totalorder %s15, 0
    %p50 = por %p48, %p49
    %p51 = scmp.ne.s32.totalorder %s37, %s38
    %p52 = scmp.eq.s32.totalorder %s16, 3
    %p53 = por %p51, %p52
    %p55 = scmp.ne.s32.totalorder %s38, %s54
    %p56 = scmp.eq.s32.totalorder %s16, 0
    %p57 = por %p55, %p56
    %s58 = ssub.s32 %s18, %s25
    %p59 = scmp.eq.s32.totalorder %s58, 0
    %s61 = sadd.s32 %s60, 1
    %s62 = scalar_select %p59, %s60, %s61
    %p65 = pneg %p59
    %p66 = scmp.eq.s32.totalorder %s10, 3
    %p67 = por %p65, %p66
    %p68 = scmp.ne.s32.totalorder %s60, %s63
    %p69 = scmp.eq.s32.totalorder %s10, 0
    %p70 = por %p68, %p69
    %p71 = scmp.ne.s32.totalorder %s60, %s63
    %p72 = scmp.eq.s32.totalorder %s15, 3
    %p73 = por %p71, %p72
    %p74 = scmp.ne.s32.totalorder %s63, %s64
    %p75 = scmp.eq.s32.totalorder %s15, 0
    %p76 = por %p74, %p75
    %p77 = scmp.ne.s32.totalorder %s63, %s64
    %p78 = scmp.eq.s32.totalorder %s16, 3
    %p79 = por %p77, %p78
    %p81 = scmp.ne.s32.totalorder %s64, %s80
    %p82 = scmp.eq.s32.totalorder %s16, 0
    %p83 = por %p81, %p82
    %s84 = ssub.s32 %s18, %s25
    %p85 = scmp.eq.s32.totalorder %s84, 0
    %s87 = sadd.s32 %s86, 1
    %s88 = scalar_select %p85, %s86, %s87
    %p91 = pneg %p85
    %p92 = scmp.eq.s32.totalorder %s10, 3
    %p93 = por %p91, %p92
    %p94 = scmp.ne.s32.totalorder %s86, %s89
    %p95 = scmp.eq.s32.totalorder %s10, 0
    %p96 = por %p94, %p95
    %p97 = scmp.ne.s32.totalorder %s86, %s89
    %p98 = scmp.eq.s32.totalorder %s15, 3
    %p99 = por %p97, %p98
    %p100 = scmp.ne.s32.totalorder %s89, %s90
    %p101 = scmp.eq.s32.totalorder %s15, 0
    %p102 = por %p100, %p101
    %p103 = scmp.ne.s32.totalorder %s89, %s90
    %p104 = scmp.eq.s32.totalorder %s16, 3
    %p105 = por %p103, %p104
    %p107 = scmp.ne.s32.totalorder %s90, %s106
    %p108 = scmp.eq.s32.totalorder %s16, 0
    %p109 = por %p107, %p108
    %s110 = ssub.s32 %s18, %s25
    %p111 = scmp.eq.s32.totalorder %s110, 0
    %s113 = sadd.s32 %s112, 1
    %s114 = scalar_select %p111, %s112, %s113
    %p117 = pneg %p111
    %p118 = scmp.eq.s32.totalorder %s10, 3
    %p119 = por %p117, %p118
    %p120 = scmp.ne.s32.totalorder %s112, %s115
    %p121 = scmp.eq.s32.totalorder %s10, 0
    %p122 = por %p120, %p121
    %p123 = scmp.ne.s32.totalorder %s112, %s115
    %p124 = scmp.eq.s32.totalorder %s15, 3
    %p125 = por %p123, %p124
    %p126 = scmp.ne.s32.totalorder %s115, %s116
    %p127 = scmp.eq.s32.totalorder %s15, 0
    %p128 = por %p126, %p127
    %p129 = scmp.ne.s32.totalorder %s115, %s116
    %p130 = scmp.eq.s32.totalorder %s16, 3
    %p131 = por %p129, %p130
    %p133 = scmp.ne.s32.totalorder %s116, %s132
    %p134 = scmp.eq.s32.totalorder %s16, 0
    %p135 = por %p133, %p134
    %s136 = ssub.s32 %s17, %s29
    %s137 = ssub.s32 %s18, %s25
    %s138 = sor.u32 %s136, %s137
    %p139 = scmp.eq.s32.totalorder %s138, 0
    %s141 = sadd.s32 %s140, 1
    %s142 = scalar_select %p139, %s140, %s141
    %p145 = pneg %p139
    %p146 = scmp.eq.s32.totalorder %s10, 3
    %p147 = por %p145, %p146
    %p148 = scmp.ne.s32.totalorder %s140, %s143
    %p149 = scmp.eq.s32.totalorder %s10, 0
    %p150 = por %p148, %p149
    %p151 = scmp.ne.s32.totalorder %s140, %s143
    %p152 = scmp.eq.s32.totalorder %s15, 3
    %p153 = por %p151, %p152
    %p154 = scmp.ne.s32.totalorder %s143, %s144
    %p155 = scmp.eq.s32.totalorder %s15, 0
    %p156 = por %p154, %p155
    %p157 = scmp.ne.s32.totalorder %s143, %s144
    %p158 = scmp.eq.s32.totalorder %s16, 3
    %p159 = por %p157, %p158
    %p161 = scmp.ne.s32.totalorder %s144, %s160
    %p162 = scmp.eq.s32.totalorder %s16, 0
    %p163 = por %p161, %p162
    %p164 = scmp.le.s32.totalorder 1, %s10
    %p165 = scmp.lt.s32.totalorder %s10, 5
    %p166 = pnand %p164, %p165
    %p167 = pneg %p166
    // Predicated region
    $region9: #{bn_relu_grouped_conv.1} parent=5 // pred_check
      _
    $region10: #{bn_relu_grouped_conv.1} parent=5 // pred_check_branch
      %169 = sbr.rel (%p166) target = $region12
    $region11: #{bn_relu_grouped_conv.1} parent=5 // pred_region
      %s170 = ssub.s32 %s10, 1
    $region12: #{bn_relu_grouped_conv.1} parent=5 // pred_fallthru
      _
    %p171 = scmp.lt.s32.totalorder %s10, 4
    // Predicated region
    $region13: #{bn_relu_grouped_conv.1} parent=5 // pred_check
      %p172 = pneg %p171
    $region14: #{bn_relu_grouped_conv.1} parent=5 // pred_check_branch
      %174 = sbr.rel (%p172) target = $region16
    $region15: #{bn_relu_grouped_conv.1} parent=5 // pred_region
      // Predicated region
      $region17: #{bn_relu_grouped_conv.1} parent=15 // pred_check
        %p175 = pneg %p44
      $region18: #{bn_relu_grouped_conv.1} parent=15 // pred_check_branch
        %177 = sbr.rel (%p175) target = $region20
      $region19: #{bn_relu_grouped_conv.1} parent=15 // pred_region
        %s178 = smul.u32 4, %s18
        %p179 = scmp.lt.s32.totalorder %s17, 0
        %s180 = scalar_select %p179, %s17, 0
        %p181 = scmp.lt.s32.totalorder %s178, 15
        %s182 = scalar_select %p181, %s178, 15
        %s183 = smul.addr %s182, 7
        %s184 = smul.addr %s180, 112
        %s185 = sadd.s32 %s183, %s184
        %s186 = smul.addr %s185, 8
        %s187 = scalar_lea.vmem %s0, %s186
        %s188 = smul.u32 4, %s18
      $region20: #{bn_relu_grouped_conv.1} parent=15 // pred_fallthru
        _
      // Predicated region
      $region21: #{bn_relu_grouped_conv.1} parent=15 // pred_check
        %p189 = pneg %p70
      $region22: #{bn_relu_grouped_conv.1} parent=15 // pred_check_branch
        %191 = sbr.rel (%p189) target = $region24
      $region23: #{bn_relu_grouped_conv.1} parent=15 // pred_region
        %s192 = smul.u32 4, %s18
        %p193 = scmp.lt.s32.totalorder %s192, 15
        %s194 = scalar_select %p193, %s192, 15
        %s195 = scalar_lea.vmem %s1, %s194
        %s196 = smul.u32 4, %s18
      $region24: #{bn_relu_grouped_conv.1} parent=15 // pred_fallthru
        _
      // Predicated region
      $region25: #{bn_relu_grouped_conv.1} parent=15 // pred_check
        %p197 = pneg %p96
      $region26: #{bn_relu_grouped_conv.1} parent=15 // pred_check_branch
        %199 = sbr.rel (%p197) target = $region28
      $region27: #{bn_relu_grouped_conv.1} parent=15 // pred_region
        %s200 = smul.u32 4, %s18
        %p201 = scmp.lt.s32.totalorder %s200, 15
        %s202 = scalar_select %p201, %s200, 15
        %s203 = scalar_lea.vmem %s2, %s202
        %s204 = smul.u32 4, %s18
      $region28: #{bn_relu_grouped_conv.1} parent=15 // pred_fallthru
        _
      // Predicated region
      $region29: #{bn_relu_grouped_conv.1} parent=15 // pred_check
        %p205 = pneg %p122
      $region30: #{bn_relu_grouped_conv.1} parent=15 // pred_check_branch
        %207 = sbr.rel (%p205) target = $region32
      $region31: #{bn_relu_grouped_conv.1} parent=15 // pred_region
        %s208 = smul.u32 8, %s18
        %p209 = scmp.lt.s32.totalorder %s208, 31
        %s210 = scalar_select %p209, %s208, 31
        %s211 = smul.addr %s210, 72
        %s212 = smul.addr %s211, 8
        %s213 = scalar_lea.vmem %s3, %s212
        %s214 = smul.u32 8, %s18
      $region32: #{bn_relu_grouped_conv.1} parent=15 // pred_fallthru
        _
    $region16: #{bn_relu_grouped_conv.1} parent=5 // pred_fallthru
      _
    %p215 = scmp.le.s32.totalorder 1, %s10
    %p216 = scmp.lt.s32.totalorder %s10, 5
    %p217 = pnand %p215, %p216
    %p218 = pneg %p217
    // Predicated region
    $region33: #{bn_relu_grouped_conv.1} parent=5 // pred_check
      _
    $region34: #{bn_relu_grouped_conv.1} parent=5 // pred_check_branch
      %220 = sbr.rel (%p217) target = $region36
    $region35: #{bn_relu_grouped_conv.1} parent=5 // pred_region
      %s221 = ssub.s32 %s10, 1
      %s222 = smul.u32 4, %s20
      %p223 = scmp.lt.s32.totalorder %s19, 0
      %s224 = scalar_select %p223, %s19, 0
      %p225 = scmp.lt.s32.totalorder %s222, 15
      %s226 = scalar_select %p225, %s222, 15
      %s227 = smul.addr %s226, 7
      %s228 = smul.addr %s224, 112
      %s229 = sadd.s32 %s227, %s228
      %s230 = smul.addr %s229, 8
      %s231 = scalar_lea.vmem %s0, %s230
      %p232 = pneg %p50
      %p233 = pneg %p47
      %s234 = smul.u32 4, %s20
      %p235 = scmp.lt.s32.totalorder %s234, 15
      %s236 = scalar_select %p235, %s234, 15
      %s237 = scalar_lea.vmem %s1, %s236
      %p238 = pneg %p76
      %p239 = pneg %p73
      %s240 = smul.u32 4, %s20
      %p241 = scmp.lt.s32.totalorder %s240, 15
      %s242 = scalar_select %p241, %s240, 15
      %s243 = scalar_lea.vmem %s2, %s242
      %p244 = pneg %p102
      %p245 = pneg %p99
      %s246 = smul.u32 8, %s20
      %p247 = scmp.lt.s32.totalorder %s246, 31
      %s248 = scalar_select %p247, %s246, 31
      %s249 = smul.addr %s248, 72
      %s250 = smul.addr %s249, 8
      %s251 = scalar_lea.vmem %s3, %s250
      %p252 = pneg %p128
      %p253 = pneg %p125
      %p254 = pneg %p156
      %p255 = pneg %p153
      %s256 = smul.u32 4, %s20
      %p257 = scmp.lt.s32.totalorder %s19, 0
      %s258 = scalar_select %p257, %s19, 0
      %p259 = scmp.lt.s32.totalorder %s256, 15
      %s260 = scalar_select %p259, %s256, 15
      %s261 = smul.addr %s260, 7
      %s262 = smul.addr %s258, 112
      %s263 = sadd.s32 %s261, %s262
      %s264 = smul.addr %s263, 8
      %s265 = scalar_lea.vmem %s4, %s264
      %s266 = smul.u32 4, %s20
      %p267 = scmp.lt.s32.totalorder %s19, 0
      %s268 = scalar_select %p267, %s19, 0
      %p269 = scmp.lt.s32.totalorder %s266, 15
      %s270 = scalar_select %p269, %s266, 15
      %s271 = smul.addr %s270, 7
      %s272 = smul.addr %s268, 112
      %s273 = sadd.s32 %s271, %s272
      %s274 = smul.addr %s273, 8
      %s275 = scalar_lea.vmem %s0, %s274
      %s276 = smul.u32 4, %s20
      %s277 = smul.u32 4, %s20
      %p278 = scmp.lt.s32.totalorder %s277, 15
      %s279 = scalar_select %p278, %s277, 15
      %s280 = scalar_lea.vmem %s1, %s279
      %s281 = smul.u32 4, %s20
      %s282 = smul.u32 4, %s20
      %p283 = scmp.lt.s32.totalorder %s282, 15
      %s284 = scalar_select %p283, %s282, 15
      %s285 = scalar_lea.vmem %s2, %s284
      %s286 = smul.u32 4, %s20
      %s287 = smul.u32 8, %s20
      %p288 = scmp.lt.s32.totalorder %s287, 31
      %s289 = scalar_select %p288, %s287, 31
      %s290 = smul.addr %s289, 72
      %s291 = smul.addr %s290, 8
      %s292 = scalar_lea.vmem %s3, %s291
      %s293 = smul.u32 8, %s20
      %s294 = smul.u32 4, %s20
      %p295 = scmp.lt.s32.totalorder %s19, 0
      %s296 = scalar_select %p295, %s19, 0
      %p297 = scmp.lt.s32.totalorder %s294, 15
      %s298 = scalar_select %p297, %s294, 15
      %s299 = smul.addr %s298, 7
      %s300 = smul.addr %s296, 112
      %s301 = sadd.s32 %s299, %s300
      %s302 = smul.addr %s301, 8
      %s303 = scalar_lea.vmem %s4, %s302
      %s304 = smul.u32 4, %s20
      %305 = vst [vmem:[#allocation2] sm:$0xff] 0.0
      %306 = vst [vmem:[#allocation2 + $0x8] sm:$0xff] 0.0
      %307 = vst [vmem:[#allocation2 + $0x10] sm:$0xff] 0.0
      %308 = vst [vmem:[#allocation2 + $0x18] sm:$0xff] 0.0
      %309 = vst [vmem:[#allocation2 + $0x20] sm:$0xff] 0.0
      %310 = vst [vmem:[#allocation2 + $0x28] sm:$0xff] 0.0
      %311 = vst [vmem:[#allocation2 + $0x30] sm:$0xff] 0.0
      %312 = vst [vmem:[#allocation2 + $0x38] sm:$0xff] 0.0
      %313 = vst [vmem:[#allocation2 + $0x40] sm:$0xff] 0.0
      %314 = vst [vmem:[#allocation2 + $0x48] sm:$0xff] 0.0
      %v315 = vld [vmem:[%s275] sm:$0x7f]
      %v316 = vld [vmem:[%s275 + $0x8] sm:$0x7f]
      %v317 = vld [vmem:[%s275 + $0x10] sm:$0x7f]
      %v318 = vld [vmem:[%s275 + $0x18] sm:$0x7f]
      %v319 = vld [vmem:[%s275 + $0x20] sm:$0x7f]
      %v320 = vld [vmem:[%s275 + $0x28] sm:$0x7f]
      %v321 = vld [vmem:[%s275 + $0x30] sm:$0x7f]
      %v322 = vld [vmem:[%s280] sm:$0x1]
      %v324 = vlaneseq
      %v325 = vshrl.u32 %v324, 7
      %v326 = vsub.s32 0, %v325
      %v327 = vrot.slane %v322, %v326
      %v329 = vmul.f32 %v315, %v327
      %v330 = vmul.f32 %v316, %v327
      %v331 = vmul.f32 %v317, %v327
      %v332 = vmul.f32 %v318, %v327
      %v333 = vmul.f32 %v319, %v327
      %v334 = vmul.f32 %v320, %v327
      %v335 = vmul.f32 %v321, %v327
      %v336 = vld [vmem:[%s285] sm:$0x1]
      %v338 = vlaneseq
      %v339 = vshrl.u32 %v338, 7
      %v340 = vsub.s32 0, %v339
      %v341 = vrot.slane %v336, %v340
      %v343 = vadd.f32 %v329, %v341
      %v344 = vadd.f32 %v330, %v341
      %v345 = vadd.f32 %v331, %v341
      %v346 = vadd.f32 %v332, %v341
      %v347 = vadd.f32 %v333, %v341
      %v348 = vadd.f32 %v334, %v341
      %v349 = vadd.f32 %v335, %v341
      %v350 = vmax.f32 %v343, 0.0
      %v351 = vmax.f32 %v344, 0.0
      %v352 = vmax.f32 %v345, 0.0
      %v353 = vmax.f32 %v346, 0.0
      %v354 = vmax.f32 %v347, 0.0
      %v355 = vmax.f32 %v348, 0.0
      %v356 = vmax.f32 %v349, 0.0
      %s357 = scalar_lea.vmem [#allocation2], 8
      %358 = vst [vmem:[%s357 + $0x1] sm:$0x7f] %v350
      %359 = vst [vmem:[%s357 + $0x9] sm:$0x7f] %v351
      %360 = vst [vmem:[%s357 + $0x11] sm:$0x7f] %v352
      %361 = vst [vmem:[%s357 + $0x19] sm:$0x7f] %v353
      %362 = vst [vmem:[%s357 + $0x21] sm:$0x7f] %v354
      %363 = vst [vmem:[%s357 + $0x29] sm:$0x7f] %v355
      %364 = vst [vmem:[%s357 + $0x31] sm:$0x7f] %v356
      %v365 = vld [vmem:[#allocation2] sm:$0xff]
      %v366 = vld [vmem:[#allocation2 + $0x8] sm:$0xff]
      %v367 = vld [vmem:[#allocation2 + $0x10] sm:$0xff]
      %v368 = vld [vmem:[#allocation2 + $0x18] sm:$0xff]
      %v369 = vld [vmem:[#allocation2 + $0x20] sm:$0xff]
      %v370 = vld [vmem:[#allocation2 + $0x28] sm:$0xff]
      %v371 = vld [vmem:[#allocation2 + $0x30] sm:$0xff]
      %v372 = vld [vmem:[#allocation2 + $0x38] sm:$0xff]
      %v373 = vld [vmem:[#allocation2 + $0x40] sm:$0xff]
      %v374 = vld [vmem:[#allocation2 + $0x48] sm:$0xff]
      %v375 = vld [vmem:[%s292] sm:$0xff]
      %v376 = vld [vmem:[%s292 + $0x8] sm:$0xff]
      %v377 = vld [vmem:[%s292 + $0x10] sm:$0xff]
      %v378 = vld [vmem:[%s292 + $0x18] sm:$0xff]
      %v379 = vld [vmem:[%s292 + $0x20] sm:$0xff]
      %v380 = vld [vmem:[%s292 + $0x28] sm:$0xff]
      %v381 = vld [vmem:[%s292 + $0x30] sm:$0xff]
      %v382 = vld [vmem:[%s292 + $0x38] sm:$0xff]
      %s383 = scalar_lea.vmem %s292, 64
      %v384 = vld [vmem:[%s383] sm:$0xff]
      %v385 = vld [vmem:[%s383 + $0x8] sm:$0xff]
      %v386 = vld [vmem:[%s383 + $0x10] sm:$0xff]
      %v387 = vld [vmem:[%s383 + $0x18] sm:$0xff]
      %v388 = vld [vmem:[%s383 + $0x20] sm:$0xff]
      %v389 = vld [vmem:[%s383 + $0x28] sm:$0xff]
      %v390 = vld [vmem:[%s383 + $0x30] sm:$0xff]
      %v391 = vld [vmem:[%s383 + $0x38] sm:$0xff]
      %vm400 = vcmask 1046528
      %v401 = vrot.slane %v365, 1
      %v402 = vrot.slane %v366, 1
      %v403 = vsel %vm400, %v401, %v402
      %v404 = vrot.slane %v367, 1
      %v405 = vsel %vm400, %v402, %v404
      %v406 = vrot.slane %v368, 1
      %v407 = vsel %vm400, %v404, %v406
      %v408 = vrot.slane %v369, 1
      %v409 = vsel %vm400, %v406, %v408
      %v410 = vrot.slane %v370, 1
      %v411 = vsel %vm400, %v408, %v410
      %v412 = vrot.slane %v371, 1
      %v413 = vsel %vm400, %v410, %v412
      %v414 = vrot.slane %v372, 1
      %v415 = vsel %vm400, %v412, %v414
      %vm416 = vcmask 523264
      %v417 = vsel %vm416, %v403, 0
      %v419 = vsel %vm416, %v405, 0
      %v421 = vsel %vm416, %v407, 0
      %v423 = vsel %vm416, %v409, 0
      %v425 = vsel %vm416, %v411, 0
      %v427 = vsel %vm416, %v413, 0
      %v429 = vsel %vm416, %v415, 0
      %431 = vmatprep.subr.mxu0 0.0
      %432 = vmatpush1.msra.mxu0 0.0
      %433 = vmatprep.subr.mxu0 0.0
      %434 = vmatpush1.msra.mxu0 0.0
      %435 = vmatprep.subr.mxu0 0.0
      %436 = vmatpush1.msra.mxu0 0.0
      %437 = vmatprep.subr.mxu0 0.0
      %438 = vmatpush1.msra.mxu0 0.0
      %439 = vmatprep.subr.mxu0 0.0
      %440 = vmatpush1.msra.mxu0 0.0
      %441 = vmatprep.subr.mxu0 0.0
      %442 = vmatpush1.msra.mxu0 0.0
      %443 = vmatprep.subr.mxu0 0.0
      %444 = vmatpush1.msra.mxu0 0.0
      %445 = vmatprep.subr.mxu0 0.0
      %446 = vmatpush1.msra.mxu0 0.0
      %447 = vmatprep.subr.mxu0 0.0
      %448 = vmatpush1.msra.mxu0 %v391
      %449 = vmatprep.subr.mxu0 0.0
      %450 = vmatpush1.msra.mxu0 %v390
      %451 = vmatprep.subr.mxu0 0.0
      %452 = vmatpush1.msra.mxu0 %v389
      %453 = vmatprep.subr.mxu0 0.0
      %454 = vmatpush1.msra.mxu0 %v388
      %455 = vmatprep.subr.mxu0 0.0
      %456 = vmatpush1.msra.mxu0 %v387
      %457 = vmatprep.subr.mxu0 0.0
      %458 = vmatpush1.msra.mxu0 %v386
      %459 = vmatprep.subr.mxu0 0.0
      %460 = vmatpush1.msra.mxu0 %v385
      %461 = vmatprep.subr.mxu0 0.0
      %462 = vmatpush1.msra.mxu0 %v384
      %463 = vmatprep.subr.mxu0 0.0
      %464 = vmatpush2.msra.mxu0 0.0
      %465 = vmatprep.subr.mxu0 0.0
      %466 = vmatpush2.msra.mxu0 0.0
      %467 = vmatprep.subr.mxu0 0.0
      %468 = vmatpush2.msra.mxu0 0.0
      %469 = vmatprep.subr.mxu0 0.0
      %470 = vmatpush2.msra.mxu0 0.0
      %471 = vmatprep.subr.mxu0 0.0
      %472 = vmatpush2.msra.mxu0 0.0
      %473 = vmatprep.subr.mxu0 0.0
      %474 = vmatpush2.msra.mxu0 0.0
      %475 = vmatprep.subr.mxu0 0.0
      %476 = vmatpush2.msra.mxu0 0.0
      %477 = vmatprep.subr.mxu0 0.0
      %478 = vmatpush2.msra.mxu0 0.0
      %479 = vmatprep.subr.mxu0 0.0
      %480 = vmatpush2.msra.mxu0 0.0
      %481 = vmatprep.subr.mxu0 0.0
      %482 = vmatpush2.msra.mxu0 0.0
      %483 = vmatprep.subr.mxu0 0.0
      %484 = vmatpush2.msra.mxu0 0.0
      %485 = vmatprep.subr.mxu0 0.0
      %486 = vmatpush2.msra.mxu0 0.0
      %487 = vmatprep.subr.mxu0 0.0
      %488 = vmatpush2.msra.mxu0 0.0
      %489 = vmatprep.subr.mxu0 0.0
      %490 = vmatpush2.msra.mxu0 0.0
      %491 = vmatprep.subr.mxu0 0.0
      %492 = vmatpush2.msra.mxu0 0.0
      %493 = vmatprep.subr.mxu0 0.0
      %494 = vmatpush2.msra.mxu0 0.0
      %495 = vmatprep.mubr.f32.mxu0 0.0
      %496 = vmatmul.mubr.f32.gmra.mxu0 %v417
      %v497 = vpop.f32.mrf.mxu0
      %v498 = vadd.f32 0.0, %v497
      %v499 = vpop.f32.mrf.mxu0
      %500 = vmatprep.mubr.f32.mxu0 0.0
      %501 = vmatmul.mubr.f32.gmra.mxu0 %v419
      %v502 = vpop.f32.mrf.mxu0
      %v503 = vadd.f32 0.0, %v502
      %v504 = vpop.f32.mrf.mxu0
      %505 = vmatprep.mubr.f32.mxu0 0.0
      %506 = vmatmul.mubr.f32.gmra.mxu0 %v421
      %v507 = vpop.f32.mrf.mxu0
      %v508 = vadd.f32 0.0, %v507
      %v509 = vpop.f32.mrf.mxu0
      %510 = vmatprep.mubr.f32.mxu0 0.0
      %511 = vmatmul.mubr.f32.gmra.mxu0 %v423
      %v512 = vpop.f32.mrf.mxu0
      %v513 = vadd.f32 0.0, %v512
      %v514 = vpop.f32.mrf.mxu0
      %515 = vmatprep.mubr.f32.mxu0 0.0
      %516 = vmatmul.mubr.f32.gmra.mxu0 %v425
      %v517 = vpop.f32.mrf.mxu0
      %v518 = vadd.f32 0.0, %v517
      %v519 = vpop.f32.mrf.mxu0
      %520 = vmatprep.mubr.f32.mxu0 0.0
      %521 = vmatmul.mubr.f32.gmra.mxu0 %v427
      %v522 = vpop.f32.mrf.mxu0
      %v523 = vadd.f32 0.0, %v522
      %v524 = vpop.f32.mrf.mxu0
      %525 = vmatprep.mubr.f32.mxu0 0.0
      %526 = vmatmul.mubr.f32.gmra.mxu0 %v429
      %v527 = vpop.f32.mrf.mxu0
      %v528 = vadd.f32 0.0, %v527
      %v529 = vpop.f32.mrf.mxu0
      %530 = vdwg.mxu0
      %v531 = vsel %vm416, %v365, 0
      %v533 = vsel %vm416, %v366, 0
      %v535 = vsel %vm416, %v367, 0
      %v537 = vsel %vm416, %v368, 0
      %v539 = vsel %vm416, %v369, 0
      %v541 = vsel %vm416, %v370, 0
      %v543 = vsel %vm416, %v371, 0
      %545 = vmatprep.subr.mxu0 0.0
      %546 = vmatpush1.msra.mxu0 0.0
      %547 = vmatprep.subr.mxu0 0.0
      %548 = vmatpush1.msra.mxu0 0.0
      %549 = vmatprep.subr.mxu0 0.0
      %550 = vmatpush1.msra.mxu0 0.0
      %551 = vmatprep.subr.mxu0 0.0
      %552 = vmatpush1.msra.mxu0 0.0
      %553 = vmatprep.subr.mxu0 0.0
      %554 = vmatpush1.msra.mxu0 0.0
      %555 = vmatprep.subr.mxu0 0.0
      %556 = vmatpush1.msra.mxu0 0.0
      %557 = vmatprep.subr.mxu0 0.0
      %558 = vmatpush1.msra.mxu0 0.0
      %559 = vmatprep.subr.mxu0 0.0
      %560 = vmatpush1.msra.mxu0 0.0
      %561 = vmatprep.subr.mxu0 0.0
      %562 = vmatpush1.msra.mxu0 %v382
      %563 = vmatprep.subr.mxu0 0.0
      %564 = vmatpush1.msra.mxu0 %v381
      %565 = vmatprep.subr.mxu0 0.0
      %566 = vmatpush1.msra.mxu0 %v380
      %567 = vmatprep.subr.mxu0 0.0
      %568 = vmatpush1.msra.mxu0 %v379
      %569 = vmatprep.subr.mxu0 0.0
      %570 = vmatpush1.msra.mxu0 %v378
      %571 = vmatprep.subr.mxu0 0.0
      %572 = vmatpush1.msra.mxu0 %v377
      %573 = vmatprep.subr.mxu0 0.0
      %574 = vmatpush1.msra.mxu0 %v376
      %575 = vmatprep.subr.mxu0 0.0
      %576 = vmatpush1.msra.mxu0 %v375
      %577 = vmatprep.subr.mxu0 0.0
      %578 = vmatpush2.msra.mxu0 0.0
      %579 = vmatprep.subr.mxu0 0.0
      %580 = vmatpush2.msra.mxu0 0.0
      %581 = vmatprep.subr.mxu0 0.0
      %582 = vmatpush2.msra.mxu0 0.0
      %583 = vmatprep.subr.mxu0 0.0
      %584 = vmatpush2.msra.mxu0 0.0
      %585 = vmatprep.subr.mxu0 0.0
      %586 = vmatpush2.msra.mxu0 0.0
      %587 = vmatprep.subr.mxu0 0.0
      %588 = vmatpush2.msra.mxu0 0.0
      %589 = vmatprep.subr.mxu0 0.0
      %590 = vmatpush2.msra.mxu0 0.0
      %591 = vmatprep.subr.mxu0 0.0
      %592 = vmatpush2.msra.mxu0 0.0
      %593 = vmatprep.subr.mxu0 0.0
      %594 = vmatpush2.msra.mxu0 0.0
      %595 = vmatprep.subr.mxu0 0.0
      %596 = vmatpush2.msra.mxu0 0.0
      %597 = vmatprep.subr.mxu0 0.0
      %598 = vmatpush2.msra.mxu0 0.0
      %599 = vmatprep.subr.mxu0 0.0
      %600 = vmatpush2.msra.mxu0 0.0
      %601 = vmatprep.subr.mxu0 0.0
      %602 = vmatpush2.msra.mxu0 0.0
      %603 = vmatprep.subr.mxu0 0.0
      %604 = vmatpush2.msra.mxu0 0.0
      %605 = vmatprep.subr.mxu0 0.0
      %606 = vmatpush2.msra.mxu0 0.0
      %607 = vmatprep.subr.mxu0 0.0
      %608 = vmatpush2.msra.mxu0 0.0
      %609 = vmatprep.mubr.f32.mxu0 0.0
      %610 = vmatmul.mubr.f32.gmra.mxu0 %v531
      %v611 = vpop.f32.mrf.mxu0
      %v612 = vadd.f32 %v498, %v611
      %v613 = vpop.f32.mrf.mxu0
      %614 = vmatprep.mubr.f32.mxu0 0.0
      %615 = vmatmul.mubr.f32.gmra.mxu0 %v533
      %v616 = vpop.f32.mrf.mxu0
      %v617 = vadd.f32 %v503, %v616
      %v618 = vpop.f32.mrf.mxu0
      %619 = vmatprep.mubr.f32.mxu0 0.0
      %620 = vmatmul.mubr.f32.gmra.mxu0 %v535
      %v621 = vpop.f32.mrf.mxu0
      %v622 = vadd.f32 %v508, %v621
      %v623 = vpop.f32.mrf.mxu0
      %624 = vmatprep.mubr.f32.mxu0 0.0
      %625 = vmatmul.mubr.f32.gmra.mxu0 %v537
      %v626 = vpop.f32.mrf.mxu0
      %v627 = vadd.f32 %v513, %v626
      %v628 = vpop.f32.mrf.mxu0
      %629 = vmatprep.mubr.f32.mxu0 0.0
      %630 = vmatmul.mubr.f32.gmra.mxu0 %v539
      %v631 = vpop.f32.mrf.mxu0
      %v632 = vadd.f32 %v518, %v631
      %v633 = vpop.f32.mrf.mxu0
      %634 = vmatprep.mubr.f32.mxu0 0.0
      %635 = vmatmul.mubr.f32.gmra.mxu0 %v541
      %v636 = vpop.f32.mrf.mxu0
      %v637 = vadd.f32 %v523, %v636
      %v638 = vpop.f32.mrf.mxu0
      %639 = vmatprep.mubr.f32.mxu0 0.0
      %640 = vmatmul.mubr.f32.gmra.mxu0 %v543
      %v641 = vpop.f32.mrf.mxu0
      %v642 = vadd.f32 %v528, %v641
      %v643 = vpop.f32.mrf.mxu0
      %644 = vdwg.mxu0
      %s645 = scalar_lea.vmem %s292, 128
      %v646 = vld [vmem:[%s645] sm:$0xff]
      %v647 = vld [vmem:[%s645 + $0x8] sm:$0xff]
      %v648 = vld [vmem:[%s645 + $0x10] sm:$0xff]
      %v649 = vld [vmem:[%s645 + $0x18] sm:$0xff]
      %v650 = vld [vmem:[%s645 + $0x20] sm:$0xff]
      %v651 = vld [vmem:[%s645 + $0x28] sm:$0xff]
      %v652 = vld [vmem:[%s645 + $0x30] sm:$0xff]
      %v653 = vld [vmem:[%s645 + $0x38] sm:$0xff]
      %vm654 = vcmask 1045504
      %v655 = vrot.slane %v365, 2
      %v656 = vrot.slane %v366, 2
      %v657 = vsel %vm654, %v655, %v656
      %v658 = vrot.slane %v367, 2
      %v659 = vsel %vm654, %v656, %v658
      %v660 = vrot.slane %v368, 2
      %v661 = vsel %vm654, %v658, %v660
      %v662 = vrot.slane %v369, 2
      %v663 = vsel %vm654, %v660, %v662
      %v664 = vrot.slane %v370, 2
      %v665 = vsel %vm654, %v662, %v664
      %v666 = vrot.slane %v371, 2
      %v667 = vsel %vm654, %v664, %v666
      %v668 = vrot.slane %v372, 2
      %v669 = vsel %vm654, %v666, %v668
      %v670 = vsel %vm416, %v657, 0
      %v672 = vsel %vm416, %v659, 0
      %v674 = vsel %vm416, %v661, 0
      %v676 = vsel %vm416, %v663, 0
      %v678 = vsel %vm416, %v665, 0
      %v680 = vsel %vm416, %v667, 0
      %v682 = vsel %vm416, %v669, 0
      %684 = vmatprep.subr.mxu0 0.0
      %685 = vmatpush1.msra.mxu0 0.0
      %686 = vmatprep.subr.mxu0 0.0
      %687 = vmatpush1.msra.mxu0 0.0
      %688 = vmatprep.subr.mxu0 0.0
      %689 = vmatpush1.msra.mxu0 0.0
      %690 = vmatprep.subr.mxu0 0.0
      %691 = vmatpush1.msra.mxu0 0.0
      %692 = vmatprep.subr.mxu0 0.0
      %693 = vmatpush1.msra.mxu0 0.0
      %694 = vmatprep.subr.mxu0 0.0
      %695 = vmatpush1.msra.mxu0 0.0
      %696 = vmatprep.subr.mxu0 0.0
      %697 = vmatpush1.msra.mxu0 0.0
      %698 = vmatprep.subr.mxu0 0.0
      %699 = vmatpush1.msra.mxu0 0.0
      %700 = vmatprep.subr.mxu0 0.0
      %701 = vmatpush1.msra.mxu0 %v653
      %702 = vmatprep.subr.mxu0 0.0
      %703 = vmatpush1.msra.mxu0 %v652
      %704 = vmatprep.subr.mxu0 0.0
      %705 = vmatpush1.msra.mxu0 %v651
      %706 = vmatprep.subr.mxu0 0.0
      %707 = vmatpush1.msra.mxu0 %v650
      %708 = vmatprep.subr.mxu0 0.0
      %709 = vmatpush1.msra.mxu0 %v649
      %710 = vmatprep.subr.mxu0 0.0
      %711 = vmatpush1.msra.mxu0 %v648
      %712 = vmatprep.subr.mxu0 0.0
      %713 = vmatpush1.msra.mxu0 %v647
      %714 = vmatprep.subr.mxu0 0.0
      %715 = vmatpush1.msra.mxu0 %v646
      %716 = vmatprep.subr.mxu0 0.0
      %717 = vmatpush2.msra.mxu0 0.0
      %718 = vmatprep.subr.mxu0 0.0
      %719 = vmatpush2.msra.mxu0 0.0
      %720 = vmatprep.subr.mxu0 0.0
      %721 = vmatpush2.msra.mxu0 0.0
      %722 = vmatprep.subr.mxu0 0.0
      %723 = vmatpush2.msra.mxu0 0.0
      %724 = vmatprep.subr.mxu0 0.0
      %725 = vmatpush2.msra.mxu0 0.0
      %726 = vmatprep.subr.mxu0 0.0
      %727 = vmatpush2.msra.mxu0 0.0
      %728 = vmatprep.subr.mxu0 0.0
      %729 = vmatpush2.msra.mxu0 0.0
      %730 = vmatprep.subr.mxu0 0.0
      %731 = vmatpush2.msra.mxu0 0.0
      %732 = vmatprep.subr.mxu0 0.0
      %733 = vmatpush2.msra.mxu0 0.0
      %734 = vmatprep.subr.mxu0 0.0
      %735 = vmatpush2.msra.mxu0 0.0
      %736 = vmatprep.subr.mxu0 0.0
      %737 = vmatpush2.msra.mxu0 0.0
      %738 = vmatprep.subr.mxu0 0.0
      %739 = vmatpush2.msra.mxu0 0.0
      %740 = vmatprep.subr.mxu0 0.0
      %741 = vmatpush2.msra.mxu0 0.0
      %742 = vmatprep.subr.mxu0 0.0
      %743 = vmatpush2.msra.mxu0 0.0
      %744 = vmatprep.subr.mxu0 0.0
      %745 = vmatpush2.msra.mxu0 0.0
      %746 = vmatprep.subr.mxu0 0.0
      %747 = vmatpush2.msra.mxu0 0.0
      %748 = vmatprep.mubr.f32.mxu0 0.0
      %749 = vmatmul.mubr.f32.gmra.mxu0 %v670
      %v750 = vpop.f32.mrf.mxu0
      %v751 = vadd.f32 0.0, %v750
      %v752 = vpop.f32.mrf.mxu0
      %753 = vmatprep.mubr.f32.mxu0 0.0
      %754 = vmatmul.mubr.f32.gmra.mxu0 %v672
      %v755 = vpop.f32.mrf.mxu0
      %v756 = vadd.f32 0.0, %v755
      %v757 = vpop.f32.mrf.mxu0
      %758 = vmatprep.mubr.f32.mxu0 0.0
      %759 = vmatmul.mubr.f32.gmra.mxu0 %v674
      %v760 = vpop.f32.mrf.mxu0
      %v761 = vadd.f32 0.0, %v760
      %v762 = vpop.f32.mrf.mxu0
      %763 = vmatprep.mubr.f32.mxu0 0.0
      %764 = vmatmul.mubr.f32.gmra.mxu0 %v676
      %v765 = vpop.f32.mrf.mxu0
      %v766 = vadd.f32 0.0, %v765
      %v767 = vpop.f32.mrf.mxu0
      %768 = vmatprep.mubr.f32.mxu0 0.0
      %769 = vmatmul.mubr.f32.gmra.mxu0 %v678
      %v770 = vpop.f32.mrf.mxu0
      %v771 = vadd.f32 0.0, %v770
      %v772 = vpop.f32.mrf.mxu0
      %773 = vmatprep.mubr.f32.mxu0 0.0
      %774 = vmatmul.mubr.f32.gmra.mxu0 %v680
      %v775 = vpop.f32.mrf.mxu0
      %v776 = vadd.f32 0.0, %v775
      %v777 = vpop.f32.mrf.mxu0
      %778 = vmatprep.mubr.f32.mxu0 0.0
      %779 = vmatmul.mubr.f32.gmra.mxu0 %v682
      %v780 = vpop.f32.mrf.mxu0
      %v781 = vadd.f32 0.0, %v780
      %v782 = vpop.f32.mrf.mxu0
      %783 = vdwg.mxu0
      %v784 = vadd.f32 %v612, %v751
      %v785 = vadd.f32 %v617, %v756
      %v786 = vadd.f32 %v622, %v761
      %v787 = vadd.f32 %v627, %v766
      %v788 = vadd.f32 %v632, %v771
      %v789 = vadd.f32 %v637, %v776
      %v790 = vadd.f32 %v642, %v781
      %s791 = scalar_lea.vmem %s292, 192
      %v792 = vld [vmem:[%s791] sm:$0xff]
      %v793 = vld [vmem:[%s791 + $0x8] sm:$0xff]
      %v794 = vld [vmem:[%s791 + $0x10] sm:$0xff]
      %v795 = vld [vmem:[%s791 + $0x18] sm:$0xff]
      %v796 = vld [vmem:[%s791 + $0x20] sm:$0xff]
      %v797 = vld [vmem:[%s791 + $0x28] sm:$0xff]
      %v798 = vld [vmem:[%s791 + $0x30] sm:$0xff]
      %v799 = vld [vmem:[%s791 + $0x38] sm:$0xff]
      %v800 = vsel %vm416, %v372, 0
      %802 = vmatprep.subr.mxu0 0.0
      %803 = vmatpush1.msra.mxu0 0.0
      %804 = vmatprep.subr.mxu0 0.0
      %805 = vmatpush1.msra.mxu0 0.0
      %806 = vmatprep.subr.mxu0 0.0
      %807 = vmatpush1.msra.mxu0 0.0
      %808 = vmatprep.subr.mxu0 0.0
      %809 = vmatpush1.msra.mxu0 0.0
      %810 = vmatprep.subr.mxu0 0.0
      %811 = vmatpush1.msra.mxu0 0.0
      %812 = vmatprep.subr.mxu0 0.0
      %813 = vmatpush1.msra.mxu0 0.0
      %814 = vmatprep.subr.mxu0 0.0
      %815 = vmatpush1.msra.mxu0 0.0
      %816 = vmatprep.subr.mxu0 0.0
      %817 = vmatpush1.msra.mxu0 0.0
      %818 = vmatprep.subr.mxu0 0.0
      %819 = vmatpush1.msra.mxu0 %v799
      %820 = vmatprep.subr.mxu0 0.0
      %821 = vmatpush1.msra.mxu0 %v798
      %822 = vmatprep.subr.mxu0 0.0
      %823 = vmatpush1.msra.mxu0 %v797
      %824 = vmatprep.subr.mxu0 0.0
      %825 = vmatpush1.msra.mxu0 %v796
      %826 = vmatprep.subr.mxu0 0.0
      %827 = vmatpush1.msra.mxu0 %v795
      %828 = vmatprep.subr.mxu0 0.0
      %829 = vmatpush1.msra.mxu0 %v794
      %830 = vmatprep.subr.mxu0 0.0
      %831 = vmatpush1.msra.mxu0 %v793
      %832 = vmatprep.subr.mxu0 0.0
      %833 = vmatpush1.msra.mxu0 %v792
      %834 = vmatprep.subr.mxu0 0.0
      %835 = vmatpush2.msra.mxu0 0.0
      %836 = vmatprep.subr.mxu0 0.0
      %837 = vmatpush2.msra.mxu0 0.0
      %838 = vmatprep.subr.mxu0 0.0
      %839 = vmatpush2.msra.mxu0 0.0
      %840 = vmatprep.subr.mxu0 0.0
      %841 = vmatpush2.msra.mxu0 0.0
      %842 = vmatprep.subr.mxu0 0.0
      %843 = vmatpush2.msra.mxu0 0.0
      %844 = vmatprep.subr.mxu0 0.0
      %845 = vmatpush2.msra.mxu0 0.0
      %846 = vmatprep.subr.mxu0 0.0
      %847 = vmatpush2.msra.mxu0 0.0
      %848 = vmatprep.subr.mxu0 0.0
      %849 = vmatpush2.msra.mxu0 0.0
      %850 = vmatprep.subr.mxu0 0.0
      %851 = vmatpush2.msra.mxu0 0.0
      %852 = vmatprep.subr.mxu0 0.0
      %853 = vmatpush2.msra.mxu0 0.0
      %854 = vmatprep.subr.mxu0 0.0
      %855 = vmatpush2.msra.mxu0 0.0
      %856 = vmatprep.subr.mxu0 0.0
      %857 = vmatpush2.msra.mxu0 0.0
      %858 = vmatprep.subr.mxu0 0.0
      %859 = vmatpush2.msra.mxu0 0.0
      %860 = vmatprep.subr.mxu0 0.0
      %861 = vmatpush2.msra.mxu0 0.0
      %862 = vmatprep.subr.mxu0 0.0
      %863 = vmatpush2.msra.mxu0 0.0
      %864 = vmatprep.subr.mxu0 0.0
      %865 = vmatpush2.msra.mxu0 0.0
      %866 = vmatprep.mubr.f32.mxu0 0.0
      %867 = vmatmul.mubr.f32.gmra.mxu0 %v533
      %v868 = vpop.f32.mrf.mxu0
      %v869 = vadd.f32 0.0, %v868
      %v870 = vpop.f32.mrf.mxu0
      %871 = vmatprep.mubr.f32.mxu0 0.0
      %872 = vmatmul.mubr.f32.gmra.mxu0 %v535
      %v873 = vpop.f32.mrf.mxu0
      %v874 = vadd.f32 0.0, %v873
      %v875 = vpop.f32.mrf.mxu0
      %876 = vmatprep.mubr.f32.mxu0 0.0
      %877 = vmatmul.mubr.f32.gmra.mxu0 %v537
      %v878 = vpop.f32.mrf.mxu0
      %v879 = vadd.f32 0.0, %v878
      %v880 = vpop.f32.mrf.mxu0
      %881 = vmatprep.mubr.f32.mxu0 0.0
      %882 = vmatmul.mubr.f32.gmra.mxu0 %v539
      %v883 = vpop.f32.mrf.mxu0
      %v884 = vadd.f32 0.0, %v883
      %v885 = vpop.f32.mrf.mxu0
      %886 = vmatprep.mubr.f32.mxu0 0.0
      %887 = vmatmul.mubr.f32.gmra.mxu0 %v541
      %v888 = vpop.f32.mrf.mxu0
      %v889 = vadd.f32 0.0, %v888
      %v890 = vpop.f32.mrf.mxu0
      %891 = vmatprep.mubr.f32.mxu0 0.0
      %892 = vmatmul.mubr.f32.gmra.mxu0 %v543
      %v893 = vpop.f32.mrf.mxu0
      %v894 = vadd.f32 0.0, %v893
      %v895 = vpop.f32.mrf.mxu0
      %896 = vmatprep.mubr.f32.mxu0 0.0
      %897 = vmatmul.mubr.f32.gmra.mxu0 %v800
      %v898 = vpop.f32.mrf.mxu0
      %v899 = vadd.f32 0.0, %v898
      %v900 = vpop.f32.mrf.mxu0
      %901 = vdwg.mxu0
      %v902 = vadd.f32 %v784, %v869
      %v903 = vadd.f32 %v785, %v874
      %v904 = vadd.f32 %v786, %v879
      %v905 = vadd.f32 %v787, %v884
      %v906 = vadd.f32 %v788, %v889
      %v907 = vadd.f32 %v789, %v894
      %v908 = vadd.f32 %v790, %v899
      %s909 = scalar_lea.vmem %s292, 256
      %v910 = vld [vmem:[%s909] sm:$0xff]
      %v911 = vld [vmem:[%s909 + $0x8] sm:$0xff]
      %v912 = vld [vmem:[%s909 + $0x10] sm:$0xff]
      %v913 = vld [vmem:[%s909 + $0x18] sm:$0xff]
      %v914 = vld [vmem:[%s909 + $0x20] sm:$0xff]
      %v915 = vld [vmem:[%s909 + $0x28] sm:$0xff]
      %v916 = vld [vmem:[%s909 + $0x30] sm:$0xff]
      %v917 = vld [vmem:[%s909 + $0x38] sm:$0xff]
      %v919 = vrot.slane %v373, 1
      %v920 = vsel %vm400, %v414, %v919
      %v921 = vsel %vm416, %v920, 0
      %923 = vmatprep.subr.mxu0 0.0
      %924 = vmatpush1.msra.mxu0 0.0
      %925 = vmatprep.subr.mxu0 0.0
      %926 = vmatpush1.msra.mxu0 0.0
      %927 = vmatprep.subr.mxu0 0.0
      %928 = vmatpush1.msra.mxu0 0.0
      %929 = vmatprep.subr.mxu0 0.0
      %930 = vmatpush1.msra.mxu0 0.0
      %931 = vmatprep.subr.mxu0 0.0
      %932 = vmatpush1.msra.mxu0 0.0
      %933 = vmatprep.subr.mxu0 0.0
      %934 = vmatpush1.msra.mxu0 0.0
      %935 = vmatprep.subr.mxu0 0.0
      %936 = vmatpush1.msra.mxu0 0.0
      %937 = vmatprep.subr.mxu0 0.0
      %938 = vmatpush1.msra.mxu0 0.0
      %939 = vmatprep.subr.mxu0 0.0
      %940 = vmatpush1.msra.mxu0 %v917
      %941 = vmatprep.subr.mxu0 0.0
      %942 = vmatpush1.msra.mxu0 %v916
      %943 = vmatprep.subr.mxu0 0.0
      %944 = vmatpush1.msra.mxu0 %v915
      %945 = vmatprep.subr.mxu0 0.0
      %946 = vmatpush1.msra.mxu0 %v914
      %947 = vmatprep.subr.mxu0 0.0
      %948 = vmatpush1.msra.mxu0 %v913
      %949 = vmatprep.subr.mxu0 0.0
      %950 = vmatpush1.msra.mxu0 %v912
      %951 = vmatprep.subr.mxu0 0.0
      %952 = vmatpush1.msra.mxu0 %v911
      %953 = vmatprep.subr.mxu0 0.0
      %954 = vmatpush1.msra.mxu0 %v910
      %955 = vmatprep.subr.mxu0 0.0
      %956 = vmatpush2.msra.mxu0 0.0
      %957 = vmatprep.subr.mxu0 0.0
      %958 = vmatpush2.msra.mxu0 0.0
      %959 = vmatprep.subr.mxu0 0.0
      %960 = vmatpush2.msra.mxu0 0.0
      %961 = vmatprep.subr.mxu0 0.0
      %962 = vmatpush2.msra.mxu0 0.0
      %963 = vmatprep.subr.mxu0 0.0
      %964 = vmatpush2.msra.mxu0 0.0
      %965 = vmatprep.subr.mxu0 0.0
      %966 = vmatpush2.msra.mxu0 0.0
      %967 = vmatprep.subr.mxu0 0.0
      %968 = vmatpush2.msra.mxu0 0.0
      %969 = vmatprep.subr.mxu0 0.0
      %970 = vmatpush2.msra.mxu0 0.0
      %971 = vmatprep.subr.mxu0 0.0
      %972 = vmatpush2.msra.mxu0 0.0
      %973 = vmatprep.subr.mxu0 0.0
      %974 = vmatpush2.msra.mxu0 0.0
      %975 = vmatprep.subr.mxu0 0.0
      %976 = vmatpush2.msra.mxu0 0.0
      %977 = vmatprep.subr.mxu0 0.0
      %978 = vmatpush2.msra.mxu0 0.0
      %979 = vmatprep.subr.mxu0 0.0
      %980 = vmatpush2.msra.mxu0 0.0
      %981 = vmatprep.subr.mxu0 0.0
      %982 = vmatpush2.msra.mxu0 0.0
      %983 = vmatprep.subr.mxu0 0.0
      %984 = vmatpush2.msra.mxu0 0.0
      %985 = vmatprep.subr.mxu0 0.0
      %986 = vmatpush2.msra.mxu0 0.0
      %987 = vmatprep.mubr.f32.mxu0 0.0
      %988 = vmatmul.mubr.f32.gmra.mxu0 %v419
      %v989 = vpop.f32.mrf.mxu0
      %v990 = vadd.f32 0.0, %v989
      %v991 = vpop.f32.mrf.mxu0
      %992 = vmatprep.mubr.f32.mxu0 0.0
      %993 = vmatmul.mubr.f32.gmra.mxu0 %v421
      %v994 = vpop.f32.mrf.mxu0
      %v995 = vadd.f32 0.0, %v994
      %v996 = vpop.f32.mrf.mxu0
      %997 = vmatprep.mubr.f32.mxu0 0.0
      %998 = vmatmul.mubr.f32.gmra.mxu0 %v423
      %v999 = vpop.f32.mrf.mxu0
      %v1000 = vadd.f32 0.0, %v999
      %v1001 = vpop.f32.mrf.mxu0
      %1002 = vmatprep.mubr.f32.mxu0 0.0
      %1003 = vmatmul.mubr.f32.gmra.mxu0 %v425
      %v1004 = vpop.f32.mrf.mxu0
      %v1005 = vadd.f32 0.0, %v1004
      %v1006 = vpop.f32.mrf.mxu0
      %1007 = vmatprep.mubr.f32.mxu0 0.0
      %1008 = vmatmul.mubr.f32.gmra.mxu0 %v427
      %v1009 = vpop.f32.mrf.mxu0
      %v1010 = vadd.f32 0.0, %v1009
      %v1011 = vpop.f32.mrf.mxu0
      %1012 = vmatprep.mubr.f32.mxu0 0.0
      %1013 = vmatmul.mubr.f32.gmra.mxu0 %v429
      %v1014 = vpop.f32.mrf.mxu0
      %v1015 = vadd.f32 0.0, %v1014
      %v1016 = vpop.f32.mrf.mxu0
      %1017 = vmatprep.mubr.f32.mxu0 0.0
      %1018 = vmatmul.mubr.f32.gmra.mxu0 %v921
      %v1019 = vpop.f32.mrf.mxu0
      %v1020 = vadd.f32 0.0, %v1019
      %v1021 = vpop.f32.mrf.mxu0
      %1022 = vdwg.mxu0
      %v1023 = vadd.f32 %v902, %v990
      %v1024 = vadd.f32 %v903, %v995
      %v1025 = vadd.f32 %v904, %v1000
      %v1026 = vadd.f32 %v905, %v1005
      %v1027 = vadd.f32 %v906, %v1010
      %v1028 = vadd.f32 %v907, %v1015
      %v1029 = vadd.f32 %v908, %v1020
      %s1030 = scalar_lea.vmem %s292, 320
      %v1031 = vld [vmem:[%s1030] sm:$0xff]
      %v1032 = vld [vmem:[%s1030 + $0x8] sm:$0xff]
      %v1033 = vld [vmem:[%s1030 + $0x10] sm:$0xff]
      %v1034 = vld [vmem:[%s1030 + $0x18] sm:$0xff]
      %v1035 = vld [vmem:[%s1030 + $0x20] sm:$0xff]
      %v1036 = vld [vmem:[%s1030 + $0x28] sm:$0xff]
      %v1037 = vld [vmem:[%s1030 + $0x30] sm:$0xff]
      %v1038 = vld [vmem:[%s1030 + $0x38] sm:$0xff]
      %v1039 = vrot.slane %v373, 2
      %v1040 = vsel %vm654, %v668, %v1039
      %v1041 = vsel %vm416, %v1040, 0
      %1043 = vmatprep.subr.mxu0 0.0
      %1044 = vmatpush1.msra.mxu0 0.0
      %1045 = vmatprep.subr.mxu0 0.0
      %1046 = vmatpush1.msra.mxu0 0.0
      %1047 = vmatprep.subr.mxu0 0.0
      %1048 = vmatpush1.msra.mxu0 0.0
      %1049 = vmatprep.subr.mxu0 0.0
      %1050 = vmatpush1.msra.mxu0 0.0
      %1051 = vmatprep.subr.mxu0 0.0
      %1052 = vmatpush1.msra.mxu0 0.0
      %1053 = vmatprep.subr.mxu0 0.0
      %1054 = vmatpush1.msra.mxu0 0.0
      %1055 = vmatprep.subr.mxu0 0.0
      %1056 = vmatpush1.msra.mxu0 0.0
      %1057 = vmatprep.subr.mxu0 0.0
      %1058 = vmatpush1.msra.mxu0 0.0
      %1059 = vmatprep.subr.mxu0 0.0
      %1060 = vmatpush1.msra.mxu0 %v1038
      %1061 = vmatprep.subr.mxu0 0.0
      %1062 = vmatpush1.msra.mxu0 %v1037
      %1063 = vmatprep.subr.mxu0 0.0
      %1064 = vmatpush1.msra.mxu0 %v1036
      %1065 = vmatprep.subr.mxu0 0.0
      %1066 = vmatpush1.msra.mxu0 %v1035
      %1067 = vmatprep.subr.mxu0 0.0
      %1068 = vmatpush1.msra.mxu0 %v1034
      %1069 = vmatprep.subr.mxu0 0.0
      %1070 = vmatpush1.msra.mxu0 %v1033
      %1071 = vmatprep.subr.mxu0 0.0
      %1072 = vmatpush1.msra.mxu0 %v1032
      %1073 = vmatprep.subr.mxu0 0.0
      %1074 = vmatpush1.msra.mxu0 %v1031
      %1075 = vmatprep.subr.mxu0 0.0
      %1076 = vmatpush2.msra.mxu0 0.0
      %1077 = vmatprep.subr.mxu0 0.0
      %1078 = vmatpush2.msra.mxu0 0.0
      %1079 = vmatprep.subr.mxu0 0.0
      %1080 = vmatpush2.msra.mxu0 0.0
      %1081 = vmatprep.subr.mxu0 0.0
      %1082 = vmatpush2.msra.mxu0 0.0
      %1083 = vmatprep.subr.mxu0 0.0
      %1084 = vmatpush2.msra.mxu0 0.0
      %1085 = vmatprep.subr.mxu0 0.0
      %1086 = vmatpush2.msra.mxu0 0.0
      %1087 = vmatprep.subr.mxu0 0.0
      %1088 = vmatpush2.msra.mxu0 0.0
      %1089 = vmatprep.subr.mxu0 0.0
      %1090 = vmatpush2.msra.mxu0 0.0
      %1091 = vmatprep.subr.mxu0 0.0
      %1092 = vmatpush2.msra.mxu0 0.0
      %1093 = vmatprep.subr.mxu0 0.0
      %1094 = vmatpush2.msra.mxu0 0.0
      %1095 = vmatprep.subr.mxu0 0.0
      %1096 = vmatpush2.msra.mxu0 0.0
      %1097 = vmatprep.subr.mxu0 0.0
      %1098 = vmatpush2.msra.mxu0 0.0
      %1099 = vmatprep.subr.mxu0 0.0
      %1100 = vmatpush2.msra.mxu0 0.0
      %1101 = vmatprep.subr.mxu0 0.0
      %1102 = vmatpush2.msra.mxu0 0.0
      %1103 = vmatprep.subr.mxu0 0.0
      %1104 = vmatpush2.msra.mxu0 0.0
      %1105 = vmatprep.subr.mxu0 0.0
      %1106 = vmatpush2.msra.mxu0 0.0
      %1107 = vmatprep.mubr.f32.mxu0 0.0
      %1108 = vmatmul.mubr.f32.gmra.mxu0 %v672
      %v1109 = vpop.f32.mrf.mxu0
      %v1110 = vadd.f32 0.0, %v1109
      %v1111 = vpop.f32.mrf.mxu0
      %1112 = vmatprep.mubr.f32.mxu0 0.0
      %1113 = vmatmul.mubr.f32.gmra.mxu0 %v674
      %v1114 = vpop.f32.mrf.mxu0
      %v1115 = vadd.f32 0.0, %v1114
      %v1116 = vpop.f32.mrf.mxu0
      %1117 = vmatprep.mubr.f32.mxu0 0.0
      %1118 = vmatmul.mubr.f32.gmra.mxu0 %v676
      %v1119 = vpop.f32.mrf.mxu0
      %v1120 = vadd.f32 0.0, %v1119
      %v1121 = vpop.f32.mrf.mxu0
      %1122 = vmatprep.mubr.f32.mxu0 0.0
      %1123 = vmatmul.mubr.f32.gmra.mxu0 %v678
      %v1124 = vpop.f32.mrf.mxu0
      %v1125 = vadd.f32 0.0, %v1124
      %v1126 = vpop.f32.mrf.mxu0
      %1127 = vmatprep.mubr.f32.mxu0 0.0
      %1128 = vmatmul.mubr.f32.gmra.mxu0 %v680
      %v1129 = vpop.f32.mrf.mxu0
      %v1130 = vadd.f32 0.0, %v1129
      %v1131 = vpop.f32.mrf.mxu0
      %1132 = vmatprep.mubr.f32.mxu0 0.0
      %1133 = vmatmul.mubr.f32.gmra.mxu0 %v682
      %v1134 = vpop.f32.mrf.mxu0
      %v1135 = vadd.f32 0.0, %v1134
      %v1136 = vpop.f32.mrf.mxu0
      %1137 = vmatprep.mubr.f32.mxu0 0.0
      %1138 = vmatmul.mubr.f32.gmra.mxu0 %v1041
      %v1139 = vpop.f32.mrf.mxu0
      %v1140 = vadd.f32 0.0, %v1139
      %v1141 = vpop.f32.mrf.mxu0
      %1142 = vdwg.mxu0
      %v1143 = vadd.f32 %v1023, %v1110
      %v1144 = vadd.f32 %v1024, %v1115
      %v1145 = vadd.f32 %v1025, %v1120
      %v1146 = vadd.f32 %v1026, %v1125
      %v1147 = vadd.f32 %v1027, %v1130
      %v1148 = vadd.f32 %v1028, %v1135
      %v1149 = vadd.f32 %v1029, %v1140
      %s1150 = scalar_lea.vmem %s292, 384
      %v1151 = vld [vmem:[%s1150] sm:$0xff]
      %v1152 = vld [vmem:[%s1150 + $0x8] sm:$0xff]
      %v1153 = vld [vmem:[%s1150 + $0x10] sm:$0xff]
      %v1154 = vld [vmem:[%s1150 + $0x18] sm:$0xff]
      %v1155 = vld [vmem:[%s1150 + $0x20] sm:$0xff]
      %v1156 = vld [vmem:[%s1150 + $0x28] sm:$0xff]
      %v1157 = vld [vmem:[%s1150 + $0x30] sm:$0xff]
      %v1158 = vld [vmem:[%s1150 + $0x38] sm:$0xff]
      %v1159 = vsel %vm416, %v373, 0
      %1161 = vmatprep.subr.mxu0 0.0
      %1162 = vmatpush1.msra.mxu0 0.0
      %1163 = vmatprep.subr.mxu0 0.0
      %1164 = vmatpush1.msra.mxu0 0.0
      %1165 = vmatprep.subr.mxu0 0.0
      %1166 = vmatpush1.msra.mxu0 0.0
      %1167 = vmatprep.subr.mxu0 0.0
      %1168 = vmatpush1.msra.mxu0 0.0
      %1169 = vmatprep.subr.mxu0 0.0
      %1170 = vmatpush1.msra.mxu0 0.0
      %1171 = vmatprep.subr.mxu0 0.0
      %1172 = vmatpush1.msra.mxu0 0.0
      %1173 = vmatprep.subr.mxu0 0.0
      %1174 = vmatpush1.msra.mxu0 0.0
      %1175 = vmatprep.subr.mxu0 0.0
      %1176 = vmatpush1.msra.mxu0 0.0
      %1177 = vmatprep.subr.mxu0 0.0
      %1178 = vmatpush1.msra.mxu0 %v1158
      %1179 = vmatprep.subr.mxu0 0.0
      %1180 = vmatpush1.msra.mxu0 %v1157
      %1181 = vmatprep.subr.mxu0 0.0
      %1182 = vmatpush1.msra.mxu0 %v1156
      %1183 = vmatprep.subr.mxu0 0.0
      %1184 = vmatpush1.msra.mxu0 %v1155
      %1185 = vmatprep.subr.mxu0 0.0
      %1186 = vmatpush1.msra.mxu0 %v1154
      %1187 = vmatprep.subr.mxu0 0.0
      %1188 = vmatpush1.msra.mxu0 %v1153
      %1189 = vmatprep.subr.mxu0 0.0
      %1190 = vmatpush1.msra.mxu0 %v1152
      %1191 = vmatprep.subr.mxu0 0.0
      %1192 = vmatpush1.msra.mxu0 %v1151
      %1193 = vmatprep.subr.mxu0 0.0
      %1194 = vmatpush2.msra.mxu0 0.0
      %1195 = vmatprep.subr.mxu0 0.0
      %1196 = vmatpush2.msra.mxu0 0.0
      %1197 = vmatprep.subr.mxu0 0.0
      %1198 = vmatpush2.msra.mxu0 0.0
      %1199 = vmatprep.subr.mxu0 0.0
      %1200 = vmatpush2.msra.mxu0 0.0
      %1201 = vmatprep.subr.mxu0 0.0
      %1202 = vmatpush2.msra.mxu0 0.0
      %1203 = vmatprep.subr.mxu0 0.0
      %1204 = vmatpush2.msra.mxu0 0.0
      %1205 = vmatprep.subr.mxu0 0.0
      %1206 = vmatpush2.msra.mxu0 0.0
      %1207 = vmatprep.subr.mxu0 0.0
      %1208 = vmatpush2.msra.mxu0 0.0
      %1209 = vmatprep.subr.mxu0 0.0
      %1210 = vmatpush2.msra.mxu0 0.0
      %1211 = vmatprep.subr.mxu0 0.0
      %1212 = vmatpush2.msra.mxu0 0.0
      %1213 = vmatprep.subr.mxu0 0.0
      %1214 = vmatpush2.msra.mxu0 0.0
      %1215 = vmatprep.subr.mxu0 0.0
      %1216 = vmatpush2.msra.mxu0 0.0
      %1217 = vmatprep.subr.mxu0 0.0
      %1218 = vmatpush2.msra.mxu0 0.0
      %1219 = vmatprep.subr.mxu0 0.0
      %1220 = vmatpush2.msra.mxu0 0.0
      %1221 = vmatprep.subr.mxu0 0.0
      %1222 = vmatpush2.msra.mxu0 0.0
      %1223 = vmatprep.subr.mxu0 0.0
      %1224 = vmatpush2.msra.mxu0 0.0
      %1225 = vmatprep.mubr.f32.mxu0 0.0
      %1226 = vmatmul.mubr.f32.gmra.mxu0 %v535
      %v1227 = vpop.f32.mrf.mxu0
      %v1228 = vadd.f32 0.0, %v1227
      %v1229 = vpop.f32.mrf.mxu0
      %1230 = vmatprep.mubr.f32.mxu0 0.0
      %1231 = vmatmul.mubr.f32.gmra.mxu0 %v537
      %v1232 = vpop.f32.mrf.mxu0
      %v1233 = vadd.f32 0.0, %v1232
      %v1234 = vpop.f32.mrf.mxu0
      %1235 = vmatprep.mubr.f32.mxu0 0.0
      %1236 = vmatmul.mubr.f32.gmra.mxu0 %v539
      %v1237 = vpop.f32.mrf.mxu0
      %v1238 = vadd.f32 0.0, %v1237
      %v1239 = vpop.f32.mrf.mxu0
      %1240 = vmatprep.mubr.f32.mxu0 0.0
      %1241 = vmatmul.mubr.f32.gmra.mxu0 %v541
      %v1242 = vpop.f32.mrf.mxu0
      %v1243 = vadd.f32 0.0, %v1242
      %v1244 = vpop.f32.mrf.mxu0
      %1245 = vmatprep.mubr.f32.mxu0 0.0
      %1246 = vmatmul.mubr.f32.gmra.mxu0 %v543
      %v1247 = vpop.f32.mrf.mxu0
      %v1248 = vadd.f32 0.0, %v1247
      %v1249 = vpop.f32.mrf.mxu0
      %1250 = vmatprep.mubr.f32.mxu0 0.0
      %1251 = vmatmul.mubr.f32.gmra.mxu0 %v800
      %v1252 = vpop.f32.mrf.mxu0
      %v1253 = vadd.f32 0.0, %v1252
      %v1254 = vpop.f32.mrf.mxu0
      %1255 = vmatprep.mubr.f32.mxu0 0.0
      %1256 = vmatmul.mubr.f32.gmra.mxu0 %v1159
      %v1257 = vpop.f32.mrf.mxu0
      %v1258 = vadd.f32 0.0, %v1257
      %v1259 = vpop.f32.mrf.mxu0
      %1260 = vdwg.mxu0
      %v1261 = vadd.f32 %v1143, %v1228
      %v1262 = vadd.f32 %v1144, %v1233
      %v1263 = vadd.f32 %v1145, %v1238
      %v1264 = vadd.f32 %v1146, %v1243
      %v1265 = vadd.f32 %v1147, %v1248
      %v1266 = vadd.f32 %v1148, %v1253
      %v1267 = vadd.f32 %v1149, %v1258
      %s1268 = scalar_lea.vmem %s292, 448
      %v1269 = vld [vmem:[%s1268] sm:$0xff]
      %v1270 = vld [vmem:[%s1268 + $0x8] sm:$0xff]
      %v1271 = vld [vmem:[%s1268 + $0x10] sm:$0xff]
      %v1272 = vld [vmem:[%s1268 + $0x18] sm:$0xff]
      %v1273 = vld [vmem:[%s1268 + $0x20] sm:$0xff]
      %v1274 = vld [vmem:[%s1268 + $0x28] sm:$0xff]
      %v1275 = vld [vmem:[%s1268 + $0x30] sm:$0xff]
      %v1276 = vld [vmem:[%s1268 + $0x38] sm:$0xff]
      %v1278 = vrot.slane %v374, 1
      %v1279 = vsel %vm400, %v919, %v1278
      %v1280 = vsel %vm416, %v1279, 0
      %1282 = vmatprep.subr.mxu0 0.0
      %1283 = vmatpush1.msra.mxu0 0.0
      %1284 = vmatprep.subr.mxu0 0.0
      %1285 = vmatpush1.msra.mxu0 0.0
      %1286 = vmatprep.subr.mxu0 0.0
      %1287 = vmatpush1.msra.mxu0 0.0
      %1288 = vmatprep.subr.mxu0 0.0
      %1289 = vmatpush1.msra.mxu0 0.0
      %1290 = vmatprep.subr.mxu0 0.0
      %1291 = vmatpush1.msra.mxu0 0.0
      %1292 = vmatprep.subr.mxu0 0.0
      %1293 = vmatpush1.msra.mxu0 0.0
      %1294 = vmatprep.subr.mxu0 0.0
      %1295 = vmatpush1.msra.mxu0 0.0
      %1296 = vmatprep.subr.mxu0 0.0
      %1297 = vmatpush1.msra.mxu0 0.0
      %1298 = vmatprep.subr.mxu0 0.0
      %1299 = vmatpush1.msra.mxu0 %v1276
      %1300 = vmatprep.subr.mxu0 0.0
      %1301 = vmatpush1.msra.mxu0 %v1275
      %1302 = vmatprep.subr.mxu0 0.0
      %1303 = vmatpush1.msra.mxu0 %v1274
      %1304 = vmatprep.subr.mxu0 0.0
      %1305 = vmatpush1.msra.mxu0 %v1273
      %1306 = vmatprep.subr.mxu0 0.0
      %1307 = vmatpush1.msra.mxu0 %v1272
      %1308 = vmatprep.subr.mxu0 0.0
      %1309 = vmatpush1.msra.mxu0 %v1271
      %1310 = vmatprep.subr.mxu0 0.0
      %1311 = vmatpush1.msra.mxu0 %v1270
      %1312 = vmatprep.subr.mxu0 0.0
      %1313 = vmatpush1.msra.mxu0 %v1269
      %1314 = vmatprep.subr.mxu0 0.0
      %1315 = vmatpush2.msra.mxu0 0.0
      %1316 = vmatprep.subr.mxu0 0.0
      %1317 = vmatpush2.msra.mxu0 0.0
      %1318 = vmatprep.subr.mxu0 0.0
      %1319 = vmatpush2.msra.mxu0 0.0
      %1320 = vmatprep.subr.mxu0 0.0
      %1321 = vmatpush2.msra.mxu0 0.0
      %1322 = vmatprep.subr.mxu0 0.0
      %1323 = vmatpush2.msra.mxu0 0.0
      %1324 = vmatprep.subr.mxu0 0.0
      %1325 = vmatpush2.msra.mxu0 0.0
      %1326 = vmatprep.subr.mxu0 0.0
      %1327 = vmatpush2.msra.mxu0 0.0
      %1328 = vmatprep.subr.mxu0 0.0
      %1329 = vmatpush2.msra.mxu0 0.0
      %1330 = vmatprep.subr.mxu0 0.0
      %1331 = vmatpush2.msra.mxu0 0.0
      %1332 = vmatprep.subr.mxu0 0.0
      %1333 = vmatpush2.msra.mxu0 0.0
      %1334 = vmatprep.subr.mxu0 0.0
      %1335 = vmatpush2.msra.mxu0 0.0
      %1336 = vmatprep.subr.mxu0 0.0
      %1337 = vmatpush2.msra.mxu0 0.0
      %1338 = vmatprep.subr.mxu0 0.0
      %1339 = vmatpush2.msra.mxu0 0.0
      %1340 = vmatprep.subr.mxu0 0.0
      %1341 = vmatpush2.msra.mxu0 0.0
      %1342 = vmatprep.subr.mxu0 0.0
      %1343 = vmatpush2.msra.mxu0 0.0
      %1344 = vmatprep.subr.mxu0 0.0
      %1345 = vmatpush2.msra.mxu0 0.0
      %1346 = vmatprep.mubr.f32.mxu0 0.0
      %1347 = vmatmul.mubr.f32.gmra.mxu0 %v421
      %v1348 = vpop.f32.mrf.mxu0
      %v1349 = vadd.f32 0.0, %v1348
      %v1350 = vpop.f32.mrf.mxu0
      %1351 = vmatprep.mubr.f32.mxu0 0.0
      %1352 = vmatmul.mubr.f32.gmra.mxu0 %v423
      %v1353 = vpop.f32.mrf.mxu0
      %v1354 = vadd.f32 0.0, %v1353
      %v1355 = vpop.f32.mrf.mxu0
      %1356 = vmatprep.mubr.f32.mxu0 0.0
      %1357 = vmatmul.mubr.f32.gmra.mxu0 %v425
      %v1358 = vpop.f32.mrf.mxu0
      %v1359 = vadd.f32 0.0, %v1358
      %v1360 = vpop.f32.mrf.mxu0
      %1361 = vmatprep.mubr.f32.mxu0 0.0
      %1362 = vmatmul.mubr.f32.gmra.mxu0 %v427
      %v1363 = vpop.f32.mrf.mxu0
      %v1364 = vadd.f32 0.0, %v1363
      %v1365 = vpop.f32.mrf.mxu0
      %1366 = vmatprep.mubr.f32.mxu0 0.0
      %1367 = vmatmul.mubr.f32.gmra.mxu0 %v429
      %v1368 = vpop.f32.mrf.mxu0
      %v1369 = vadd.f32 0.0, %v1368
      %v1370 = vpop.f32.mrf.mxu0
      %1371 = vmatprep.mubr.f32.mxu0 0.0
      %1372 = vmatmul.mubr.f32.gmra.mxu0 %v921
      %v1373 = vpop.f32.mrf.mxu0
      %v1374 = vadd.f32 0.0, %v1373
      %v1375 = vpop.f32.mrf.mxu0
      %1376 = vmatprep.mubr.f32.mxu0 0.0
      %1377 = vmatmul.mubr.f32.gmra.mxu0 %v1280
      %v1378 = vpop.f32.mrf.mxu0
      %v1379 = vadd.f32 0.0, %v1378
      %v1380 = vpop.f32.mrf.mxu0
      %1381 = vdwg.mxu0
      %v1382 = vadd.f32 %v1261, %v1349
      %v1383 = vadd.f32 %v1262, %v1354
      %v1384 = vadd.f32 %v1263, %v1359
      %v1385 = vadd.f32 %v1264, %v1364
      %v1386 = vadd.f32 %v1265, %v1369
      %v1387 = vadd.f32 %v1266, %v1374
      %v1388 = vadd.f32 %v1267, %v1379
      %s1389 = scalar_lea.vmem %s292, 512
      %v1390 = vld [vmem:[%s1389] sm:$0xff]
      %v1391 = vld [vmem:[%s1389 + $0x8] sm:$0xff]
      %v1392 = vld [vmem:[%s1389 + $0x10] sm:$0xff]
      %v1393 = vld [vmem:[%s1389 + $0x18] sm:$0xff]
      %v1394 = vld [vmem:[%s1389 + $0x20] sm:$0xff]
      %v1395 = vld [vmem:[%s1389 + $0x28] sm:$0xff]
      %v1396 = vld [vmem:[%s1389 + $0x30] sm:$0xff]
      %v1397 = vld [vmem:[%s1389 + $0x38] sm:$0xff]
      %v1398 = vrot.slane %v374, 2
      %v1399 = vsel %vm654, %v1039, %v1398
      %v1400 = vsel %vm416, %v1399, 0
      %1402 = vmatprep.subr.mxu0 0.0
      %1403 = vmatpush1.msra.mxu0 0.0
      %1404 = vmatprep.subr.mxu0 0.0
      %1405 = vmatpush1.msra.mxu0 0.0
      %1406 = vmatprep.subr.mxu0 0.0
      %1407 = vmatpush1.msra.mxu0 0.0
      %1408 = vmatprep.subr.mxu0 0.0
      %1409 = vmatpush1.msra.mxu0 0.0
      %1410 = vmatprep.subr.mxu0 0.0
      %1411 = vmatpush1.msra.mxu0 0.0
      %1412 = vmatprep.subr.mxu0 0.0
      %1413 = vmatpush1.msra.mxu0 0.0
      %1414 = vmatprep.subr.mxu0 0.0
      %1415 = vmatpush1.msra.mxu0 0.0
      %1416 = vmatprep.subr.mxu0 0.0
      %1417 = vmatpush1.msra.mxu0 0.0
      %1418 = vmatprep.subr.mxu0 0.0
      %1419 = vmatpush1.msra.mxu0 %v1397
      %1420 = vmatprep.subr.mxu0 0.0
      %1421 = vmatpush1.msra.mxu0 %v1396
      %1422 = vmatprep.subr.mxu0 0.0
      %1423 = vmatpush1.msra.mxu0 %v1395
      %1424 = vmatprep.subr.mxu0 0.0
      %1425 = vmatpush1.msra.mxu0 %v1394
      %1426 = vmatprep.subr.mxu0 0.0
      %1427 = vmatpush1.msra.mxu0 %v1393
      %1428 = vmatprep.subr.mxu0 0.0
      %1429 = vmatpush1.msra.mxu0 %v1392
      %1430 = vmatprep.subr.mxu0 0.0
      %1431 = vmatpush1.msra.mxu0 %v1391
      %1432 = vmatprep.subr.mxu0 0.0
      %1433 = vmatpush1.msra.mxu0 %v1390
      %1434 = vmatprep.subr.mxu0 0.0
      %1435 = vmatpush2.msra.mxu0 0.0
      %1436 = vmatprep.subr.mxu0 0.0
      %1437 = vmatpush2.msra.mxu0 0.0
      %1438 = vmatprep.subr.mxu0 0.0
      %1439 = vmatpush2.msra.mxu0 0.0
      %1440 = vmatprep.subr.mxu0 0.0
      %1441 = vmatpush2.msra.mxu0 0.0
      %1442 = vmatprep.subr.mxu0 0.0
      %1443 = vmatpush2.msra.mxu0 0.0
      %1444 = vmatprep.subr.mxu0 0.0
      %1445 = vmatpush2.msra.mxu0 0.0
      %1446 = vmatprep.subr.mxu0 0.0
      %1447 = vmatpush2.msra.mxu0 0.0
      %1448 = vmatprep.subr.mxu0 0.0
      %1449 = vmatpush2.msra.mxu0 0.0
      %1450 = vmatprep.subr.mxu0 0.0
      %1451 = vmatpush2.msra.mxu0 0.0
      %1452 = vmatprep.subr.mxu0 0.0
      %1453 = vmatpush2.msra.mxu0 0.0
      %1454 = vmatprep.subr.mxu0 0.0
      %1455 = vmatpush2.msra.mxu0 0.0
      %1456 = vmatprep.subr.mxu0 0.0
      %1457 = vmatpush2.msra.mxu0 0.0
      %1458 = vmatprep.subr.mxu0 0.0
      %1459 = vmatpush2.msra.mxu0 0.0
      %1460 = vmatprep.subr.mxu0 0.0
      %1461 = vmatpush2.msra.mxu0 0.0
      %1462 = vmatprep.subr.mxu0 0.0
      %1463 = vmatpush2.msra.mxu0 0.0
      %1464 = vmatprep.subr.mxu0 0.0
      %1465 = vmatpush2.msra.mxu0 0.0
      %1466 = vmatprep.mubr.f32.mxu0 0.0
      %1467 = vmatmul.mubr.f32.gmra.mxu0 %v674
      %v1468 = vpop.f32.mrf.mxu0
      %v1469 = vadd.f32 0.0, %v1468
      %v1470 = vpop.f32.mrf.mxu0
      %1471 = vmatprep.mubr.f32.mxu0 0.0
      %1472 = vmatmul.mubr.f32.gmra.mxu0 %v676
      %v1473 = vpop.f32.mrf.mxu0
      %v1474 = vadd.f32 0.0, %v1473
      %v1475 = vpop.f32.mrf.mxu0
      %1476 = vmatprep.mubr.f32.mxu0 0.0
      %1477 = vmatmul.mubr.f32.gmra.mxu0 %v678
      %v1478 = vpop.f32.mrf.mxu0
      %v1479 = vadd.f32 0.0, %v1478
      %v1480 = vpop.f32.mrf.mxu0
      %1481 = vmatprep.mubr.f32.mxu0 0.0
      %1482 = vmatmul.mubr.f32.gmra.mxu0 %v680
      %v1483 = vpop.f32.mrf.mxu0
      %v1484 = vadd.f32 0.0, %v1483
      %v1485 = vpop.f32.mrf.mxu0
      %1486 = vmatprep.mubr.f32.mxu0 0.0
      %1487 = vmatmul.mubr.f32.gmra.mxu0 %v682
      %v1488 = vpop.f32.mrf.mxu0
      %v1489 = vadd.f32 0.0, %v1488
      %v1490 = vpop.f32.mrf.mxu0
      %1491 = vmatprep.mubr.f32.mxu0 0.0
      %1492 = vmatmul.mubr.f32.gmra.mxu0 %v1041
      %v1493 = vpop.f32.mrf.mxu0
      %v1494 = vadd.f32 0.0, %v1493
      %v1495 = vpop.f32.mrf.mxu0
      %1496 = vmatprep.mubr.f32.mxu0 0.0
      %1497 = vmatmul.mubr.f32.gmra.mxu0 %v1400
      %v1498 = vpop.f32.mrf.mxu0
      %v1499 = vadd.f32 0.0, %v1498
      %v1500 = vpop.f32.mrf.mxu0
      %1501 = vdwg.mxu0
      %v1502 = vadd.f32 %v1382, %v1469
      %v1503 = vadd.f32 %v1383, %v1474
      %v1504 = vadd.f32 %v1384, %v1479
      %v1505 = vadd.f32 %v1385, %v1484
      %v1506 = vadd.f32 %v1386, %v1489
      %v1507 = vadd.f32 %v1387, %v1494
      %v1508 = vadd.f32 %v1388, %v1499
      %s1509 = scalar_lea.vmem %s292, 576
      %v1510 = vld [vmem:[%s1509] sm:$0xff]
      %v1511 = vld [vmem:[%s1509 + $0x8] sm:$0xff]
      %v1512 = vld [vmem:[%s1509 + $0x10] sm:$0xff]
      %v1513 = vld [vmem:[%s1509 + $0x18] sm:$0xff]
      %v1514 = vld [vmem:[%s1509 + $0x20] sm:$0xff]
      %v1515 = vld [vmem:[%s1509 + $0x28] sm:$0xff]
      %v1516 = vld [vmem:[%s1509 + $0x30] sm:$0xff]
      %v1517 = vld [vmem:[%s1509 + $0x38] sm:$0xff]
      %s1518 = scalar_lea.vmem %s292, 640
      %v1519 = vld [vmem:[%s1518] sm:$0xff]
      %v1520 = vld [vmem:[%s1518 + $0x8] sm:$0xff]
      %v1521 = vld [vmem:[%s1518 + $0x10] sm:$0xff]
      %v1522 = vld [vmem:[%s1518 + $0x18] sm:$0xff]
      %v1523 = vld [vmem:[%s1518 + $0x20] sm:$0xff]
      %v1524 = vld [vmem:[%s1518 + $0x28] sm:$0xff]
      %v1525 = vld [vmem:[%s1518 + $0x30] sm:$0xff]
      %v1526 = vld [vmem:[%s1518 + $0x38] sm:$0xff]
      %1527 = vrot.lane.b32.xlu0 %v403, 64
      %v1528 = vpop.permute.xlu0 %1527
      %1529 = vrot.lane.b32.xlu0 %v405, 64
      %v1530 = vpop.permute.xlu0 %1529
      %1531 = vrot.lane.b32.xlu0 %v407, 64
      %v1532 = vpop.permute.xlu0 %1531
      %1533 = vrot.lane.b32.xlu0 %v409, 64
      %v1534 = vpop.permute.xlu0 %1533
      %1535 = vrot.lane.b32.xlu0 %v411, 64
      %v1536 = vpop.permute.xlu0 %1535
      %1537 = vrot.lane.b32.xlu0 %v413, 64
      %v1538 = vpop.permute.xlu0 %1537
      %1539 = vrot.lane.b32.xlu0 %v415, 64
      %v1540 = vpop.permute.xlu0 %1539
      %v1541 = vsel %vm416, %v1528, 0
      %v1543 = vsel %vm416, %v1530, 0
      %v1545 = vsel %vm416, %v1532, 0
      %v1547 = vsel %vm416, %v1534, 0
      %v1549 = vsel %vm416, %v1536, 0
      %v1551 = vsel %vm416, %v1538, 0
      %v1553 = vsel %vm416, %v1540, 0
      %1555 = vmatprep.subr.mxu0 0.0
      %1556 = vmatpush1.msra.mxu0 0.0
      %1557 = vmatprep.subr.mxu0 0.0
      %1558 = vmatpush1.msra.mxu0 0.0
      %1559 = vmatprep.subr.mxu0 0.0
      %1560 = vmatpush1.msra.mxu0 0.0
      %1561 = vmatprep.subr.mxu0 0.0
      %1562 = vmatpush1.msra.mxu0 0.0
      %1563 = vmatprep.subr.mxu0 0.0
      %1564 = vmatpush1.msra.mxu0 0.0
      %1565 = vmatprep.subr.mxu0 0.0
      %1566 = vmatpush1.msra.mxu0 0.0
      %1567 = vmatprep.subr.mxu0 0.0
      %1568 = vmatpush1.msra.mxu0 0.0
      %1569 = vmatprep.subr.mxu0 0.0
      %1570 = vmatpush1.msra.mxu0 0.0
      %1571 = vmatprep.subr.mxu0 0.0
      %1572 = vmatpush1.msra.mxu0 %v1526
      %1573 = vmatprep.subr.mxu0 0.0
      %1574 = vmatpush1.msra.mxu0 %v1525
      %1575 = vmatprep.subr.mxu0 0.0
      %1576 = vmatpush1.msra.mxu0 %v1524
      %1577 = vmatprep.subr.mxu0 0.0
      %1578 = vmatpush1.msra.mxu0 %v1523
      %1579 = vmatprep.subr.mxu0 0.0
      %1580 = vmatpush1.msra.mxu0 %v1522
      %1581 = vmatprep.subr.mxu0 0.0
      %1582 = vmatpush1.msra.mxu0 %v1521
      %1583 = vmatprep.subr.mxu0 0.0
      %1584 = vmatpush1.msra.mxu0 %v1520
      %1585 = vmatprep.subr.mxu0 0.0
      %1586 = vmatpush1.msra.mxu0 %v1519
      %1587 = vmatprep.subr.mxu0 0.0
      %1588 = vmatpush2.msra.mxu0 0.0
      %1589 = vmatprep.subr.mxu0 0.0
      %1590 = vmatpush2.msra.mxu0 0.0
      %1591 = vmatprep.subr.mxu0 0.0
      %1592 = vmatpush2.msra.mxu0 0.0
      %1593 = vmatprep.subr.mxu0 0.0
      %1594 = vmatpush2.msra.mxu0 0.0
      %1595 = vmatprep.subr.mxu0 0.0
      %1596 = vmatpush2.msra.mxu0 0.0
      %1597 = vmatprep.subr.mxu0 0.0
      %1598 = vmatpush2.msra.mxu0 0.0
      %1599 = vmatprep.subr.mxu0 0.0
      %1600 = vmatpush2.msra.mxu0 0.0
      %1601 = vmatprep.subr.mxu0 0.0
      %1602 = vmatpush2.msra.mxu0 0.0
      %1603 = vmatprep.subr.mxu0 0.0
      %1604 = vmatpush2.msra.mxu0 0.0
      %1605 = vmatprep.subr.mxu0 0.0
      %1606 = vmatpush2.msra.mxu0 0.0
      %1607 = vmatprep.subr.mxu0 0.0
      %1608 = vmatpush2.msra.mxu0 0.0
      %1609 = vmatprep.subr.mxu0 0.0
      %1610 = vmatpush2.msra.mxu0 0.0
      %1611 = vmatprep.subr.mxu0 0.0
      %1612 = vmatpush2.msra.mxu0 0.0
      %1613 = vmatprep.subr.mxu0 0.0
      %1614 = vmatpush2.msra.mxu0 0.0
      %1615 = vmatprep.subr.mxu0 0.0
      %1616 = vmatpush2.msra.mxu0 0.0
      %1617 = vmatprep.subr.mxu0 0.0
      %1618 = vmatpush2.msra.mxu0 0.0
      %1619 = vmatprep.mubr.f32.mxu0 0.0
      %1620 = vmatmul.mubr.f32.gmra.mxu0 %v1541
      %v1621 = vpop.f32.mrf.mxu0
      %v1622 = vadd.f32 0.0, %v1621
      %v1623 = vpop.f32.mrf.mxu0
      %1624 = vmatprep.mubr.f32.mxu0 0.0
      %1625 = vmatmul.mubr.f32.gmra.mxu0 %v1543
      %v1626 = vpop.f32.mrf.mxu0
      %v1627 = vadd.f32 0.0, %v1626
      %v1628 = vpop.f32.mrf.mxu0
      %1629 = vmatprep.mubr.f32.mxu0 0.0
      %1630 = vmatmul.mubr.f32.gmra.mxu0 %v1545
      %v1631 = vpop.f32.mrf.mxu0
      %v1632 = vadd.f32 0.0, %v1631
      %v1633 = vpop.f32.mrf.mxu0
      %1634 = vmatprep.mubr.f32.mxu0 0.0
      %1635 = vmatmul.mubr.f32.gmra.mxu0 %v1547
      %v1636 = vpop.f32.mrf.mxu0
      %v1637 = vadd.f32 0.0, %v1636
      %v1638 = vpop.f32.mrf.mxu0
      %1639 = vmatprep.mubr.f32.mxu0 0.0
      %1640 = vmatmul.mubr.f32.gmra.mxu0 %v1549
      %v1641 = vpop.f32.mrf.mxu0
      %v1642 = vadd.f32 0.0, %v1641
      %v1643 = vpop.f32.mrf.mxu0
      %1644 = vmatprep.mubr.f32.mxu0 0.0
      %1645 = vmatmul.mubr.f32.gmra.mxu0 %v1551
      %v1646 = vpop.f32.mrf.mxu0
      %v1647 = vadd.f32 0.0, %v1646
      %v1648 = vpop.f32.mrf.mxu0
      %1649 = vmatprep.mubr.f32.mxu0 0.0
      %1650 = vmatmul.mubr.f32.gmra.mxu0 %v1553
      %v1651 = vpop.f32.mrf.mxu0
      %v1652 = vadd.f32 0.0, %v1651
      %v1653 = vpop.f32.mrf.mxu0
      %1654 = vdwg.mxu0
      %1655 = vrot.lane.b32.xlu0 %v365, 64
      %v1656 = vpop.permute.xlu0 %1655
      %1657 = vrot.lane.b32.xlu0 %v366, 64
      %v1658 = vpop.permute.xlu0 %1657
      %1659 = vrot.lane.b32.xlu0 %v367, 64
      %v1660 = vpop.permute.xlu0 %1659
      %1661 = vrot.lane.b32.xlu0 %v368, 64
      %v1662 = vpop.permute.xlu0 %1661
      %1663 = vrot.lane.b32.xlu0 %v369, 64
      %v1664 = vpop.permute.xlu0 %1663
      %1665 = vrot.lane.b32.xlu0 %v370, 64
      %v1666 = vpop.permute.xlu0 %1665
      %1667 = vrot.lane.b32.xlu0 %v371, 64
      %v1668 = vpop.permute.xlu0 %1667
      %v1669 = vsel %vm416, %v1656, 0
      %v1671 = vsel %vm416, %v1658, 0
      %v1673 = vsel %vm416, %v1660, 0
      %v1675 = vsel %vm416, %v1662, 0
      %v1677 = vsel %vm416, %v1664, 0
      %v1679 = vsel %vm416, %v1666, 0
      %v1681 = vsel %vm416, %v1668, 0
      %1683 = vmatprep.subr.mxu0 0.0
      %1684 = vmatpush1.msra.mxu0 0.0
      %1685 = vmatprep.subr.mxu0 0.0
      %1686 = vmatpush1.msra.mxu0 0.0
      %1687 = vmatprep.subr.mxu0 0.0
      %1688 = vmatpush1.msra.mxu0 0.0
      %1689 = vmatprep.subr.mxu0 0.0
      %1690 = vmatpush1.msra.mxu0 0.0
      %1691 = vmatprep.subr.mxu0 0.0
      %1692 = vmatpush1.msra.mxu0 0.0
      %1693 = vmatprep.subr.mxu0 0.0
      %1694 = vmatpush1.msra.mxu0 0.0
      %1695 = vmatprep.subr.mxu0 0.0
      %1696 = vmatpush1.msra.mxu0 0.0
      %1697 = vmatprep.subr.mxu0 0.0
      %1698 = vmatpush1.msra.mxu0 0.0
      %1699 = vmatprep.subr.mxu0 0.0
      %1700 = vmatpush1.msra.mxu0 %v1517
      %1701 = vmatprep.subr.mxu0 0.0
      %1702 = vmatpush1.msra.mxu0 %v1516
      %1703 = vmatprep.subr.mxu0 0.0
      %1704 = vmatpush1.msra.mxu0 %v1515
      %1705 = vmatprep.subr.mxu0 0.0
      %1706 = vmatpush1.msra.mxu0 %v1514
      %1707 = vmatprep.subr.mxu0 0.0
      %1708 = vmatpush1.msra.mxu0 %v1513
      %1709 = vmatprep.subr.mxu0 0.0
      %1710 = vmatpush1.msra.mxu0 %v1512
      %1711 = vmatprep.subr.mxu0 0.0
      %1712 = vmatpush1.msra.mxu0 %v1511
      %1713 = vmatprep.subr.mxu0 0.0
      %1714 = vmatpush1.msra.mxu0 %v1510
      %1715 = vmatprep.subr.mxu0 0.0
      %1716 = vmatpush2.msra.mxu0 0.0
      %1717 = vmatprep.subr.mxu0 0.0
      %1718 = vmatpush2.msra.mxu0 0.0
      %1719 = vmatprep.subr.mxu0 0.0
      %1720 = vmatpush2.msra.mxu0 0.0
      %1721 = vmatprep.subr.mxu0 0.0
      %1722 = vmatpush2.msra.mxu0 0.0
      %1723 = vmatprep.subr.mxu0 0.0
      %1724 = vmatpush2.msra.mxu0 0.0
      %1725 = vmatprep.subr.mxu0 0.0
      %1726 = vmatpush2.msra.mxu0 0.0
      %1727 = vmatprep.subr.mxu0 0.0
      %1728 = vmatpush2.msra.mxu0 0.0
      %1729 = vmatprep.subr.mxu0 0.0
      %1730 = vmatpush2.msra.mxu0 0.0
      %1731 = vmatprep.subr.mxu0 0.0
      %1732 = vmatpush2.msra.mxu0 0.0
      %1733 = vmatprep.subr.mxu0 0.0
      %1734 = vmatpush2.msra.mxu0 0.0
      %1735 = vmatprep.subr.mxu0 0.0
      %1736 = vmatpush2.msra.mxu0 0.0
      %1737 = vmatprep.subr.mxu0 0.0
      %1738 = vmatpush2.msra.mxu0 0.0
      %1739 = vmatprep.subr.mxu0 0.0
      %1740 = vmatpush2.msra.mxu0 0.0
      %1741 = vmatprep.subr.mxu0 0.0
      %1742 = vmatpush2.msra.mxu0 0.0
      %1743 = vmatprep.subr.mxu0 0.0
      %1744 = vmatpush2.msra.mxu0 0.0
      %1745 = vmatprep.subr.mxu0 0.0
      %1746 = vmatpush2.msra.mxu0 0.0
      %1747 = vmatprep.mubr.f32.mxu0 0.0
      %1748 = vmatmul.mubr.f32.gmra.mxu0 %v1669
      %v1749 = vpop.f32.mrf.mxu0
      %v1750 = vadd.f32 %v1622, %v1749
      %v1751 = vpop.f32.mrf.mxu0
      %1752 = vmatprep.mubr.f32.mxu0 0.0
      %1753 = vmatmul.mubr.f32.gmra.mxu0 %v1671
      %v1754 = vpop.f32.mrf.mxu0
      %v1755 = vadd.f32 %v1627, %v1754
      %v1756 = vpop.f32.mrf.mxu0
      %1757 = vmatprep.mubr.f32.mxu0 0.0
      %1758 = vmatmul.mubr.f32.gmra.mxu0 %v1673
      %v1759 = vpop.f32.mrf.mxu0
      %v1760 = vadd.f32 %v1632, %v1759
      %v1761 = vpop.f32.mrf.mxu0
      %1762 = vmatprep.mubr.f32.mxu0 0.0
      %1763 = vmatmul.mubr.f32.gmra.mxu0 %v1675
      %v1764 = vpop.f32.mrf.mxu0
      %v1765 = vadd.f32 %v1637, %v1764
      %v1766 = vpop.f32.mrf.mxu0
      %1767 = vmatprep.mubr.f32.mxu0 0.0
      %1768 = vmatmul.mubr.f32.gmra.mxu0 %v1677
      %v1769 = vpop.f32.mrf.mxu0
      %v1770 = vadd.f32 %v1642, %v1769
      %v1771 = vpop.f32.mrf.mxu0
      %1772 = vmatprep.mubr.f32.mxu0 0.0
      %1773 = vmatmul.mubr.f32.gmra.mxu0 %v1679
      %v1774 = vpop.f32.mrf.mxu0
      %v1775 = vadd.f32 %v1647, %v1774
      %v1776 = vpop.f32.mrf.mxu0
      %1777 = vmatprep.mubr.f32.mxu0 0.0
      %1778 = vmatmul.mubr.f32.gmra.mxu0 %v1681
      %v1779 = vpop.f32.mrf.mxu0
      %v1780 = vadd.f32 %v1652, %v1779
      %v1781 = vpop.f32.mrf.mxu0
      %1782 = vdwg.mxu0
      %s1783 = scalar_lea.vmem %s292, 704
      %v1784 = vld [vmem:[%s1783] sm:$0xff]
      %v1785 = vld [vmem:[%s1783 + $0x8] sm:$0xff]
      %v1786 = vld [vmem:[%s1783 + $0x10] sm:$0xff]
      %v1787 = vld [vmem:[%s1783 + $0x18] sm:$0xff]
      %v1788 = vld [vmem:[%s1783 + $0x20] sm:$0xff]
      %v1789 = vld [vmem:[%s1783 + $0x28] sm:$0xff]
      %v1790 = vld [vmem:[%s1783 + $0x30] sm:$0xff]
      %v1791 = vld [vmem:[%s1783 + $0x38] sm:$0xff]
      %1792 = vrot.lane.b32.xlu0 %v657, 64
      %v1793 = vpop.permute.xlu0 %1792
      %1794 = vrot.lane.b32.xlu0 %v659, 64
      %v1795 = vpop.permute.xlu0 %1794
      %1796 = vrot.lane.b32.xlu0 %v661, 64
      %v1797 = vpop.permute.xlu0 %1796
      %1798 = vrot.lane.b32.xlu0 %v663, 64
      %v1799 = vpop.permute.xlu0 %1798
      %1800 = vrot.lane.b32.xlu0 %v665, 64
      %v1801 = vpop.permute.xlu0 %1800
      %1802 = vrot.lane.b32.xlu0 %v667, 64
      %v1803 = vpop.permute.xlu0 %1802
      %1804 = vrot.lane.b32.xlu0 %v669, 64
      %v1805 = vpop.permute.xlu0 %1804
      %v1806 = vsel %vm416, %v1793, 0
      %v1808 = vsel %vm416, %v1795, 0
      %v1810 = vsel %vm416, %v1797, 0
      %v1812 = vsel %vm416, %v1799, 0
      %v1814 = vsel %vm416, %v1801, 0
      %v1816 = vsel %vm416, %v1803, 0
      %v1818 = vsel %vm416, %v1805, 0
      %1820 = vmatprep.subr.mxu0 0.0
      %1821 = vmatpush1.msra.mxu0 0.0
      %1822 = vmatprep.subr.mxu0 0.0
      %1823 = vmatpush1.msra.mxu0 0.0
      %1824 = vmatprep.subr.mxu0 0.0
      %1825 = vmatpush1.msra.mxu0 0.0
      %1826 = vmatprep.subr.mxu0 0.0
      %1827 = vmatpush1.msra.mxu0 0.0
      %1828 = vmatprep.subr.mxu0 0.0
      %1829 = vmatpush1.msra.mxu0 0.0
      %1830 = vmatprep.subr.mxu0 0.0
      %1831 = vmatpush1.msra.mxu0 0.0
      %1832 = vmatprep.subr.mxu0 0.0
      %1833 = vmatpush1.msra.mxu0 0.0
      %1834 = vmatprep.subr.mxu0 0.0
      %1835 = vmatpush1.msra.mxu0 0.0
      %1836 = vmatprep.subr.mxu0 0.0
      %1837 = vmatpush1.msra.mxu0 %v1791
      %1838 = vmatprep.subr.mxu0 0.0
      %1839 = vmatpush1.msra.mxu0 %v1790
      %1840 = vmatprep.subr.mxu0 0.0
      %1841 = vmatpush1.msra.mxu0 %v1789
      %1842 = vmatprep.subr.mxu0 0.0
      %1843 = vmatpush1.msra.mxu0 %v1788
      %1844 = vmatprep.subr.mxu0 0.0
      %1845 = vmatpush1.msra.mxu0 %v1787
      %1846 = vmatprep.subr.mxu0 0.0
      %1847 = vmatpush1.msra.mxu0 %v1786
      %1848 = vmatprep.subr.mxu0 0.0
      %1849 = vmatpush1.msra.mxu0 %v1785
      %1850 = vmatprep.subr.mxu0 0.0
      %1851 = vmatpush1.msra.mxu0 %v1784
      %1852 = vmatprep.subr.mxu0 0.0
      %1853 = vmatpush2.msra.mxu0 0.0
      %1854 = vmatprep.subr.mxu0 0.0
      %1855 = vmatpush2.msra.mxu0 0.0
      %1856 = vmatprep.subr.mxu0 0.0
      %1857 = vmatpush2.msra.mxu0 0.0
      %1858 = vmatprep.subr.mxu0 0.0
      %1859 = vmatpush2.msra.mxu0 0.0
      %1860 = vmatprep.subr.mxu0 0.0
      %1861 = vmatpush2.msra.mxu0 0.0
      %1862 = vmatprep.subr.mxu0 0.0
      %1863 = vmatpush2.msra.mxu0 0.0
      %1864 = vmatprep.subr.mxu0 0.0
      %1865 = vmatpush2.msra.mxu0 0.0
      %1866 = vmatprep.subr.mxu0 0.0
      %1867 = vmatpush2.msra.mxu0 0.0
      %1868 = vmatprep.subr.mxu0 0.0
      %1869 = vmatpush2.msra.mxu0 0.0
      %1870 = vmatprep.subr.mxu0 0.0
      %1871 = vmatpush2.msra.mxu0 0.0
      %1872 = vmatprep.subr.mxu0 0.0
      %1873 = vmatpush2.msra.mxu0 0.0
      %1874 = vmatprep.subr.mxu0 0.0
      %1875 = vmatpush2.msra.mxu0 0.0
      %1876 = vmatprep.subr.mxu0 0.0
      %1877 = vmatpush2.msra.mxu0 0.0
      %1878 = vmatprep.subr.mxu0 0.0
      %1879 = vmatpush2.msra.mxu0 0.0
      %1880 = vmatprep.subr.mxu0 0.0
      %1881 = vmatpush2.msra.mxu0 0.0
      %1882 = vmatprep.subr.mxu0 0.0
      %1883 = vmatpush2.msra.mxu0 0.0
      %1884 = vmatprep.mubr.f32.mxu0 0.0
      %1885 = vmatmul.mubr.f32.gmra.mxu0 %v1806
      %v1886 = vpop.f32.mrf.mxu0
      %v1887 = vadd.f32 0.0, %v1886
      %v1888 = vpop.f32.mrf.mxu0
      %1889 = vmatprep.mubr.f32.mxu0 0.0
      %1890 = vmatmul.mubr.f32.gmra.mxu0 %v1808
      %v1891 = vpop.f32.mrf.mxu0
      %v1892 = vadd.f32 0.0, %v1891
      %v1893 = vpop.f32.mrf.mxu0
      %1894 = vmatprep.mubr.f32.mxu0 0.0
      %1895 = vmatmul.mubr.f32.gmra.mxu0 %v1810
      %v1896 = vpop.f32.mrf.mxu0
      %v1897 = vadd.f32 0.0, %v1896
      %v1898 = vpop.f32.mrf.mxu0
      %1899 = vmatprep.mubr.f32.mxu0 0.0
      %1900 = vmatmul.mubr.f32.gmra.mxu0 %v1812
      %v1901 = vpop.f32.mrf.mxu0
      %v1902 = vadd.f32 0.0, %v1901
      %v1903 = vpop.f32.mrf.mxu0
      %1904 = vmatprep.mubr.f32.mxu0 0.0
      %1905 = vmatmul.mubr.f32.gmra.mxu0 %v1814
      %v1906 = vpop.f32.mrf.mxu0
      %v1907 = vadd.f32 0.0, %v1906
      %v1908 = vpop.f32.mrf.mxu0
      %1909 = vmatprep.mubr.f32.mxu0 0.0
      %1910 = vmatmul.mubr.f32.gmra.mxu0 %v1816
      %v1911 = vpop.f32.mrf.mxu0
      %v1912 = vadd.f32 0.0, %v1911
      %v1913 = vpop.f32.mrf.mxu0
      %1914 = vmatprep.mubr.f32.mxu0 0.0
      %1915 = vmatmul.mubr.f32.gmra.mxu0 %v1818
      %v1916 = vpop.f32.mrf.mxu0
      %v1917 = vadd.f32 0.0, %v1916
      %v1918 = vpop.f32.mrf.mxu0
      %1919 = vdwg.mxu0
      %v1920 = vadd.f32 %v1750, %v1887
      %v1921 = vadd.f32 %v1755, %v1892
      %v1922 = vadd.f32 %v1760, %v1897
      %v1923 = vadd.f32 %v1765, %v1902
      %v1924 = vadd.f32 %v1770, %v1907
      %v1925 = vadd.f32 %v1775, %v1912
      %v1926 = vadd.f32 %v1780, %v1917
      %s1927 = scalar_lea.vmem %s292, 768
      %v1928 = vld [vmem:[%s1927] sm:$0xff]
      %v1929 = vld [vmem:[%s1927 + $0x8] sm:$0xff]
      %v1930 = vld [vmem:[%s1927 + $0x10] sm:$0xff]
      %v1931 = vld [vmem:[%s1927 + $0x18] sm:$0xff]
      %v1932 = vld [vmem:[%s1927 + $0x20] sm:$0xff]
      %v1933 = vld [vmem:[%s1927 + $0x28] sm:$0xff]
      %v1934 = vld [vmem:[%s1927 + $0x30] sm:$0xff]
      %v1935 = vld [vmem:[%s1927 + $0x38] sm:$0xff]
      %1936 = vrot.lane.b32.xlu0 %v372, 64
      %v1937 = vpop.permute.xlu0 %1936
      %v1938 = vsel %vm416, %v1937, 0
      %1940 = vmatprep.subr.mxu0 0.0
      %1941 = vmatpush1.msra.mxu0 0.0
      %1942 = vmatprep.subr.mxu0 0.0
      %1943 = vmatpush1.msra.mxu0 0.0
      %1944 = vmatprep.subr.mxu0 0.0
      %1945 = vmatpush1.msra.mxu0 0.0
      %1946 = vmatprep.subr.mxu0 0.0
      %1947 = vmatpush1.msra.mxu0 0.0
      %1948 = vmatprep.subr.mxu0 0.0
      %1949 = vmatpush1.msra.mxu0 0.0
      %1950 = vmatprep.subr.mxu0 0.0
      %1951 = vmatpush1.msra.mxu0 0.0
      %1952 = vmatprep.subr.mxu0 0.0
      %1953 = vmatpush1.msra.mxu0 0.0
      %1954 = vmatprep.subr.mxu0 0.0
      %1955 = vmatpush1.msra.mxu0 0.0
      %1956 = vmatprep.subr.mxu0 0.0
      %1957 = vmatpush1.msra.mxu0 %v1935
      %1958 = vmatprep.subr.mxu0 0.0
      %1959 = vmatpush1.msra.mxu0 %v1934
      %1960 = vmatprep.subr.mxu0 0.0
      %1961 = vmatpush1.msra.mxu0 %v1933
      %1962 = vmatprep.subr.mxu0 0.0
      %1963 = vmatpush1.msra.mxu0 %v1932
      %1964 = vmatprep.subr.mxu0 0.0
      %1965 = vmatpush1.msra.mxu0 %v1931
      %1966 = vmatprep.subr.mxu0 0.0
      %1967 = vmatpush1.msra.mxu0 %v1930
      %1968 = vmatprep.subr.mxu0 0.0
      %1969 = vmatpush1.msra.mxu0 %v1929
      %1970 = vmatprep.subr.mxu0 0.0
      %1971 = vmatpush1.msra.mxu0 %v1928
      %1972 = vmatprep.subr.mxu0 0.0
      %1973 = vmatpush2.msra.mxu0 0.0
      %1974 = vmatprep.subr.mxu0 0.0
      %1975 = vmatpush2.msra.mxu0 0.0
      %1976 = vmatprep.subr.mxu0 0.0
      %1977 = vmatpush2.msra.mxu0 0.0
      %1978 = vmatprep.subr.mxu0 0.0
      %1979 = vmatpush2.msra.mxu0 0.0
      %1980 = vmatprep.subr.mxu0 0.0
      %1981 = vmatpush2.msra.mxu0 0.0
      %1982 = vmatprep.subr.mxu0 0.0
      %1983 = vmatpush2.msra.mxu0 0.0
      %1984 = vmatprep.subr.mxu0 0.0
      %1985 = vmatpush2.msra.mxu0 0.0
      %1986 = vmatprep.subr.mxu0 0.0
      %1987 = vmatpush2.msra.mxu0 0.0
      %1988 = vmatprep.subr.mxu0 0.0
      %1989 = vmatpush2.msra.mxu0 0.0
      %1990 = vmatprep.subr.mxu0 0.0
      %1991 = vmatpush2.msra.mxu0 0.0
      %1992 = vmatprep.subr.mxu0 0.0
      %1993 = vmatpush2.msra.mxu0 0.0
      %1994 = vmatprep.subr.mxu0 0.0
      %1995 = vmatpush2.msra.mxu0 0.0
      %1996 = vmatprep.subr.mxu0 0.0
      %1997 = vmatpush2.msra.mxu0 0.0
      %1998 = vmatprep.subr.mxu0 0.0
      %1999 = vmatpush2.msra.mxu0 0.0
      %2000 = vmatprep.subr.mxu0 0.0
      %2001 = vmatpush2.msra.mxu0 0.0
      %2002 = vmatprep.subr.mxu0 0.0
      %2003 = vmatpush2.msra.mxu0 0.0
      %2004 = vmatprep.mubr.f32.mxu0 0.0
      %2005 = vmatmul.mubr.f32.gmra.mxu0 %v1671
      %v2006 = vpop.f32.mrf.mxu0
      %v2007 = vadd.f32 0.0, %v2006
      %v2008 = vpop.f32.mrf.mxu0
      %2009 = vmatprep.mubr.f32.mxu0 0.0
      %2010 = vmatmul.mubr.f32.gmra.mxu0 %v1673
      %v2011 = vpop.f32.mrf.mxu0
      %v2012 = vadd.f32 0.0, %v2011
      %v2013 = vpop.f32.mrf.mxu0
      %2014 = vmatprep.mubr.f32.mxu0 0.0
      %2015 = vmatmul.mubr.f32.gmra.mxu0 %v1675
      %v2016 = vpop.f32.mrf.mxu0
      %v2017 = vadd.f32 0.0, %v2016
      %v2018 = vpop.f32.mrf.mxu0
      %2019 = vmatprep.mubr.f32.mxu0 0.0
      %2020 = vmatmul.mubr.f32.gmra.mxu0 %v1677
      %v2021 = vpop.f32.mrf.mxu0
      %v2022 = vadd.f32 0.0, %v2021
      %v2023 = vpop.f32.mrf.mxu0
      %2024 = vmatprep.mubr.f32.mxu0 0.0
      %2025 = vmatmul.mubr.f32.gmra.mxu0 %v1679
      %v2026 = vpop.f32.mrf.mxu0
      %v2027 = vadd.f32 0.0, %v2026
      %v2028 = vpop.f32.mrf.mxu0
      %2029 = vmatprep.mubr.f32.mxu0 0.0
      %2030 = vmatmul.mubr.f32.gmra.mxu0 %v1681
      %v2031 = vpop.f32.mrf.mxu0
      %v2032 = vadd.f32 0.0, %v2031
      %v2033 = vpop.f32.mrf.mxu0
      %2034 = vmatprep.mubr.f32.mxu0 0.0
      %2035 = vmatmul.mubr.f32.gmra.mxu0 %v1938
      %v2036 = vpop.f32.mrf.mxu0
      %v2037 = vadd.f32 0.0, %v2036
      %v2038 = vpop.f32.mrf.mxu0
      %2039 = vdwg.mxu0
      %v2040 = vadd.f32 %v1920, %v2007
      %v2041 = vadd.f32 %v1921, %v2012
      %v2042 = vadd.f32 %v1922, %v2017
      %v2043 = vadd.f32 %v1923, %v2022
      %v2044 = vadd.f32 %v1924, %v2027
      %v2045 = vadd.f32 %v1925, %v2032
      %v2046 = vadd.f32 %v1926, %v2037
      %s2047 = scalar_lea.vmem %s292, 832
      %v2048 = vld [vmem:[%s2047] sm:$0xff]
      %v2049 = vld [vmem:[%s2047 + $0x8] sm:$0xff]
      %v2050 = vld [vmem:[%s2047 + $0x10] sm:$0xff]
      %v2051 = vld [vmem:[%s2047 + $0x18] sm:$0xff]
      %v2052 = vld [vmem:[%s2047 + $0x20] sm:$0xff]
      %v2053 = vld [vmem:[%s2047 + $0x28] sm:$0xff]
      %v2054 = vld [vmem:[%s2047 + $0x30] sm:$0xff]
      %v2055 = vld [vmem:[%s2047 + $0x38] sm:$0xff]
      %2056 = vrot.lane.b32.xlu0 %v920, 64
      %v2057 = vpop.permute.xlu0 %2056
      %v2058 = vsel %vm416, %v2057, 0
      %2060 = vmatprep.subr.mxu0 0.0
      %2061 = vmatpush1.msra.mxu0 0.0
      %2062 = vmatprep.subr.mxu0 0.0
      %2063 = vmatpush1.msra.mxu0 0.0
      %2064 = vmatprep.subr.mxu0 0.0
      %2065 = vmatpush1.msra.mxu0 0.0
      %2066 = vmatprep.subr.mxu0 0.0
      %2067 = vmatpush1.msra.mxu0 0.0
      %2068 = vmatprep.subr.mxu0 0.0
      %2069 = vmatpush1.msra.mxu0 0.0
      %2070 = vmatprep.subr.mxu0 0.0
      %2071 = vmatpush1.msra.mxu0 0.0
      %2072 = vmatprep.subr.mxu0 0.0
      %2073 = vmatpush1.msra.mxu0 0.0
      %2074 = vmatprep.subr.mxu0 0.0
      %2075 = vmatpush1.msra.mxu0 0.0
      %2076 = vmatprep.subr.mxu0 0.0
      %2077 = vmatpush1.msra.mxu0 %v2055
      %2078 = vmatprep.subr.mxu0 0.0
      %2079 = vmatpush1.msra.mxu0 %v2054
      %2080 = vmatprep.subr.mxu0 0.0
      %2081 = vmatpush1.msra.mxu0 %v2053
      %2082 = vmatprep.subr.mxu0 0.0
      %2083 = vmatpush1.msra.mxu0 %v2052
      %2084 = vmatprep.subr.mxu0 0.0
      %2085 = vmatpush1.msra.mxu0 %v2051
      %2086 = vmatprep.subr.mxu0 0.0
      %2087 = vmatpush1.msra.mxu0 %v2050
      %2088 = vmatprep.subr.mxu0 0.0
      %2089 = vmatpush1.msra.mxu0 %v2049
      %2090 = vmatprep.subr.mxu0 0.0
      %2091 = vmatpush1.msra.mxu0 %v2048
      %2092 = vmatprep.subr.mxu0 0.0
      %2093 = vmatpush2.msra.mxu0 0.0
      %2094 = vmatprep.subr.mxu0 0.0
      %2095 = vmatpush2.msra.mxu0 0.0
      %2096 = vmatprep.subr.mxu0 0.0
      %2097 = vmatpush2.msra.mxu0 0.0
      %2098 = vmatprep.subr.mxu0 0.0
      %2099 = vmatpush2.msra.mxu0 0.0
      %2100 = vmatprep.subr.mxu0 0.0
      %2101 = vmatpush2.msra.mxu0 0.0
      %2102 = vmatprep.subr.mxu0 0.0
      %2103 = vmatpush2.msra.mxu0 0.0
      %2104 = vmatprep.subr.mxu0 0.0
      %2105 = vmatpush2.msra.mxu0 0.0
      %2106 = vmatprep.subr.mxu0 0.0
      %2107 = vmatpush2.msra.mxu0 0.0
      %2108 = vmatprep.subr.mxu0 0.0
      %2109 = vmatpush2.msra.mxu0 0.0
      %2110 = vmatprep.subr.mxu0 0.0
      %2111 = vmatpush2.msra.mxu0 0.0
      %2112 = vmatprep.subr.mxu0 0.0
      %2113 = vmatpush2.msra.mxu0 0.0
      %2114 = vmatprep.subr.mxu0 0.0
      %2115 = vmatpush2.msra.mxu0 0.0
      %2116 = vmatprep.subr.mxu0 0.0
      %2117 = vmatpush2.msra.mxu0 0.0
      %2118 = vmatprep.subr.mxu0 0.0
      %2119 = vmatpush2.msra.mxu0 0.0
      %2120 = vmatprep.subr.mxu0 0.0
      %2121 = vmatpush2.msra.mxu0 0.0
      %2122 = vmatprep.subr.mxu0 0.0
      %2123 = vmatpush2.msra.mxu0 0.0
      %2124 = vmatprep.mubr.f32.mxu0 0.0
      %2125 = vmatmul.mubr.f32.gmra.mxu0 %v1543
      %v2126 = vpop.f32.mrf.mxu0
      %v2127 = vadd.f32 0.0, %v2126
      %v2128 = vpop.f32.mrf.mxu0
      %2129 = vmatprep.mubr.f32.mxu0 0.0
      %2130 = vmatmul.mubr.f32.gmra.mxu0 %v1545
      %v2131 = vpop.f32.mrf.mxu0
      %v2132 = vadd.f32 0.0, %v2131
      %v2133 = vpop.f32.mrf.mxu0
      %2134 = vmatprep.mubr.f32.mxu0 0.0
      %2135 = vmatmul.mubr.f32.gmra.mxu0 %v1547
      %v2136 = vpop.f32.mrf.mxu0
      %v2137 = vadd.f32 0.0, %v2136
      %v2138 = vpop.f32.mrf.mxu0
      %2139 = vmatprep.mubr.f32.mxu0 0.0
      %2140 = vmatmul.mubr.f32.gmra.mxu0 %v1549
      %v2141 = vpop.f32.mrf.mxu0
      %v2142 = vadd.f32 0.0, %v2141
      %v2143 = vpop.f32.mrf.mxu0
      %2144 = vmatprep.mubr.f32.mxu0 0.0
      %2145 = vmatmul.mubr.f32.gmra.mxu0 %v1551
      %v2146 = vpop.f32.mrf.mxu0
      %v2147 = vadd.f32 0.0, %v2146
      %v2148 = vpop.f32.mrf.mxu0
      %2149 = vmatprep.mubr.f32.mxu0 0.0
      %2150 = vmatmul.mubr.f32.gmra.mxu0 %v1553
      %v2151 = vpop.f32.mrf.mxu0
      %v2152 = vadd.f32 0.0, %v2151
      %v2153 = vpop.f32.mrf.mxu0
      %2154 = vmatprep.mubr.f32.mxu0 0.0
      %2155 = vmatmul.mubr.f32.gmra.mxu0 %v2058
      %v2156 = vpop.f32.mrf.mxu0
      %v2157 = vadd.f32 0.0, %v2156
      %v2158 = vpop.f32.mrf.mxu0
      %2159 = vdwg.mxu0
      %v2160 = vadd.f32 %v2040, %v2127
      %v2161 = vadd.f32 %v2041, %v2132
      %v2162 = vadd.f32 %v2042, %v2137
      %v2163 = vadd.f32 %v2043, %v2142
      %v2164 = vadd.f32 %v2044, %v2147
      %v2165 = vadd.f32 %v2045, %v2152
      %v2166 = vadd.f32 %v2046, %v2157
      %s2167 = scalar_lea.vmem %s292, 896
      %v2168 = vld [vmem:[%s2167] sm:$0xff]
      %v2169 = vld [vmem:[%s2167 + $0x8] sm:$0xff]
      %v2170 = vld [vmem:[%s2167 + $0x10] sm:$0xff]
      %v2171 = vld [vmem:[%s2167 + $0x18] sm:$0xff]
      %v2172 = vld [vmem:[%s2167 + $0x20] sm:$0xff]
      %v2173 = vld [vmem:[%s2167 + $0x28] sm:$0xff]
      %v2174 = vld [vmem:[%s2167 + $0x30] sm:$0xff]
      %v2175 = vld [vmem:[%s2167 + $0x38] sm:$0xff]
      %2176 = vrot.lane.b32.xlu0 %v1040, 64
      %v2177 = vpop.permute.xlu0 %2176
      %v2178 = vsel %vm416, %v2177, 0
      %2180 = vmatprep.subr.mxu0 0.0
      %2181 = vmatpush1.msra.mxu0 0.0
      %2182 = vmatprep.subr.mxu0 0.0
      %2183 = vmatpush1.msra.mxu0 0.0
      %2184 = vmatprep.subr.mxu0 0.0
      %2185 = vmatpush1.msra.mxu0 0.0
      %2186 = vmatprep.subr.mxu0 0.0
      %2187 = vmatpush1.msra.mxu0 0.0
      %2188 = vmatprep.subr.mxu0 0.0
      %2189 = vmatpush1.msra.mxu0 0.0
      %2190 = vmatprep.subr.mxu0 0.0
      %2191 = vmatpush1.msra.mxu0 0.0
      %2192 = vmatprep.subr.mxu0 0.0
      %2193 = vmatpush1.msra.mxu0 0.0
      %2194 = vmatprep.subr.mxu0 0.0
      %2195 = vmatpush1.msra.mxu0 0.0
      %2196 = vmatprep.subr.mxu0 0.0
      %2197 = vmatpush1.msra.mxu0 %v2175
      %2198 = vmatprep.subr.mxu0 0.0
      %2199 = vmatpush1.msra.mxu0 %v2174
      %2200 = vmatprep.subr.mxu0 0.0
      %2201 = vmatpush1.msra.mxu0 %v2173
      %2202 = vmatprep.subr.mxu0 0.0
      %2203 = vmatpush1.msra.mxu0 %v2172
      %2204 = vmatprep.subr.mxu0 0.0
      %2205 = vmatpush1.msra.mxu0 %v2171
      %2206 = vmatprep.subr.mxu0 0.0
      %2207 = vmatpush1.msra.mxu0 %v2170
      %2208 = vmatprep.subr.mxu0 0.0
      %2209 = vmatpush1.msra.mxu0 %v2169
      %2210 = vmatprep.subr.mxu0 0.0
      %2211 = vmatpush1.msra.mxu0 %v2168
      %2212 = vmatprep.subr.mxu0 0.0
      %2213 = vmatpush2.msra.mxu0 0.0
      %2214 = vmatprep.subr.mxu0 0.0
      %2215 = vmatpush2.msra.mxu0 0.0
      %2216 = vmatprep.subr.mxu0 0.0
      %2217 = vmatpush2.msra.mxu0 0.0
      %2218 = vmatprep.subr.mxu0 0.0
      %2219 = vmatpush2.msra.mxu0 0.0
      %2220 = vmatprep.subr.mxu0 0.0
      %2221 = vmatpush2.msra.mxu0 0.0
      %2222 = vmatprep.subr.mxu0 0.0
      %2223 = vmatpush2.msra.mxu0 0.0
      %2224 = vmatprep.subr.mxu0 0.0
      %2225 = vmatpush2.msra.mxu0 0.0
      %2226 = vmatprep.subr.mxu0 0.0
      %2227 = vmatpush2.msra.mxu0 0.0
      %2228 = vmatprep.subr.mxu0 0.0
      %2229 = vmatpush2.msra.mxu0 0.0
      %2230 = vmatprep.subr.mxu0 0.0
      %2231 = vmatpush2.msra.mxu0 0.0
      %2232 = vmatprep.subr.mxu0 0.0
      %2233 = vmatpush2.msra.mxu0 0.0
      %2234 = vmatprep.subr.mxu0 0.0
      %2235 = vmatpush2.msra.mxu0 0.0
      %2236 = vmatprep.subr.mxu0 0.0
      %2237 = vmatpush2.msra.mxu0 0.0
      %2238 = vmatprep.subr.mxu0 0.0
      %2239 = vmatpush2.msra.mxu0 0.0
      %2240 = vmatprep.subr.mxu0 0.0
      %2241 = vmatpush2.msra.mxu0 0.0
      %2242 = vmatprep.subr.mxu0 0.0
      %2243 = vmatpush2.msra.mxu0 0.0
      %2244 = vmatprep.mubr.f32.mxu0 0.0
      %2245 = vmatmul.mubr.f32.gmra.mxu0 %v1808
      %v2246 = vpop.f32.mrf.mxu0
      %v2247 = vadd.f32 0.0, %v2246
      %v2248 = vpop.f32.mrf.mxu0
      %2249 = vmatprep.mubr.f32.mxu0 0.0
      %2250 = vmatmul.mubr.f32.gmra.mxu0 %v1810
      %v2251 = vpop.f32.mrf.mxu0
      %v2252 = vadd.f32 0.0, %v2251
      %v2253 = vpop.f32.mrf.mxu0
      %2254 = vmatprep.mubr.f32.mxu0 0.0
      %2255 = vmatmul.mubr.f32.gmra.mxu0 %v1812
      %v2256 = vpop.f32.mrf.mxu0
      %v2257 = vadd.f32 0.0, %v2256
      %v2258 = vpop.f32.mrf.mxu0
      %2259 = vmatprep.mubr.f32.mxu0 0.0
      %2260 = vmatmul.mubr.f32.gmra.mxu0 %v1814
      %v2261 = vpop.f32.mrf.mxu0
      %v2262 = vadd.f32 0.0, %v2261
      %v2263 = vpop.f32.mrf.mxu0
      %2264 = vmatprep.mubr.f32.mxu0 0.0
      %2265 = vmatmul.mubr.f32.gmra.mxu0 %v1816
      %v2266 = vpop.f32.mrf.mxu0
      %v2267 = vadd.f32 0.0, %v2266
      %v2268 = vpop.f32.mrf.mxu0
      %2269 = vmatprep.mubr.f32.mxu0 0.0
      %2270 = vmatmul.mubr.f32.gmra.mxu0 %v1818
      %v2271 = vpop.f32.mrf.mxu0
      %v2272 = vadd.f32 0.0, %v2271
      %v2273 = vpop.f32.mrf.mxu0
      %2274 = vmatprep.mubr.f32.mxu0 0.0
      %2275 = vmatmul.mubr.f32.gmra.mxu0 %v2178
      %v2276 = vpop.f32.mrf.mxu0
      %v2277 = vadd.f32 0.0, %v2276
      %v2278 = vpop.f32.mrf.mxu0
      %2279 = vdwg.mxu0
      %v2280 = vadd.f32 %v2160, %v2247
      %v2281 = vadd.f32 %v2161, %v2252
      %v2282 = vadd.f32 %v2162, %v2257
      %v2283 = vadd.f32 %v2163, %v2262
      %v2284 = vadd.f32 %v2164, %v2267
      %v2285 = vadd.f32 %v2165, %v2272
      %v2286 = vadd.f32 %v2166, %v2277
      %s2287 = scalar_lea.vmem %s292, 960
      %v2288 = vld [vmem:[%s2287] sm:$0xff]
      %v2289 = vld [vmem:[%s2287 + $0x8] sm:$0xff]
      %v2290 = vld [vmem:[%s2287 + $0x10] sm:$0xff]
      %v2291 = vld [vmem:[%s2287 + $0x18] sm:$0xff]
      %v2292 = vld [vmem:[%s2287 + $0x20] sm:$0xff]
      %v2293 = vld [vmem:[%s2287 + $0x28] sm:$0xff]
      %v2294 = vld [vmem:[%s2287 + $0x30] sm:$0xff]
      %v2295 = vld [vmem:[%s2287 + $0x38] sm:$0xff]
      %2296 = vrot.lane.b32.xlu0 %v373, 64
      %v2297 = vpop.permute.xlu0 %2296
      %v2298 = vsel %vm416, %v2297, 0
      %2300 = vmatprep.subr.mxu0 0.0
      %2301 = vmatpush1.msra.mxu0 0.0
      %2302 = vmatprep.subr.mxu0 0.0
      %2303 = vmatpush1.msra.mxu0 0.0
      %2304 = vmatprep.subr.mxu0 0.0
      %2305 = vmatpush1.msra.mxu0 0.0
      %2306 = vmatprep.subr.mxu0 0.0
      %2307 = vmatpush1.msra.mxu0 0.0
      %2308 = vmatprep.subr.mxu0 0.0
      %2309 = vmatpush1.msra.mxu0 0.0
      %2310 = vmatprep.subr.mxu0 0.0
      %2311 = vmatpush1.msra.mxu0 0.0
      %2312 = vmatprep.subr.mxu0 0.0
      %2313 = vmatpush1.msra.mxu0 0.0
      %2314 = vmatprep.subr.mxu0 0.0
      %2315 = vmatpush1.msra.mxu0 0.0
      %2316 = vmatprep.subr.mxu0 0.0
      %2317 = vmatpush1.msra.mxu0 %v2295
      %2318 = vmatprep.subr.mxu0 0.0
      %2319 = vmatpush1.msra.mxu0 %v2294
      %2320 = vmatprep.subr.mxu0 0.0
      %2321 = vmatpush1.msra.mxu0 %v2293
      %2322 = vmatprep.subr.mxu0 0.0
      %2323 = vmatpush1.msra.mxu0 %v2292
      %2324 = vmatprep.subr.mxu0 0.0
      %2325 = vmatpush1.msra.mxu0 %v2291
      %2326 = vmatprep.subr.mxu0 0.0
      %2327 = vmatpush1.msra.mxu0 %v2290
      %2328 = vmatprep.subr.mxu0 0.0
      %2329 = vmatpush1.msra.mxu0 %v2289
      %2330 = vmatprep.subr.mxu0 0.0
      %2331 = vmatpush1.msra.mxu0 %v2288
      %2332 = vmatprep.subr.mxu0 0.0
      %2333 = vmatpush2.msra.mxu0 0.0
      %2334 = vmatprep.subr.mxu0 0.0
      %2335 = vmatpush2.msra.mxu0 0.0
      %2336 = vmatprep.subr.mxu0 0.0
      %2337 = vmatpush2.msra.mxu0 0.0
      %2338 = vmatprep.subr.mxu0 0.0
      %2339 = vmatpush2.msra.mxu0 0.0
      %2340 = vmatprep.subr.mxu0 0.0
      %2341 = vmatpush2.msra.mxu0 0.0
      %2342 = vmatprep.subr.mxu0 0.0
      %2343 = vmatpush2.msra.mxu0 0.0
      %2344 = vmatprep.subr.mxu0 0.0
      %2345 = vmatpush2.msra.mxu0 0.0
      %2346 = vmatprep.subr.mxu0 0.0
      %2347 = vmatpush2.msra.mxu0 0.0
      %2348 = vmatprep.subr.mxu0 0.0
      %2349 = vmatpush2.msra.mxu0 0.0
      %2350 = vmatprep.subr.mxu0 0.0
      %2351 = vmatpush2.msra.mxu0 0.0
      %2352 = vmatprep.subr.mxu0 0.0
      %2353 = vmatpush2.msra.mxu0 0.0
      %2354 = vmatprep.subr.mxu0 0.0
      %2355 = vmatpush2.msra.mxu0 0.0
      %2356 = vmatprep.subr.mxu0 0.0
      %2357 = vmatpush2.msra.mxu0 0.0
      %2358 = vmatprep.subr.mxu0 0.0
      %2359 = vmatpush2.msra.mxu0 0.0
      %2360 = vmatprep.subr.mxu0 0.0
      %2361 = vmatpush2.msra.mxu0 0.0
      %2362 = vmatprep.subr.mxu0 0.0
      %2363 = vmatpush2.msra.mxu0 0.0
      %2364 = vmatprep.mubr.f32.mxu0 0.0
      %2365 = vmatmul.mubr.f32.gmra.mxu0 %v1673
      %v2366 = vpop.f32.mrf.mxu0
      %v2367 = vadd.f32 0.0, %v2366
      %v2368 = vpop.f32.mrf.mxu0
      %2369 = vmatprep.mubr.f32.mxu0 0.0
      %2370 = vmatmul.mubr.f32.gmra.mxu0 %v1675
      %v2371 = vpop.f32.mrf.mxu0
      %v2372 = vadd.f32 0.0, %v2371
      %v2373 = vpop.f32.mrf.mxu0
      %2374 = vmatprep.mubr.f32.mxu0 0.0
      %2375 = vmatmul.mubr.f32.gmra.mxu0 %v1677
      %v2376 = vpop.f32.mrf.mxu0
      %v2377 = vadd.f32 0.0, %v2376
      %v2378 = vpop.f32.mrf.mxu0
      %2379 = vmatprep.mubr.f32.mxu0 0.0
      %2380 = vmatmul.mubr.f32.gmra.mxu0 %v1679
      %v2381 = vpop.f32.mrf.mxu0
      %v2382 = vadd.f32 0.0, %v2381
      %v2383 = vpop.f32.mrf.mxu0
      %2384 = vmatprep.mubr.f32.mxu0 0.0
      %2385 = vmatmul.mubr.f32.gmra.mxu0 %v1681
      %v2386 = vpop.f32.mrf.mxu0
      %v2387 = vadd.f32 0.0, %v2386
      %v2388 = vpop.f32.mrf.mxu0
      %2389 = vmatprep.mubr.f32.mxu0 0.0
      %2390 = vmatmul.mubr.f32.gmra.mxu0 %v1938
      %v2391 = vpop.f32.mrf.mxu0
      %v2392 = vadd.f32 0.0, %v2391
      %v2393 = vpop.f32.mrf.mxu0
      %2394 = vmatprep.mubr.f32.mxu0 0.0
      %2395 = vmatmul.mubr.f32.gmra.mxu0 %v2298
      %v2396 = vpop.f32.mrf.mxu0
      %v2397 = vadd.f32 0.0, %v2396
      %v2398 = vpop.f32.mrf.mxu0
      %2399 = vdwg.mxu0
      %v2400 = vadd.f32 %v2280, %v2367
      %v2401 = vadd.f32 %v2281, %v2372
      %v2402 = vadd.f32 %v2282, %v2377
      %v2403 = vadd.f32 %v2283, %v2382
      %v2404 = vadd.f32 %v2284, %v2387
      %v2405 = vadd.f32 %v2285, %v2392
      %v2406 = vadd.f32 %v2286, %v2397
      %s2407 = scalar_lea.vmem %s292, 1024
      %v2408 = vld [vmem:[%s2407] sm:$0xff]
      %v2409 = vld [vmem:[%s2407 + $0x8] sm:$0xff]
      %v2410 = vld [vmem:[%s2407 + $0x10] sm:$0xff]
      %v2411 = vld [vmem:[%s2407 + $0x18] sm:$0xff]
      %v2412 = vld [vmem:[%s2407 + $0x20] sm:$0xff]
      %v2413 = vld [vmem:[%s2407 + $0x28] sm:$0xff]
      %v2414 = vld [vmem:[%s2407 + $0x30] sm:$0xff]
      %v2415 = vld [vmem:[%s2407 + $0x38] sm:$0xff]
      %2416 = vrot.lane.b32.xlu0 %v1279, 64
      %v2417 = vpop.permute.xlu0 %2416
      %v2418 = vsel %vm416, %v2417, 0
      %2420 = vmatprep.subr.mxu0 0.0
      %2421 = vmatpush1.msra.mxu0 0.0
      %2422 = vmatprep.subr.mxu0 0.0
      %2423 = vmatpush1.msra.mxu0 0.0
      %2424 = vmatprep.subr.mxu0 0.0
      %2425 = vmatpush1.msra.mxu0 0.0
      %2426 = vmatprep.subr.mxu0 0.0
      %2427 = vmatpush1.msra.mxu0 0.0
      %2428 = vmatprep.subr.mxu0 0.0
      %2429 = vmatpush1.msra.mxu0 0.0
      %2430 = vmatprep.subr.mxu0 0.0
      %2431 = vmatpush1.msra.mxu0 0.0
      %2432 = vmatprep.subr.mxu0 0.0
      %2433 = vmatpush1.msra.mxu0 0.0
      %2434 = vmatprep.subr.mxu0 0.0
      %2435 = vmatpush1.msra.mxu0 0.0
      %2436 = vmatprep.subr.mxu0 0.0
      %2437 = vmatpush1.msra.mxu0 %v2415
      %2438 = vmatprep.subr.mxu0 0.0
      %2439 = vmatpush1.msra.mxu0 %v2414
      %2440 = vmatprep.subr.mxu0 0.0
      %2441 = vmatpush1.msra.mxu0 %v2413
      %2442 = vmatprep.subr.mxu0 0.0
      %2443 = vmatpush1.msra.mxu0 %v2412
      %2444 = vmatprep.subr.mxu0 0.0
      %2445 = vmatpush1.msra.mxu0 %v2411
      %2446 = vmatprep.subr.mxu0 0.0
      %2447 = vmatpush1.msra.mxu0 %v2410
      %2448 = vmatprep.subr.mxu0 0.0
      %2449 = vmatpush1.msra.mxu0 %v2409
      %2450 = vmatprep.subr.mxu0 0.0
      %2451 = vmatpush1.msra.mxu0 %v2408
      %2452 = vmatprep.subr.mxu0 0.0
      %2453 = vmatpush2.msra.mxu0 0.0
      %2454 = vmatprep.subr.mxu0 0.0
      %2455 = vmatpush2.msra.mxu0 0.0
      %2456 = vmatprep.subr.mxu0 0.0
      %2457 = vmatpush2.msra.mxu0 0.0
      %2458 = vmatprep.subr.mxu0 0.0
      %2459 = vmatpush2.msra.mxu0 0.0
      %2460 = vmatprep.subr.mxu0 0.0
      %2461 = vmatpush2.msra.mxu0 0.0
      %2462 = vmatprep.subr.mxu0 0.0
      %2463 = vmatpush2.msra.mxu0 0.0
      %2464 = vmatprep.subr.mxu0 0.0
      %2465 = vmatpush2.msra.mxu0 0.0
      %2466 = vmatprep.subr.mxu0 0.0
      %2467 = vmatpush2.msra.mxu0 0.0
      %2468 = vmatprep.subr.mxu0 0.0
      %2469 = vmatpush2.msra.mxu0 0.0
      %2470 = vmatprep.subr.mxu0 0.0
      %2471 = vmatpush2.msra.mxu0 0.0
      %2472 = vmatprep.subr.mxu0 0.0
      %2473 = vmatpush2.msra.mxu0 0.0
      %2474 = vmatprep.subr.mxu0 0.0
      %2475 = vmatpush2.msra.mxu0 0.0
      %2476 = vmatprep.subr.mxu0 0.0
      %2477 = vmatpush2.msra.mxu0 0.0
      %2478 = vmatprep.subr.mxu0 0.0
      %2479 = vmatpush2.msra.mxu0 0.0
      %2480 = vmatprep.subr.mxu0 0.0
      %2481 = vmatpush2.msra.mxu0 0.0
      %2482 = vmatprep.subr.mxu0 0.0
      %2483 = vmatpush2.msra.mxu0 0.0
      %2484 = vmatprep.mubr.f32.mxu0 0.0
      %2485 = vmatmul.mubr.f32.gmra.mxu0 %v1545
      %v2486 = vpop.f32.mrf.mxu0
      %v2487 = vadd.f32 0.0, %v2486
      %v2488 = vpop.f32.mrf.mxu0
      %2489 = vmatprep.mubr.f32.mxu0 0.0
      %2490 = vmatmul.mubr.f32.gmra.mxu0 %v1547
      %v2491 = vpop.f32.mrf.mxu0
      %v2492 = vadd.f32 0.0, %v2491
      %v2493 = vpop.f32.mrf.mxu0
      %2494 = vmatprep.mubr.f32.mxu0 0.0
      %2495 = vmatmul.mubr.f32.gmra.mxu0 %v1549
      %v2496 = vpop.f32.mrf.mxu0
      %v2497 = vadd.f32 0.0, %v2496
      %v2498 = vpop.f32.mrf.mxu0
      %2499 = vmatprep.mubr.f32.mxu0 0.0
      %2500 = vmatmul.mubr.f32.gmra.mxu0 %v1551
      %v2501 = vpop.f32.mrf.mxu0
      %v2502 = vadd.f32 0.0, %v2501
      %v2503 = vpop.f32.mrf.mxu0
      %2504 = vmatprep.mubr.f32.mxu0 0.0
      %2505 = vmatmul.mubr.f32.gmra.mxu0 %v1553
      %v2506 = vpop.f32.mrf.mxu0
      %v2507 = vadd.f32 0.0, %v2506
      %v2508 = vpop.f32.mrf.mxu0
      %2509 = vmatprep.mubr.f32.mxu0 0.0
      %2510 = vmatmul.mubr.f32.gmra.mxu0 %v2058
      %v2511 = vpop.f32.mrf.mxu0
      %v2512 = vadd.f32 0.0, %v2511
      %v2513 = vpop.f32.mrf.mxu0
      %2514 = vmatprep.mubr.f32.mxu0 0.0
      %2515 = vmatmul.mubr.f32.gmra.mxu0 %v2418
      %v2516 = vpop.f32.mrf.mxu0
      %v2517 = vadd.f32 0.0, %v2516
      %v2518 = vpop.f32.mrf.mxu0
      %2519 = vdwg.mxu0
      %v2520 = vadd.f32 %v2400, %v2487
      %v2521 = vadd.f32 %v2401, %v2492
      %v2522 = vadd.f32 %v2402, %v2497
      %v2523 = vadd.f32 %v2403, %v2502
      %v2524 = vadd.f32 %v2404, %v2507
      %v2525 = vadd.f32 %v2405, %v2512
      %v2526 = vadd.f32 %v2406, %v2517
      %s2527 = scalar_lea.vmem %s292, 1088
      %v2528 = vld [vmem:[%s2527] sm:$0xff]
      %v2529 = vld [vmem:[%s2527 + $0x8] sm:$0xff]
      %v2530 = vld [vmem:[%s2527 + $0x10] sm:$0xff]
      %v2531 = vld [vmem:[%s2527 + $0x18] sm:$0xff]
      %v2532 = vld [vmem:[%s2527 + $0x20] sm:$0xff]
      %v2533 = vld [vmem:[%s2527 + $0x28] sm:$0xff]
      %v2534 = vld [vmem:[%s2527 + $0x30] sm:$0xff]
      %v2535 = vld [vmem:[%s2527 + $0x38] sm:$0xff]
      %2536 = vrot.lane.b32.xlu0 %v1399, 64
      %v2537 = vpop.permute.xlu0 %2536
      %v2538 = vsel %vm416, %v2537, 0
      %2540 = vmatprep.subr.mxu0 0.0
      %2541 = vmatpush1.msra.mxu0 0.0
      %2542 = vmatprep.subr.mxu0 0.0
      %2543 = vmatpush1.msra.mxu0 0.0
      %2544 = vmatprep.subr.mxu0 0.0
      %2545 = vmatpush1.msra.mxu0 0.0
      %2546 = vmatprep.subr.mxu0 0.0
      %2547 = vmatpush1.msra.mxu0 0.0
      %2548 = vmatprep.subr.mxu0 0.0
      %2549 = vmatpush1.msra.mxu0 0.0
      %2550 = vmatprep.subr.mxu0 0.0
      %2551 = vmatpush1.msra.mxu0 0.0
      %2552 = vmatprep.subr.mxu0 0.0
      %2553 = vmatpush1.msra.mxu0 0.0
      %2554 = vmatprep.subr.mxu0 0.0
      %2555 = vmatpush1.msra.mxu0 0.0
      %2556 = vmatprep.subr.mxu0 0.0
      %2557 = vmatpush1.msra.mxu0 %v2535
      %2558 = vmatprep.subr.mxu0 0.0
      %2559 = vmatpush1.msra.mxu0 %v2534
      %2560 = vmatprep.subr.mxu0 0.0
      %2561 = vmatpush1.msra.mxu0 %v2533
      %2562 = vmatprep.subr.mxu0 0.0
      %2563 = vmatpush1.msra.mxu0 %v2532
      %2564 = vmatprep.subr.mxu0 0.0
      %2565 = vmatpush1.msra.mxu0 %v2531
      %2566 = vmatprep.subr.mxu0 0.0
      %2567 = vmatpush1.msra.mxu0 %v2530
      %2568 = vmatprep.subr.mxu0 0.0
      %2569 = vmatpush1.msra.mxu0 %v2529
      %2570 = vmatprep.subr.mxu0 0.0
      %2571 = vmatpush1.msra.mxu0 %v2528
      %2572 = vmatprep.subr.mxu0 0.0
      %2573 = vmatpush2.msra.mxu0 0.0
      %2574 = vmatprep.subr.mxu0 0.0
      %2575 = vmatpush2.msra.mxu0 0.0
      %2576 = vmatprep.subr.mxu0 0.0
      %2577 = vmatpush2.msra.mxu0 0.0
      %2578 = vmatprep.subr.mxu0 0.0
      %2579 = vmatpush2.msra.mxu0 0.0
      %2580 = vmatprep.subr.mxu0 0.0
      %2581 = vmatpush2.msra.mxu0 0.0
      %2582 = vmatprep.subr.mxu0 0.0
      %2583 = vmatpush2.msra.mxu0 0.0
      %2584 = vmatprep.subr.mxu0 0.0
      %2585 = vmatpush2.msra.mxu0 0.0
      %2586 = vmatprep.subr.mxu0 0.0
      %2587 = vmatpush2.msra.mxu0 0.0
      %2588 = vmatprep.subr.mxu0 0.0
      %2589 = vmatpush2.msra.mxu0 0.0
      %2590 = vmatprep.subr.mxu0 0.0
      %2591 = vmatpush2.msra.mxu0 0.0
      %2592 = vmatprep.subr.mxu0 0.0
      %2593 = vmatpush2.msra.mxu0 0.0
      %2594 = vmatprep.subr.mxu0 0.0
      %2595 = vmatpush2.msra.mxu0 0.0
      %2596 = vmatprep.subr.mxu0 0.0
      %2597 = vmatpush2.msra.mxu0 0.0
      %2598 = vmatprep.subr.mxu0 0.0
      %2599 = vmatpush2.msra.mxu0 0.0
      %2600 = vmatprep.subr.mxu0 0.0
      %2601 = vmatpush2.msra.mxu0 0.0
      %2602 = vmatprep.subr.mxu0 0.0
      %2603 = vmatpush2.msra.mxu0 0.0
      %2604 = vmatprep.mubr.f32.mxu0 0.0
      %2605 = vmatmul.mubr.f32.gmra.mxu0 %v1810
      %v2606 = vpop.f32.mrf.mxu0
      %v2607 = vadd.f32 0.0, %v2606
      %v2608 = vpop.f32.mrf.mxu0
      %2609 = vmatprep.mubr.f32.mxu0 0.0
      %2610 = vmatmul.mubr.f32.gmra.mxu0 %v1812
      %v2611 = vpop.f32.mrf.mxu0
      %v2612 = vadd.f32 0.0, %v2611
      %v2613 = vpop.f32.mrf.mxu0
      %2614 = vmatprep.mubr.f32.mxu0 0.0
      %2615 = vmatmul.mubr.f32.gmra.mxu0 %v1814
      %v2616 = vpop.f32.mrf.mxu0
      %v2617 = vadd.f32 0.0, %v2616
      %v2618 = vpop.f32.mrf.mxu0
      %2619 = vmatprep.mubr.f32.mxu0 0.0
      %2620 = vmatmul.mubr.f32.gmra.mxu0 %v1816
      %v2621 = vpop.f32.mrf.mxu0
      %v2622 = vadd.f32 0.0, %v2621
      %v2623 = vpop.f32.mrf.mxu0
      %2624 = vmatprep.mubr.f32.mxu0 0.0
      %2625 = vmatmul.mubr.f32.gmra.mxu0 %v1818
      %v2626 = vpop.f32.mrf.mxu0
      %v2627 = vadd.f32 0.0, %v2626
      %v2628 = vpop.f32.mrf.mxu0
      %2629 = vmatprep.mubr.f32.mxu0 0.0
      %2630 = vmatmul.mubr.f32.gmra.mxu0 %v2178
      %v2631 = vpop.f32.mrf.mxu0
      %v2632 = vadd.f32 0.0, %v2631
      %v2633 = vpop.f32.mrf.mxu0
      %2634 = vmatprep.mubr.f32.mxu0 0.0
      %2635 = vmatmul.mubr.f32.gmra.mxu0 %v2538
      %v2636 = vpop.f32.mrf.mxu0
      %v2637 = vadd.f32 0.0, %v2636
      %v2638 = vpop.f32.mrf.mxu0
      %2639 = vdwg.mxu0
      %v2640 = vadd.f32 %v2520, %v2607
      %v2641 = vadd.f32 %v2521, %v2612
      %v2642 = vadd.f32 %v2522, %v2617
      %v2643 = vadd.f32 %v2523, %v2622
      %v2644 = vadd.f32 %v2524, %v2627
      %v2645 = vadd.f32 %v2525, %v2632
      %v2646 = vadd.f32 %v2526, %v2637
      %2654 = vrot.lane.b32.xlu0 %v2640, 64
      %v2655 = vpop.permute.xlu0 %2654
      %2656 = vrot.lane.b32.xlu0 %v2641, 64
      %v2657 = vpop.permute.xlu0 %2656
      %2658 = vrot.lane.b32.xlu0 %v2642, 64
      %v2659 = vpop.permute.xlu0 %2658
      %2660 = vrot.lane.b32.xlu0 %v2643, 64
      %v2661 = vpop.permute.xlu0 %2660
      %2662 = vrot.lane.b32.xlu0 %v2644, 64
      %v2663 = vpop.permute.xlu0 %2662
      %2664 = vrot.lane.b32.xlu0 %v2645, 64
      %v2665 = vpop.permute.xlu0 %2664
      %2666 = vrot.lane.b32.xlu0 %v2646, 64
      %v2667 = vpop.permute.xlu0 %2666
      %v2675 = vsel %vm416, %v1502, %v2655
      %v2676 = vsel %vm416, %v1503, %v2657
      %v2677 = vsel %vm416, %v1504, %v2659
      %v2678 = vsel %vm416, %v1505, %v2661
      %v2679 = vsel %vm416, %v1506, %v2663
      %v2680 = vsel %vm416, %v1507, %v2665
      %v2681 = vsel %vm416, %v1508, %v2667
      %2682 = vst [vmem:[%s303] sm:$0x7f] %v2675
      %2683 = vst [vmem:[%s303 + $0x8] sm:$0x7f] %v2676
      %2684 = vst [vmem:[%s303 + $0x10] sm:$0x7f] %v2677
      %2685 = vst [vmem:[%s303 + $0x18] sm:$0x7f] %v2678
      %2686 = vst [vmem:[%s303 + $0x20] sm:$0x7f] %v2679
      %2687 = vst [vmem:[%s303 + $0x28] sm:$0x7f] %v2680
      %2688 = vst [vmem:[%s303 + $0x30] sm:$0x7f] %v2681
      %s2689 = scalar_lea.vmem %s275, 56
      %v2690 = vld [vmem:[%s2689] sm:$0x7f]
      %v2691 = vld [vmem:[%s2689 + $0x8] sm:$0x7f]
      %v2692 = vld [vmem:[%s2689 + $0x10] sm:$0x7f]
      %v2693 = vld [vmem:[%s2689 + $0x18] sm:$0x7f]
      %v2694 = vld [vmem:[%s2689 + $0x20] sm:$0x7f]
      %v2695 = vld [vmem:[%s2689 + $0x28] sm:$0x7f]
      %v2696 = vld [vmem:[%s2689 + $0x30] sm:$0x7f]
      %s2697 = scalar_lea.vmem %s280, 1
      %v2698 = vld [vmem:[%s2697] sm:$0x1]
      %v2700 = vlaneseq
      %v2701 = vshrl.u32 %v2700, 7
      %v2702 = vsub.s32 0, %v2701
      %v2703 = vrot.slane %v2698, %v2702
      %v2705 = vmul.f32 %v2690, %v2703
      %v2706 = vmul.f32 %v2691, %v2703
      %v2707 = vmul.f32 %v2692, %v2703
      %v2708 = vmul.f32 %v2693, %v2703
      %v2709 = vmul.f32 %v2694, %v2703
      %v2710 = vmul.f32 %v2695, %v2703
      %v2711 = vmul.f32 %v2696, %v2703
      %s2712 = scalar_lea.vmem %s285, 1
      %v2713 = vld [vmem:[%s2712] sm:$0x1]
      %v2715 = vlaneseq
      %v2716 = vshrl.u32 %v2715, 7
      %v2717 = vsub.s32 0, %v2716
      %v2718 = vrot.slane %v2713, %v2717
      %v2720 = vadd.f32 %v2705, %v2718
      %v2721 = vadd.f32 %v2706, %v2718
      %v2722 = vadd.f32 %v2707, %v2718
      %v2723 = vadd.f32 %v2708, %v2718
      %v2724 = vadd.f32 %v2709, %v2718
      %v2725 = vadd.f32 %v2710, %v2718
      %v2726 = vadd.f32 %v2711, %v2718
      %v2727 = vmax.f32 %v2720, 0.0
      %v2728 = vmax.f32 %v2721, 0.0
      %v2729 = vmax.f32 %v2722, 0.0
      %v2730 = vmax.f32 %v2723, 0.0
      %v2731 = vmax.f32 %v2724, 0.0
      %v2732 = vmax.f32 %v2725, 0.0
      %v2733 = vmax.f32 %v2726, 0.0
      %2734 = vst [vmem:[%s357 + $0x1] sm:$0x7f] %v2727
      %2735 = vst [vmem:[%s357 + $0x9] sm:$0x7f] %v2728
      %2736 = vst [vmem:[%s357 + $0x11] sm:$0x7f] %v2729
      %2737 = vst [vmem:[%s357 + $0x19] sm:$0x7f] %v2730
      %2738 = vst [vmem:[%s357 + $0x21] sm:$0x7f] %v2731
      %2739 = vst [vmem:[%s357 + $0x29] sm:$0x7f] %v2732
      %2740 = vst [vmem:[%s357 + $0x31] sm:$0x7f] %v2733
      %v2741 = vld [vmem:[#allocation2] sm:$0xff]
      %v2742 = vld [vmem:[#allocation2 + $0x8] sm:$0xff]
      %v2743 = vld [vmem:[#allocation2 + $0x10] sm:$0xff]
      %v2744 = vld [vmem:[#allocation2 + $0x18] sm:$0xff]
      %v2745 = vld [vmem:[#allocation2 + $0x20] sm:$0xff]
      %v2746 = vld [vmem:[#allocation2 + $0x28] sm:$0xff]
      %v2747 = vld [vmem:[#allocation2 + $0x30] sm:$0xff]
      %v2748 = vld [vmem:[#allocation2 + $0x38] sm:$0xff]
      %v2749 = vld [vmem:[#allocation2 + $0x40] sm:$0xff]
      %v2750 = vld [vmem:[#allocation2 + $0x48] sm:$0xff]
      %s2751 = scalar_lea.vmem %s292, 1152
      %v2752 = vld [vmem:[%s2751] sm:$0xff]
      %v2753 = vld [vmem:[%s2751 + $0x8] sm:$0xff]
      %v2754 = vld [vmem:[%s2751 + $0x10] sm:$0xff]
      %v2755 = vld [vmem:[%s2751 + $0x18] sm:$0xff]
      %v2756 = vld [vmem:[%s2751 + $0x20] sm:$0xff]
      %v2757 = vld [vmem:[%s2751 + $0x28] sm:$0xff]
      %v2758 = vld [vmem:[%s2751 + $0x30] sm:$0xff]
      %v2759 = vld [vmem:[%s2751 + $0x38] sm:$0xff]
      %s2760 = scalar_lea.vmem %s292, 1216
      %v2761 = vld [vmem:[%s2760] sm:$0xff]
      %v2762 = vld [vmem:[%s2760 + $0x8] sm:$0xff]
      %v2763 = vld [vmem:[%s2760 + $0x10] sm:$0xff]
      %v2764 = vld [vmem:[%s2760 + $0x18] sm:$0xff]
      %v2765 = vld [vmem:[%s2760 + $0x20] sm:$0xff]
      %v2766 = vld [vmem:[%s2760 + $0x28] sm:$0xff]
      %v2767 = vld [vmem:[%s2760 + $0x30] sm:$0xff]
      %v2768 = vld [vmem:[%s2760 + $0x38] sm:$0xff]
      %v2777 = vrot.slane %v2741, 1
      %v2778 = vrot.slane %v2742, 1
      %v2779 = vsel %vm400, %v2777, %v2778
      %v2780 = vrot.slane %v2743, 1
      %v2781 = vsel %vm400, %v2778, %v2780
      %v2782 = vrot.slane %v2744, 1
      %v2783 = vsel %vm400, %v2780, %v2782
      %v2784 = vrot.slane %v2745, 1
      %v2785 = vsel %vm400, %v2782, %v2784
      %v2786 = vrot.slane %v2746, 1
      %v2787 = vsel %vm400, %v2784, %v2786
      %v2788 = vrot.slane %v2747, 1
      %v2789 = vsel %vm400, %v2786, %v2788
      %v2790 = vrot.slane %v2748, 1
      %v2791 = vsel %vm400, %v2788, %v2790
      %v2792 = vsel %vm416, %v2779, 0
      %v2794 = vsel %vm416, %v2781, 0
      %v2796 = vsel %vm416, %v2783, 0
      %v2798 = vsel %vm416, %v2785, 0
      %v2800 = vsel %vm416, %v2787, 0
      %v2802 = vsel %vm416, %v2789, 0
      %v2804 = vsel %vm416, %v2791, 0
      %2806 = vmatprep.subr.mxu0 0.0
      %2807 = vmatpush1.msra.mxu0 0.0
      %2808 = vmatprep.subr.mxu0 0.0
      %2809 = vmatpush1.msra.mxu0 0.0
      %2810 = vmatprep.subr.mxu0 0.0
      %2811 = vmatpush1.msra.mxu0 0.0
      %2812 = vmatprep.subr.mxu0 0.0
      %2813 = vmatpush1.msra.mxu0 0.0
      %2814 = vmatprep.subr.mxu0 0.0
      %2815 = vmatpush1.msra.mxu0 0.0
      %2816 = vmatprep.subr.mxu0 0.0
      %2817 = vmatpush1.msra.mxu0 0.0
      %2818 = vmatprep.subr.mxu0 0.0
      %2819 = vmatpush1.msra.mxu0 0.0
      %2820 = vmatprep.subr.mxu0 0.0
      %2821 = vmatpush1.msra.mxu0 0.0
      %2822 = vmatprep.subr.mxu0 0.0
      %2823 = vmatpush1.msra.mxu0 %v2768
      %2824 = vmatprep.subr.mxu0 0.0
      %2825 = vmatpush1.msra.mxu0 %v2767
      %2826 = vmatprep.subr.mxu0 0.0
      %2827 = vmatpush1.msra.mxu0 %v2766
      %2828 = vmatprep.subr.mxu0 0.0
      %2829 = vmatpush1.msra.mxu0 %v2765
      %2830 = vmatprep.subr.mxu0 0.0
      %2831 = vmatpush1.msra.mxu0 %v2764
      %2832 = vmatprep.subr.mxu0 0.0
      %2833 = vmatpush1.msra.mxu0 %v2763
      %2834 = vmatprep.subr.mxu0 0.0
      %2835 = vmatpush1.msra.mxu0 %v2762
      %2836 = vmatprep.subr.mxu0 0.0
      %2837 = vmatpush1.msra.mxu0 %v2761
      %2838 = vmatprep.subr.mxu0 0.0
      %2839 = vmatpush2.msra.mxu0 0.0
      %2840 = vmatprep.subr.mxu0 0.0
      %2841 = vmatpush2.msra.mxu0 0.0
      %2842 = vmatprep.subr.mxu0 0.0
      %2843 = vmatpush2.msra.mxu0 0.0
      %2844 = vmatprep.subr.mxu0 0.0
      %2845 = vmatpush2.msra.mxu0 0.0
      %2846 = vmatprep.subr.mxu0 0.0
      %2847 = vmatpush2.msra.mxu0 0.0
      %2848 = vmatprep.subr.mxu0 0.0
      %2849 = vmatpush2.msra.mxu0 0.0
      %2850 = vmatprep.subr.mxu0 0.0
      %2851 = vmatpush2.msra.mxu0 0.0
      %2852 = vmatprep.subr.mxu0 0.0
      %2853 = vmatpush2.msra.mxu0 0.0
      %2854 = vmatprep.subr.mxu0 0.0
      %2855 = vmatpush2.msra.mxu0 0.0
      %2856 = vmatprep.subr.mxu0 0.0
      %2857 = vmatpush2.msra.mxu0 0.0
      %2858 = vmatprep.subr.mxu0 0.0
      %2859 = vmatpush2.msra.mxu0 0.0
      %2860 = vmatprep.subr.mxu0 0.0
      %2861 = vmatpush2.msra.mxu0 0.0
      %2862 = vmatprep.subr.mxu0 0.0
      %2863 = vmatpush2.msra.mxu0 0.0
      %2864 = vmatprep.subr.mxu0 0.0
      %2865 = vmatpush2.msra.mxu0 0.0
      %2866 = vmatprep.subr.mxu0 0.0
      %2867 = vmatpush2.msra.mxu0 0.0
      %2868 = vmatprep.subr.mxu0 0.0
      %2869 = vmatpush2.msra.mxu0 0.0
      %2870 = vmatprep.mubr.f32.mxu0 0.0
      %2871 = vmatmul.mubr.f32.gmra.mxu0 %v2792
      %v2872 = vpop.f32.mrf.mxu0
      %v2873 = vadd.f32 0.0, %v2872
      %v2874 = vpop.f32.mrf.mxu0
      %2875 = vmatprep.mubr.f32.mxu0 0.0
      %2876 = vmatmul.mubr.f32.gmra.mxu0 %v2794
      %v2877 = vpop.f32.mrf.mxu0
      %v2878 = vadd.f32 0.0, %v2877
      %v2879 = vpop.f32.mrf.mxu0
      %2880 = vmatprep.mubr.f32.mxu0 0.0
      %2881 = vmatmul.mubr.f32.gmra.mxu0 %v2796
      %v2882 = vpop.f32.mrf.mxu0
      %v2883 = vadd.f32 0.0, %v2882
      %v2884 = vpop.f32.mrf.mxu0
      %2885 = vmatprep.mubr.f32.mxu0 0.0
      %2886 = vmatmul.mubr.f32.gmra.mxu0 %v2798
      %v2887 = vpop.f32.mrf.mxu0
      %v2888 = vadd.f32 0.0, %v2887
      %v2889 = vpop.f32.mrf.mxu0
      %2890 = vmatprep.mubr.f32.mxu0 0.0
      %2891 = vmatmul.mubr.f32.gmra.mxu0 %v2800
      %v2892 = vpop.f32.mrf.mxu0
      %v2893 = vadd.f32 0.0, %v2892
      %v2894 = vpop.f32.mrf.mxu0
      %2895 = vmatprep.mubr.f32.mxu0 0.0
      %2896 = vmatmul.mubr.f32.gmra.mxu0 %v2802
      %v2897 = vpop.f32.mrf.mxu0
      %v2898 = vadd.f32 0.0, %v2897
      %v2899 = vpop.f32.mrf.mxu0
      %2900 = vmatprep.mubr.f32.mxu0 0.0
      %2901 = vmatmul.mubr.f32.gmra.mxu0 %v2804
      %v2902 = vpop.f32.mrf.mxu0
      %v2903 = vadd.f32 0.0, %v2902
      %v2904 = vpop.f32.mrf.mxu0
      %2905 = vdwg.mxu0
      %v2906 = vsel %vm416, %v2741, 0
      %v2908 = vsel %vm416, %v2742, 0
      %v2910 = vsel %vm416, %v2743, 0
      %v2912 = vsel %vm416, %v2744, 0
      %v2914 = vsel %vm416, %v2745, 0
      %v2916 = vsel %vm416, %v2746, 0
      %v2918 = vsel %vm416, %v2747, 0
      %2920 = vmatprep.subr.mxu0 0.0
      %2921 = vmatpush1.msra.mxu0 0.0
      %2922 = vmatprep.subr.mxu0 0.0
      %2923 = vmatpush1.msra.mxu0 0.0
      %2924 = vmatprep.subr.mxu0 0.0
      %2925 = vmatpush1.msra.mxu0 0.0
      %2926 = vmatprep.subr.mxu0 0.0
      %2927 = vmatpush1.msra.mxu0 0.0
      %2928 = vmatprep.subr.mxu0 0.0
      %2929 = vmatpush1.msra.mxu0 0.0
      %2930 = vmatprep.subr.mxu0 0.0
      %2931 = vmatpush1.msra.mxu0 0.0
      %2932 = vmatprep.subr.mxu0 0.0
      %2933 = vmatpush1.msra.mxu0 0.0
      %2934 = vmatprep.subr.mxu0 0.0
      %2935 = vmatpush1.msra.mxu0 0.0
      %2936 = vmatprep.subr.mxu0 0.0
      %2937 = vmatpush1.msra.mxu0 %v2759
      %2938 = vmatprep.subr.mxu0 0.0
      %2939 = vmatpush1.msra.mxu0 %v2758
      %2940 = vmatprep.subr.mxu0 0.0
      %2941 = vmatpush1.msra.mxu0 %v2757
      %2942 = vmatprep.subr.mxu0 0.0
      %2943 = vmatpush1.msra.mxu0 %v2756
      %2944 = vmatprep.subr.mxu0 0.0
      %2945 = vmatpush1.msra.mxu0 %v2755
      %2946 = vmatprep.subr.mxu0 0.0
      %2947 = vmatpush1.msra.mxu0 %v2754
      %2948 = vmatprep.subr.mxu0 0.0
      %2949 = vmatpush1.msra.mxu0 %v2753
      %2950 = vmatprep.subr.mxu0 0.0
      %2951 = vmatpush1.msra.mxu0 %v2752
      %2952 = vmatprep.subr.mxu0 0.0
      %2953 = vmatpush2.msra.mxu0 0.0
      %2954 = vmatprep.subr.mxu0 0.0
      %2955 = vmatpush2.msra.mxu0 0.0
      %2956 = vmatprep.subr.mxu0 0.0
      %2957 = vmatpush2.msra.mxu0 0.0
      %2958 = vmatprep.subr.mxu0 0.0
      %2959 = vmatpush2.msra.mxu0 0.0
      %2960 = vmatprep.subr.mxu0 0.0
      %2961 = vmatpush2.msra.mxu0 0.0
      %2962 = vmatprep.subr.mxu0 0.0
      %2963 = vmatpush2.msra.mxu0 0.0
      %2964 = vmatprep.subr.mxu0 0.0
      %2965 = vmatpush2.msra.mxu0 0.0
      %2966 = vmatprep.subr.mxu0 0.0
      %2967 = vmatpush2.msra.mxu0 0.0
      %2968 = vmatprep.subr.mxu0 0.0
      %2969 = vmatpush2.msra.mxu0 0.0
      %2970 = vmatprep.subr.mxu0 0.0
      %2971 = vmatpush2.msra.mxu0 0.0
      %2972 = vmatprep.subr.mxu0 0.0
      %2973 = vmatpush2.msra.mxu0 0.0
      %2974 = vmatprep.subr.mxu0 0.0
      %2975 = vmatpush2.msra.mxu0 0.0
      %2976 = vmatprep.subr.mxu0 0.0
      %2977 = vmatpush2.msra.mxu0 0.0
      %2978 = vmatprep.subr.mxu0 0.0
      %2979 = vmatpush2.msra.mxu0 0.0
      %2980 = vmatprep.subr.mxu0 0.0
      %2981 = vmatpush2.msra.mxu0 0.0
      %2982 = vmatprep.subr.mxu0 0.0
      %2983 = vmatpush2.msra.mxu0 0.0
      %2984 = vmatprep.mubr.f32.mxu0 0.0
      %2985 = vmatmul.mubr.f32.gmra.mxu0 %v2906
      %v2986 = vpop.f32.mrf.mxu0
      %v2987 = vadd.f32 %v2873, %v2986
      %v2988 = vpop.f32.mrf.mxu0
      %2989 = vmatprep.mubr.f32.mxu0 0.0
      %2990 = vmatmul.mubr.f32.gmra.mxu0 %v2908
      %v2991 = vpop.f32.mrf.mxu0
      %v2992 = vadd.f32 %v2878, %v2991
      %v2993 = vpop.f32.mrf.mxu0
      %2994 = vmatprep.mubr.f32.mxu0 0.0
      %2995 = vmatmul.mubr.f32.gmra.mxu0 %v2910
      %v2996 = vpop.f32.mrf.mxu0
      %v2997 = vadd.f32 %v2883, %v2996
      %v2998 = vpop.f32.mrf.mxu0
      %2999 = vmatprep.mubr.f32.mxu0 0.0
      %3000 = vmatmul.mubr.f32.gmra.mxu0 %v2912
      %v3001 = vpop.f32.mrf.mxu0
      %v3002 = vadd.f32 %v2888, %v3001
      %v3003 = vpop.f32.mrf.mxu0
      %3004 = vmatprep.mubr.f32.mxu0 0.0
      %3005 = vmatmul.mubr.f32.gmra.mxu0 %v2914
      %v3006 = vpop.f32.mrf.mxu0
      %v3007 = vadd.f32 %v2893, %v3006
      %v3008 = vpop.f32.mrf.mxu0
      %3009 = vmatprep.mubr.f32.mxu0 0.0
      %3010 = vmatmul.mubr.f32.gmra.mxu0 %v2916
      %v3011 = vpop.f32.mrf.mxu0
      %v3012 = vadd.f32 %v2898, %v3011
      %v3013 = vpop.f32.mrf.mxu0
      %3014 = vmatprep.mubr.f32.mxu0 0.0
      %3015 = vmatmul.mubr.f32.gmra.mxu0 %v2918
      %v3016 = vpop.f32.mrf.mxu0
      %v3017 = vadd.f32 %v2903, %v3016
      %v3018 = vpop.f32.mrf.mxu0
      %3019 = vdwg.mxu0
      %s3020 = scalar_lea.vmem %s292, 1280
      %v3021 = vld [vmem:[%s3020] sm:$0xff]
      %v3022 = vld [vmem:[%s3020 + $0x8] sm:$0xff]
      %v3023 = vld [vmem:[%s3020 + $0x10] sm:$0xff]
      %v3024 = vld [vmem:[%s3020 + $0x18] sm:$0xff]
      %v3025 = vld [vmem:[%s3020 + $0x20] sm:$0xff]
      %v3026 = vld [vmem:[%s3020 + $0x28] sm:$0xff]
      %v3027 = vld [vmem:[%s3020 + $0x30] sm:$0xff]
      %v3028 = vld [vmem:[%s3020 + $0x38] sm:$0xff]
      %v3029 = vrot.slane %v2741, 2
      %v3030 = vrot.slane %v2742, 2
      %v3031 = vsel %vm654, %v3029, %v3030
      %v3032 = vrot.slane %v2743, 2
      %v3033 = vsel %vm654, %v3030, %v3032
      %v3034 = vrot.slane %v2744, 2
      %v3035 = vsel %vm654, %v3032, %v3034
      %v3036 = vrot.slane %v2745, 2
      %v3037 = vsel %vm654, %v3034, %v3036
      %v3038 = vrot.slane %v2746, 2
      %v3039 = vsel %vm654, %v3036, %v3038
      %v3040 = vrot.slane %v2747, 2
      %v3041 = vsel %vm654, %v3038, %v3040
      %v3042 = vrot.slane %v2748, 2
      %v3043 = vsel %vm654, %v3040, %v3042
      %v3044 = vsel %vm416, %v3031, 0
      %v3046 = vsel %vm416, %v3033, 0
      %v3048 = vsel %vm416, %v3035, 0
      %v3050 = vsel %vm416, %v3037, 0
      %v3052 = vsel %vm416, %v3039, 0
      %v3054 = vsel %vm416, %v3041, 0
      %v3056 = vsel %vm416, %v3043, 0
      %3058 = vmatprep.subr.mxu0 0.0
      %3059 = vmatpush1.msra.mxu0 0.0
      %3060 = vmatprep.subr.mxu0 0.0
      %3061 = vmatpush1.msra.mxu0 0.0
      %3062 = vmatprep.subr.mxu0 0.0
      %3063 = vmatpush1.msra.mxu0 0.0
      %3064 = vmatprep.subr.mxu0 0.0
      %3065 = vmatpush1.msra.mxu0 0.0
      %3066 = vmatprep.subr.mxu0 0.0
      %3067 = vmatpush1.msra.mxu0 0.0
      %3068 = vmatprep.subr.mxu0 0.0
      %3069 = vmatpush1.msra.mxu0 0.0
      %3070 = vmatprep.subr.mxu0 0.0
      %3071 = vmatpush1.msra.mxu0 0.0
      %3072 = vmatprep.subr.mxu0 0.0
      %3073 = vmatpush1.msra.mxu0 0.0
      %3074 = vmatprep.subr.mxu0 0.0
      %3075 = vmatpush1.msra.mxu0 %v3028
      %3076 = vmatprep.subr.mxu0 0.0
      %3077 = vmatpush1.msra.mxu0 %v3027
      %3078 = vmatprep.subr.mxu0 0.0
      %3079 = vmatpush1.msra.mxu0 %v3026
      %3080 = vmatprep.subr.mxu0 0.0
      %3081 = vmatpush1.msra.mxu0 %v3025
      %3082 = vmatprep.subr.mxu0 0.0
      %3083 = vmatpush1.msra.mxu0 %v3024
      %3084 = vmatprep.subr.mxu0 0.0
      %3085 = vmatpush1.msra.mxu0 %v3023
      %3086 = vmatprep.subr.mxu0 0.0
      %3087 = vmatpush1.msra.mxu0 %v3022
      %3088 = vmatprep.subr.mxu0 0.0
      %3089 = vmatpush1.msra.mxu0 %v3021
      %3090 = vmatprep.subr.mxu0 0.0
      %3091 = vmatpush2.msra.mxu0 0.0
      %3092 = vmatprep.subr.mxu0 0.0
      %3093 = vmatpush2.msra.mxu0 0.0
      %3094 = vmatprep.subr.mxu0 0.0
      %3095 = vmatpush2.msra.mxu0 0.0
      %3096 = vmatprep.subr.mxu0 0.0
      %3097 = vmatpush2.msra.mxu0 0.0
      %3098 = vmatprep.subr.mxu0 0.0
      %3099 = vmatpush2.msra.mxu0 0.0
      %3100 = vmatprep.subr.mxu0 0.0
      %3101 = vmatpush2.msra.mxu0 0.0
      %3102 = vmatprep.subr.mxu0 0.0
      %3103 = vmatpush2.msra.mxu0 0.0
      %3104 = vmatprep.subr.mxu0 0.0
      %3105 = vmatpush2.msra.mxu0 0.0
      %3106 = vmatprep.subr.mxu0 0.0
      %3107 = vmatpush2.msra.mxu0 0.0
      %3108 = vmatprep.subr.mxu0 0.0
      %3109 = vmatpush2.msra.mxu0 0.0
      %3110 = vmatprep.subr.mxu0 0.0
      %3111 = vmatpush2.msra.mxu0 0.0
      %3112 = vmatprep.subr.mxu0 0.0
      %3113 = vmatpush2.msra.mxu0 0.0
      %3114 = vmatprep.subr.mxu0 0.0
      %3115 = vmatpush2.msra.mxu0 0.0
      %3116 = vmatprep.subr.mxu0 0.0
      %3117 = vmatpush2.msra.mxu0 0.0
      %3118 = vmatprep.subr.mxu0 0.0
      %3119 = vmatpush2.msra.mxu0 0.0
      %3120 = vmatprep.subr.mxu0 0.0
      %3121 = vmatpush2.msra.mxu0 0.0
      %3122 = vmatprep.mubr.f32.mxu0 0.0
      %3123 = vmatmul.mubr.f32.gmra.mxu0 %v3044
      %v3124 = vpop.f32.mrf.mxu0
      %v3125 = vadd.f32 0.0, %v3124
      %v3126 = vpop.f32.mrf.mxu0
      %3127 = vmatprep.mubr.f32.mxu0 0.0
      %3128 = vmatmul.mubr.f32.gmra.mxu0 %v3046
      %v3129 = vpop.f32.mrf.mxu0
      %v3130 = vadd.f32 0.0, %v3129
      %v3131 = vpop.f32.mrf.mxu0
      %3132 = vmatprep.mubr.f32.mxu0 0.0
      %3133 = vmatmul.mubr.f32.gmra.mxu0 %v3048
      %v3134 = vpop.f32.mrf.mxu0
      %v3135 = vadd.f32 0.0, %v3134
      %v3136 = vpop.f32.mrf.mxu0
      %3137 = vmatprep.mubr.f32.mxu0 0.0
      %3138 = vmatmul.mubr.f32.gmra.mxu0 %v3050
      %v3139 = vpop.f32.mrf.mxu0
      %v3140 = vadd.f32 0.0, %v3139
      %v3141 = vpop.f32.mrf.mxu0
      %3142 = vmatprep.mubr.f32.mxu0 0.0
      %3143 = vmatmul.mubr.f32.gmra.mxu0 %v3052
      %v3144 = vpop.f32.mrf.mxu0
      %v3145 = vadd.f32 0.0, %v3144
      %v3146 = vpop.f32.mrf.mxu0
      %3147 = vmatprep.mubr.f32.mxu0 0.0
      %3148 = vmatmul.mubr.f32.gmra.mxu0 %v3054
      %v3149 = vpop.f32.mrf.mxu0
      %v3150 = vadd.f32 0.0, %v3149
      %v3151 = vpop.f32.mrf.mxu0
      %3152 = vmatprep.mubr.f32.mxu0 0.0
      %3153 = vmatmul.mubr.f32.gmra.mxu0 %v3056
      %v3154 = vpop.f32.mrf.mxu0
      %v3155 = vadd.f32 0.0, %v3154
      %v3156 = vpop.f32.mrf.mxu0
      %3157 = vdwg.mxu0
      %v3158 = vadd.f32 %v2987, %v3125
      %v3159 = vadd.f32 %v2992, %v3130
      %v3160 = vadd.f32 %v2997, %v3135
      %v3161 = vadd.f32 %v3002, %v3140
      %v3162 = vadd.f32 %v3007, %v3145
      %v3163 = vadd.f32 %v3012, %v3150
      %v3164 = vadd.f32 %v3017, %v3155
      %s3165 = scalar_lea.vmem %s292, 1344
      %v3166 = vld [vmem:[%s3165] sm:$0xff]
      %v3167 = vld [vmem:[%s3165 + $0x8] sm:$0xff]
      %v3168 = vld [vmem:[%s3165 + $0x10] sm:$0xff]
      %v3169 = vld [vmem:[%s3165 + $0x18] sm:$0xff]
      %v3170 = vld [vmem:[%s3165 + $0x20] sm:$0xff]
      %v3171 = vld [vmem:[%s3165 + $0x28] sm:$0xff]
      %v3172 = vld [vmem:[%s3165 + $0x30] sm:$0xff]
      %v3173 = vld [vmem:[%s3165 + $0x38] sm:$0xff]
      %v3174 = vsel %vm416, %v2748, 0
      %3176 = vmatprep.subr.mxu0 0.0
      %3177 = vmatpush1.msra.mxu0 0.0
      %3178 = vmatprep.subr.mxu0 0.0
      %3179 = vmatpush1.msra.mxu0 0.0
      %3180 = vmatprep.subr.mxu0 0.0
      %3181 = vmatpush1.msra.mxu0 0.0
      %3182 = vmatprep.subr.mxu0 0.0
      %3183 = vmatpush1.msra.mxu0 0.0
      %3184 = vmatprep.subr.mxu0 0.0
      %3185 = vmatpush1.msra.mxu0 0.0
      %3186 = vmatprep.subr.mxu0 0.0
      %3187 = vmatpush1.msra.mxu0 0.0
      %3188 = vmatprep.subr.mxu0 0.0
      %3189 = vmatpush1.msra.mxu0 0.0
      %3190 = vmatprep.subr.mxu0 0.0
      %3191 = vmatpush1.msra.mxu0 0.0
      %3192 = vmatprep.subr.mxu0 0.0
      %3193 = vmatpush1.msra.mxu0 %v3173
      %3194 = vmatprep.subr.mxu0 0.0
      %3195 = vmatpush1.msra.mxu0 %v3172
      %3196 = vmatprep.subr.mxu0 0.0
      %3197 = vmatpush1.msra.mxu0 %v3171
      %3198 = vmatprep.subr.mxu0 0.0
      %3199 = vmatpush1.msra.mxu0 %v3170
      %3200 = vmatprep.subr.mxu0 0.0
      %3201 = vmatpush1.msra.mxu0 %v3169
      %3202 = vmatprep.subr.mxu0 0.0
      %3203 = vmatpush1.msra.mxu0 %v3168
      %3204 = vmatprep.subr.mxu0 0.0
      %3205 = vmatpush1.msra.mxu0 %v3167
      %3206 = vmatprep.subr.mxu0 0.0
      %3207 = vmatpush1.msra.mxu0 %v3166
      %3208 = vmatprep.subr.mxu0 0.0
      %3209 = vmatpush2.msra.mxu0 0.0
      %3210 = vmatprep.subr.mxu0 0.0
      %3211 = vmatpush2.msra.mxu0 0.0
      %3212 = vmatprep.subr.mxu0 0.0
      %3213 = vmatpush2.msra.mxu0 0.0
      %3214 = vmatprep.subr.mxu0 0.0
      %3215 = vmatpush2.msra.mxu0 0.0
      %3216 = vmatprep.subr.mxu0 0.0
      %3217 = vmatpush2.msra.mxu0 0.0
      %3218 = vmatprep.subr.mxu0 0.0
      %3219 = vmatpush2.msra.mxu0 0.0
      %3220 = vmatprep.subr.mxu0 0.0
      %3221 = vmatpush2.msra.mxu0 0.0
      %3222 = vmatprep.subr.mxu0 0.0
      %3223 = vmatpush2.msra.mxu0 0.0
      %3224 = vmatprep.subr.mxu0 0.0
      %3225 = vmatpush2.msra.mxu0 0.0
      %3226 = vmatprep.subr.mxu0 0.0
      %3227 = vmatpush2.msra.mxu0 0.0
      %3228 = vmatprep.subr.mxu0 0.0
      %3229 = vmatpush2.msra.mxu0 0.0
      %3230 = vmatprep.subr.mxu0 0.0
      %3231 = vmatpush2.msra.mxu0 0.0
      %3232 = vmatprep.subr.mxu0 0.0
      %3233 = vmatpush2.msra.mxu0 0.0
      %3234 = vmatprep.subr.mxu0 0.0
      %3235 = vmatpush2.msra.mxu0 0.0
      %3236 = vmatprep.subr.mxu0 0.0
      %3237 = vmatpush2.msra.mxu0 0.0
      %3238 = vmatprep.subr.mxu0 0.0
      %3239 = vmatpush2.msra.mxu0 0.0
      %3240 = vmatprep.mubr.f32.mxu0 0.0
      %3241 = vmatmul.mubr.f32.gmra.mxu0 %v2908
      %v3242 = vpop.f32.mrf.mxu0
      %v3243 = vadd.f32 0.0, %v3242
      %v3244 = vpop.f32.mrf.mxu0
      %3245 = vmatprep.mubr.f32.mxu0 0.0
      %3246 = vmatmul.mubr.f32.gmra.mxu0 %v2910
      %v3247 = vpop.f32.mrf.mxu0
      %v3248 = vadd.f32 0.0, %v3247
      %v3249 = vpop.f32.mrf.mxu0
      %3250 = vmatprep.mubr.f32.mxu0 0.0
      %3251 = vmatmul.mubr.f32.gmra.mxu0 %v2912
      %v3252 = vpop.f32.mrf.mxu0
      %v3253 = vadd.f32 0.0, %v3252
      %v3254 = vpop.f32.mrf.mxu0
      %3255 = vmatprep.mubr.f32.mxu0 0.0
      %3256 = vmatmul.mubr.f32.gmra.mxu0 %v2914
      %v3257 = vpop.f32.mrf.mxu0
      %v3258 = vadd.f32 0.0, %v3257
      %v3259 = vpop.f32.mrf.mxu0
      %3260 = vmatprep.mubr.f32.mxu0 0.0
      %3261 = vmatmul.mubr.f32.gmra.mxu0 %v2916
      %v3262 = vpop.f32.mrf.mxu0
      %v3263 = vadd.f32 0.0, %v3262
      %v3264 = vpop.f32.mrf.mxu0
      %3265 = vmatprep.mubr.f32.mxu0 0.0
      %3266 = vmatmul.mubr.f32.gmra.mxu0 %v2918
      %v3267 = vpop.f32.mrf.mxu0
      %v3268 = vadd.f32 0.0, %v3267
      %v3269 = vpop.f32.mrf.mxu0
      %3270 = vmatprep.mubr.f32.mxu0 0.0
      %3271 = vmatmul.mubr.f32.gmra.mxu0 %v3174
      %v3272 = vpop.f32.mrf.mxu0
      %v3273 = vadd.f32 0.0, %v3272
      %v3274 = vpop.f32.mrf.mxu0
      %3275 = vdwg.mxu0
      %v3276 = vadd.f32 %v3158, %v3243
      %v3277 = vadd.f32 %v3159, %v3248
      %v3278 = vadd.f32 %v3160, %v3253
      %v3279 = vadd.f32 %v3161, %v3258
      %v3280 = vadd.f32 %v3162, %v3263
      %v3281 = vadd.f32 %v3163, %v3268
      %v3282 = vadd.f32 %v3164, %v3273
      %s3283 = scalar_lea.vmem %s292, 1408
      %v3284 = vld [vmem:[%s3283] sm:$0xff]
      %v3285 = vld [vmem:[%s3283 + $0x8] sm:$0xff]
      %v3286 = vld [vmem:[%s3283 + $0x10] sm:$0xff]
      %v3287 = vld [vmem:[%s3283 + $0x18] sm:$0xff]
      %v3288 = vld [vmem:[%s3283 + $0x20] sm:$0xff]
      %v3289 = vld [vmem:[%s3283 + $0x28] sm:$0xff]
      %v3290 = vld [vmem:[%s3283 + $0x30] sm:$0xff]
      %v3291 = vld [vmem:[%s3283 + $0x38] sm:$0xff]
      %v3293 = vrot.slane %v2749, 1
      %v3294 = vsel %vm400, %v2790, %v3293
      %v3295 = vsel %vm416, %v3294, 0
      %3297 = vmatprep.subr.mxu0 0.0
      %3298 = vmatpush1.msra.mxu0 0.0
      %3299 = vmatprep.subr.mxu0 0.0
      %3300 = vmatpush1.msra.mxu0 0.0
      %3301 = vmatprep.subr.mxu0 0.0
      %3302 = vmatpush1.msra.mxu0 0.0
      %3303 = vmatprep.subr.mxu0 0.0
      %3304 = vmatpush1.msra.mxu0 0.0
      %3305 = vmatprep.subr.mxu0 0.0
      %3306 = vmatpush1.msra.mxu0 0.0
      %3307 = vmatprep.subr.mxu0 0.0
      %3308 = vmatpush1.msra.mxu0 0.0
      %3309 = vmatprep.subr.mxu0 0.0
      %3310 = vmatpush1.msra.mxu0 0.0
      %3311 = vmatprep.subr.mxu0 0.0
      %3312 = vmatpush1.msra.mxu0 0.0
      %3313 = vmatprep.subr.mxu0 0.0
      %3314 = vmatpush1.msra.mxu0 %v3291
      %3315 = vmatprep.subr.mxu0 0.0
      %3316 = vmatpush1.msra.mxu0 %v3290
      %3317 = vmatprep.subr.mxu0 0.0
      %3318 = vmatpush1.msra.mxu0 %v3289
      %3319 = vmatprep.subr.mxu0 0.0
      %3320 = vmatpush1.msra.mxu0 %v3288
      %3321 = vmatprep.subr.mxu0 0.0
      %3322 = vmatpush1.msra.mxu0 %v3287
      %3323 = vmatprep.subr.mxu0 0.0
      %3324 = vmatpush1.msra.mxu0 %v3286
      %3325 = vmatprep.subr.mxu0 0.0
      %3326 = vmatpush1.msra.mxu0 %v3285
      %3327 = vmatprep.subr.mxu0 0.0
      %3328 = vmatpush1.msra.mxu0 %v3284
      %3329 = vmatprep.subr.mxu0 0.0
      %3330 = vmatpush2.msra.mxu0 0.0
      %3331 = vmatprep.subr.mxu0 0.0
      %3332 = vmatpush2.msra.mxu0 0.0
      %3333 = vmatprep.subr.mxu0 0.0
      %3334 = vmatpush2.msra.mxu0 0.0
      %3335 = vmatprep.subr.mxu0 0.0
      %3336 = vmatpush2.msra.mxu0 0.0
      %3337 = vmatprep.subr.mxu0 0.0
      %3338 = vmatpush2.msra.mxu0 0.0
      %3339 = vmatprep.subr.mxu0 0.0
      %3340 = vmatpush2.msra.mxu0 0.0
      %3341 = vmatprep.subr.mxu0 0.0
      %3342 = vmatpush2.msra.mxu0 0.0
      %3343 = vmatprep.subr.mxu0 0.0
      %3344 = vmatpush2.msra.mxu0 0.0
      %3345 = vmatprep.subr.mxu0 0.0
      %3346 = vmatpush2.msra.mxu0 0.0
      %3347 = vmatprep.subr.mxu0 0.0
      %3348 = vmatpush2.msra.mxu0 0.0
      %3349 = vmatprep.subr.mxu0 0.0
      %3350 = vmatpush2.msra.mxu0 0.0
      %3351 = vmatprep.subr.mxu0 0.0
      %3352 = vmatpush2.msra.mxu0 0.0
      %3353 = vmatprep.subr.mxu0 0.0
      %3354 = vmatpush2.msra.mxu0 0.0
      %3355 = vmatprep.subr.mxu0 0.0
      %3356 = vmatpush2.msra.mxu0 0.0
      %3357 = vmatprep.subr.mxu0 0.0
      %3358 = vmatpush2.msra.mxu0 0.0
      %3359 = vmatprep.subr.mxu0 0.0
      %3360 = vmatpush2.msra.mxu0 0.0
      %3361 = vmatprep.mubr.f32.mxu0 0.0
      %3362 = vmatmul.mubr.f32.gmra.mxu0 %v2794
      %v3363 = vpop.f32.mrf.mxu0
      %v3364 = vadd.f32 0.0, %v3363
      %v3365 = vpop.f32.mrf.mxu0
      %3366 = vmatprep.mubr.f32.mxu0 0.0
      %3367 = vmatmul.mubr.f32.gmra.mxu0 %v2796
      %v3368 = vpop.f32.mrf.mxu0
      %v3369 = vadd.f32 0.0, %v3368
      %v3370 = vpop.f32.mrf.mxu0
      %3371 = vmatprep.mubr.f32.mxu0 0.0
      %3372 = vmatmul.mubr.f32.gmra.mxu0 %v2798
      %v3373 = vpop.f32.mrf.mxu0
      %v3374 = vadd.f32 0.0, %v3373
      %v3375 = vpop.f32.mrf.mxu0
      %3376 = vmatprep.mubr.f32.mxu0 0.0
      %3377 = vmatmul.mubr.f32.gmra.mxu0 %v2800
      %v3378 = vpop.f32.mrf.mxu0
      %v3379 = vadd.f32 0.0, %v3378
      %v3380 = vpop.f32.mrf.mxu0
      %3381 = vmatprep.mubr.f32.mxu0 0.0
      %3382 = vmatmul.mubr.f32.gmra.mxu0 %v2802
      %v3383 = vpop.f32.mrf.mxu0
      %v3384 = vadd.f32 0.0, %v3383
      %v3385 = vpop.f32.mrf.mxu0
      %3386 = vmatprep.mubr.f32.mxu0 0.0
      %3387 = vmatmul.mubr.f32.gmra.mxu0 %v2804
      %v3388 = vpop.f32.mrf.mxu0
      %v3389 = vadd.f32 0.0, %v3388
      %v3390 = vpop.f32.mrf.mxu0
      %3391 = vmatprep.mubr.f32.mxu0 0.0
      %3392 = vmatmul.mubr.f32.gmra.mxu0 %v3295
      %v3393 = vpop.f32.mrf.mxu0
      %v3394 = vadd.f32 0.0, %v3393
      %v3395 = vpop.f32.mrf.mxu0
      %3396 = vdwg.mxu0
      %v3397 = vadd.f32 %v3276, %v3364
      %v3398 = vadd.f32 %v3277, %v3369
      %v3399 = vadd.f32 %v3278, %v3374
      %v3400 = vadd.f32 %v3279, %v3379
      %v3401 = vadd.f32 %v3280, %v3384
      %v3402 = vadd.f32 %v3281, %v3389
      %v3403 = vadd.f32 %v3282, %v3394
      %s3404 = scalar_lea.vmem %s292, 1472
      %v3405 = vld [vmem:[%s3404] sm:$0xff]
      %v3406 = vld [vmem:[%s3404 + $0x8] sm:$0xff]
      %v3407 = vld [vmem:[%s3404 + $0x10] sm:$0xff]
      %v3408 = vld [vmem:[%s3404 + $0x18] sm:$0xff]
      %v3409 = vld [vmem:[%s3404 + $0x20] sm:$0xff]
      %v3410 = vld [vmem:[%s3404 + $0x28] sm:$0xff]
      %v3411 = vld [vmem:[%s3404 + $0x30] sm:$0xff]
      %v3412 = vld [vmem:[%s3404 + $0x38] sm:$0xff]
      %v3413 = vrot.slane %v2749, 2
      %v3414 = vsel %vm654, %v3042, %v3413
      %v3415 = vsel %vm416, %v3414, 0
      %3417 = vmatprep.subr.mxu0 0.0
      %3418 = vmatpush1.msra.mxu0 0.0
      %3419 = vmatprep.subr.mxu0 0.0
      %3420 = vmatpush1.msra.mxu0 0.0
      %3421 = vmatprep.subr.mxu0 0.0
      %3422 = vmatpush1.msra.mxu0 0.0
      %3423 = vmatprep.subr.mxu0 0.0
      %3424 = vmatpush1.msra.mxu0 0.0
      %3425 = vmatprep.subr.mxu0 0.0
      %3426 = vmatpush1.msra.mxu0 0.0
      %3427 = vmatprep.subr.mxu0 0.0
      %3428 = vmatpush1.msra.mxu0 0.0
      %3429 = vmatprep.subr.mxu0 0.0
      %3430 = vmatpush1.msra.mxu0 0.0
      %3431 = vmatprep.subr.mxu0 0.0
      %3432 = vmatpush1.msra.mxu0 0.0
      %3433 = vmatprep.subr.mxu0 0.0
      %3434 = vmatpush1.msra.mxu0 %v3412
      %3435 = vmatprep.subr.mxu0 0.0
      %3436 = vmatpush1.msra.mxu0 %v3411
      %3437 = vmatprep.subr.mxu0 0.0
      %3438 = vmatpush1.msra.mxu0 %v3410
      %3439 = vmatprep.subr.mxu0 0.0
      %3440 = vmatpush1.msra.mxu0 %v3409
      %3441 = vmatprep.subr.mxu0 0.0
      %3442 = vmatpush1.msra.mxu0 %v3408
      %3443 = vmatprep.subr.mxu0 0.0
      %3444 = vmatpush1.msra.mxu0 %v3407
      %3445 = vmatprep.subr.mxu0 0.0
      %3446 = vmatpush1.msra.mxu0 %v3406
      %3447 = vmatprep.subr.mxu0 0.0
      %3448 = vmatpush1.msra.mxu0 %v3405
      %3449 = vmatprep.subr.mxu0 0.0
      %3450 = vmatpush2.msra.mxu0 0.0
      %3451 = vmatprep.subr.mxu0 0.0
      %3452 = vmatpush2.msra.mxu0 0.0
      %3453 = vmatprep.subr.mxu0 0.0
      %3454 = vmatpush2.msra.mxu0 0.0
      %3455 = vmatprep.subr.mxu0 0.0
      %3456 = vmatpush2.msra.mxu0 0.0
      %3457 = vmatprep.subr.mxu0 0.0
      %3458 = vmatpush2.msra.mxu0 0.0
      %3459 = vmatprep.subr.mxu0 0.0
      %3460 = vmatpush2.msra.mxu0 0.0
      %3461 = vmatprep.subr.mxu0 0.0
      %3462 = vmatpush2.msra.mxu0 0.0
      %3463 = vmatprep.subr.mxu0 0.0
      %3464 = vmatpush2.msra.mxu0 0.0
      %3465 = vmatprep.subr.mxu0 0.0
      %3466 = vmatpush2.msra.mxu0 0.0
      %3467 = vmatprep.subr.mxu0 0.0
      %3468 = vmatpush2.msra.mxu0 0.0
      %3469 = vmatprep.subr.mxu0 0.0
      %3470 = vmatpush2.msra.mxu0 0.0
      %3471 = vmatprep.subr.mxu0 0.0
      %3472 = vmatpush2.msra.mxu0 0.0
      %3473 = vmatprep.subr.mxu0 0.0
      %3474 = vmatpush2.msra.mxu0 0.0
      %3475 = vmatprep.subr.mxu0 0.0
      %3476 = vmatpush2.msra.mxu0 0.0
      %3477 = vmatprep.subr.mxu0 0.0
      %3478 = vmatpush2.msra.mxu0 0.0
      %3479 = vmatprep.subr.mxu0 0.0
      %3480 = vmatpush2.msra.mxu0 0.0
      %3481 = vmatprep.mubr.f32.mxu0 0.0
      %3482 = vmatmul.mubr.f32.gmra.mxu0 %v3046
      %v3483 = vpop.f32.mrf.mxu0
      %v3484 = vadd.f32 0.0, %v3483
      %v3485 = vpop.f32.mrf.mxu0
      %3486 = vmatprep.mubr.f32.mxu0 0.0
      %3487 = vmatmul.mubr.f32.gmra.mxu0 %v3048
      %v3488 = vpop.f32.mrf.mxu0
      %v3489 = vadd.f32 0.0, %v3488
      %v3490 = vpop.f32.mrf.mxu0
      %3491 = vmatprep.mubr.f32.mxu0 0.0
      %3492 = vmatmul.mubr.f32.gmra.mxu0 %v3050
      %v3493 = vpop.f32.mrf.mxu0
      %v3494 = vadd.f32 0.0, %v3493
      %v3495 = vpop.f32.mrf.mxu0
      %3496 = vmatprep.mubr.f32.mxu0 0.0
      %3497 = vmatmul.mubr.f32.gmra.mxu0 %v3052
      %v3498 = vpop.f32.mrf.mxu0
      %v3499 = vadd.f32 0.0, %v3498
      %v3500 = vpop.f32.mrf.mxu0
      %3501 = vmatprep.mubr.f32.mxu0 0.0
      %3502 = vmatmul.mubr.f32.gmra.mxu0 %v3054
      %v3503 = vpop.f32.mrf.mxu0
      %v3504 = vadd.f32 0.0, %v3503
      %v3505 = vpop.f32.mrf.mxu0
      %3506 = vmatprep.mubr.f32.mxu0 0.0
      %3507 = vmatmul.mubr.f32.gmra.mxu0 %v3056
      %v3508 = vpop.f32.mrf.mxu0
      %v3509 = vadd.f32 0.0, %v3508
      %v3510 = vpop.f32.mrf.mxu0
      %3511 = vmatprep.mubr.f32.mxu0 0.0
      %3512 = vmatmul.mubr.f32.gmra.mxu0 %v3415
      %v3513 = vpop.f32.mrf.mxu0
      %v3514 = vadd.f32 0.0, %v3513
      %v3515 = vpop.f32.mrf.mxu0
      %3516 = vdwg.mxu0
      %v3517 = vadd.f32 %v3397, %v3484
      %v3518 = vadd.f32 %v3398, %v3489
      %v3519 = vadd.f32 %v3399, %v3494
      %v3520 = vadd.f32 %v3400, %v3499
      %v3521 = vadd.f32 %v3401, %v3504
      %v3522 = vadd.f32 %v3402, %v3509
      %v3523 = vadd.f32 %v3403, %v3514
      %s3524 = scalar_lea.vmem %s292, 1536
      %v3525 = vld [vmem:[%s3524] sm:$0xff]
      %v3526 = vld [vmem:[%s3524 + $0x8] sm:$0xff]
      %v3527 = vld [vmem:[%s3524 + $0x10] sm:$0xff]
      %v3528 = vld [vmem:[%s3524 + $0x18] sm:$0xff]
      %v3529 = vld [vmem:[%s3524 + $0x20] sm:$0xff]
      %v3530 = vld [vmem:[%s3524 + $0x28] sm:$0xff]
      %v3531 = vld [vmem:[%s3524 + $0x30] sm:$0xff]
      %v3532 = vld [vmem:[%s3524 + $0x38] sm:$0xff]
      %v3533 = vsel %vm416, %v2749, 0
      %3535 = vmatprep.subr.mxu0 0.0
      %3536 = vmatpush1.msra.mxu0 0.0
      %3537 = vmatprep.subr.mxu0 0.0
      %3538 = vmatpush1.msra.mxu0 0.0
      %3539 = vmatprep.subr.mxu0 0.0
      %3540 = vmatpush1.msra.mxu0 0.0
      %3541 = vmatprep.subr.mxu0 0.0
      %3542 = vmatpush1.msra.mxu0 0.0
      %3543 = vmatprep.subr.mxu0 0.0
      %3544 = vmatpush1.msra.mxu0 0.0
      %3545 = vmatprep.subr.mxu0 0.0
      %3546 = vmatpush1.msra.mxu0 0.0
      %3547 = vmatprep.subr.mxu0 0.0
      %3548 = vmatpush1.msra.mxu0 0.0
      %3549 = vmatprep.subr.mxu0 0.0
      %3550 = vmatpush1.msra.mxu0 0.0
      %3551 = vmatprep.subr.mxu0 0.0
      %3552 = vmatpush1.msra.mxu0 %v3532
      %3553 = vmatprep.subr.mxu0 0.0
      %3554 = vmatpush1.msra.mxu0 %v3531
      %3555 = vmatprep.subr.mxu0 0.0
      %3556 = vmatpush1.msra.mxu0 %v3530
      %3557 = vmatprep.subr.mxu0 0.0
      %3558 = vmatpush1.msra.mxu0 %v3529
      %3559 = vmatprep.subr.mxu0 0.0
      %3560 = vmatpush1.msra.mxu0 %v3528
      %3561 = vmatprep.subr.mxu0 0.0
      %3562 = vmatpush1.msra.mxu0 %v3527
      %3563 = vmatprep.subr.mxu0 0.0
      %3564 = vmatpush1.msra.mxu0 %v3526
      %3565 = vmatprep.subr.mxu0 0.0
      %3566 = vmatpush1.msra.mxu0 %v3525
      %3567 = vmatprep.subr.mxu0 0.0
      %3568 = vmatpush2.msra.mxu0 0.0
      %3569 = vmatprep.subr.mxu0 0.0
      %3570 = vmatpush2.msra.mxu0 0.0
      %3571 = vmatprep.subr.mxu0 0.0
      %3572 = vmatpush2.msra.mxu0 0.0
      %3573 = vmatprep.subr.mxu0 0.0
      %3574 = vmatpush2.msra.mxu0 0.0
      %3575 = vmatprep.subr.mxu0 0.0
      %3576 = vmatpush2.msra.mxu0 0.0
      %3577 = vmatprep.subr.mxu0 0.0
      %3578 = vmatpush2.msra.mxu0 0.0
      %3579 = vmatprep.subr.mxu0 0.0
      %3580 = vmatpush2.msra.mxu0 0.0
      %3581 = vmatprep.subr.mxu0 0.0
      %3582 = vmatpush2.msra.mxu0 0.0
      %3583 = vmatprep.subr.mxu0 0.0
      %3584 = vmatpush2.msra.mxu0 0.0
      %3585 = vmatprep.subr.mxu0 0.0
      %3586 = vmatpush2.msra.mxu0 0.0
      %3587 = vmatprep.subr.mxu0 0.0
      %3588 = vmatpush2.msra.mxu0 0.0
      %3589 = vmatprep.subr.mxu0 0.0
      %3590 = vmatpush2.msra.mxu0 0.0
      %3591 = vmatprep.subr.mxu0 0.0
      %3592 = vmatpush2.msra.mxu0 0.0
      %3593 = vmatprep.subr.mxu0 0.0
      %3594 = vmatpush2.msra.mxu0 0.0
      %3595 = vmatprep.subr.mxu0 0.0
      %3596 = vmatpush2.msra.mxu0 0.0
      %3597 = vmatprep.subr.mxu0 0.0
      %3598 = vmatpush2.msra.mxu0 0.0
      %3599 = vmatprep.mubr.f32.mxu0 0.0
      %3600 = vmatmul.mubr.f32.gmra.mxu0 %v2910
      %v3601 = vpop.f32.mrf.mxu0
      %v3602 = vadd.f32 0.0, %v3601
      %v3603 = vpop.f32.mrf.mxu0
      %3604 = vmatprep.mubr.f32.mxu0 0.0
      %3605 = vmatmul.mubr.f32.gmra.mxu0 %v2912
      %v3606 = vpop.f32.mrf.mxu0
      %v3607 = vadd.f32 0.0, %v3606
      %v3608 = vpop.f32.mrf.mxu0
      %3609 = vmatprep.mubr.f32.mxu0 0.0
      %3610 = vmatmul.mubr.f32.gmra.mxu0 %v2914
      %v3611 = vpop.f32.mrf.mxu0
      %v3612 = vadd.f32 0.0, %v3611
      %v3613 = vpop.f32.mrf.mxu0
      %3614 = vmatprep.mubr.f32.mxu0 0.0
      %3615 = vmatmul.mubr.f32.gmra.mxu0 %v2916
      %v3616 = vpop.f32.mrf.mxu0
      %v3617 = vadd.f32 0.0, %v3616
      %v3618 = vpop.f32.mrf.mxu0
      %3619 = vmatprep.mubr.f32.mxu0 0.0
      %3620 = vmatmul.mubr.f32.gmra.mxu0 %v2918
      %v3621 = vpop.f32.mrf.mxu0
      %v3622 = vadd.f32 0.0, %v3621
      %v3623 = vpop.f32.mrf.mxu0
      %3624 = vmatprep.mubr.f32.mxu0 0.0
      %3625 = vmatmul.mubr.f32.gmra.mxu0 %v3174
      %v3626 = vpop.f32.mrf.mxu0
      %v3627 = vadd.f32 0.0, %v3626
      %v3628 = vpop.f32.mrf.mxu0
      %3629 = vmatprep.mubr.f32.mxu0 0.0
      %3630 = vmatmul.mubr.f32.gmra.mxu0 %v3533
      %v3631 = vpop.f32.mrf.mxu0
      %v3632 = vadd.f32 0.0, %v3631
      %v3633 = vpop.f32.mrf.mxu0
      %3634 = vdwg.mxu0
      %v3635 = vadd.f32 %v3517, %v3602
      %v3636 = vadd.f32 %v3518, %v3607
      %v3637 = vadd.f32 %v3519, %v3612
      %v3638 = vadd.f32 %v3520, %v3617
      %v3639 = vadd.f32 %v3521, %v3622
      %v3640 = vadd.f32 %v3522, %v3627
      %v3641 = vadd.f32 %v3523, %v3632
      %s3642 = scalar_lea.vmem %s292, 1600
      %v3643 = vld [vmem:[%s3642] sm:$0xff]
      %v3644 = vld [vmem:[%s3642 + $0x8] sm:$0xff]
      %v3645 = vld [vmem:[%s3642 + $0x10] sm:$0xff]
      %v3646 = vld [vmem:[%s3642 + $0x18] sm:$0xff]
      %v3647 = vld [vmem:[%s3642 + $0x20] sm:$0xff]
      %v3648 = vld [vmem:[%s3642 + $0x28] sm:$0xff]
      %v3649 = vld [vmem:[%s3642 + $0x30] sm:$0xff]
      %v3650 = vld [vmem:[%s3642 + $0x38] sm:$0xff]
      %v3652 = vrot.slane %v2750, 1
      %v3653 = vsel %vm400, %v3293, %v3652
      %v3654 = vsel %vm416, %v3653, 0
      %3656 = vmatprep.subr.mxu0 0.0
      %3657 = vmatpush1.msra.mxu0 0.0
      %3658 = vmatprep.subr.mxu0 0.0
      %3659 = vmatpush1.msra.mxu0 0.0
      %3660 = vmatprep.subr.mxu0 0.0
      %3661 = vmatpush1.msra.mxu0 0.0
      %3662 = vmatprep.subr.mxu0 0.0
      %3663 = vmatpush1.msra.mxu0 0.0
      %3664 = vmatprep.subr.mxu0 0.0
      %3665 = vmatpush1.msra.mxu0 0.0
      %3666 = vmatprep.subr.mxu0 0.0
      %3667 = vmatpush1.msra.mxu0 0.0
      %3668 = vmatprep.subr.mxu0 0.0
      %3669 = vmatpush1.msra.mxu0 0.0
      %3670 = vmatprep.subr.mxu0 0.0
      %3671 = vmatpush1.msra.mxu0 0.0
      %3672 = vmatprep.subr.mxu0 0.0
      %3673 = vmatpush1.msra.mxu0 %v3650
      %3674 = vmatprep.subr.mxu0 0.0
      %3675 = vmatpush1.msra.mxu0 %v3649
      %3676 = vmatprep.subr.mxu0 0.0
      %3677 = vmatpush1.msra.mxu0 %v3648
      %3678 = vmatprep.subr.mxu0 0.0
      %3679 = vmatpush1.msra.mxu0 %v3647
      %3680 = vmatprep.subr.mxu0 0.0
      %3681 = vmatpush1.msra.mxu0 %v3646
      %3682 = vmatprep.subr.mxu0 0.0
      %3683 = vmatpush1.msra.mxu0 %v3645
      %3684 = vmatprep.subr.mxu0 0.0
      %3685 = vmatpush1.msra.mxu0 %v3644
      %3686 = vmatprep.subr.mxu0 0.0
      %3687 = vmatpush1.msra.mxu0 %v3643
      %3688 = vmatprep.subr.mxu0 0.0
      %3689 = vmatpush2.msra.mxu0 0.0
      %3690 = vmatprep.subr.mxu0 0.0
      %3691 = vmatpush2.msra.mxu0 0.0
      %3692 = vmatprep.subr.mxu0 0.0
      %3693 = vmatpush2.msra.mxu0 0.0
      %3694 = vmatprep.subr.mxu0 0.0
      %3695 = vmatpush2.msra.mxu0 0.0
      %3696 = vmatprep.subr.mxu0 0.0
      %3697 = vmatpush2.msra.mxu0 0.0
      %3698 = vmatprep.subr.mxu0 0.0
      %3699 = vmatpush2.msra.mxu0 0.0
      %3700 = vmatprep.subr.mxu0 0.0
      %3701 = vmatpush2.msra.mxu0 0.0
      %3702 = vmatprep.subr.mxu0 0.0
      %3703 = vmatpush2.msra.mxu0 0.0
      %3704 = vmatprep.subr.mxu0 0.0
      %3705 = vmatpush2.msra.mxu0 0.0
      %3706 = vmatprep.subr.mxu0 0.0
      %3707 = vmatpush2.msra.mxu0 0.0
      %3708 = vmatprep.subr.mxu0 0.0
      %3709 = vmatpush2.msra.mxu0 0.0
      %3710 = vmatprep.subr.mxu0 0.0
      %3711 = vmatpush2.msra.mxu0 0.0
      %3712 = vmatprep.subr.mxu0 0.0
      %3713 = vmatpush2.msra.mxu0 0.0
      %3714 = vmatprep.subr.mxu0 0.0
      %3715 = vmatpush2.msra.mxu0 0.0
      %3716 = vmatprep.subr.mxu0 0.0
      %3717 = vmatpush2.msra.mxu0 0.0
      %3718 = vmatprep.subr.mxu0 0.0
      %3719 = vmatpush2.msra.mxu0 0.0
      %3720 = vmatprep.mubr.f32.mxu0 0.0
      %3721 = vmatmul.mubr.f32.gmra.mxu0 %v2796
      %v3722 = vpop.f32.mrf.mxu0
      %v3723 = vadd.f32 0.0, %v3722
      %v3724 = vpop.f32.mrf.mxu0
      %3725 = vmatprep.mubr.f32.mxu0 0.0
      %3726 = vmatmul.mubr.f32.gmra.mxu0 %v2798
      %v3727 = vpop.f32.mrf.mxu0
      %v3728 = vadd.f32 0.0, %v3727
      %v3729 = vpop.f32.mrf.mxu0
      %3730 = vmatprep.mubr.f32.mxu0 0.0
      %3731 = vmatmul.mubr.f32.gmra.mxu0 %v2800
      %v3732 = vpop.f32.mrf.mxu0
      %v3733 = vadd.f32 0.0, %v3732
      %v3734 = vpop.f32.mrf.mxu0
      %3735 = vmatprep.mubr.f32.mxu0 0.0
      %3736 = vmatmul.mubr.f32.gmra.mxu0 %v2802
      %v3737 = vpop.f32.mrf.mxu0
      %v3738 = vadd.f32 0.0, %v3737
      %v3739 = vpop.f32.mrf.mxu0
      %3740 = vmatprep.mubr.f32.mxu0 0.0
      %3741 = vmatmul.mubr.f32.gmra.mxu0 %v2804
      %v3742 = vpop.f32.mrf.mxu0
      %v3743 = vadd.f32 0.0, %v3742
      %v3744 = vpop.f32.mrf.mxu0
      %3745 = vmatprep.mubr.f32.mxu0 0.0
      %3746 = vmatmul.mubr.f32.gmra.mxu0 %v3295
      %v3747 = vpop.f32.mrf.mxu0
      %v3748 = vadd.f32 0.0, %v3747
      %v3749 = vpop.f32.mrf.mxu0
      %3750 = vmatprep.mubr.f32.mxu0 0.0
      %3751 = vmatmul.mubr.f32.gmra.mxu0 %v3654
      %v3752 = vpop.f32.mrf.mxu0
      %v3753 = vadd.f32 0.0, %v3752
      %v3754 = vpop.f32.mrf.mxu0
      %3755 = vdwg.mxu0
      %v3756 = vadd.f32 %v3635, %v3723
      %v3757 = vadd.f32 %v3636, %v3728
      %v3758 = vadd.f32 %v3637, %v3733
      %v3759 = vadd.f32 %v3638, %v3738
      %v3760 = vadd.f32 %v3639, %v3743
      %v3761 = vadd.f32 %v3640, %v3748
      %v3762 = vadd.f32 %v3641, %v3753
      %s3763 = scalar_lea.vmem %s292, 1664
      %v3764 = vld [vmem:[%s3763] sm:$0xff]
      %v3765 = vld [vmem:[%s3763 + $0x8] sm:$0xff]
      %v3766 = vld [vmem:[%s3763 + $0x10] sm:$0xff]
      %v3767 = vld [vmem:[%s3763 + $0x18] sm:$0xff]
      %v3768 = vld [vmem:[%s3763 + $0x20] sm:$0xff]
      %v3769 = vld [vmem:[%s3763 + $0x28] sm:$0xff]
      %v3770 = vld [vmem:[%s3763 + $0x30] sm:$0xff]
      %v3771 = vld [vmem:[%s3763 + $0x38] sm:$0xff]
      %v3772 = vrot.slane %v2750, 2
      %v3773 = vsel %vm654, %v3413, %v3772
      %v3774 = vsel %vm416, %v3773, 0
      %3776 = vmatprep.subr.mxu0 0.0
      %3777 = vmatpush1.msra.mxu0 0.0
      %3778 = vmatprep.subr.mxu0 0.0
      %3779 = vmatpush1.msra.mxu0 0.0
      %3780 = vmatprep.subr.mxu0 0.0
      %3781 = vmatpush1.msra.mxu0 0.0
      %3782 = vmatprep.subr.mxu0 0.0
      %3783 = vmatpush1.msra.mxu0 0.0
      %3784 = vmatprep.subr.mxu0 0.0
      %3785 = vmatpush1.msra.mxu0 0.0
      %3786 = vmatprep.subr.mxu0 0.0
      %3787 = vmatpush1.msra.mxu0 0.0
      %3788 = vmatprep.subr.mxu0 0.0
      %3789 = vmatpush1.msra.mxu0 0.0
      %3790 = vmatprep.subr.mxu0 0.0
      %3791 = vmatpush1.msra.mxu0 0.0
      %3792 = vmatprep.subr.mxu0 0.0
      %3793 = vmatpush1.msra.mxu0 %v3771
      %3794 = vmatprep.subr.mxu0 0.0
      %3795 = vmatpush1.msra.mxu0 %v3770
      %3796 = vmatprep.subr.mxu0 0.0
      %3797 = vmatpush1.msra.mxu0 %v3769
      %3798 = vmatprep.subr.mxu0 0.0
      %3799 = vmatpush1.msra.mxu0 %v3768
      %3800 = vmatprep.subr.mxu0 0.0
      %3801 = vmatpush1.msra.mxu0 %v3767
      %3802 = vmatprep.subr.mxu0 0.0
      %3803 = vmatpush1.msra.mxu0 %v3766
      %3804 = vmatprep.subr.mxu0 0.0
      %3805 = vmatpush1.msra.mxu0 %v3765
      %3806 = vmatprep.subr.mxu0 0.0
      %3807 = vmatpush1.msra.mxu0 %v3764
      %3808 = vmatprep.subr.mxu0 0.0
      %3809 = vmatpush2.msra.mxu0 0.0
      %3810 = vmatprep.subr.mxu0 0.0
      %3811 = vmatpush2.msra.mxu0 0.0
      %3812 = vmatprep.subr.mxu0 0.0
      %3813 = vmatpush2.msra.mxu0 0.0
      %3814 = vmatprep.subr.mxu0 0.0
      %3815 = vmatpush2.msra.mxu0 0.0
      %3816 = vmatprep.subr.mxu0 0.0
      %3817 = vmatpush2.msra.mxu0 0.0
      %3818 = vmatprep.subr.mxu0 0.0
      %3819 = vmatpush2.msra.mxu0 0.0
      %3820 = vmatprep.subr.mxu0 0.0
      %3821 = vmatpush2.msra.mxu0 0.0
      %3822 = vmatprep.subr.mxu0 0.0
      %3823 = vmatpush2.msra.mxu0 0.0
      %3824 = vmatprep.subr.mxu0 0.0
      %3825 = vmatpush2.msra.mxu0 0.0
      %3826 = vmatprep.subr.mxu0 0.0
      %3827 = vmatpush2.msra.mxu0 0.0
      %3828 = vmatprep.subr.mxu0 0.0
      %3829 = vmatpush2.msra.mxu0 0.0
      %3830 = vmatprep.subr.mxu0 0.0
      %3831 = vmatpush2.msra.mxu0 0.0
      %3832 = vmatprep.subr.mxu0 0.0
      %3833 = vmatpush2.msra.mxu0 0.0
      %3834 = vmatprep.subr.mxu0 0.0
      %3835 = vmatpush2.msra.mxu0 0.0
      %3836 = vmatprep.subr.mxu0 0.0
      %3837 = vmatpush2.msra.mxu0 0.0
      %3838 = vmatprep.subr.mxu0 0.0
      %3839 = vmatpush2.msra.mxu0 0.0
      %3840 = vmatprep.mubr.f32.mxu0 0.0
      %3841 = vmatmul.mubr.f32.gmra.mxu0 %v3048
      %v3842 = vpop.f32.mrf.mxu0
      %v3843 = vadd.f32 0.0, %v3842
      %v3844 = vpop.f32.mrf.mxu0
      %3845 = vmatprep.mubr.f32.mxu0 0.0
      %3846 = vmatmul.mubr.f32.gmra.mxu0 %v3050
      %v3847 = vpop.f32.mrf.mxu0
      %v3848 = vadd.f32 0.0, %v3847
      %v3849 = vpop.f32.mrf.mxu0
      %3850 = vmatprep.mubr.f32.mxu0 0.0
      %3851 = vmatmul.mubr.f32.gmra.mxu0 %v3052
      %v3852 = vpop.f32.mrf.mxu0
      %v3853 = vadd.f32 0.0, %v3852
      %v3854 = vpop.f32.mrf.mxu0
      %3855 = vmatprep.mubr.f32.mxu0 0.0
      %3856 = vmatmul.mubr.f32.gmra.mxu0 %v3054
      %v3857 = vpop.f32.mrf.mxu0
      %v3858 = vadd.f32 0.0, %v3857
      %v3859 = vpop.f32.mrf.mxu0
      %3860 = vmatprep.mubr.f32.mxu0 0.0
      %3861 = vmatmul.mubr.f32.gmra.mxu0 %v3056
      %v3862 = vpop.f32.mrf.mxu0
      %v3863 = vadd.f32 0.0, %v3862
      %v3864 = vpop.f32.mrf.mxu0
      %3865 = vmatprep.mubr.f32.mxu0 0.0
      %3866 = vmatmul.mubr.f32.gmra.mxu0 %v3415
      %v3867 = vpop.f32.mrf.mxu0
      %v3868 = vadd.f32 0.0, %v3867
      %v3869 = vpop.f32.mrf.mxu0
      %3870 = vmatprep.mubr.f32.mxu0 0.0
      %3871 = vmatmul.mubr.f32.gmra.mxu0 %v3774
      %v3872 = vpop.f32.mrf.mxu0
      %v3873 = vadd.f32 0.0, %v3872
      %v3874 = vpop.f32.mrf.mxu0
      %3875 = vdwg.mxu0
      %v3876 = vadd.f32 %v3756, %v3843
      %v3877 = vadd.f32 %v3757, %v3848
      %v3878 = vadd.f32 %v3758, %v3853
      %v3879 = vadd.f32 %v3759, %v3858
      %v3880 = vadd.f32 %v3760, %v3863
      %v3881 = vadd.f32 %v3761, %v3868
      %v3882 = vadd.f32 %v3762, %v3873
      %s3883 = scalar_lea.vmem %s292, 1728
      %v3884 = vld [vmem:[%s3883] sm:$0xff]
      %v3885 = vld [vmem:[%s3883 + $0x8] sm:$0xff]
      %v3886 = vld [vmem:[%s3883 + $0x10] sm:$0xff]
      %v3887 = vld [vmem:[%s3883 + $0x18] sm:$0xff]
      %v3888 = vld [vmem:[%s3883 + $0x20] sm:$0xff]
      %v3889 = vld [vmem:[%s3883 + $0x28] sm:$0xff]
      %v3890 = vld [vmem:[%s3883 + $0x30] sm:$0xff]
      %v3891 = vld [vmem:[%s3883 + $0x38] sm:$0xff]
      %s3892 = scalar_lea.vmem %s292, 1792
      %v3893 = vld [vmem:[%s3892] sm:$0xff]
      %v3894 = vld [vmem:[%s3892 + $0x8] sm:$0xff]
      %v3895 = vld [vmem:[%s3892 + $0x10] sm:$0xff]
      %v3896 = vld [vmem:[%s3892 + $0x18] sm:$0xff]
      %v3897 = vld [vmem:[%s3892 + $0x20] sm:$0xff]
      %v3898 = vld [vmem:[%s3892 + $0x28] sm:$0xff]
      %v3899 = vld [vmem:[%s3892 + $0x30] sm:$0xff]
      %v3900 = vld [vmem:[%s3892 + $0x38] sm:$0xff]
      %3901 = vrot.lane.b32.xlu0 %v2779, 64
      %v3902 = vpop.permute.xlu0 %3901
      %3903 = vrot.lane.b32.xlu0 %v2781, 64
      %v3904 = vpop.permute.xlu0 %3903
      %3905 = vrot.lane.b32.xlu0 %v2783, 64
      %v3906 = vpop.permute.xlu0 %3905
      %3907 = vrot.lane.b32.xlu0 %v2785, 64
      %v3908 = vpop.permute.xlu0 %3907
      %3909 = vrot.lane.b32.xlu0 %v2787, 64
      %v3910 = vpop.permute.xlu0 %3909
      %3911 = vrot.lane.b32.xlu0 %v2789, 64
      %v3912 = vpop.permute.xlu0 %3911
      %3913 = vrot.lane.b32.xlu0 %v2791, 64
      %v3914 = vpop.permute.xlu0 %3913
      %v3915 = vsel %vm416, %v3902, 0
      %v3917 = vsel %vm416, %v3904, 0
      %v3919 = vsel %vm416, %v3906, 0
      %v3921 = vsel %vm416, %v3908, 0
      %v3923 = vsel %vm416, %v3910, 0
      %v3925 = vsel %vm416, %v3912, 0
      %v3927 = vsel %vm416, %v3914, 0
      %3929 = vmatprep.subr.mxu0 0.0
      %3930 = vmatpush1.msra.mxu0 0.0
      %3931 = vmatprep.subr.mxu0 0.0
      %3932 = vmatpush1.msra.mxu0 0.0
      %3933 = vmatprep.subr.mxu0 0.0
      %3934 = vmatpush1.msra.mxu0 0.0
      %3935 = vmatprep.subr.mxu0 0.0
      %3936 = vmatpush1.msra.mxu0 0.0
      %3937 = vmatprep.subr.mxu0 0.0
      %3938 = vmatpush1.msra.mxu0 0.0
      %3939 = vmatprep.subr.mxu0 0.0
      %3940 = vmatpush1.msra.mxu0 0.0
      %3941 = vmatprep.subr.mxu0 0.0
      %3942 = vmatpush1.msra.mxu0 0.0
      %3943 = vmatprep.subr.mxu0 0.0
      %3944 = vmatpush1.msra.mxu0 0.0
      %3945 = vmatprep.subr.mxu0 0.0
      %3946 = vmatpush1.msra.mxu0 %v3900
      %3947 = vmatprep.subr.mxu0 0.0
      %3948 = vmatpush1.msra.mxu0 %v3899
      %3949 = vmatprep.subr.mxu0 0.0
      %3950 = vmatpush1.msra.mxu0 %v3898
      %3951 = vmatprep.subr.mxu0 0.0
      %3952 = vmatpush1.msra.mxu0 %v3897
      %3953 = vmatprep.subr.mxu0 0.0
      %3954 = vmatpush1.msra.mxu0 %v3896
      %3955 = vmatprep.subr.mxu0 0.0
      %3956 = vmatpush1.msra.mxu0 %v3895
      %3957 = vmatprep.subr.mxu0 0.0
      %3958 = vmatpush1.msra.mxu0 %v3894
      %3959 = vmatprep.subr.mxu0 0.0
      %3960 = vmatpush1.msra.mxu0 %v3893
      %3961 = vmatprep.subr.mxu0 0.0
      %3962 = vmatpush2.msra.mxu0 0.0
      %3963 = vmatprep.subr.mxu0 0.0
      %3964 = vmatpush2.msra.mxu0 0.0
      %3965 = vmatprep.subr.mxu0 0.0
      %3966 = vmatpush2.msra.mxu0 0.0
      %3967 = vmatprep.subr.mxu0 0.0
      %3968 = vmatpush2.msra.mxu0 0.0
      %3969 = vmatprep.subr.mxu0 0.0
      %3970 = vmatpush2.msra.mxu0 0.0
      %3971 = vmatprep.subr.mxu0 0.0
      %3972 = vmatpush2.msra.mxu0 0.0
      %3973 = vmatprep.subr.mxu0 0.0
      %3974 = vmatpush2.msra.mxu0 0.0
      %3975 = vmatprep.subr.mxu0 0.0
      %3976 = vmatpush2.msra.mxu0 0.0
      %3977 = vmatprep.subr.mxu0 0.0
      %3978 = vmatpush2.msra.mxu0 0.0
      %3979 = vmatprep.subr.mxu0 0.0
      %3980 = vmatpush2.msra.mxu0 0.0
      %3981 = vmatprep.subr.mxu0 0.0
      %3982 = vmatpush2.msra.mxu0 0.0
      %3983 = vmatprep.subr.mxu0 0.0
      %3984 = vmatpush2.msra.mxu0 0.0
      %3985 = vmatprep.subr.mxu0 0.0
      %3986 = vmatpush2.msra.mxu0 0.0
      %3987 = vmatprep.subr.mxu0 0.0
      %3988 = vmatpush2.msra.mxu0 0.0
      %3989 = vmatprep.subr.mxu0 0.0
      %3990 = vmatpush2.msra.mxu0 0.0
      %3991 = vmatprep.subr.mxu0 0.0
      %3992 = vmatpush2.msra.mxu0 0.0
      %3993 = vmatprep.mubr.f32.mxu0 0.0
      %3994 = vmatmul.mubr.f32.gmra.mxu0 %v3915
      %v3995 = vpop.f32.mrf.mxu0
      %v3996 = vadd.f32 0.0, %v3995
      %v3997 = vpop.f32.mrf.mxu0
      %3998 = vmatprep.mubr.f32.mxu0 0.0
      %3999 = vmatmul.mubr.f32.gmra.mxu0 %v3917
      %v4000 = vpop.f32.mrf.mxu0
      %v4001 = vadd.f32 0.0, %v4000
      %v4002 = vpop.f32.mrf.mxu0
      %4003 = vmatprep.mubr.f32.mxu0 0.0
      %4004 = vmatmul.mubr.f32.gmra.mxu0 %v3919
      %v4005 = vpop.f32.mrf.mxu0
      %v4006 = vadd.f32 0.0, %v4005
      %v4007 = vpop.f32.mrf.mxu0
      %4008 = vmatprep.mubr.f32.mxu0 0.0
      %4009 = vmatmul.mubr.f32.gmra.mxu0 %v3921
      %v4010 = vpop.f32.mrf.mxu0
      %v4011 = vadd.f32 0.0, %v4010
      %v4012 = vpop.f32.mrf.mxu0
      %4013 = vmatprep.mubr.f32.mxu0 0.0
      %4014 = vmatmul.mubr.f32.gmra.mxu0 %v3923
      %v4015 = vpop.f32.mrf.mxu0
      %v4016 = vadd.f32 0.0, %v4015
      %v4017 = vpop.f32.mrf.mxu0
      %4018 = vmatprep.mubr.f32.mxu0 0.0
      %4019 = vmatmul.mubr.f32.gmra.mxu0 %v3925
      %v4020 = vpop.f32.mrf.mxu0
      %v4021 = vadd.f32 0.0, %v4020
      %v4022 = vpop.f32.mrf.mxu0
      %4023 = vmatprep.mubr.f32.mxu0 0.0
      %4024 = vmatmul.mubr.f32.gmra.mxu0 %v3927
      %v4025 = vpop.f32.mrf.mxu0
      %v4026 = vadd.f32 0.0, %v4025
      %v4027 = vpop.f32.mrf.mxu0
      %4028 = vdwg.mxu0
      %4029 = vrot.lane.b32.xlu0 %v2741, 64
      %v4030 = vpop.permute.xlu0 %4029
      %4031 = vrot.lane.b32.xlu0 %v2742, 64
      %v4032 = vpop.permute.xlu0 %4031
      %4033 = vrot.lane.b32.xlu0 %v2743, 64
      %v4034 = vpop.permute.xlu0 %4033
      %4035 = vrot.lane.b32.xlu0 %v2744, 64
      %v4036 = vpop.permute.xlu0 %4035
      %4037 = vrot.lane.b32.xlu0 %v2745, 64
      %v4038 = vpop.permute.xlu0 %4037
      %4039 = vrot.lane.b32.xlu0 %v2746, 64
      %v4040 = vpop.permute.xlu0 %4039
      %4041 = vrot.lane.b32.xlu0 %v2747, 64
      %v4042 = vpop.permute.xlu0 %4041
      %v4043 = vsel %vm416, %v4030, 0
      %v4045 = vsel %vm416, %v4032, 0
      %v4047 = vsel %vm416, %v4034, 0
      %v4049 = vsel %vm416, %v4036, 0
      %v4051 = vsel %vm416, %v4038, 0
      %v4053 = vsel %vm416, %v4040, 0
      %v4055 = vsel %vm416, %v4042, 0
      %4057 = vmatprep.subr.mxu0 0.0
      %4058 = vmatpush1.msra.mxu0 0.0
      %4059 = vmatprep.subr.mxu0 0.0
      %4060 = vmatpush1.msra.mxu0 0.0
      %4061 = vmatprep.subr.mxu0 0.0
      %4062 = vmatpush1.msra.mxu0 0.0
      %4063 = vmatprep.subr.mxu0 0.0
      %4064 = vmatpush1.msra.mxu0 0.0
      %4065 = vmatprep.subr.mxu0 0.0
      %4066 = vmatpush1.msra.mxu0 0.0
      %4067 = vmatprep.subr.mxu0 0.0
      %4068 = vmatpush1.msra.mxu0 0.0
      %4069 = vmatprep.subr.mxu0 0.0
      %4070 = vmatpush1.msra.mxu0 0.0
      %4071 = vmatprep.subr.mxu0 0.0
      %4072 = vmatpush1.msra.mxu0 0.0
      %4073 = vmatprep.subr.mxu0 0.0
      %4074 = vmatpush1.msra.mxu0 %v3891
      %4075 = vmatprep.subr.mxu0 0.0
      %4076 = vmatpush1.msra.mxu0 %v3890
      %4077 = vmatprep.subr.mxu0 0.0
      %4078 = vmatpush1.msra.mxu0 %v3889
      %4079 = vmatprep.subr.mxu0 0.0
      %4080 = vmatpush1.msra.mxu0 %v3888
      %4081 = vmatprep.subr.mxu0 0.0
      %4082 = vmatpush1.msra.mxu0 %v3887
      %4083 = vmatprep.subr.mxu0 0.0
      %4084 = vmatpush1.msra.mxu0 %v3886
      %4085 = vmatprep.subr.mxu0 0.0
      %4086 = vmatpush1.msra.mxu0 %v3885
      %4087 = vmatprep.subr.mxu0 0.0
      %4088 = vmatpush1.msra.mxu0 %v3884
      %4089 = vmatprep.subr.mxu0 0.0
      %4090 = vmatpush2.msra.mxu0 0.0
      %4091 = vmatprep.subr.mxu0 0.0
      %4092 = vmatpush2.msra.mxu0 0.0
      %4093 = vmatprep.subr.mxu0 0.0
      %4094 = vmatpush2.msra.mxu0 0.0
      %4095 = vmatprep.subr.mxu0 0.0
      %4096 = vmatpush2.msra.mxu0 0.0
      %4097 = vmatprep.subr.mxu0 0.0
      %4098 = vmatpush2.msra.mxu0 0.0
      %4099 = vmatprep.subr.mxu0 0.0
      %4100 = vmatpush2.msra.mxu0 0.0
      %4101 = vmatprep.subr.mxu0 0.0
      %4102 = vmatpush2.msra.mxu0 0.0
      %4103 = vmatprep.subr.mxu0 0.0
      %4104 = vmatpush2.msra.mxu0 0.0
      %4105 = vmatprep.subr.mxu0 0.0
      %4106 = vmatpush2.msra.mxu0 0.0
      %4107 = vmatprep.subr.mxu0 0.0
      %4108 = vmatpush2.msra.mxu0 0.0
      %4109 = vmatprep.subr.mxu0 0.0
      %4110 = vmatpush2.msra.mxu0 0.0
      %4111 = vmatprep.subr.mxu0 0.0
      %4112 = vmatpush2.msra.mxu0 0.0
      %4113 = vmatprep.subr.mxu0 0.0
      %4114 = vmatpush2.msra.mxu0 0.0
      %4115 = vmatprep.subr.mxu0 0.0
      %4116 = vmatpush2.msra.mxu0 0.0
      %4117 = vmatprep.subr.mxu0 0.0
      %4118 = vmatpush2.msra.mxu0 0.0
      %4119 = vmatprep.subr.mxu0 0.0
      %4120 = vmatpush2.msra.mxu0 0.0
      %4121 = vmatprep.mubr.f32.mxu0 0.0
      %4122 = vmatmul.mubr.f32.gmra.mxu0 %v4043
      %v4123 = vpop.f32.mrf.mxu0
      %v4124 = vadd.f32 %v3996, %v4123
      %v4125 = vpop.f32.mrf.mxu0
      %4126 = vmatprep.mubr.f32.mxu0 0.0
      %4127 = vmatmul.mubr.f32.gmra.mxu0 %v4045
      %v4128 = vpop.f32.mrf.mxu0
      %v4129 = vadd.f32 %v4001, %v4128
      %v4130 = vpop.f32.mrf.mxu0
      %4131 = vmatprep.mubr.f32.mxu0 0.0
      %4132 = vmatmul.mubr.f32.gmra.mxu0 %v4047
      %v4133 = vpop.f32.mrf.mxu0
      %v4134 = vadd.f32 %v4006, %v4133
      %v4135 = vpop.f32.mrf.mxu0
      %4136 = vmatprep.mubr.f32.mxu0 0.0
      %4137 = vmatmul.mubr.f32.gmra.mxu0 %v4049
      %v4138 = vpop.f32.mrf.mxu0
      %v4139 = vadd.f32 %v4011, %v4138
      %v4140 = vpop.f32.mrf.mxu0
      %4141 = vmatprep.mubr.f32.mxu0 0.0
      %4142 = vmatmul.mubr.f32.gmra.mxu0 %v4051
      %v4143 = vpop.f32.mrf.mxu0
      %v4144 = vadd.f32 %v4016, %v4143
      %v4145 = vpop.f32.mrf.mxu0
      %4146 = vmatprep.mubr.f32.mxu0 0.0
      %4147 = vmatmul.mubr.f32.gmra.mxu0 %v4053
      %v4148 = vpop.f32.mrf.mxu0
      %v4149 = vadd.f32 %v4021, %v4148
      %v4150 = vpop.f32.mrf.mxu0
      %4151 = vmatprep.mubr.f32.mxu0 0.0
      %4152 = vmatmul.mubr.f32.gmra.mxu0 %v4055
      %v4153 = vpop.f32.mrf.mxu0
      %v4154 = vadd.f32 %v4026, %v4153
      %v4155 = vpop.f32.mrf.mxu0
      %4156 = vdwg.mxu0
      %s4157 = scalar_lea.vmem %s292, 1856
      %v4158 = vld [vmem:[%s4157] sm:$0xff]
      %v4159 = vld [vmem:[%s4157 + $0x8] sm:$0xff]
      %v4160 = vld [vmem:[%s4157 + $0x10] sm:$0xff]
      %v4161 = vld [vmem:[%s4157 + $0x18] sm:$0xff]
      %v4162 = vld [vmem:[%s4157 + $0x20] sm:$0xff]
      %v4163 = vld [vmem:[%s4157 + $0x28] sm:$0xff]
      %v4164 = vld [vmem:[%s4157 + $0x30] sm:$0xff]
      %v4165 = vld [vmem:[%s4157 + $0x38] sm:$0xff]
      %4166 = vrot.lane.b32.xlu0 %v3031, 64
      %v4167 = vpop.permute.xlu0 %4166
      %4168 = vrot.lane.b32.xlu0 %v3033, 64
      %v4169 = vpop.permute.xlu0 %4168
      %4170 = vrot.lane.b32.xlu0 %v3035, 64
      %v4171 = vpop.permute.xlu0 %4170
      %4172 = vrot.lane.b32.xlu0 %v3037, 64
      %v4173 = vpop.permute.xlu0 %4172
      %4174 = vrot.lane.b32.xlu0 %v3039, 64
      %v4175 = vpop.permute.xlu0 %4174
      %4176 = vrot.lane.b32.xlu0 %v3041, 64
      %v4177 = vpop.permute.xlu0 %4176
      %4178 = vrot.lane.b32.xlu0 %v3043, 64
      %v4179 = vpop.permute.xlu0 %4178
      %v4180 = vsel %vm416, %v4167, 0
      %v4182 = vsel %vm416, %v4169, 0
      %v4184 = vsel %vm416, %v4171, 0
      %v4186 = vsel %vm416, %v4173, 0
      %v4188 = vsel %vm416, %v4175, 0
      %v4190 = vsel %vm416, %v4177, 0
      %v4192 = vsel %vm416, %v4179, 0
      %4194 = vmatprep.subr.mxu0 0.0
      %4195 = vmatpush1.msra.mxu0 0.0
      %4196 = vmatprep.subr.mxu0 0.0
      %4197 = vmatpush1.msra.mxu0 0.0
      %4198 = vmatprep.subr.mxu0 0.0
      %4199 = vmatpush1.msra.mxu0 0.0
      %4200 = vmatprep.subr.mxu0 0.0
      %4201 = vmatpush1.msra.mxu0 0.0
      %4202 = vmatprep.subr.mxu0 0.0
      %4203 = vmatpush1.msra.mxu0 0.0
      %4204 = vmatprep.subr.mxu0 0.0
      %4205 = vmatpush1.msra.mxu0 0.0
      %4206 = vmatprep.subr.mxu0 0.0
      %4207 = vmatpush1.msra.mxu0 0.0
      %4208 = vmatprep.subr.mxu0 0.0
      %4209 = vmatpush1.msra.mxu0 0.0
      %4210 = vmatprep.subr.mxu0 0.0
      %4211 = vmatpush1.msra.mxu0 %v4165
      %4212 = vmatprep.subr.mxu0 0.0
      %4213 = vmatpush1.msra.mxu0 %v4164
      %4214 = vmatprep.subr.mxu0 0.0
      %4215 = vmatpush1.msra.mxu0 %v4163
      %4216 = vmatprep.subr.mxu0 0.0
      %4217 = vmatpush1.msra.mxu0 %v4162
      %4218 = vmatprep.subr.mxu0 0.0
      %4219 = vmatpush1.msra.mxu0 %v4161
      %4220 = vmatprep.subr.mxu0 0.0
      %4221 = vmatpush1.msra.mxu0 %v4160
      %4222 = vmatprep.subr.mxu0 0.0
      %4223 = vmatpush1.msra.mxu0 %v4159
      %4224 = vmatprep.subr.mxu0 0.0
      %4225 = vmatpush1.msra.mxu0 %v4158
      %4226 = vmatprep.subr.mxu0 0.0
      %4227 = vmatpush2.msra.mxu0 0.0
      %4228 = vmatprep.subr.mxu0 0.0
      %4229 = vmatpush2.msra.mxu0 0.0
      %4230 = vmatprep.subr.mxu0 0.0
      %4231 = vmatpush2.msra.mxu0 0.0
      %4232 = vmatprep.subr.mxu0 0.0
      %4233 = vmatpush2.msra.mxu0 0.0
      %4234 = vmatprep.subr.mxu0 0.0
      %4235 = vmatpush2.msra.mxu0 0.0
      %4236 = vmatprep.subr.mxu0 0.0
      %4237 = vmatpush2.msra.mxu0 0.0
      %4238 = vmatprep.subr.mxu0 0.0
      %4239 = vmatpush2.msra.mxu0 0.0
      %4240 = vmatprep.subr.mxu0 0.0
      %4241 = vmatpush2.msra.mxu0 0.0
      %4242 = vmatprep.subr.mxu0 0.0
      %4243 = vmatpush2.msra.mxu0 0.0
      %4244 = vmatprep.subr.mxu0 0.0
      %4245 = vmatpush2.msra.mxu0 0.0
      %4246 = vmatprep.subr.mxu0 0.0
      %4247 = vmatpush2.msra.mxu0 0.0
      %4248 = vmatprep.subr.mxu0 0.0
      %4249 = vmatpush2.msra.mxu0 0.0
      %4250 = vmatprep.subr.mxu0 0.0
      %4251 = vmatpush2.msra.mxu0 0.0
      %4252 = vmatprep.subr.mxu0 0.0
      %4253 = vmatpush2.msra.mxu0 0.0
      %4254 = vmatprep.subr.mxu0 0.0
      %4255 = vmatpush2.msra.mxu0 0.0
      %4256 = vmatprep.subr.mxu0 0.0
      %4257 = vmatpush2.msra.mxu0 0.0
      %4258 = vmatprep.mubr.f32.mxu0 0.0
      %4259 = vmatmul.mubr.f32.gmra.mxu0 %v4180
      %v4260 = vpop.f32.mrf.mxu0
      %v4261 = vadd.f32 0.0, %v4260
      %v4262 = vpop.f32.mrf.mxu0
      %4263 = vmatprep.mubr.f32.mxu0 0.0
      %4264 = vmatmul.mubr.f32.gmra.mxu0 %v4182
      %v4265 = vpop.f32.mrf.mxu0
      %v4266 = vadd.f32 0.0, %v4265
      %v4267 = vpop.f32.mrf.mxu0
      %4268 = vmatprep.mubr.f32.mxu0 0.0
      %4269 = vmatmul.mubr.f32.gmra.mxu0 %v4184
      %v4270 = vpop.f32.mrf.mxu0
      %v4271 = vadd.f32 0.0, %v4270
      %v4272 = vpop.f32.mrf.mxu0
      %4273 = vmatprep.mubr.f32.mxu0 0.0
      %4274 = vmatmul.mubr.f32.gmra.mxu0 %v4186
      %v4275 = vpop.f32.mrf.mxu0
      %v4276 = vadd.f32 0.0, %v4275
      %v4277 = vpop.f32.mrf.mxu0
      %4278 = vmatprep.mubr.f32.mxu0 0.0
      %4279 = vmatmul.mubr.f32.gmra.mxu0 %v4188
      %v4280 = vpop.f32.mrf.mxu0
      %v4281 = vadd.f32 0.0, %v4280
      %v4282 = vpop.f32.mrf.mxu0
      %4283 = vmatprep.mubr.f32.mxu0 0.0
      %4284 = vmatmul.mubr.f32.gmra.mxu0 %v4190
      %v4285 = vpop.f32.mrf.mxu0
      %v4286 = vadd.f32 0.0, %v4285
      %v4287 = vpop.f32.mrf.mxu0
      %4288 = vmatprep.mubr.f32.mxu0 0.0
      %4289 = vmatmul.mubr.f32.gmra.mxu0 %v4192
      %v4290 = vpop.f32.mrf.mxu0
      %v4291 = vadd.f32 0.0, %v4290
      %v4292 = vpop.f32.mrf.mxu0
      %4293 = vdwg.mxu0
      %v4294 = vadd.f32 %v4124, %v4261
      %v4295 = vadd.f32 %v4129, %v4266
      %v4296 = vadd.f32 %v4134, %v4271
      %v4297 = vadd.f32 %v4139, %v4276
      %v4298 = vadd.f32 %v4144, %v4281
      %v4299 = vadd.f32 %v4149, %v4286
      %v4300 = vadd.f32 %v4154, %v4291
      %s4301 = scalar_lea.vmem %s292, 1920
      %v4302 = vld [vmem:[%s4301] sm:$0xff]
      %v4303 = vld [vmem:[%s4301 + $0x8] sm:$0xff]
      %v4304 = vld [vmem:[%s4301 + $0x10] sm:$0xff]
      %v4305 = vld [vmem:[%s4301 + $0x18] sm:$0xff]
      %v4306 = vld [vmem:[%s4301 + $0x20] sm:$0xff]
      %v4307 = vld [vmem:[%s4301 + $0x28] sm:$0xff]
      %v4308 = vld [vmem:[%s4301 + $0x30] sm:$0xff]
      %v4309 = vld [vmem:[%s4301 + $0x38] sm:$0xff]
      %4310 = vrot.lane.b32.xlu0 %v2748, 64
      %v4311 = vpop.permute.xlu0 %4310
      %v4312 = vsel %vm416, %v4311, 0
      %4314 = vmatprep.subr.mxu0 0.0
      %4315 = vmatpush1.msra.mxu0 0.0
      %4316 = vmatprep.subr.mxu0 0.0
      %4317 = vmatpush1.msra.mxu0 0.0
      %4318 = vmatprep.subr.mxu0 0.0
      %4319 = vmatpush1.msra.mxu0 0.0
      %4320 = vmatprep.subr.mxu0 0.0
      %4321 = vmatpush1.msra.mxu0 0.0
      %4322 = vmatprep.subr.mxu0 0.0
      %4323 = vmatpush1.msra.mxu0 0.0
      %4324 = vmatprep.subr.mxu0 0.0
      %4325 = vmatpush1.msra.mxu0 0.0
      %4326 = vmatprep.subr.mxu0 0.0
      %4327 = vmatpush1.msra.mxu0 0.0
      %4328 = vmatprep.subr.mxu0 0.0
      %4329 = vmatpush1.msra.mxu0 0.0
      %4330 = vmatprep.subr.mxu0 0.0
      %4331 = vmatpush1.msra.mxu0 %v4309
      %4332 = vmatprep.subr.mxu0 0.0
      %4333 = vmatpush1.msra.mxu0 %v4308
      %4334 = vmatprep.subr.mxu0 0.0
      %4335 = vmatpush1.msra.mxu0 %v4307
      %4336 = vmatprep.subr.mxu0 0.0
      %4337 = vmatpush1.msra.mxu0 %v4306
      %4338 = vmatprep.subr.mxu0 0.0
      %4339 = vmatpush1.msra.mxu0 %v4305
      %4340 = vmatprep.subr.mxu0 0.0
      %4341 = vmatpush1.msra.mxu0 %v4304
      %4342 = vmatprep.subr.mxu0 0.0
      %4343 = vmatpush1.msra.mxu0 %v4303
      %4344 = vmatprep.subr.mxu0 0.0
      %4345 = vmatpush1.msra.mxu0 %v4302
      %4346 = vmatprep.subr.mxu0 0.0
      %4347 = vmatpush2.msra.mxu0 0.0
      %4348 = vmatprep.subr.mxu0 0.0
      %4349 = vmatpush2.msra.mxu0 0.0
      %4350 = vmatprep.subr.mxu0 0.0
      %4351 = vmatpush2.msra.mxu0 0.0
      %4352 = vmatprep.subr.mxu0 0.0
      %4353 = vmatpush2.msra.mxu0 0.0
      %4354 = vmatprep.subr.mxu0 0.0
      %4355 = vmatpush2.msra.mxu0 0.0
      %4356 = vmatprep.subr.mxu0 0.0
      %4357 = vmatpush2.msra.mxu0 0.0
      %4358 = vmatprep.subr.mxu0 0.0
      %4359 = vmatpush2.msra.mxu0 0.0
      %4360 = vmatprep.subr.mxu0 0.0
      %4361 = vmatpush2.msra.mxu0 0.0
      %4362 = vmatprep.subr.mxu0 0.0
      %4363 = vmatpush2.msra.mxu0 0.0
      %4364 = vmatprep.subr.mxu0 0.0
      %4365 = vmatpush2.msra.mxu0 0.0
      %4366 = vmatprep.subr.mxu0 0.0
      %4367 = vmatpush2.msra.mxu0 0.0
      %4368 = vmatprep.subr.mxu0 0.0
      %4369 = vmatpush2.msra.mxu0 0.0
      %4370 = vmatprep.subr.mxu0 0.0
      %4371 = vmatpush2.msra.mxu0 0.0
      %4372 = vmatprep.subr.mxu0 0.0
      %4373 = vmatpush2.msra.mxu0 0.0
      %4374 = vmatprep.subr.mxu0 0.0
      %4375 = vmatpush2.msra.mxu0 0.0
      %4376 = vmatprep.subr.mxu0 0.0
      %4377 = vmatpush2.msra.mxu0 0.0
      %4378 = vmatprep.mubr.f32.mxu0 0.0
      %4379 = vmatmul.mubr.f32.gmra.mxu0 %v4045
      %v4380 = vpop.f32.mrf.mxu0
      %v4381 = vadd.f32 0.0, %v4380
      %v4382 = vpop.f32.mrf.mxu0
      %4383 = vmatprep.mubr.f32.mxu0 0.0
      %4384 = vmatmul.mubr.f32.gmra.mxu0 %v4047
      %v4385 = vpop.f32.mrf.mxu0
      %v4386 = vadd.f32 0.0, %v4385
      %v4387 = vpop.f32.mrf.mxu0
      %4388 = vmatprep.mubr.f32.mxu0 0.0
      %4389 = vmatmul.mubr.f32.gmra.mxu0 %v4049
      %v4390 = vpop.f32.mrf.mxu0
      %v4391 = vadd.f32 0.0, %v4390
      %v4392 = vpop.f32.mrf.mxu0
      %4393 = vmatprep.mubr.f32.mxu0 0.0
      %4394 = vmatmul.mubr.f32.gmra.mxu0 %v4051
      %v4395 = vpop.f32.mrf.mxu0
      %v4396 = vadd.f32 0.0, %v4395
      %v4397 = vpop.f32.mrf.mxu0
      %4398 = vmatprep.mubr.f32.mxu0 0.0
      %4399 = vmatmul.mubr.f32.gmra.mxu0 %v4053
      %v4400 = vpop.f32.mrf.mxu0
      %v4401 = vadd.f32 0.0, %v4400
      %v4402 = vpop.f32.mrf.mxu0
      %4403 = vmatprep.mubr.f32.mxu0 0.0
      %4404 = vmatmul.mubr.f32.gmra.mxu0 %v4055
      %v4405 = vpop.f32.mrf.mxu0
      %v4406 = vadd.f32 0.0, %v4405
      %v4407 = vpop.f32.mrf.mxu0
      %4408 = vmatprep.mubr.f32.mxu0 0.0
      %4409 = vmatmul.mubr.f32.gmra.mxu0 %v4312
      %v4410 = vpop.f32.mrf.mxu0
      %v4411 = vadd.f32 0.0, %v4410
      %v4412 = vpop.f32.mrf.mxu0
      %4413 = vdwg.mxu0
      %v4414 = vadd.f32 %v4294, %v4381
      %v4415 = vadd.f32 %v4295, %v4386
      %v4416 = vadd.f32 %v4296, %v4391
      %v4417 = vadd.f32 %v4297, %v4396
      %v4418 = vadd.f32 %v4298, %v4401
      %v4419 = vadd.f32 %v4299, %v4406
      %v4420 = vadd.f32 %v4300, %v4411
      %s4421 = scalar_lea.vmem %s292, 1984
      %v4422 = vld [vmem:[%s4421] sm:$0xff]
      %v4423 = vld [vmem:[%s4421 + $0x8] sm:$0xff]
      %v4424 = vld [vmem:[%s4421 + $0x10] sm:$0xff]
      %v4425 = vld [vmem:[%s4421 + $0x18] sm:$0xff]
      %v4426 = vld [vmem:[%s4421 + $0x20] sm:$0xff]
      %v4427 = vld [vmem:[%s4421 + $0x28] sm:$0xff]
      %v4428 = vld [vmem:[%s4421 + $0x30] sm:$0xff]
      %v4429 = vld [vmem:[%s4421 + $0x38] sm:$0xff]
      %4430 = vrot.lane.b32.xlu0 %v3294, 64
      %v4431 = vpop.permute.xlu0 %4430
      %v4432 = vsel %vm416, %v4431, 0
      %4434 = vmatprep.subr.mxu0 0.0
      %4435 = vmatpush1.msra.mxu0 0.0
      %4436 = vmatprep.subr.mxu0 0.0
      %4437 = vmatpush1.msra.mxu0 0.0
      %4438 = vmatprep.subr.mxu0 0.0
      %4439 = vmatpush1.msra.mxu0 0.0
      %4440 = vmatprep.subr.mxu0 0.0
      %4441 = vmatpush1.msra.mxu0 0.0
      %4442 = vmatprep.subr.mxu0 0.0
      %4443 = vmatpush1.msra.mxu0 0.0
      %4444 = vmatprep.subr.mxu0 0.0
      %4445 = vmatpush1.msra.mxu0 0.0
      %4446 = vmatprep.subr.mxu0 0.0
      %4447 = vmatpush1.msra.mxu0 0.0
      %4448 = vmatprep.subr.mxu0 0.0
      %4449 = vmatpush1.msra.mxu0 0.0
      %4450 = vmatprep.subr.mxu0 0.0
      %4451 = vmatpush1.msra.mxu0 %v4429
      %4452 = vmatprep.subr.mxu0 0.0
      %4453 = vmatpush1.msra.mxu0 %v4428
      %4454 = vmatprep.subr.mxu0 0.0
      %4455 = vmatpush1.msra.mxu0 %v4427
      %4456 = vmatprep.subr.mxu0 0.0
      %4457 = vmatpush1.msra.mxu0 %v4426
      %4458 = vmatprep.subr.mxu0 0.0
      %4459 = vmatpush1.msra.mxu0 %v4425
      %4460 = vmatprep.subr.mxu0 0.0
      %4461 = vmatpush1.msra.mxu0 %v4424
      %4462 = vmatprep.subr.mxu0 0.0
      %4463 = vmatpush1.msra.mxu0 %v4423
      %4464 = vmatprep.subr.mxu0 0.0
      %4465 = vmatpush1.msra.mxu0 %v4422
      %4466 = vmatprep.subr.mxu0 0.0
      %4467 = vmatpush2.msra.mxu0 0.0
      %4468 = vmatprep.subr.mxu0 0.0
      %4469 = vmatpush2.msra.mxu0 0.0
      %4470 = vmatprep.subr.mxu0 0.0
      %4471 = vmatpush2.msra.mxu0 0.0
      %4472 = vmatprep.subr.mxu0 0.0
      %4473 = vmatpush2.msra.mxu0 0.0
      %4474 = vmatprep.subr.mxu0 0.0
      %4475 = vmatpush2.msra.mxu0 0.0
      %4476 = vmatprep.subr.mxu0 0.0
      %4477 = vmatpush2.msra.mxu0 0.0
      %4478 = vmatprep.subr.mxu0 0.0
      %4479 = vmatpush2.msra.mxu0 0.0
      %4480 = vmatprep.subr.mxu0 0.0
      %4481 = vmatpush2.msra.mxu0 0.0
      %4482 = vmatprep.subr.mxu0 0.0
      %4483 = vmatpush2.msra.mxu0 0.0
      %4484 = vmatprep.subr.mxu0 0.0
      %4485 = vmatpush2.msra.mxu0 0.0
      %4486 = vmatprep.subr.mxu0 0.0
      %4487 = vmatpush2.msra.mxu0 0.0
      %4488 = vmatprep.subr.mxu0 0.0
      %4489 = vmatpush2.msra.mxu0 0.0
      %4490 = vmatprep.subr.mxu0 0.0
      %4491 = vmatpush2.msra.mxu0 0.0
      %4492 = vmatprep.subr.mxu0 0.0
      %4493 = vmatpush2.msra.mxu0 0.0
      %4494 = vmatprep.subr.mxu0 0.0
      %4495 = vmatpush2.msra.mxu0 0.0
      %4496 = vmatprep.subr.mxu0 0.0
      %4497 = vmatpush2.msra.mxu0 0.0
      %4498 = vmatprep.mubr.f32.mxu0 0.0
      %4499 = vmatmul.mubr.f32.gmra.mxu0 %v3917
      %v4500 = vpop.f32.mrf.mxu0
      %v4501 = vadd.f32 0.0, %v4500
      %v4502 = vpop.f32.mrf.mxu0
      %4503 = vmatprep.mubr.f32.mxu0 0.0
      %4504 = vmatmul.mubr.f32.gmra.mxu0 %v3919
      %v4505 = vpop.f32.mrf.mxu0
      %v4506 = vadd.f32 0.0, %v4505
      %v4507 = vpop.f32.mrf.mxu0
      %4508 = vmatprep.mubr.f32.mxu0 0.0
      %4509 = vmatmul.mubr.f32.gmra.mxu0 %v3921
      %v4510 = vpop.f32.mrf.mxu0
      %v4511 = vadd.f32 0.0, %v4510
      %v4512 = vpop.f32.mrf.mxu0
      %4513 = vmatprep.mubr.f32.mxu0 0.0
      %4514 = vmatmul.mubr.f32.gmra.mxu0 %v3923
      %v4515 = vpop.f32.mrf.mxu0
      %v4516 = vadd.f32 0.0, %v4515
      %v4517 = vpop.f32.mrf.mxu0
      %4518 = vmatprep.mubr.f32.mxu0 0.0
      %4519 = vmatmul.mubr.f32.gmra.mxu0 %v3925
      %v4520 = vpop.f32.mrf.mxu0
      %v4521 = vadd.f32 0.0, %v4520
      %v4522 = vpop.f32.mrf.mxu0
      %4523 = vmatprep.mubr.f32.mxu0 0.0
      %4524 = vmatmul.mubr.f32.gmra.mxu0 %v3927
      %v4525 = vpop.f32.mrf.mxu0
      %v4526 = vadd.f32 0.0, %v4525
      %v4527 = vpop.f32.mrf.mxu0
      %4528 = vmatprep.mubr.f32.mxu0 0.0
      %4529 = vmatmul.mubr.f32.gmra.mxu0 %v4432
      %v4530 = vpop.f32.mrf.mxu0
      %v4531 = vadd.f32 0.0, %v4530
      %v4532 = vpop.f32.mrf.mxu0
      %4533 = vdwg.mxu0
      %v4534 = vadd.f32 %v4414, %v4501
      %v4535 = vadd.f32 %v4415, %v4506
      %v4536 = vadd.f32 %v4416, %v4511
      %v4537 = vadd.f32 %v4417, %v4516
      %v4538 = vadd.f32 %v4418, %v4521
      %v4539 = vadd.f32 %v4419, %v4526
      %v4540 = vadd.f32 %v4420, %v4531
      %s4541 = scalar_lea.vmem %s292, 2048
      %v4542 = vld [vmem:[%s4541] sm:$0xff]
      %v4543 = vld [vmem:[%s4541 + $0x8] sm:$0xff]
      %v4544 = vld [vmem:[%s4541 + $0x10] sm:$0xff]
      %v4545 = vld [vmem:[%s4541 + $0x18] sm:$0xff]
      %v4546 = vld [vmem:[%s4541 + $0x20] sm:$0xff]
      %v4547 = vld [vmem:[%s4541 + $0x28] sm:$0xff]
      %v4548 = vld [vmem:[%s4541 + $0x30] sm:$0xff]
      %v4549 = vld [vmem:[%s4541 + $0x38] sm:$0xff]
      %4550 = vrot.lane.b32.xlu0 %v3414, 64
      %v4551 = vpop.permute.xlu0 %4550
      %v4552 = vsel %vm416, %v4551, 0
      %4554 = vmatprep.subr.mxu0 0.0
      %4555 = vmatpush1.msra.mxu0 0.0
      %4556 = vmatprep.subr.mxu0 0.0
      %4557 = vmatpush1.msra.mxu0 0.0
      %4558 = vmatprep.subr.mxu0 0.0
      %4559 = vmatpush1.msra.mxu0 0.0
      %4560 = vmatprep.subr.mxu0 0.0
      %4561 = vmatpush1.msra.mxu0 0.0
      %4562 = vmatprep.subr.mxu0 0.0
      %4563 = vmatpush1.msra.mxu0 0.0
      %4564 = vmatprep.subr.mxu0 0.0
      %4565 = vmatpush1.msra.mxu0 0.0
      %4566 = vmatprep.subr.mxu0 0.0
      %4567 = vmatpush1.msra.mxu0 0.0
      %4568 = vmatprep.subr.mxu0 0.0
      %4569 = vmatpush1.msra.mxu0 0.0
      %4570 = vmatprep.subr.mxu0 0.0
      %4571 = vmatpush1.msra.mxu0 %v4549
      %4572 = vmatprep.subr.mxu0 0.0
      %4573 = vmatpush1.msra.mxu0 %v4548
      %4574 = vmatprep.subr.mxu0 0.0
      %4575 = vmatpush1.msra.mxu0 %v4547
      %4576 = vmatprep.subr.mxu0 0.0
      %4577 = vmatpush1.msra.mxu0 %v4546
      %4578 = vmatprep.subr.mxu0 0.0
      %4579 = vmatpush1.msra.mxu0 %v4545
      %4580 = vmatprep.subr.mxu0 0.0
      %4581 = vmatpush1.msra.mxu0 %v4544
      %4582 = vmatprep.subr.mxu0 0.0
      %4583 = vmatpush1.msra.mxu0 %v4543
      %4584 = vmatprep.subr.mxu0 0.0
      %4585 = vmatpush1.msra.mxu0 %v4542
      %4586 = vmatprep.subr.mxu0 0.0
      %4587 = vmatpush2.msra.mxu0 0.0
      %4588 = vmatprep.subr.mxu0 0.0
      %4589 = vmatpush2.msra.mxu0 0.0
      %4590 = vmatprep.subr.mxu0 0.0
      %4591 = vmatpush2.msra.mxu0 0.0
      %4592 = vmatprep.subr.mxu0 0.0
      %4593 = vmatpush2.msra.mxu0 0.0
      %4594 = vmatprep.subr.mxu0 0.0
      %4595 = vmatpush2.msra.mxu0 0.0
      %4596 = vmatprep.subr.mxu0 0.0
      %4597 = vmatpush2.msra.mxu0 0.0
      %4598 = vmatprep.subr.mxu0 0.0
      %4599 = vmatpush2.msra.mxu0 0.0
      %4600 = vmatprep.subr.mxu0 0.0
      %4601 = vmatpush2.msra.mxu0 0.0
      %4602 = vmatprep.subr.mxu0 0.0
      %4603 = vmatpush2.msra.mxu0 0.0
      %4604 = vmatprep.subr.mxu0 0.0
      %4605 = vmatpush2.msra.mxu0 0.0
      %4606 = vmatprep.subr.mxu0 0.0
      %4607 = vmatpush2.msra.mxu0 0.0
      %4608 = vmatprep.subr.mxu0 0.0
      %4609 = vmatpush2.msra.mxu0 0.0
      %4610 = vmatprep.subr.mxu0 0.0
      %4611 = vmatpush2.msra.mxu0 0.0
      %4612 = vmatprep.subr.mxu0 0.0
      %4613 = vmatpush2.msra.mxu0 0.0
      %4614 = vmatprep.subr.mxu0 0.0
      %4615 = vmatpush2.msra.mxu0 0.0
      %4616 = vmatprep.subr.mxu0 0.0
      %4617 = vmatpush2.msra.mxu0 0.0
      %4618 = vmatprep.mubr.f32.mxu0 0.0
      %4619 = vmatmul.mubr.f32.gmra.mxu0 %v4182
      %v4620 = vpop.f32.mrf.mxu0
      %v4621 = vadd.f32 0.0, %v4620
      %v4622 = vpop.f32.mrf.mxu0
      %4623 = vmatprep.mubr.f32.mxu0 0.0
      %4624 = vmatmul.mubr.f32.gmra.mxu0 %v4184
      %v4625 = vpop.f32.mrf.mxu0
      %v4626 = vadd.f32 0.0, %v4625
      %v4627 = vpop.f32.mrf.mxu0
      %4628 = vmatprep.mubr.f32.mxu0 0.0
      %4629 = vmatmul.mubr.f32.gmra.mxu0 %v4186
      %v4630 = vpop.f32.mrf.mxu0
      %v4631 = vadd.f32 0.0, %v4630
      %v4632 = vpop.f32.mrf.mxu0
      %4633 = vmatprep.mubr.f32.mxu0 0.0
      %4634 = vmatmul.mubr.f32.gmra.mxu0 %v4188
      %v4635 = vpop.f32.mrf.mxu0
      %v4636 = vadd.f32 0.0, %v4635
      %v4637 = vpop.f32.mrf.mxu0
      %4638 = vmatprep.mubr.f32.mxu0 0.0
      %4639 = vmatmul.mubr.f32.gmra.mxu0 %v4190
      %v4640 = vpop.f32.mrf.mxu0
      %v4641 = vadd.f32 0.0, %v4640
      %v4642 = vpop.f32.mrf.mxu0
      %4643 = vmatprep.mubr.f32.mxu0 0.0
      %4644 = vmatmul.mubr.f32.gmra.mxu0 %v4192
      %v4645 = vpop.f32.mrf.mxu0
      %v4646 = vadd.f32 0.0, %v4645
      %v4647 = vpop.f32.mrf.mxu0
      %4648 = vmatprep.mubr.f32.mxu0 0.0
      %4649 = vmatmul.mubr.f32.gmra.mxu0 %v4552
      %v4650 = vpop.f32.mrf.mxu0
      %v4651 = vadd.f32 0.0, %v4650
      %v4652 = vpop.f32.mrf.mxu0
      %4653 = vdwg.mxu0
      %v4654 = vadd.f32 %v4534, %v4621
      %v4655 = vadd.f32 %v4535, %v4626
      %v4656 = vadd.f32 %v4536, %v4631
      %v4657 = vadd.f32 %v4537, %v4636
      %v4658 = vadd.f32 %v4538, %v4641
      %v4659 = vadd.f32 %v4539, %v4646
      %v4660 = vadd.f32 %v4540, %v4651
      %s4661 = scalar_lea.vmem %s292, 2112
      %v4662 = vld [vmem:[%s4661] sm:$0xff]
      %v4663 = vld [vmem:[%s4661 + $0x8] sm:$0xff]
      %v4664 = vld [vmem:[%s4661 + $0x10] sm:$0xff]
      %v4665 = vld [vmem:[%s4661 + $0x18] sm:$0xff]
      %v4666 = vld [vmem:[%s4661 + $0x20] sm:$0xff]
      %v4667 = vld [vmem:[%s4661 + $0x28] sm:$0xff]
      %v4668 = vld [vmem:[%s4661 + $0x30] sm:$0xff]
      %v4669 = vld [vmem:[%s4661 + $0x38] sm:$0xff]
      %4670 = vrot.lane.b32.xlu0 %v2749, 64
      %v4671 = vpop.permute.xlu0 %4670
      %v4672 = vsel %vm416, %v4671, 0
      %4674 = vmatprep.subr.mxu0 0.0
      %4675 = vmatpush1.msra.mxu0 0.0
      %4676 = vmatprep.subr.mxu0 0.0
      %4677 = vmatpush1.msra.mxu0 0.0
      %4678 = vmatprep.subr.mxu0 0.0
      %4679 = vmatpush1.msra.mxu0 0.0
      %4680 = vmatprep.subr.mxu0 0.0
      %4681 = vmatpush1.msra.mxu0 0.0
      %4682 = vmatprep.subr.mxu0 0.0
      %4683 = vmatpush1.msra.mxu0 0.0
      %4684 = vmatprep.subr.mxu0 0.0
      %4685 = vmatpush1.msra.mxu0 0.0
      %4686 = vmatprep.subr.mxu0 0.0
      %4687 = vmatpush1.msra.mxu0 0.0
      %4688 = vmatprep.subr.mxu0 0.0
      %4689 = vmatpush1.msra.mxu0 0.0
      %4690 = vmatprep.subr.mxu0 0.0
      %4691 = vmatpush1.msra.mxu0 %v4669
      %4692 = vmatprep.subr.mxu0 0.0
      %4693 = vmatpush1.msra.mxu0 %v4668
      %4694 = vmatprep.subr.mxu0 0.0
      %4695 = vmatpush1.msra.mxu0 %v4667
      %4696 = vmatprep.subr.mxu0 0.0
      %4697 = vmatpush1.msra.mxu0 %v4666
      %4698 = vmatprep.subr.mxu0 0.0
      %4699 = vmatpush1.msra.mxu0 %v4665
      %4700 = vmatprep.subr.mxu0 0.0
      %4701 = vmatpush1.msra.mxu0 %v4664
      %4702 = vmatprep.subr.mxu0 0.0
      %4703 = vmatpush1.msra.mxu0 %v4663
      %4704 = vmatprep.subr.mxu0 0.0
      %4705 = vmatpush1.msra.mxu0 %v4662
      %4706 = vmatprep.subr.mxu0 0.0
      %4707 = vmatpush2.msra.mxu0 0.0
      %4708 = vmatprep.subr.mxu0 0.0
      %4709 = vmatpush2.msra.mxu0 0.0
      %4710 = vmatprep.subr.mxu0 0.0
      %4711 = vmatpush2.msra.mxu0 0.0
      %4712 = vmatprep.subr.mxu0 0.0
      %4713 = vmatpush2.msra.mxu0 0.0
      %4714 = vmatprep.subr.mxu0 0.0
      %4715 = vmatpush2.msra.mxu0 0.0
      %4716 = vmatprep.subr.mxu0 0.0
      %4717 = vmatpush2.msra.mxu0 0.0
      %4718 = vmatprep.subr.mxu0 0.0
      %4719 = vmatpush2.msra.mxu0 0.0
      %4720 = vmatprep.subr.mxu0 0.0
      %4721 = vmatpush2.msra.mxu0 0.0
      %4722 = vmatprep.subr.mxu0 0.0
      %4723 = vmatpush2.msra.mxu0 0.0
      %4724 = vmatprep.subr.mxu0 0.0
      %4725 = vmatpush2.msra.mxu0 0.0
      %4726 = vmatprep.subr.mxu0 0.0
      %4727 = vmatpush2.msra.mxu0 0.0
      %4728 = vmatprep.subr.mxu0 0.0
      %4729 = vmatpush2.msra.mxu0 0.0
      %4730 = vmatprep.subr.mxu0 0.0
      %4731 = vmatpush2.msra.mxu0 0.0
      %4732 = vmatprep.subr.mxu0 0.0
      %4733 = vmatpush2.msra.mxu0 0.0
      %4734 = vmatprep.subr.mxu0 0.0
      %4735 = vmatpush2.msra.mxu0 0.0
      %4736 = vmatprep.subr.mxu0 0.0
      %4737 = vmatpush2.msra.mxu0 0.0
      %4738 = vmatprep.mubr.f32.mxu0 0.0
      %4739 = vmatmul.mubr.f32.gmra.mxu0 %v4047
      %v4740 = vpop.f32.mrf.mxu0
      %v4741 = vadd.f32 0.0, %v4740
      %v4742 = vpop.f32.mrf.mxu0
      %4743 = vmatprep.mubr.f32.mxu0 0.0
      %4744 = vmatmul.mubr.f32.gmra.mxu0 %v4049
      %v4745 = vpop.f32.mrf.mxu0
      %v4746 = vadd.f32 0.0, %v4745
      %v4747 = vpop.f32.mrf.mxu0
      %4748 = vmatprep.mubr.f32.mxu0 0.0
      %4749 = vmatmul.mubr.f32.gmra.mxu0 %v4051
      %v4750 = vpop.f32.mrf.mxu0
      %v4751 = vadd.f32 0.0, %v4750
      %v4752 = vpop.f32.mrf.mxu0
      %4753 = vmatprep.mubr.f32.mxu0 0.0
      %4754 = vmatmul.mubr.f32.gmra.mxu0 %v4053
      %v4755 = vpop.f32.mrf.mxu0
      %v4756 = vadd.f32 0.0, %v4755
      %v4757 = vpop.f32.mrf.mxu0
      %4758 = vmatprep.mubr.f32.mxu0 0.0
      %4759 = vmatmul.mubr.f32.gmra.mxu0 %v4055
      %v4760 = vpop.f32.mrf.mxu0
      %v4761 = vadd.f32 0.0, %v4760
      %v4762 = vpop.f32.mrf.mxu0
      %4763 = vmatprep.mubr.f32.mxu0 0.0
      %4764 = vmatmul.mubr.f32.gmra.mxu0 %v4312
      %v4765 = vpop.f32.mrf.mxu0
      %v4766 = vadd.f32 0.0, %v4765
      %v4767 = vpop.f32.mrf.mxu0
      %4768 = vmatprep.mubr.f32.mxu0 0.0
      %4769 = vmatmul.mubr.f32.gmra.mxu0 %v4672
      %v4770 = vpop.f32.mrf.mxu0
      %v4771 = vadd.f32 0.0, %v4770
      %v4772 = vpop.f32.mrf.mxu0
      %4773 = vdwg.mxu0
      %v4774 = vadd.f32 %v4654, %v4741
      %v4775 = vadd.f32 %v4655, %v4746
      %v4776 = vadd.f32 %v4656, %v4751
      %v4777 = vadd.f32 %v4657, %v4756
      %v4778 = vadd.f32 %v4658, %v4761
      %v4779 = vadd.f32 %v4659, %v4766
      %v4780 = vadd.f32 %v4660, %v4771
      %s4781 = scalar_lea.vmem %s292, 2176
      %v4782 = vld [vmem:[%s4781] sm:$0xff]
      %v4783 = vld [vmem:[%s4781 + $0x8] sm:$0xff]
      %v4784 = vld [vmem:[%s4781 + $0x10] sm:$0xff]
      %v4785 = vld [vmem:[%s4781 + $0x18] sm:$0xff]
      %v4786 = vld [vmem:[%s4781 + $0x20] sm:$0xff]
      %v4787 = vld [vmem:[%s4781 + $0x28] sm:$0xff]
      %v4788 = vld [vmem:[%s4781 + $0x30] sm:$0xff]
      %v4789 = vld [vmem:[%s4781 + $0x38] sm:$0xff]
      %4790 = vrot.lane.b32.xlu0 %v3653, 64
      %v4791 = vpop.permute.xlu0 %4790
      %v4792 = vsel %vm416, %v4791, 0
      %4794 = vmatprep.subr.mxu0 0.0
      %4795 = vmatpush1.msra.mxu0 0.0
      %4796 = vmatprep.subr.mxu0 0.0
      %4797 = vmatpush1.msra.mxu0 0.0
      %4798 = vmatprep.subr.mxu0 0.0
      %4799 = vmatpush1.msra.mxu0 0.0
      %4800 = vmatprep.subr.mxu0 0.0
      %4801 = vmatpush1.msra.mxu0 0.0
      %4802 = vmatprep.subr.mxu0 0.0
      %4803 = vmatpush1.msra.mxu0 0.0
      %4804 = vmatprep.subr.mxu0 0.0
      %4805 = vmatpush1.msra.mxu0 0.0
      %4806 = vmatprep.subr.mxu0 0.0
      %4807 = vmatpush1.msra.mxu0 0.0
      %4808 = vmatprep.subr.mxu0 0.0
      %4809 = vmatpush1.msra.mxu0 0.0
      %4810 = vmatprep.subr.mxu0 0.0
      %4811 = vmatpush1.msra.mxu0 %v4789
      %4812 = vmatprep.subr.mxu0 0.0
      %4813 = vmatpush1.msra.mxu0 %v4788
      %4814 = vmatprep.subr.mxu0 0.0
      %4815 = vmatpush1.msra.mxu0 %v4787
      %4816 = vmatprep.subr.mxu0 0.0
      %4817 = vmatpush1.msra.mxu0 %v4786
      %4818 = vmatprep.subr.mxu0 0.0
      %4819 = vmatpush1.msra.mxu0 %v4785
      %4820 = vmatprep.subr.mxu0 0.0
      %4821 = vmatpush1.msra.mxu0 %v4784
      %4822 = vmatprep.subr.mxu0 0.0
      %4823 = vmatpush1.msra.mxu0 %v4783
      %4824 = vmatprep.subr.mxu0 0.0
      %4825 = vmatpush1.msra.mxu0 %v4782
      %4826 = vmatprep.subr.mxu0 0.0
      %4827 = vmatpush2.msra.mxu0 0.0
      %4828 = vmatprep.subr.mxu0 0.0
      %4829 = vmatpush2.msra.mxu0 0.0
      %4830 = vmatprep.subr.mxu0 0.0
      %4831 = vmatpush2.msra.mxu0 0.0
      %4832 = vmatprep.subr.mxu0 0.0
      %4833 = vmatpush2.msra.mxu0 0.0
      %4834 = vmatprep.subr.mxu0 0.0
      %4835 = vmatpush2.msra.mxu0 0.0
      %4836 = vmatprep.subr.mxu0 0.0
      %4837 = vmatpush2.msra.mxu0 0.0
      %4838 = vmatprep.subr.mxu0 0.0
      %4839 = vmatpush2.msra.mxu0 0.0
      %4840 = vmatprep.subr.mxu0 0.0
      %4841 = vmatpush2.msra.mxu0 0.0
      %4842 = vmatprep.subr.mxu0 0.0
      %4843 = vmatpush2.msra.mxu0 0.0
      %4844 = vmatprep.subr.mxu0 0.0
      %4845 = vmatpush2.msra.mxu0 0.0
      %4846 = vmatprep.subr.mxu0 0.0
      %4847 = vmatpush2.msra.mxu0 0.0
      %4848 = vmatprep.subr.mxu0 0.0
      %4849 = vmatpush2.msra.mxu0 0.0
      %4850 = vmatprep.subr.mxu0 0.0
      %4851 = vmatpush2.msra.mxu0 0.0
      %4852 = vmatprep.subr.mxu0 0.0
      %4853 = vmatpush2.msra.mxu0 0.0
      %4854 = vmatprep.subr.mxu0 0.0
      %4855 = vmatpush2.msra.mxu0 0.0
      %4856 = vmatprep.subr.mxu0 0.0
      %4857 = vmatpush2.msra.mxu0 0.0
      %4858 = vmatprep.mubr.f32.mxu0 0.0
      %4859 = vmatmul.mubr.f32.gmra.mxu0 %v3919
      %v4860 = vpop.f32.mrf.mxu0
      %v4861 = vadd.f32 0.0, %v4860
      %v4862 = vpop.f32.mrf.mxu0
      %4863 = vmatprep.mubr.f32.mxu0 0.0
      %4864 = vmatmul.mubr.f32.gmra.mxu0 %v3921
      %v4865 = vpop.f32.mrf.mxu0
      %v4866 = vadd.f32 0.0, %v4865
      %v4867 = vpop.f32.mrf.mxu0
      %4868 = vmatprep.mubr.f32.mxu0 0.0
      %4869 = vmatmul.mubr.f32.gmra.mxu0 %v3923
      %v4870 = vpop.f32.mrf.mxu0
      %v4871 = vadd.f32 0.0, %v4870
      %v4872 = vpop.f32.mrf.mxu0
      %4873 = vmatprep.mubr.f32.mxu0 0.0
      %4874 = vmatmul.mubr.f32.gmra.mxu0 %v3925
      %v4875 = vpop.f32.mrf.mxu0
      %v4876 = vadd.f32 0.0, %v4875
      %v4877 = vpop.f32.mrf.mxu0
      %4878 = vmatprep.mubr.f32.mxu0 0.0
      %4879 = vmatmul.mubr.f32.gmra.mxu0 %v3927
      %v4880 = vpop.f32.mrf.mxu0
      %v4881 = vadd.f32 0.0, %v4880
      %v4882 = vpop.f32.mrf.mxu0
      %4883 = vmatprep.mubr.f32.mxu0 0.0
      %4884 = vmatmul.mubr.f32.gmra.mxu0 %v4432
      %v4885 = vpop.f32.mrf.mxu0
      %v4886 = vadd.f32 0.0, %v4885
      %v4887 = vpop.f32.mrf.mxu0
      %4888 = vmatprep.mubr.f32.mxu0 0.0
      %4889 = vmatmul.mubr.f32.gmra.mxu0 %v4792
      %v4890 = vpop.f32.mrf.mxu0
      %v4891 = vadd.f32 0.0, %v4890
      %v4892 = vpop.f32.mrf.mxu0
      %4893 = vdwg.mxu0
      %v4894 = vadd.f32 %v4774, %v4861
      %v4895 = vadd.f32 %v4775, %v4866
      %v4896 = vadd.f32 %v4776, %v4871
      %v4897 = vadd.f32 %v4777, %v4876
      %v4898 = vadd.f32 %v4778, %v4881
      %v4899 = vadd.f32 %v4779, %v4886
      %v4900 = vadd.f32 %v4780, %v4891
      %s4901 = scalar_lea.vmem %s292, 2240
      %v4902 = vld [vmem:[%s4901] sm:$0xff]
      %v4903 = vld [vmem:[%s4901 + $0x8] sm:$0xff]
      %v4904 = vld [vmem:[%s4901 + $0x10] sm:$0xff]
      %v4905 = vld [vmem:[%s4901 + $0x18] sm:$0xff]
      %v4906 = vld [vmem:[%s4901 + $0x20] sm:$0xff]
      %v4907 = vld [vmem:[%s4901 + $0x28] sm:$0xff]
      %v4908 = vld [vmem:[%s4901 + $0x30] sm:$0xff]
      %v4909 = vld [vmem:[%s4901 + $0x38] sm:$0xff]
      %4910 = vrot.lane.b32.xlu0 %v3773, 64
      %v4911 = vpop.permute.xlu0 %4910
      %v4912 = vsel %vm416, %v4911, 0
      %4914 = vmatprep.subr.mxu0 0.0
      %4915 = vmatpush1.msra.mxu0 0.0
      %4916 = vmatprep.subr.mxu0 0.0
      %4917 = vmatpush1.msra.mxu0 0.0
      %4918 = vmatprep.subr.mxu0 0.0
      %4919 = vmatpush1.msra.mxu0 0.0
      %4920 = vmatprep.subr.mxu0 0.0
      %4921 = vmatpush1.msra.mxu0 0.0
      %4922 = vmatprep.subr.mxu0 0.0
      %4923 = vmatpush1.msra.mxu0 0.0
      %4924 = vmatprep.subr.mxu0 0.0
      %4925 = vmatpush1.msra.mxu0 0.0
      %4926 = vmatprep.subr.mxu0 0.0
      %4927 = vmatpush1.msra.mxu0 0.0
      %4928 = vmatprep.subr.mxu0 0.0
      %4929 = vmatpush1.msra.mxu0 0.0
      %4930 = vmatprep.subr.mxu0 0.0
      %4931 = vmatpush1.msra.mxu0 %v4909
      %4932 = vmatprep.subr.mxu0 0.0
      %4933 = vmatpush1.msra.mxu0 %v4908
      %4934 = vmatprep.subr.mxu0 0.0
      %4935 = vmatpush1.msra.mxu0 %v4907
      %4936 = vmatprep.subr.mxu0 0.0
      %4937 = vmatpush1.msra.mxu0 %v4906
      %4938 = vmatprep.subr.mxu0 0.0
      %4939 = vmatpush1.msra.mxu0 %v4905
      %4940 = vmatprep.subr.mxu0 0.0
      %4941 = vmatpush1.msra.mxu0 %v4904
      %4942 = vmatprep.subr.mxu0 0.0
      %4943 = vmatpush1.msra.mxu0 %v4903
      %4944 = vmatprep.subr.mxu0 0.0
      %4945 = vmatpush1.msra.mxu0 %v4902
      %4946 = vmatprep.subr.mxu0 0.0
      %4947 = vmatpush2.msra.mxu0 0.0
      %4948 = vmatprep.subr.mxu0 0.0
      %4949 = vmatpush2.msra.mxu0 0.0
      %4950 = vmatprep.subr.mxu0 0.0
      %4951 = vmatpush2.msra.mxu0 0.0
      %4952 = vmatprep.subr.mxu0 0.0
      %4953 = vmatpush2.msra.mxu0 0.0
      %4954 = vmatprep.subr.mxu0 0.0
      %4955 = vmatpush2.msra.mxu0 0.0
      %4956 = vmatprep.subr.mxu0 0.0
      %4957 = vmatpush2.msra.mxu0 0.0
      %4958 = vmatprep.subr.mxu0 0.0
      %4959 = vmatpush2.msra.mxu0 0.0
      %4960 = vmatprep.subr.mxu0 0.0
      %4961 = vmatpush2.msra.mxu0 0.0
      %4962 = vmatprep.subr.mxu0 0.0
      %4963 = vmatpush2.msra.mxu0 0.0
      %4964 = vmatprep.subr.mxu0 0.0
      %4965 = vmatpush2.msra.mxu0 0.0
      %4966 = vmatprep.subr.mxu0 0.0
      %4967 = vmatpush2.msra.mxu0 0.0
      %4968 = vmatprep.subr.mxu0 0.0
      %4969 = vmatpush2.msra.mxu0 0.0
      %4970 = vmatprep.subr.mxu0 0.0
      %4971 = vmatpush2.msra.mxu0 0.0
      %4972 = vmatprep.subr.mxu0 0.0
      %4973 = vmatpush2.msra.mxu0 0.0
      %4974 = vmatprep.subr.mxu0 0.0
      %4975 = vmatpush2.msra.mxu0 0.0
      %4976 = vmatprep.subr.mxu0 0.0
      %4977 = vmatpush2.msra.mxu0 0.0
      %4978 = vmatprep.mubr.f32.mxu0 0.0
      %4979 = vmatmul.mubr.f32.gmra.mxu0 %v4184
      %v4980 = vpop.f32.mrf.mxu0
      %v4981 = vadd.f32 0.0, %v4980
      %v4982 = vpop.f32.mrf.mxu0
      %4983 = vmatprep.mubr.f32.mxu0 0.0
      %4984 = vmatmul.mubr.f32.gmra.mxu0 %v4186
      %v4985 = vpop.f32.mrf.mxu0
      %v4986 = vadd.f32 0.0, %v4985
      %v4987 = vpop.f32.mrf.mxu0
      %4988 = vmatprep.mubr.f32.mxu0 0.0
      %4989 = vmatmul.mubr.f32.gmra.mxu0 %v4188
      %v4990 = vpop.f32.mrf.mxu0
      %v4991 = vadd.f32 0.0, %v4990
      %v4992 = vpop.f32.mrf.mxu0
      %4993 = vmatprep.mubr.f32.mxu0 0.0
      %4994 = vmatmul.mubr.f32.gmra.mxu0 %v4190
      %v4995 = vpop.f32.mrf.mxu0
      %v4996 = vadd.f32 0.0, %v4995
      %v4997 = vpop.f32.mrf.mxu0
      %4998 = vmatprep.mubr.f32.mxu0 0.0
      %4999 = vmatmul.mubr.f32.gmra.mxu0 %v4192
      %v5000 = vpop.f32.mrf.mxu0
      %v5001 = vadd.f32 0.0, %v5000
      %v5002 = vpop.f32.mrf.mxu0
      %5003 = vmatprep.mubr.f32.mxu0 0.0
      %5004 = vmatmul.mubr.f32.gmra.mxu0 %v4552
      %v5005 = vpop.f32.mrf.mxu0
      %v5006 = vadd.f32 0.0, %v5005
      %v5007 = vpop.f32.mrf.mxu0
      %5008 = vmatprep.mubr.f32.mxu0 0.0
      %5009 = vmatmul.mubr.f32.gmra.mxu0 %v4912
      %v5010 = vpop.f32.mrf.mxu0
      %v5011 = vadd.f32 0.0, %v5010
      %v5012 = vpop.f32.mrf.mxu0
      %5013 = vdwg.mxu0
      %v5014 = vadd.f32 %v4894, %v4981
      %v5015 = vadd.f32 %v4895, %v4986
      %v5016 = vadd.f32 %v4896, %v4991
      %v5017 = vadd.f32 %v4897, %v4996
      %v5018 = vadd.f32 %v4898, %v5001
      %v5019 = vadd.f32 %v4899, %v5006
      %v5020 = vadd.f32 %v4900, %v5011
      %5028 = vrot.lane.b32.xlu0 %v5014, 64
      %v5029 = vpop.permute.xlu0 %5028
      %5030 = vrot.lane.b32.xlu0 %v5015, 64
      %v5031 = vpop.permute.xlu0 %5030
      %5032 = vrot.lane.b32.xlu0 %v5016, 64
      %v5033 = vpop.permute.xlu0 %5032
      %5034 = vrot.lane.b32.xlu0 %v5017, 64
      %v5035 = vpop.permute.xlu0 %5034
      %5036 = vrot.lane.b32.xlu0 %v5018, 64
      %v5037 = vpop.permute.xlu0 %5036
      %5038 = vrot.lane.b32.xlu0 %v5019, 64
      %v5039 = vpop.permute.xlu0 %5038
      %5040 = vrot.lane.b32.xlu0 %v5020, 64
      %v5041 = vpop.permute.xlu0 %5040
      %v5049 = vsel %vm416, %v3876, %v5029
      %v5050 = vsel %vm416, %v3877, %v5031
      %v5051 = vsel %vm416, %v3878, %v5033
      %v5052 = vsel %vm416, %v3879, %v5035
      %v5053 = vsel %vm416, %v3880, %v5037
      %v5054 = vsel %vm416, %v3881, %v5039
      %v5055 = vsel %vm416, %v3882, %v5041
      %s5056 = scalar_lea.vmem %s303, 56
      %5057 = vst [vmem:[%s5056] sm:$0x7f] %v5049
      %5058 = vst [vmem:[%s5056 + $0x8] sm:$0x7f] %v5050
      %5059 = vst [vmem:[%s5056 + $0x10] sm:$0x7f] %v5051
      %5060 = vst [vmem:[%s5056 + $0x18] sm:$0x7f] %v5052
      %5061 = vst [vmem:[%s5056 + $0x20] sm:$0x7f] %v5053
      %5062 = vst [vmem:[%s5056 + $0x28] sm:$0x7f] %v5054
      %5063 = vst [vmem:[%s5056 + $0x30] sm:$0x7f] %v5055
      %s5064 = scalar_lea.vmem %s275, 112
      %v5065 = vld [vmem:[%s5064] sm:$0x7f]
      %v5066 = vld [vmem:[%s5064 + $0x8] sm:$0x7f]
      %v5067 = vld [vmem:[%s5064 + $0x10] sm:$0x7f]
      %v5068 = vld [vmem:[%s5064 + $0x18] sm:$0x7f]
      %v5069 = vld [vmem:[%s5064 + $0x20] sm:$0x7f]
      %v5070 = vld [vmem:[%s5064 + $0x28] sm:$0x7f]
      %v5071 = vld [vmem:[%s5064 + $0x30] sm:$0x7f]
      %s5072 = scalar_lea.vmem %s280, 2
      %v5073 = vld [vmem:[%s5072] sm:$0x1]
      %v5075 = vlaneseq
      %v5076 = vshrl.u32 %v5075, 7
      %v5077 = vsub.s32 0, %v5076
      %v5078 = vrot.slane %v5073, %v5077
      %v5080 = vmul.f32 %v5065, %v5078
      %v5081 = vmul.f32 %v5066, %v5078
      %v5082 = vmul.f32 %v5067, %v5078
      %v5083 = vmul.f32 %v5068, %v5078
      %v5084 = vmul.f32 %v5069, %v5078
      %v5085 = vmul.f32 %v5070, %v5078
      %v5086 = vmul.f32 %v5071, %v5078
      %s5087 = scalar_lea.vmem %s285, 2
      %v5088 = vld [vmem:[%s5087] sm:$0x1]
      %v5090 = vlaneseq
      %v5091 = vshrl.u32 %v5090, 7
      %v5092 = vsub.s32 0, %v5091
      %v5093 = vrot.slane %v5088, %v5092
      %v5095 = vadd.f32 %v5080, %v5093
      %v5096 = vadd.f32 %v5081, %v5093
      %v5097 = vadd.f32 %v5082, %v5093
      %v5098 = vadd.f32 %v5083, %v5093
      %v5099 = vadd.f32 %v5084, %v5093
      %v5100 = vadd.f32 %v5085, %v5093
      %v5101 = vadd.f32 %v5086, %v5093
      %v5102 = vmax.f32 %v5095, 0.0
      %v5103 = vmax.f32 %v5096, 0.0
      %v5104 = vmax.f32 %v5097, 0.0
      %v5105 = vmax.f32 %v5098, 0.0
      %v5106 = vmax.f32 %v5099, 0.0
      %v5107 = vmax.f32 %v5100, 0.0
      %v5108 = vmax.f32 %v5101, 0.0
      %5109 = vst [vmem:[%s357 + $0x1] sm:$0x7f] %v5102
      %5110 = vst [vmem:[%s357 + $0x9] sm:$0x7f] %v5103
      %5111 = vst [vmem:[%s357 + $0x11] sm:$0x7f] %v5104
      %5112 = vst [vmem:[%s357 + $0x19] sm:$0x7f] %v5105
      %5113 = vst [vmem:[%s357 + $0x21] sm:$0x7f] %v5106
      %5114 = vst [vmem:[%s357 + $0x29] sm:$0x7f] %v5107
      %5115 = vst [vmem:[%s357 + $0x31] sm:$0x7f] %v5108
      %v5116 = vld [vmem:[#allocation2] sm:$0xff]
      %v5117 = vld [vmem:[#allocation2 + $0x8] sm:$0xff]
      %v5118 = vld [vmem:[#allocation2 + $0x10] sm:$0xff]
      %v5119 = vld [vmem:[#allocation2 + $0x18] sm:$0xff]
      %v5120 = vld [vmem:[#allocation2 + $0x20] sm:$0xff]
      %v5121 = vld [vmem:[#allocation2 + $0x28] sm:$0xff]
      %v5122 = vld [vmem:[#allocation2 + $0x30] sm:$0xff]
      %v5123 = vld [vmem:[#allocation2 + $0x38] sm:$0xff]
      %v5124 = vld [vmem:[#allocation2 + $0x40] sm:$0xff]
      %v5125 = vld [vmem:[#allocation2 + $0x48] sm:$0xff]
      %s5126 = scalar_lea.vmem %s292, 2304
      %v5127 = vld [vmem:[%s5126] sm:$0xff]
      %v5128 = vld [vmem:[%s5126 + $0x8] sm:$0xff]
      %v5129 = vld [vmem:[%s5126 + $0x10] sm:$0xff]
      %v5130 = vld [vmem:[%s5126 + $0x18] sm:$0xff]
      %v5131 = vld [vmem:[%s5126 + $0x20] sm:$0xff]
      %v5132 = vld [vmem:[%s5126 + $0x28] sm:$0xff]
      %v5133 = vld [vmem:[%s5126 + $0x30] sm:$0xff]
      %v5134 = vld [vmem:[%s5126 + $0x38] sm:$0xff]
      %s5135 = scalar_lea.vmem %s292, 2368
      %v5136 = vld [vmem:[%s5135] sm:$0xff]
      %v5137 = vld [vmem:[%s5135 + $0x8] sm:$0xff]
      %v5138 = vld [vmem:[%s5135 + $0x10] sm:$0xff]
      %v5139 = vld [vmem:[%s5135 + $0x18] sm:$0xff]
      %v5140 = vld [vmem:[%s5135 + $0x20] sm:$0xff]
      %v5141 = vld [vmem:[%s5135 + $0x28] sm:$0xff]
      %v5142 = vld [vmem:[%s5135 + $0x30] sm:$0xff]
      %v5143 = vld [vmem:[%s5135 + $0x38] sm:$0xff]
      %v5152 = vrot.slane %v5116, 1
      %v5153 = vrot.slane %v5117, 1
      %v5154 = vsel %vm400, %v5152, %v5153
      %v5155 = vrot.slane %v5118, 1
      %v5156 = vsel %vm400, %v5153, %v5155
      %v5157 = vrot.slane %v5119, 1
      %v5158 = vsel %vm400, %v5155, %v5157
      %v5159 = vrot.slane %v5120, 1
      %v5160 = vsel %vm400, %v5157, %v5159
      %v5161 = vrot.slane %v5121, 1
      %v5162 = vsel %vm400, %v5159, %v5161
      %v5163 = vrot.slane %v5122, 1
      %v5164 = vsel %vm400, %v5161, %v5163
      %v5165 = vrot.slane %v5123, 1
      %v5166 = vsel %vm400, %v5163, %v5165
      %v5167 = vsel %vm416, %v5154, 0
      %v5169 = vsel %vm416, %v5156, 0
      %v5171 = vsel %vm416, %v5158, 0
      %v5173 = vsel %vm416, %v5160, 0
      %v5175 = vsel %vm416, %v5162, 0
      %v5177 = vsel %vm416, %v5164, 0
      %v5179 = vsel %vm416, %v5166, 0
      %5181 = vmatprep.subr.mxu0 0.0
      %5182 = vmatpush1.msra.mxu0 0.0
      %5183 = vmatprep.subr.mxu0 0.0
      %5184 = vmatpush1.msra.mxu0 0.0
      %5185 = vmatprep.subr.mxu0 0.0
      %5186 = vmatpush1.msra.mxu0 0.0
      %5187 = vmatprep.subr.mxu0 0.0
      %5188 = vmatpush1.msra.mxu0 0.0
      %5189 = vmatprep.subr.mxu0 0.0
      %5190 = vmatpush1.msra.mxu0 0.0
      %5191 = vmatprep.subr.mxu0 0.0
      %5192 = vmatpush1.msra.mxu0 0.0
      %5193 = vmatprep.subr.mxu0 0.0
      %5194 = vmatpush1.msra.mxu0 0.0
      %5195 = vmatprep.subr.mxu0 0.0
      %5196 = vmatpush1.msra.mxu0 0.0
      %5197 = vmatprep.subr.mxu0 0.0
      %5198 = vmatpush1.msra.mxu0 %v5143
      %5199 = vmatprep.subr.mxu0 0.0
      %5200 = vmatpush1.msra.mxu0 %v5142
      %5201 = vmatprep.subr.mxu0 0.0
      %5202 = vmatpush1.msra.mxu0 %v5141
      %5203 = vmatprep.subr.mxu0 0.0
      %5204 = vmatpush1.msra.mxu0 %v5140
      %5205 = vmatprep.subr.mxu0 0.0
      %5206 = vmatpush1.msra.mxu0 %v5139
      %5207 = vmatprep.subr.mxu0 0.0
      %5208 = vmatpush1.msra.mxu0 %v5138
      %5209 = vmatprep.subr.mxu0 0.0
      %5210 = vmatpush1.msra.mxu0 %v5137
      %5211 = vmatprep.subr.mxu0 0.0
      %5212 = vmatpush1.msra.mxu0 %v5136
      %5213 = vmatprep.subr.mxu0 0.0
      %5214 = vmatpush2.msra.mxu0 0.0
      %5215 = vmatprep.subr.mxu0 0.0
      %5216 = vmatpush2.msra.mxu0 0.0
      %5217 = vmatprep.subr.mxu0 0.0
      %5218 = vmatpush2.msra.mxu0 0.0
      %5219 = vmatprep.subr.mxu0 0.0
      %5220 = vmatpush2.msra.mxu0 0.0
      %5221 = vmatprep.subr.mxu0 0.0
      %5222 = vmatpush2.msra.mxu0 0.0
      %5223 = vmatprep.subr.mxu0 0.0
      %5224 = vmatpush2.msra.mxu0 0.0
      %5225 = vmatprep.subr.mxu0 0.0
      %5226 = vmatpush2.msra.mxu0 0.0
      %5227 = vmatprep.subr.mxu0 0.0
      %5228 = vmatpush2.msra.mxu0 0.0
      %5229 = vmatprep.subr.mxu0 0.0
      %5230 = vmatpush2.msra.mxu0 0.0
      %5231 = vmatprep.subr.mxu0 0.0
      %5232 = vmatpush2.msra.mxu0 0.0
      %5233 = vmatprep.subr.mxu0 0.0
      %5234 = vmatpush2.msra.mxu0 0.0
      %5235 = vmatprep.subr.mxu0 0.0
      %5236 = vmatpush2.msra.mxu0 0.0
      %5237 = vmatprep.subr.mxu0 0.0
      %5238 = vmatpush2.msra.mxu0 0.0
      %5239 = vmatprep.subr.mxu0 0.0
      %5240 = vmatpush2.msra.mxu0 0.0
      %5241 = vmatprep.subr.mxu0 0.0
      %5242 = vmatpush2.msra.mxu0 0.0
      %5243 = vmatprep.subr.mxu0 0.0
      %5244 = vmatpush2.msra.mxu0 0.0
      %5245 = vmatprep.mubr.f32.mxu0 0.0
      %5246 = vmatmul.mubr.f32.gmra.mxu0 %v5167
      %v5247 = vpop.f32.mrf.mxu0
      %v5248 = vadd.f32 0.0, %v5247
      %v5249 = vpop.f32.mrf.mxu0
      %5250 = vmatprep.mubr.f32.mxu0 0.0
      %5251 = vmatmul.mubr.f32.gmra.mxu0 %v5169
      %v5252 = vpop.f32.mrf.mxu0
      %v5253 = vadd.f32 0.0, %v5252
      %v5254 = vpop.f32.mrf.mxu0
      %5255 = vmatprep.mubr.f32.mxu0 0.0
      %5256 = vmatmul.mubr.f32.gmra.mxu0 %v5171
      %v5257 = vpop.f32.mrf.mxu0
      %v5258 = vadd.f32 0.0, %v5257
      %v5259 = vpop.f32.mrf.mxu0
      %5260 = vmatprep.mubr.f32.mxu0 0.0
      %5261 = vmatmul.mubr.f32.gmra.mxu0 %v5173
      %v5262 = vpop.f32.mrf.mxu0
      %v5263 = vadd.f32 0.0, %v5262
      %v5264 = vpop.f32.mrf.mxu0
      %5265 = vmatprep.mubr.f32.mxu0 0.0
      %5266 = vmatmul.mubr.f32.gmra.mxu0 %v5175
      %v5267 = vpop.f32.mrf.mxu0
      %v5268 = vadd.f32 0.0, %v5267
      %v5269 = vpop.f32.mrf.mxu0
      %5270 = vmatprep.mubr.f32.mxu0 0.0
      %5271 = vmatmul.mubr.f32.gmra.mxu0 %v5177
      %v5272 = vpop.f32.mrf.mxu0
      %v5273 = vadd.f32 0.0, %v5272
      %v5274 = vpop.f32.mrf.mxu0
      %5275 = vmatprep.mubr.f32.mxu0 0.0
      %5276 = vmatmul.mubr.f32.gmra.mxu0 %v5179
      %v5277 = vpop.f32.mrf.mxu0
      %v5278 = vadd.f32 0.0, %v5277
      %v5279 = vpop.f32.mrf.mxu0
      %5280 = vdwg.mxu0
      %v5281 = vsel %vm416, %v5116, 0
      %v5283 = vsel %vm416, %v5117, 0
      %v5285 = vsel %vm416, %v5118, 0
      %v5287 = vsel %vm416, %v5119, 0
      %v5289 = vsel %vm416, %v5120, 0
      %v5291 = vsel %vm416, %v5121, 0
      %v5293 = vsel %vm416, %v5122, 0
      %5295 = vmatprep.subr.mxu0 0.0
      %5296 = vmatpush1.msra.mxu0 0.0
      %5297 = vmatprep.subr.mxu0 0.0
      %5298 = vmatpush1.msra.mxu0 0.0
      %5299 = vmatprep.subr.mxu0 0.0
      %5300 = vmatpush1.msra.mxu0 0.0
      %5301 = vmatprep.subr.mxu0 0.0
      %5302 = vmatpush1.msra.mxu0 0.0
      %5303 = vmatprep.subr.mxu0 0.0
      %5304 = vmatpush1.msra.mxu0 0.0
      %5305 = vmatprep.subr.mxu0 0.0
      %5306 = vmatpush1.msra.mxu0 0.0
      %5307 = vmatprep.subr.mxu0 0.0
      %5308 = vmatpush1.msra.mxu0 0.0
      %5309 = vmatprep.subr.mxu0 0.0
      %5310 = vmatpush1.msra.mxu0 0.0
      %5311 = vmatprep.subr.mxu0 0.0
      %5312 = vmatpush1.msra.mxu0 %v5134
      %5313 = vmatprep.subr.mxu0 0.0
      %5314 = vmatpush1.msra.mxu0 %v5133
      %5315 = vmatprep.subr.mxu0 0.0
      %5316 = vmatpush1.msra.mxu0 %v5132
      %5317 = vmatprep.subr.mxu0 0.0
      %5318 = vmatpush1.msra.mxu0 %v5131
      %5319 = vmatprep.subr.mxu0 0.0
      %5320 = vmatpush1.msra.mxu0 %v5130
      %5321 = vmatprep.subr.mxu0 0.0
      %5322 = vmatpush1.msra.mxu0 %v5129
      %5323 = vmatprep.subr.mxu0 0.0
      %5324 = vmatpush1.msra.mxu0 %v5128
      %5325 = vmatprep.subr.mxu0 0.0
      %5326 = vmatpush1.msra.mxu0 %v5127
      %5327 = vmatprep.subr.mxu0 0.0
      %5328 = vmatpush2.msra.mxu0 0.0
      %5329 = vmatprep.subr.mxu0 0.0
      %5330 = vmatpush2.msra.mxu0 0.0
      %5331 = vmatprep.subr.mxu0 0.0
      %5332 = vmatpush2.msra.mxu0 0.0
      %5333 = vmatprep.subr.mxu0 0.0
      %5334 = vmatpush2.msra.mxu0 0.0
      %5335 = vmatprep.subr.mxu0 0.0
      %5336 = vmatpush2.msra.mxu0 0.0
      %5337 = vmatprep.subr.mxu0 0.0
      %5338 = vmatpush2.msra.mxu0 0.0
      %5339 = vmatprep.subr.mxu0 0.0
      %5340 = vmatpush2.msra.mxu0 0.0
      %5341 = vmatprep.subr.mxu0 0.0
      %5342 = vmatpush2.msra.mxu0 0.0
      %5343 = vmatprep.subr.mxu0 0.0
      %5344 = vmatpush2.msra.mxu0 0.0
      %5345 = vmatprep.subr.mxu0 0.0
      %5346 = vmatpush2.msra.mxu0 0.0
      %5347 = vmatprep.subr.mxu0 0.0
      %5348 = vmatpush2.msra.mxu0 0.0
      %5349 = vmatprep.subr.mxu0 0.0
      %5350 = vmatpush2.msra.mxu0 0.0
      %5351 = vmatprep.subr.mxu0 0.0
      %5352 = vmatpush2.msra.mxu0 0.0
      %5353 = vmatprep.subr.mxu0 0.0
      %5354 = vmatpush2.msra.mxu0 0.0
      %5355 = vmatprep.subr.mxu0 0.0
      %5356 = vmatpush2.msra.mxu0 0.0
      %5357 = vmatprep.subr.mxu0 0.0
      %5358 = vmatpush2.msra.mxu0 0.0
      %5359 = vmatprep.mubr.f32.mxu0 0.0
      %5360 = vmatmul.mubr.f32.gmra.mxu0 %v5281
      %v5361 = vpop.f32.mrf.mxu0
      %v5362 = vadd.f32 %v5248, %v5361
      %v5363 = vpop.f32.mrf.mxu0
      %5364 = vmatprep.mubr.f32.mxu0 0.0
      %5365 = vmatmul.mubr.f32.gmra.mxu0 %v5283
      %v5366 = vpop.f32.mrf.mxu0
      %v5367 = vadd.f32 %v5253, %v5366
      %v5368 = vpop.f32.mrf.mxu0
      %5369 = vmatprep.mubr.f32.mxu0 0.0
      %5370 = vmatmul.mubr.f32.gmra.mxu0 %v5285
      %v5371 = vpop.f32.mrf.mxu0
      %v5372 = vadd.f32 %v5258, %v5371
      %v5373 = vpop.f32.mrf.mxu0
      %5374 = vmatprep.mubr.f32.mxu0 0.0
      %5375 = vmatmul.mubr.f32.gmra.mxu0 %v5287
      %v5376 = vpop.f32.mrf.mxu0
      %v5377 = vadd.f32 %v5263, %v5376
      %v5378 = vpop.f32.mrf.mxu0
      %5379 = vmatprep.mubr.f32.mxu0 0.0
      %5380 = vmatmul.mubr.f32.gmra.mxu0 %v5289
      %v5381 = vpop.f32.mrf.mxu0
      %v5382 = vadd.f32 %v5268, %v5381
      %v5383 = vpop.f32.mrf.mxu0
      %5384 = vmatprep.mubr.f32.mxu0 0.0
      %5385 = vmatmul.mubr.f32.gmra.mxu0 %v5291
      %v5386 = vpop.f32.mrf.mxu0
      %v5387 = vadd.f32 %v5273, %v5386
      %v5388 = vpop.f32.mrf.mxu0
      %5389 = vmatprep.mubr.f32.mxu0 0.0
      %5390 = vmatmul.mubr.f32.gmra.mxu0 %v5293
      %v5391 = vpop.f32.mrf.mxu0
      %v5392 = vadd.f32 %v5278, %v5391
      %v5393 = vpop.f32.mrf.mxu0
      %5394 = vdwg.mxu0
      %s5395 = scalar_lea.vmem %s292, 2432
      %v5396 = vld [vmem:[%s5395] sm:$0xff]
      %v5397 = vld [vmem:[%s5395 + $0x8] sm:$0xff]
      %v5398 = vld [vmem:[%s5395 + $0x10] sm:$0xff]
      %v5399 = vld [vmem:[%s5395 + $0x18] sm:$0xff]
      %v5400 = vld [vmem:[%s5395 + $0x20] sm:$0xff]
      %v5401 = vld [vmem:[%s5395 + $0x28] sm:$0xff]
      %v5402 = vld [vmem:[%s5395 + $0x30] sm:$0xff]
      %v5403 = vld [vmem:[%s5395 + $0x38] sm:$0xff]
      %v5404 = vrot.slane %v5116, 2
      %v5405 = vrot.slane %v5117, 2
      %v5406 = vsel %vm654, %v5404, %v5405
      %v5407 = vrot.slane %v5118, 2
      %v5408 = vsel %vm654, %v5405, %v5407
      %v5409 = vrot.slane %v5119, 2
      %v5410 = vsel %vm654, %v5407, %v5409
      %v5411 = vrot.slane %v5120, 2
      %v5412 = vsel %vm654, %v5409, %v5411
      %v5413 = vrot.slane %v5121, 2
      %v5414 = vsel %vm654, %v5411, %v5413
      %v5415 = vrot.slane %v5122, 2
      %v5416 = vsel %vm654, %v5413, %v5415
      %v5417 = vrot.slane %v5123, 2
      %v5418 = vsel %vm654, %v5415, %v5417
      %v5419 = vsel %vm416, %v5406, 0
      %v5421 = vsel %vm416, %v5408, 0
      %v5423 = vsel %vm416, %v5410, 0
      %v5425 = vsel %vm416, %v5412, 0
      %v5427 = vsel %vm416, %v5414, 0
      %v5429 = vsel %vm416, %v5416, 0
      %v5431 = vsel %vm416, %v5418, 0
      %5433 = vmatprep.subr.mxu0 0.0
      %5434 = vmatpush1.msra.mxu0 0.0
      %5435 = vmatprep.subr.mxu0 0.0
      %5436 = vmatpush1.msra.mxu0 0.0
      %5437 = vmatprep.subr.mxu0 0.0
      %5438 = vmatpush1.msra.mxu0 0.0
      %5439 = vmatprep.subr.mxu0 0.0
      %5440 = vmatpush1.msra.mxu0 0.0
      %5441 = vmatprep.subr.mxu0 0.0
      %5442 = vmatpush1.msra.mxu0 0.0
      %5443 = vmatprep.subr.mxu0 0.0
      %5444 = vmatpush1.msra.mxu0 0.0
      %5445 = vmatprep.subr.mxu0 0.0
      %5446 = vmatpush1.msra.mxu0 0.0
      %5447 = vmatprep.subr.mxu0 0.0
      %5448 = vmatpush1.msra.mxu0 0.0
      %5449 = vmatprep.subr.mxu0 0.0
      %5450 = vmatpush1.msra.mxu0 %v5403
      %5451 = vmatprep.subr.mxu0 0.0
      %5452 = vmatpush1.msra.mxu0 %v5402
      %5453 = vmatprep.subr.mxu0 0.0
      %5454 = vmatpush1.msra.mxu0 %v5401
      %5455 = vmatprep.subr.mxu0 0.0
      %5456 = vmatpush1.msra.mxu0 %v5400
      %5457 = vmatprep.subr.mxu0 0.0
      %5458 = vmatpush1.msra.mxu0 %v5399
      %5459 = vmatprep.subr.mxu0 0.0
      %5460 = vmatpush1.msra.mxu0 %v5398
      %5461 = vmatprep.subr.mxu0 0.0
      %5462 = vmatpush1.msra.mxu0 %v5397
      %5463 = vmatprep.subr.mxu0 0.0
      %5464 = vmatpush1.msra.mxu0 %v5396
      %5465 = vmatprep.subr.mxu0 0.0
      %5466 = vmatpush2.msra.mxu0 0.0
      %5467 = vmatprep.subr.mxu0 0.0
      %5468 = vmatpush2.msra.mxu0 0.0
      %5469 = vmatprep.subr.mxu0 0.0
      %5470 = vmatpush2.msra.mxu0 0.0
      %5471 = vmatprep.subr.mxu0 0.0
      %5472 = vmatpush2.msra.mxu0 0.0
      %5473 = vmatprep.subr.mxu0 0.0
      %5474 = vmatpush2.msra.mxu0 0.0
      %5475 = vmatprep.subr.mxu0 0.0
      %5476 = vmatpush2.msra.mxu0 0.0
      %5477 = vmatprep.subr.mxu0 0.0
      %5478 = vmatpush2.msra.mxu0 0.0
      %5479 = vmatprep.subr.mxu0 0.0
      %5480 = vmatpush2.msra.mxu0 0.0
      %5481 = vmatprep.subr.mxu0 0.0
      %5482 = vmatpush2.msra.mxu0 0.0
      %5483 = vmatprep.subr.mxu0 0.0
      %5484 = vmatpush2.msra.mxu0 0.0
      %5485 = vmatprep.subr.mxu0 0.0
      %5486 = vmatpush2.msra.mxu0 0.0
      %5487 = vmatprep.subr.mxu0 0.0
      %5488 = vmatpush2.msra.mxu0 0.0
      %5489 = vmatprep.subr.mxu0 0.0
      %5490 = vmatpush2.msra.mxu0 0.0
      %5491 = vmatprep.subr.mxu0 0.0
      %5492 = vmatpush2.msra.mxu0 0.0
      %5493 = vmatprep.subr.mxu0 0.0
      %5494 = vmatpush2.msra.mxu0 0.0
      %5495 = vmatprep.subr.mxu0 0.0
      %5496 = vmatpush2.msra.mxu0 0.0
      %5497 = vmatprep.mubr.f32.mxu0 0.0
      %5498 = vmatmul.mubr.f32.gmra.mxu0 %v5419
      %v5499 = vpop.f32.mrf.mxu0
      %v5500 = vadd.f32 0.0, %v5499
      %v5501 = vpop.f32.mrf.mxu0
      %5502 = vmatprep.mubr.f32.mxu0 0.0
      %5503 = vmatmul.mubr.f32.gmra.mxu0 %v5421
      %v5504 = vpop.f32.mrf.mxu0
      %v5505 = vadd.f32 0.0, %v5504
      %v5506 = vpop.f32.mrf.mxu0
      %5507 = vmatprep.mubr.f32.mxu0 0.0
      %5508 = vmatmul.mubr.f32.gmra.mxu0 %v5423
      %v5509 = vpop.f32.mrf.mxu0
      %v5510 = vadd.f32 0.0, %v5509
      %v5511 = vpop.f32.mrf.mxu0
      %5512 = vmatprep.mubr.f32.mxu0 0.0
      %5513 = vmatmul.mubr.f32.gmra.mxu0 %v5425
      %v5514 = vpop.f32.mrf.mxu0
      %v5515 = vadd.f32 0.0, %v5514
      %v5516 = vpop.f32.mrf.mxu0
      %5517 = vmatprep.mubr.f32.mxu0 0.0
      %5518 = vmatmul.mubr.f32.gmra.mxu0 %v5427
      %v5519 = vpop.f32.mrf.mxu0
      %v5520 = vadd.f32 0.0, %v5519
      %v5521 = vpop.f32.mrf.mxu0
      %5522 = vmatprep.mubr.f32.mxu0 0.0
      %5523 = vmatmul.mubr.f32.gmra.mxu0 %v5429
      %v5524 = vpop.f32.mrf.mxu0
      %v5525 = vadd.f32 0.0, %v5524
      %v5526 = vpop.f32.mrf.mxu0
      %5527 = vmatprep.mubr.f32.mxu0 0.0
      %5528 = vmatmul.mubr.f32.gmra.mxu0 %v5431
      %v5529 = vpop.f32.mrf.mxu0
      %v5530 = vadd.f32 0.0, %v5529
      %v5531 = vpop.f32.mrf.mxu0
      %5532 = vdwg.mxu0
      %v5533 = vadd.f32 %v5362, %v5500
      %v5534 = vadd.f32 %v5367, %v5505
      %v5535 = vadd.f32 %v5372, %v5510
      %v5536 = vadd.f32 %v5377, %v5515
      %v5537 = vadd.f32 %v5382, %v5520
      %v5538 = vadd.f32 %v5387, %v5525
      %v5539 = vadd.f32 %v5392, %v5530
      %s5540 = scalar_lea.vmem %s292, 2496
      %v5541 = vld [vmem:[%s5540] sm:$0xff]
      %v5542 = vld [vmem:[%s5540 + $0x8] sm:$0xff]
      %v5543 = vld [vmem:[%s5540 + $0x10] sm:$0xff]
      %v5544 = vld [vmem:[%s5540 + $0x18] sm:$0xff]
      %v5545 = vld [vmem:[%s5540 + $0x20] sm:$0xff]
      %v5546 = vld [vmem:[%s5540 + $0x28] sm:$0xff]
      %v5547 = vld [vmem:[%s5540 + $0x30] sm:$0xff]
      %v5548 = vld [vmem:[%s5540 + $0x38] sm:$0xff]
      %v5549 = vsel %vm416, %v5123, 0
      %5551 = vmatprep.subr.mxu0 0.0
      %5552 = vmatpush1.msra.mxu0 0.0
      %5553 = vmatprep.subr.mxu0 0.0
      %5554 = vmatpush1.msra.mxu0 0.0
      %5555 = vmatprep.subr.mxu0 0.0
      %5556 = vmatpush1.msra.mxu0 0.0
      %5557 = vmatprep.subr.mxu0 0.0
      %5558 = vmatpush1.msra.mxu0 0.0
      %5559 = vmatprep.subr.mxu0 0.0
      %5560 = vmatpush1.msra.mxu0 0.0
      %5561 = vmatprep.subr.mxu0 0.0
      %5562 = vmatpush1.msra.mxu0 0.0
      %5563 = vmatprep.subr.mxu0 0.0
      %5564 = vmatpush1.msra.mxu0 0.0
      %5565 = vmatprep.subr.mxu0 0.0
      %5566 = vmatpush1.msra.mxu0 0.0
      %5567 = vmatprep.subr.mxu0 0.0
      %5568 = vmatpush1.msra.mxu0 %v5548
      %5569 = vmatprep.subr.mxu0 0.0
      %5570 = vmatpush1.msra.mxu0 %v5547
      %5571 = vmatprep.subr.mxu0 0.0
      %5572 = vmatpush1.msra.mxu0 %v5546
      %5573 = vmatprep.subr.mxu0 0.0
      %5574 = vmatpush1.msra.mxu0 %v5545
      %5575 = vmatprep.subr.mxu0 0.0
      %5576 = vmatpush1.msra.mxu0 %v5544
      %5577 = vmatprep.subr.mxu0 0.0
      %5578 = vmatpush1.msra.mxu0 %v5543
      %5579 = vmatprep.subr.mxu0 0.0
      %5580 = vmatpush1.msra.mxu0 %v5542
      %5581 = vmatprep.subr.mxu0 0.0
      %5582 = vmatpush1.msra.mxu0 %v5541
      %5583 = vmatprep.subr.mxu0 0.0
      %5584 = vmatpush2.msra.mxu0 0.0
      %5585 = vmatprep.subr.mxu0 0.0
      %5586 = vmatpush2.msra.mxu0 0.0
      %5587 = vmatprep.subr.mxu0 0.0
      %5588 = vmatpush2.msra.mxu0 0.0
      %5589 = vmatprep.subr.mxu0 0.0
      %5590 = vmatpush2.msra.mxu0 0.0
      %5591 = vmatprep.subr.mxu0 0.0
      %5592 = vmatpush2.msra.mxu0 0.0
      %5593 = vmatprep.subr.mxu0 0.0
      %5594 = vmatpush2.msra.mxu0 0.0
      %5595 = vmatprep.subr.mxu0 0.0
      %5596 = vmatpush2.msra.mxu0 0.0
      %5597 = vmatprep.subr.mxu0 0.0
      %5598 = vmatpush2.msra.mxu0 0.0
      %5599 = vmatprep.subr.mxu0 0.0
      %5600 = vmatpush2.msra.mxu0 0.0
      %5601 = vmatprep.subr.mxu0 0.0
      %5602 = vmatpush2.msra.mxu0 0.0
      %5603 = vmatprep.subr.mxu0 0.0
      %5604 = vmatpush2.msra.mxu0 0.0
      %5605 = vmatprep.subr.mxu0 0.0
      %5606 = vmatpush2.msra.mxu0 0.0
      %5607 = vmatprep.subr.mxu0 0.0
      %5608 = vmatpush2.msra.mxu0 0.0
      %5609 = vmatprep.subr.mxu0 0.0
      %5610 = vmatpush2.msra.mxu0 0.0
      %5611 = vmatprep.subr.mxu0 0.0
      %5612 = vmatpush2.msra.mxu0 0.0
      %5613 = vmatprep.subr.mxu0 0.0
      %5614 = vmatpush2.msra.mxu0 0.0
      %5615 = vmatprep.mubr.f32.mxu0 0.0
      %5616 = vmatmul.mubr.f32.gmra.mxu0 %v5283
      %v5617 = vpop.f32.mrf.mxu0
      %v5618 = vadd.f32 0.0, %v5617
      %v5619 = vpop.f32.mrf.mxu0
      %5620 = vmatprep.mubr.f32.mxu0 0.0
      %5621 = vmatmul.mubr.f32.gmra.mxu0 %v5285
      %v5622 = vpop.f32.mrf.mxu0
      %v5623 = vadd.f32 0.0, %v5622
      %v5624 = vpop.f32.mrf.mxu0
      %5625 = vmatprep.mubr.f32.mxu0 0.0
      %5626 = vmatmul.mubr.f32.gmra.mxu0 %v5287
      %v5627 = vpop.f32.mrf.mxu0
      %v5628 = vadd.f32 0.0, %v5627
      %v5629 = vpop.f32.mrf.mxu0
      %5630 = vmatprep.mubr.f32.mxu0 0.0
      %5631 = vmatmul.mubr.f32.gmra.mxu0 %v5289
      %v5632 = vpop.f32.mrf.mxu0
      %v5633 = vadd.f32 0.0, %v5632
      %v5634 = vpop.f32.mrf.mxu0
      %5635 = vmatprep.mubr.f32.mxu0 0.0
      %5636 = vmatmul.mubr.f32.gmra.mxu0 %v5291
      %v5637 = vpop.f32.mrf.mxu0
      %v5638 = vadd.f32 0.0, %v5637
      %v5639 = vpop.f32.mrf.mxu0
      %5640 = vmatprep.mubr.f32.mxu0 0.0
      %5641 = vmatmul.mubr.f32.gmra.mxu0 %v5293
      %v5642 = vpop.f32.mrf.mxu0
      %v5643 = vadd.f32 0.0, %v5642
      %v5644 = vpop.f32.mrf.mxu0
      %5645 = vmatprep.mubr.f32.mxu0 0.0
      %5646 = vmatmul.mubr.f32.gmra.mxu0 %v5549
      %v5647 = vpop.f32.mrf.mxu0
      %v5648 = vadd.f32 0.0, %v5647
      %v5649 = vpop.f32.mrf.mxu0
      %5650 = vdwg.mxu0
      %v5651 = vadd.f32 %v5533, %v5618
      %v5652 = vadd.f32 %v5534, %v5623
      %v5653 = vadd.f32 %v5535, %v5628
      %v5654 = vadd.f32 %v5536, %v5633
      %v5655 = vadd.f32 %v5537, %v5638
      %v5656 = vadd.f32 %v5538, %v5643
      %v5657 = vadd.f32 %v5539, %v5648
      %s5658 = scalar_lea.vmem %s292, 2560
      %v5659 = vld [vmem:[%s5658] sm:$0xff]
      %v5660 = vld [vmem:[%s5658 + $0x8] sm:$0xff]
      %v5661 = vld [vmem:[%s5658 + $0x10] sm:$0xff]
      %v5662 = vld [vmem:[%s5658 + $0x18] sm:$0xff]
      %v5663 = vld [vmem:[%s5658 + $0x20] sm:$0xff]
      %v5664 = vld [vmem:[%s5658 + $0x28] sm:$0xff]
      %v5665 = vld [vmem:[%s5658 + $0x30] sm:$0xff]
      %v5666 = vld [vmem:[%s5658 + $0x38] sm:$0xff]
      %v5668 = vrot.slane %v5124, 1
      %v5669 = vsel %vm400, %v5165, %v5668
      %v5670 = vsel %vm416, %v5669, 0
      %5672 = vmatprep.subr.mxu0 0.0
      %5673 = vmatpush1.msra.mxu0 0.0
      %5674 = vmatprep.subr.mxu0 0.0
      %5675 = vmatpush1.msra.mxu0 0.0
      %5676 = vmatprep.subr.mxu0 0.0
      %5677 = vmatpush1.msra.mxu0 0.0
      %5678 = vmatprep.subr.mxu0 0.0
      %5679 = vmatpush1.msra.mxu0 0.0
      %5680 = vmatprep.subr.mxu0 0.0
      %5681 = vmatpush1.msra.mxu0 0.0
      %5682 = vmatprep.subr.mxu0 0.0
      %5683 = vmatpush1.msra.mxu0 0.0
      %5684 = vmatprep.subr.mxu0 0.0
      %5685 = vmatpush1.msra.mxu0 0.0
      %5686 = vmatprep.subr.mxu0 0.0
      %5687 = vmatpush1.msra.mxu0 0.0
      %5688 = vmatprep.subr.mxu0 0.0
      %5689 = vmatpush1.msra.mxu0 %v5666
      %5690 = vmatprep.subr.mxu0 0.0
      %5691 = vmatpush1.msra.mxu0 %v5665
      %5692 = vmatprep.subr.mxu0 0.0
      %5693 = vmatpush1.msra.mxu0 %v5664
      %5694 = vmatprep.subr.mxu0 0.0
      %5695 = vmatpush1.msra.mxu0 %v5663
      %5696 = vmatprep.subr.mxu0 0.0
      %5697 = vmatpush1.msra.mxu0 %v5662
      %5698 = vmatprep.subr.mxu0 0.0
      %5699 = vmatpush1.msra.mxu0 %v5661
      %5700 = vmatprep.subr.mxu0 0.0
      %5701 = vmatpush1.msra.mxu0 %v5660
      %5702 = vmatprep.subr.mxu0 0.0
      %5703 = vmatpush1.msra.mxu0 %v5659
      %5704 = vmatprep.subr.mxu0 0.0
      %5705 = vmatpush2.msra.mxu0 0.0
      %5706 = vmatprep.subr.mxu0 0.0
      %5707 = vmatpush2.msra.mxu0 0.0
      %5708 = vmatprep.subr.mxu0 0.0
      %5709 = vmatpush2.msra.mxu0 0.0
      %5710 = vmatprep.subr.mxu0 0.0
      %5711 = vmatpush2.msra.mxu0 0.0
      %5712 = vmatprep.subr.mxu0 0.0
      %5713 = vmatpush2.msra.mxu0 0.0
      %5714 = vmatprep.subr.mxu0 0.0
      %5715 = vmatpush2.msra.mxu0 0.0
      %5716 = vmatprep.subr.mxu0 0.0
      %5717 = vmatpush2.msra.mxu0 0.0
      %5718 = vmatprep.subr.mxu0 0.0
      %5719 = vmatpush2.msra.mxu0 0.0
      %5720 = vmatprep.subr.mxu0 0.0
      %5721 = vmatpush2.msra.mxu0 0.0
      %5722 = vmatprep.subr.mxu0 0.0
      %5723 = vmatpush2.msra.mxu0 0.0
      %5724 = vmatprep.subr.mxu0 0.0
      %5725 = vmatpush2.msra.mxu0 0.0
      %5726 = vmatprep.subr.mxu0 0.0
      %5727 = vmatpush2.msra.mxu0 0.0
      %5728 = vmatprep.subr.mxu0 0.0
      %5729 = vmatpush2.msra.mxu0 0.0
      %5730 = vmatprep.subr.mxu0 0.0
      %5731 = vmatpush2.msra.mxu0 0.0
      %5732 = vmatprep.subr.mxu0 0.0
      %5733 = vmatpush2.msra.mxu0 0.0
      %5734 = vmatprep.subr.mxu0 0.0
      %5735 = vmatpush2.msra.mxu0 0.0
      %5736 = vmatprep.mubr.f32.mxu0 0.0
      %5737 = vmatmul.mubr.f32.gmra.mxu0 %v5169
      %v5738 = vpop.f32.mrf.mxu0
      %v5739 = vadd.f32 0.0, %v5738
      %v5740 = vpop.f32.mrf.mxu0
      %5741 = vmatprep.mubr.f32.mxu0 0.0
      %5742 = vmatmul.mubr.f32.gmra.mxu0 %v5171
      %v5743 = vpop.f32.mrf.mxu0
      %v5744 = vadd.f32 0.0, %v5743
      %v5745 = vpop.f32.mrf.mxu0
      %5746 = vmatprep.mubr.f32.mxu0 0.0
      %5747 = vmatmul.mubr.f32.gmra.mxu0 %v5173
      %v5748 = vpop.f32.mrf.mxu0
      %v5749 = vadd.f32 0.0, %v5748
      %v5750 = vpop.f32.mrf.mxu0
      %5751 = vmatprep.mubr.f32.mxu0 0.0
      %5752 = vmatmul.mubr.f32.gmra.mxu0 %v5175
      %v5753 = vpop.f32.mrf.mxu0
      %v5754 = vadd.f32 0.0, %v5753
      %v5755 = vpop.f32.mrf.mxu0
      %5756 = vmatprep.mubr.f32.mxu0 0.0
      %5757 = vmatmul.mubr.f32.gmra.mxu0 %v5177
      %v5758 = vpop.f32.mrf.mxu0
      %v5759 = vadd.f32 0.0, %v5758
      %v5760 = vpop.f32.mrf.mxu0
      %5761 = vmatprep.mubr.f32.mxu0 0.0
      %5762 = vmatmul.mubr.f32.gmra.mxu0 %v5179
      %v5763 = vpop.f32.mrf.mxu0
      %v5764 = vadd.f32 0.0, %v5763
      %v5765 = vpop.f32.mrf.mxu0
      %5766 = vmatprep.mubr.f32.mxu0 0.0
      %5767 = vmatmul.mubr.f32.gmra.mxu0 %v5670
      %v5768 = vpop.f32.mrf.mxu0
      %v5769 = vadd.f32 0.0, %v5768
      %v5770 = vpop.f32.mrf.mxu0
      %5771 = vdwg.mxu0
      %v5772 = vadd.f32 %v5651, %v5739
      %v5773 = vadd.f32 %v5652, %v5744
      %v5774 = vadd.f32 %v5653, %v5749
      %v5775 = vadd.f32 %v5654, %v5754
      %v5776 = vadd.f32 %v5655, %v5759
      %v5777 = vadd.f32 %v5656, %v5764
      %v5778 = vadd.f32 %v5657, %v5769
      %s5779 = scalar_lea.vmem %s292, 2624
      %v5780 = vld [vmem:[%s5779] sm:$0xff]
      %v5781 = vld [vmem:[%s5779 + $0x8] sm:$0xff]
      %v5782 = vld [vmem:[%s5779 + $0x10] sm:$0xff]
      %v5783 = vld [vmem:[%s5779 + $0x18] sm:$0xff]
      %v5784 = vld [vmem:[%s5779 + $0x20] sm:$0xff]
      %v5785 = vld [vmem:[%s5779 + $0x28] sm:$0xff]
      %v5786 = vld [vmem:[%s5779 + $0x30] sm:$0xff]
      %v5787 = vld [vmem:[%s5779 + $0x38] sm:$0xff]
      %v5788 = vrot.slane %v5124, 2
      %v5789 = vsel %vm654, %v5417, %v5788
      %v5790 = vsel %vm416, %v5789, 0
      %5792 = vmatprep.subr.mxu0 0.0
      %5793 = vmatpush1.msra.mxu0 0.0
      %5794 = vmatprep.subr.mxu0 0.0
      %5795 = vmatpush1.msra.mxu0 0.0
      %5796 = vmatprep.subr.mxu0 0.0
      %5797 = vmatpush1.msra.mxu0 0.0
      %5798 = vmatprep.subr.mxu0 0.0
      %5799 = vmatpush1.msra.mxu0 0.0
      %5800 = vmatprep.subr.mxu0 0.0
      %5801 = vmatpush1.msra.mxu0 0.0
      %5802 = vmatprep.subr.mxu0 0.0
      %5803 = vmatpush1.msra.mxu0 0.0
      %5804 = vmatprep.subr.mxu0 0.0
      %5805 = vmatpush1.msra.mxu0 0.0
      %5806 = vmatprep.subr.mxu0 0.0
      %5807 = vmatpush1.msra.mxu0 0.0
      %5808 = vmatprep.subr.mxu0 0.0
      %5809 = vmatpush1.msra.mxu0 %v5787
      %5810 = vmatprep.subr.mxu0 0.0
      %5811 = vmatpush1.msra.mxu0 %v5786
      %5812 = vmatprep.subr.mxu0 0.0
      %5813 = vmatpush1.msra.mxu0 %v5785
      %5814 = vmatprep.subr.mxu0 0.0
      %5815 = vmatpush1.msra.mxu0 %v5784
      %5816 = vmatprep.subr.mxu0 0.0
      %5817 = vmatpush1.msra.mxu0 %v5783
      %5818 = vmatprep.subr.mxu0 0.0
      %5819 = vmatpush1.msra.mxu0 %v5782
      %5820 = vmatprep.subr.mxu0 0.0
      %5821 = vmatpush1.msra.mxu0 %v5781
      %5822 = vmatprep.subr.mxu0 0.0
      %5823 = vmatpush1.msra.mxu0 %v5780
      %5824 = vmatprep.subr.mxu0 0.0
      %5825 = vmatpush2.msra.mxu0 0.0
      %5826 = vmatprep.subr.mxu0 0.0
      %5827 = vmatpush2.msra.mxu0 0.0
      %5828 = vmatprep.subr.mxu0 0.0
      %5829 = vmatpush2.msra.mxu0 0.0
      %5830 = vmatprep.subr.mxu0 0.0
      %5831 = vmatpush2.msra.mxu0 0.0
      %5832 = vmatprep.subr.mxu0 0.0
      %5833 = vmatpush2.msra.mxu0 0.0
      %5834 = vmatprep.subr.mxu0 0.0
      %5835 = vmatpush2.msra.mxu0 0.0
      %5836 = vmatprep.subr.mxu0 0.0
      %5837 = vmatpush2.msra.mxu0 0.0
      %5838 = vmatprep.subr.mxu0 0.0
      %5839 = vmatpush2.msra.mxu0 0.0
      %5840 = vmatprep.subr.mxu0 0.0
      %5841 = vmatpush2.msra.mxu0 0.0
      %5842 = vmatprep.subr.mxu0 0.0
      %5843 = vmatpush2.msra.mxu0 0.0
      %5844 = vmatprep.subr.mxu0 0.0
      %5845 = vmatpush2.msra.mxu0 0.0
      %5846 = vmatprep.subr.mxu0 0.0
      %5847 = vmatpush2.msra.mxu0 0.0
      %5848 = vmatprep.subr.mxu0 0.0
      %5849 = vmatpush2.msra.mxu0 0.0
      %5850 = vmatprep.subr.mxu0 0.0
      %5851 = vmatpush2.msra.mxu0 0.0
      %5852 = vmatprep.subr.mxu0 0.0
      %5853 = vmatpush2.msra.mxu0 0.0
      %5854 = vmatprep.subr.mxu0 0.0
      %5855 = vmatpush2.msra.mxu0 0.0
      %5856 = vmatprep.mubr.f32.mxu0 0.0
      %5857 = vmatmul.mubr.f32.gmra.mxu0 %v5421
      %v5858 = vpop.f32.mrf.mxu0
      %v5859 = vadd.f32 0.0, %v5858
      %v5860 = vpop.f32.mrf.mxu0
      %5861 = vmatprep.mubr.f32.mxu0 0.0
      %5862 = vmatmul.mubr.f32.gmra.mxu0 %v5423
      %v5863 = vpop.f32.mrf.mxu0
      %v5864 = vadd.f32 0.0, %v5863
      %v5865 = vpop.f32.mrf.mxu0
      %5866 = vmatprep.mubr.f32.mxu0 0.0
      %5867 = vmatmul.mubr.f32.gmra.mxu0 %v5425
      %v5868 = vpop.f32.mrf.mxu0
      %v5869 = vadd.f32 0.0, %v5868
      %v5870 = vpop.f32.mrf.mxu0
      %5871 = vmatprep.mubr.f32.mxu0 0.0
      %5872 = vmatmul.mubr.f32.gmra.mxu0 %v5427
      %v5873 = vpop.f32.mrf.mxu0
      %v5874 = vadd.f32 0.0, %v5873
      %v5875 = vpop.f32.mrf.mxu0
      %5876 = vmatprep.mubr.f32.mxu0 0.0
      %5877 = vmatmul.mubr.f32.gmra.mxu0 %v5429
      %v5878 = vpop.f32.mrf.mxu0
      %v5879 = vadd.f32 0.0, %v5878
      %v5880 = vpop.f32.mrf.mxu0
      %5881 = vmatprep.mubr.f32.mxu0 0.0
      %5882 = vmatmul.mubr.f32.gmra.mxu0 %v5431
      %v5883 = vpop.f32.mrf.mxu0
      %v5884 = vadd.f32 0.0, %v5883
      %v5885 = vpop.f32.mrf.mxu0
      %5886 = vmatprep.mubr.f32.mxu0 0.0
      %5887 = vmatmul.mubr.f32.gmra.mxu0 %v5790
      %v5888 = vpop.f32.mrf.mxu0
      %v5889 = vadd.f32 0.0, %v5888
      %v5890 = vpop.f32.mrf.mxu0
      %5891 = vdwg.mxu0
      %v5892 = vadd.f32 %v5772, %v5859
      %v5893 = vadd.f32 %v5773, %v5864
      %v5894 = vadd.f32 %v5774, %v5869
      %v5895 = vadd.f32 %v5775, %v5874
      %v5896 = vadd.f32 %v5776, %v5879
      %v5897 = vadd.f32 %v5777, %v5884
      %v5898 = vadd.f32 %v5778, %v5889
      %s5899 = scalar_lea.vmem %s292, 2688
      %v5900 = vld [vmem:[%s5899] sm:$0xff]
      %v5901 = vld [vmem:[%s5899 + $0x8] sm:$0xff]
      %v5902 = vld [vmem:[%s5899 + $0x10] sm:$0xff]
      %v5903 = vld [vmem:[%s5899 + $0x18] sm:$0xff]
      %v5904 = vld [vmem:[%s5899 + $0x20] sm:$0xff]
      %v5905 = vld [vmem:[%s5899 + $0x28] sm:$0xff]
      %v5906 = vld [vmem:[%s5899 + $0x30] sm:$0xff]
      %v5907 = vld [vmem:[%s5899 + $0x38] sm:$0xff]
      %v5908 = vsel %vm416, %v5124, 0
      %5910 = vmatprep.subr.mxu0 0.0
      %5911 = vmatpush1.msra.mxu0 0.0
      %5912 = vmatprep.subr.mxu0 0.0
      %5913 = vmatpush1.msra.mxu0 0.0
      %5914 = vmatprep.subr.mxu0 0.0
      %5915 = vmatpush1.msra.mxu0 0.0
      %5916 = vmatprep.subr.mxu0 0.0
      %5917 = vmatpush1.msra.mxu0 0.0
      %5918 = vmatprep.subr.mxu0 0.0
      %5919 = vmatpush1.msra.mxu0 0.0
      %5920 = vmatprep.subr.mxu0 0.0
      %5921 = vmatpush1.msra.mxu0 0.0
      %5922 = vmatprep.subr.mxu0 0.0
      %5923 = vmatpush1.msra.mxu0 0.0
      %5924 = vmatprep.subr.mxu0 0.0
      %5925 = vmatpush1.msra.mxu0 0.0
      %5926 = vmatprep.subr.mxu0 0.0
      %5927 = vmatpush1.msra.mxu0 %v5907
      %5928 = vmatprep.subr.mxu0 0.0
      %5929 = vmatpush1.msra.mxu0 %v5906
      %5930 = vmatprep.subr.mxu0 0.0
      %5931 = vmatpush1.msra.mxu0 %v5905
      %5932 = vmatprep.subr.mxu0 0.0
      %5933 = vmatpush1.msra.mxu0 %v5904
      %5934 = vmatprep.subr.mxu0 0.0
      %5935 = vmatpush1.msra.mxu0 %v5903
      %5936 = vmatprep.subr.mxu0 0.0
      %5937 = vmatpush1.msra.mxu0 %v5902
      %5938 = vmatprep.subr.mxu0 0.0
      %5939 = vmatpush1.msra.mxu0 %v5901
      %5940 = vmatprep.subr.mxu0 0.0
      %5941 = vmatpush1.msra.mxu0 %v5900
      %5942 = vmatprep.subr.mxu0 0.0
      %5943 = vmatpush2.msra.mxu0 0.0
      %5944 = vmatprep.subr.mxu0 0.0
      %5945 = vmatpush2.msra.mxu0 0.0
      %5946 = vmatprep.subr.mxu0 0.0
      %5947 = vmatpush2.msra.mxu0 0.0
      %5948 = vmatprep.subr.mxu0 0.0
      %5949 = vmatpush2.msra.mxu0 0.0
      %5950 = vmatprep.subr.mxu0 0.0
      %5951 = vmatpush2.msra.mxu0 0.0
      %5952 = vmatprep.subr.mxu0 0.0
      %5953 = vmatpush2.msra.mxu0 0.0
      %5954 = vmatprep.subr.mxu0 0.0
      %5955 = vmatpush2.msra.mxu0 0.0
      %5956 = vmatprep.subr.mxu0 0.0
      %5957 = vmatpush2.msra.mxu0 0.0
      %5958 = vmatprep.subr.mxu0 0.0
      %5959 = vmatpush2.msra.mxu0 0.0
      %5960 = vmatprep.subr.mxu0 0.0
      %5961 = vmatpush2.msra.mxu0 0.0
      %5962 = vmatprep.subr.mxu0 0.0
      %5963 = vmatpush2.msra.mxu0 0.0
      %5964 = vmatprep.subr.mxu0 0.0
      %5965 = vmatpush2.msra.mxu0 0.0
      %5966 = vmatprep.subr.mxu0 0.0
      %5967 = vmatpush2.msra.mxu0 0.0
      %5968 = vmatprep.subr.mxu0 0.0
      %5969 = vmatpush2.msra.mxu0 0.0
      %5970 = vmatprep.subr.mxu0 0.0
      %5971 = vmatpush2.msra.mxu0 0.0
      %5972 = vmatprep.subr.mxu0 0.0
      %5973 = vmatpush2.msra.mxu0 0.0
      %5974 = vmatprep.mubr.f32.mxu0 0.0
      %5975 = vmatmul.mubr.f32.gmra.mxu0 %v5285
      %v5976 = vpop.f32.mrf.mxu0
      %v5977 = vadd.f32 0.0, %v5976
      %v5978 = vpop.f32.mrf.mxu0
      %5979 = vmatprep.mubr.f32.mxu0 0.0
      %5980 = vmatmul.mubr.f32.gmra.mxu0 %v5287
      %v5981 = vpop.f32.mrf.mxu0
      %v5982 = vadd.f32 0.0, %v5981
      %v5983 = vpop.f32.mrf.mxu0
      %5984 = vmatprep.mubr.f32.mxu0 0.0
      %5985 = vmatmul.mubr.f32.gmra.mxu0 %v5289
      %v5986 = vpop.f32.mrf.mxu0
      %v5987 = vadd.f32 0.0, %v5986
      %v5988 = vpop.f32.mrf.mxu0
      %5989 = vmatprep.mubr.f32.mxu0 0.0
      %5990 = vmatmul.mubr.f32.gmra.mxu0 %v5291
      %v5991 = vpop.f32.mrf.mxu0
      %v5992 = vadd.f32 0.0, %v5991
      %v5993 = vpop.f32.mrf.mxu0
      %5994 = vmatprep.mubr.f32.mxu0 0.0
      %5995 = vmatmul.mubr.f32.gmra.mxu0 %v5293
      %v5996 = vpop.f32.mrf.mxu0
      %v5997 = vadd.f32 0.0, %v5996
      %v5998 = vpop.f32.mrf.mxu0
      %5999 = vmatprep.mubr.f32.mxu0 0.0
      %6000 = vmatmul.mubr.f32.gmra.mxu0 %v5549
      %v6001 = vpop.f32.mrf.mxu0
      %v6002 = vadd.f32 0.0, %v6001
      %v6003 = vpop.f32.mrf.mxu0
      %6004 = vmatprep.mubr.f32.mxu0 0.0
      %6005 = vmatmul.mubr.f32.gmra.mxu0 %v5908
      %v6006 = vpop.f32.mrf.mxu0
      %v6007 = vadd.f32 0.0, %v6006
      %v6008 = vpop.f32.mrf.mxu0
      %6009 = vdwg.mxu0
      %v6010 = vadd.f32 %v5892, %v5977
      %v6011 = vadd.f32 %v5893, %v5982
      %v6012 = vadd.f32 %v5894, %v5987
      %v6013 = vadd.f32 %v5895, %v5992
      %v6014 = vadd.f32 %v5896, %v5997
      %v6015 = vadd.f32 %v5897, %v6002
      %v6016 = vadd.f32 %v5898, %v6007
      %s6017 = scalar_lea.vmem %s292, 2752
      %v6018 = vld [vmem:[%s6017] sm:$0xff]
      %v6019 = vld [vmem:[%s6017 + $0x8] sm:$0xff]
      %v6020 = vld [vmem:[%s6017 + $0x10] sm:$0xff]
      %v6021 = vld [vmem:[%s6017 + $0x18] sm:$0xff]
      %v6022 = vld [vmem:[%s6017 + $0x20] sm:$0xff]
      %v6023 = vld [vmem:[%s6017 + $0x28] sm:$0xff]
      %v6024 = vld [vmem:[%s6017 + $0x30] sm:$0xff]
      %v6025 = vld [vmem:[%s6017 + $0x38] sm:$0xff]
      %v6027 = vrot.slane %v5125, 1
      %v6028 = vsel %vm400, %v5668, %v6027
      %v6029 = vsel %vm416, %v6028, 0
      %6031 = vmatprep.subr.mxu0 0.0
      %6032 = vmatpush1.msra.mxu0 0.0
      %6033 = vmatprep.subr.mxu0 0.0
      %6034 = vmatpush1.msra.mxu0 0.0
      %6035 = vmatprep.subr.mxu0 0.0
      %6036 = vmatpush1.msra.mxu0 0.0
      %6037 = vmatprep.subr.mxu0 0.0
      %6038 = vmatpush1.msra.mxu0 0.0
      %6039 = vmatprep.subr.mxu0 0.0
      %6040 = vmatpush1.msra.mxu0 0.0
      %6041 = vmatprep.subr.mxu0 0.0
      %6042 = vmatpush1.msra.mxu0 0.0
      %6043 = vmatprep.subr.mxu0 0.0
      %6044 = vmatpush1.msra.mxu0 0.0
      %6045 = vmatprep.subr.mxu0 0.0
      %6046 = vmatpush1.msra.mxu0 0.0
      %6047 = vmatprep.subr.mxu0 0.0
      %6048 = vmatpush1.msra.mxu0 %v6025
      %6049 = vmatprep.subr.mxu0 0.0
      %6050 = vmatpush1.msra.mxu0 %v6024
      %6051 = vmatprep.subr.mxu0 0.0
      %6052 = vmatpush1.msra.mxu0 %v6023
      %6053 = vmatprep.subr.mxu0 0.0
      %6054 = vmatpush1.msra.mxu0 %v6022
      %6055 = vmatprep.subr.mxu0 0.0
      %6056 = vmatpush1.msra.mxu0 %v6021
      %6057 = vmatprep.subr.mxu0 0.0
      %6058 = vmatpush1.msra.mxu0 %v6020
      %6059 = vmatprep.subr.mxu0 0.0
      %6060 = vmatpush1.msra.mxu0 %v6019
      %6061 = vmatprep.subr.mxu0 0.0
      %6062 = vmatpush1.msra.mxu0 %v6018
      %6063 = vmatprep.subr.mxu0 0.0
      %6064 = vmatpush2.msra.mxu0 0.0
      %6065 = vmatprep.subr.mxu0 0.0
      %6066 = vmatpush2.msra.mxu0 0.0
      %6067 = vmatprep.subr.mxu0 0.0
      %6068 = vmatpush2.msra.mxu0 0.0
      %6069 = vmatprep.subr.mxu0 0.0
      %6070 = vmatpush2.msra.mxu0 0.0
      %6071 = vmatprep.subr.mxu0 0.0
      %6072 = vmatpush2.msra.mxu0 0.0
      %6073 = vmatprep.subr.mxu0 0.0
      %6074 = vmatpush2.msra.mxu0 0.0
      %6075 = vmatprep.subr.mxu0 0.0
      %6076 = vmatpush2.msra.mxu0 0.0
      %6077 = vmatprep.subr.mxu0 0.0
      %6078 = vmatpush2.msra.mxu0 0.0
      %6079 = vmatprep.subr.mxu0 0.0
      %6080 = vmatpush2.msra.mxu0 0.0
      %6081 = vmatprep.subr.mxu0 0.0
      %6082 = vmatpush2.msra.mxu0 0.0
      %6083 = vmatprep.subr.mxu0 0.0
      %6084 = vmatpush2.msra.mxu0 0.0
      %6085 = vmatprep.subr.mxu0 0.0
      %6086 = vmatpush2.msra.mxu0 0.0
      %6087 = vmatprep.subr.mxu0 0.0
      %6088 = vmatpush2.msra.mxu0 0.0
      %6089 = vmatprep.subr.mxu0 0.0
      %6090 = vmatpush2.msra.mxu0 0.0
      %6091 = vmatprep.subr.mxu0 0.0
      %6092 = vmatpush2.msra.mxu0 0.0
      %6093 = vmatprep.subr.mxu0 0.0
      %6094 = vmatpush2.msra.mxu0 0.0
      %6095 = vmatprep.mubr.f32.mxu0 0.0
      %6096 = vmatmul.mubr.f32.gmra.mxu0 %v5171
      %v6097 = vpop.f32.mrf.mxu0
      %v6098 = vadd.f32 0.0, %v6097
      %v6099 = vpop.f32.mrf.mxu0
      %6100 = vmatprep.mubr.f32.mxu0 0.0
      %6101 = vmatmul.mubr.f32.gmra.mxu0 %v5173
      %v6102 = vpop.f32.mrf.mxu0
      %v6103 = vadd.f32 0.0, %v6102
      %v6104 = vpop.f32.mrf.mxu0
      %6105 = vmatprep.mubr.f32.mxu0 0.0
      %6106 = vmatmul.mubr.f32.gmra.mxu0 %v5175
      %v6107 = vpop.f32.mrf.mxu0
      %v6108 = vadd.f32 0.0, %v6107
      %v6109 = vpop.f32.mrf.mxu0
      %6110 = vmatprep.mubr.f32.mxu0 0.0
      %6111 = vmatmul.mubr.f32.gmra.mxu0 %v5177
      %v6112 = vpop.f32.mrf.mxu0
      %v6113 = vadd.f32 0.0, %v6112
      %v6114 = vpop.f32.mrf.mxu0
      %6115 = vmatprep.mubr.f32.mxu0 0.0
      %6116 = vmatmul.mubr.f32.gmra.mxu0 %v5179
      %v6117 = vpop.f32.mrf.mxu0
      %v6118 = vadd.f32 0.0, %v6117
      %v6119 = vpop.f32.mrf.mxu0
      %6120 = vmatprep.mubr.f32.mxu0 0.0
      %6121 = vmatmul.mubr.f32.gmra.mxu0 %v5670
      %v6122 = vpop.f32.mrf.mxu0
      %v6123 = vadd.f32 0.0, %v6122
      %v6124 = vpop.f32.mrf.mxu0
      %6125 = vmatprep.mubr.f32.mxu0 0.0
      %6126 = vmatmul.mubr.f32.gmra.mxu0 %v6029
      %v6127 = vpop.f32.mrf.mxu0
      %v6128 = vadd.f32 0.0, %v6127
      %v6129 = vpop.f32.mrf.mxu0
      %6130 = vdwg.mxu0
      %v6131 = vadd.f32 %v6010, %v6098
      %v6132 = vadd.f32 %v6011, %v6103
      %v6133 = vadd.f32 %v6012, %v6108
      %v6134 = vadd.f32 %v6013, %v6113
      %v6135 = vadd.f32 %v6014, %v6118
      %v6136 = vadd.f32 %v6015, %v6123
      %v6137 = vadd.f32 %v6016, %v6128
      %s6138 = scalar_lea.vmem %s292, 2816
      %v6139 = vld [vmem:[%s6138] sm:$0xff]
      %v6140 = vld [vmem:[%s6138 + $0x8] sm:$0xff]
      %v6141 = vld [vmem:[%s6138 + $0x10] sm:$0xff]
      %v6142 = vld [vmem:[%s6138 + $0x18] sm:$0xff]
      %v6143 = vld [vmem:[%s6138 + $0x20] sm:$0xff]
      %v6144 = vld [vmem:[%s6138 + $0x28] sm:$0xff]
      %v6145 = vld [vmem:[%s6138 + $0x30] sm:$0xff]
      %v6146 = vld [vmem:[%s6138 + $0x38] sm:$0xff]
      %v6147 = vrot.slane %v5125, 2
      %v6148 = vsel %vm654, %v5788, %v6147
      %v6149 = vsel %vm416, %v6148, 0
      %6151 = vmatprep.subr.mxu0 0.0
      %6152 = vmatpush1.msra.mxu0 0.0
      %6153 = vmatprep.subr.mxu0 0.0
      %6154 = vmatpush1.msra.mxu0 0.0
      %6155 = vmatprep.subr.mxu0 0.0
      %6156 = vmatpush1.msra.mxu0 0.0
      %6157 = vmatprep.subr.mxu0 0.0
      %6158 = vmatpush1.msra.mxu0 0.0
      %6159 = vmatprep.subr.mxu0 0.0
      %6160 = vmatpush1.msra.mxu0 0.0
      %6161 = vmatprep.subr.mxu0 0.0
      %6162 = vmatpush1.msra.mxu0 0.0
      %6163 = vmatprep.subr.mxu0 0.0
      %6164 = vmatpush1.msra.mxu0 0.0
      %6165 = vmatprep.subr.mxu0 0.0
      %6166 = vmatpush1.msra.mxu0 0.0
      %6167 = vmatprep.subr.mxu0 0.0
      %6168 = vmatpush1.msra.mxu0 %v6146
      %6169 = vmatprep.subr.mxu0 0.0
      %6170 = vmatpush1.msra.mxu0 %v6145
      %6171 = vmatprep.subr.mxu0 0.0
      %6172 = vmatpush1.msra.mxu0 %v6144
      %6173 = vmatprep.subr.mxu0 0.0
      %6174 = vmatpush1.msra.mxu0 %v6143
      %6175 = vmatprep.subr.mxu0 0.0
      %6176 = vmatpush1.msra.mxu0 %v6142
      %6177 = vmatprep.subr.mxu0 0.0
      %6178 = vmatpush1.msra.mxu0 %v6141
      %6179 = vmatprep.subr.mxu0 0.0
      %6180 = vmatpush1.msra.mxu0 %v6140
      %6181 = vmatprep.subr.mxu0 0.0
      %6182 = vmatpush1.msra.mxu0 %v6139
      %6183 = vmatprep.subr.mxu0 0.0
      %6184 = vmatpush2.msra.mxu0 0.0
      %6185 = vmatprep.subr.mxu0 0.0
      %6186 = vmatpush2.msra.mxu0 0.0
      %6187 = vmatprep.subr.mxu0 0.0
      %6188 = vmatpush2.msra.mxu0 0.0
      %6189 = vmatprep.subr.mxu0 0.0
      %6190 = vmatpush2.msra.mxu0 0.0
      %6191 = vmatprep.subr.mxu0 0.0
      %6192 = vmatpush2.msra.mxu0 0.0
      %6193 = vmatprep.subr.mxu0 0.0
      %6194 = vmatpush2.msra.mxu0 0.0
      %6195 = vmatprep.subr.mxu0 0.0
      %6196 = vmatpush2.msra.mxu0 0.0
      %6197 = vmatprep.subr.mxu0 0.0
      %6198 = vmatpush2.msra.mxu0 0.0
      %6199 = vmatprep.subr.mxu0 0.0
      %6200 = vmatpush2.msra.mxu0 0.0
      %6201 = vmatprep.subr.mxu0 0.0
      %6202 = vmatpush2.msra.mxu0 0.0
      %6203 = vmatprep.subr.mxu0 0.0
      %6204 = vmatpush2.msra.mxu0 0.0
      %6205 = vmatprep.subr.mxu0 0.0
      %6206 = vmatpush2.msra.mxu0 0.0
      %6207 = vmatprep.subr.mxu0 0.0
      %6208 = vmatpush2.msra.mxu0 0.0
      %6209 = vmatprep.subr.mxu0 0.0
      %6210 = vmatpush2.msra.mxu0 0.0
      %6211 = vmatprep.subr.mxu0 0.0
      %6212 = vmatpush2.msra.mxu0 0.0
      %6213 = vmatprep.subr.mxu0 0.0
      %6214 = vmatpush2.msra.mxu0 0.0
      %6215 = vmatprep.mubr.f32.mxu0 0.0
      %6216 = vmatmul.mubr.f32.gmra.mxu0 %v5423
      %v6217 = vpop.f32.mrf.mxu0
      %v6218 = vadd.f32 0.0, %v6217
      %v6219 = vpop.f32.mrf.mxu0
      %6220 = vmatprep.mubr.f32.mxu0 0.0
      %6221 = vmatmul.mubr.f32.gmra.mxu0 %v5425
      %v6222 = vpop.f32.mrf.mxu0
      %v6223 = vadd.f32 0.0, %v6222
      %v6224 = vpop.f32.mrf.mxu0
      %6225 = vmatprep.mubr.f32.mxu0 0.0
      %6226 = vmatmul.mubr.f32.gmra.mxu0 %v5427
      %v6227 = vpop.f32.mrf.mxu0
      %v6228 = vadd.f32 0.0, %v6227
      %v6229 = vpop.f32.mrf.mxu0
      %6230 = vmatprep.mubr.f32.mxu0 0.0
      %6231 = vmatmul.mubr.f32.gmra.mxu0 %v5429
      %v6232 = vpop.f32.mrf.mxu0
      %v6233 = vadd.f32 0.0, %v6232
      %v6234 = vpop.f32.mrf.mxu0
      %6235 = vmatprep.mubr.f32.mxu0 0.0
      %6236 = vmatmul.mubr.f32.gmra.mxu0 %v5431
      %v6237 = vpop.f32.mrf.mxu0
      %v6238 = vadd.f32 0.0, %v6237
      %v6239 = vpop.f32.mrf.mxu0
      %6240 = vmatprep.mubr.f32.mxu0 0.0
      %6241 = vmatmul.mubr.f32.gmra.mxu0 %v5790
      %v6242 = vpop.f32.mrf.mxu0
      %v6243 = vadd.f32 0.0, %v6242
      %v6244 = vpop.f32.mrf.mxu0
      %6245 = vmatprep.mubr.f32.mxu0 0.0
      %6246 = vmatmul.mubr.f32.gmra.mxu0 %v6149
      %v6247 = vpop.f32.mrf.mxu0
      %v6248 = vadd.f32 0.0, %v6247
      %v6249 = vpop.f32.mrf.mxu0
      %6250 = vdwg.mxu0
      %v6251 = vadd.f32 %v6131, %v6218
      %v6252 = vadd.f32 %v6132, %v6223
      %v6253 = vadd.f32 %v6133, %v6228
      %v6254 = vadd.f32 %v6134, %v6233
      %v6255 = vadd.f32 %v6135, %v6238
      %v6256 = vadd.f32 %v6136, %v6243
      %v6257 = vadd.f32 %v6137, %v6248
      %s6258 = scalar_lea.vmem %s292, 2880
      %v6259 = vld [vmem:[%s6258] sm:$0xff]
      %v6260 = vld [vmem:[%s6258 + $0x8] sm:$0xff]
      %v6261 = vld [vmem:[%s6258 + $0x10] sm:$0xff]
      %v6262 = vld [vmem:[%s6258 + $0x18] sm:$0xff]
      %v6263 = vld [vmem:[%s6258 + $0x20] sm:$0xff]
      %v6264 = vld [vmem:[%s6258 + $0x28] sm:$0xff]
      %v6265 = vld [vmem:[%s6258 + $0x30] sm:$0xff]
      %v6266 = vld [vmem:[%s6258 + $0x38] sm:$0xff]
      %s6267 = scalar_lea.vmem %s292, 2944
      %v6268 = vld [vmem:[%s6267] sm:$0xff]
      %v6269 = vld [vmem:[%s6267 + $0x8] sm:$0xff]
      %v6270 = vld [vmem:[%s6267 + $0x10] sm:$0xff]
      %v6271 = vld [vmem:[%s6267 + $0x18] sm:$0xff]
      %v6272 = vld [vmem:[%s6267 + $0x20] sm:$0xff]
      %v6273 = vld [vmem:[%s6267 + $0x28] sm:$0xff]
      %v6274 = vld [vmem:[%s6267 + $0x30] sm:$0xff]
      %v6275 = vld [vmem:[%s6267 + $0x38] sm:$0xff]
      %6276 = vrot.lane.b32.xlu0 %v5154, 64
      %v6277 = vpop.permute.xlu0 %6276
      %6278 = vrot.lane.b32.xlu0 %v5156, 64
      %v6279 = vpop.permute.xlu0 %6278
      %6280 = vrot.lane.b32.xlu0 %v5158, 64
      %v6281 = vpop.permute.xlu0 %6280
      %6282 = vrot.lane.b32.xlu0 %v5160, 64
      %v6283 = vpop.permute.xlu0 %6282
      %6284 = vrot.lane.b32.xlu0 %v5162, 64
      %v6285 = vpop.permute.xlu0 %6284
      %6286 = vrot.lane.b32.xlu0 %v5164, 64
      %v6287 = vpop.permute.xlu0 %6286
      %6288 = vrot.lane.b32.xlu0 %v5166, 64
      %v6289 = vpop.permute.xlu0 %6288
      %v6290 = vsel %vm416, %v6277, 0
      %v6292 = vsel %vm416, %v6279, 0
      %v6294 = vsel %vm416, %v6281, 0
      %v6296 = vsel %vm416, %v6283, 0
      %v6298 = vsel %vm416, %v6285, 0
      %v6300 = vsel %vm416, %v6287, 0
      %v6302 = vsel %vm416, %v6289, 0
      %6304 = vmatprep.subr.mxu0 0.0
      %6305 = vmatpush1.msra.mxu0 0.0
      %6306 = vmatprep.subr.mxu0 0.0
      %6307 = vmatpush1.msra.mxu0 0.0
      %6308 = vmatprep.subr.mxu0 0.0
      %6309 = vmatpush1.msra.mxu0 0.0
      %6310 = vmatprep.subr.mxu0 0.0
      %6311 = vmatpush1.msra.mxu0 0.0
      %6312 = vmatprep.subr.mxu0 0.0
      %6313 = vmatpush1.msra.mxu0 0.0
      %6314 = vmatprep.subr.mxu0 0.0
      %6315 = vmatpush1.msra.mxu0 0.0
      %6316 = vmatprep.subr.mxu0 0.0
      %6317 = vmatpush1.msra.mxu0 0.0
      %6318 = vmatprep.subr.mxu0 0.0
      %6319 = vmatpush1.msra.mxu0 0.0
      %6320 = vmatprep.subr.mxu0 0.0
      %6321 = vmatpush1.msra.mxu0 %v6275
      %6322 = vmatprep.subr.mxu0 0.0
      %6323 = vmatpush1.msra.mxu0 %v6274
      %6324 = vmatprep.subr.mxu0 0.0
      %6325 = vmatpush1.msra.mxu0 %v6273
      %6326 = vmatprep.subr.mxu0 0.0
      %6327 = vmatpush1.msra.mxu0 %v6272
      %6328 = vmatprep.subr.mxu0 0.0
      %6329 = vmatpush1.msra.mxu0 %v6271
      %6330 = vmatprep.subr.mxu0 0.0
      %6331 = vmatpush1.msra.mxu0 %v6270
      %6332 = vmatprep.subr.mxu0 0.0
      %6333 = vmatpush1.msra.mxu0 %v6269
      %6334 = vmatprep.subr.mxu0 0.0
      %6335 = vmatpush1.msra.mxu0 %v6268
      %6336 = vmatprep.subr.mxu0 0.0
      %6337 = vmatpush2.msra.mxu0 0.0
      %6338 = vmatprep.subr.mxu0 0.0
      %6339 = vmatpush2.msra.mxu0 0.0
      %6340 = vmatprep.subr.mxu0 0.0
      %6341 = vmatpush2.msra.mxu0 0.0
      %6342 = vmatprep.subr.mxu0 0.0
      %6343 = vmatpush2.msra.mxu0 0.0
      %6344 = vmatprep.subr.mxu0 0.0
      %6345 = vmatpush2.msra.mxu0 0.0
      %6346 = vmatprep.subr.mxu0 0.0
      %6347 = vmatpush2.msra.mxu0 0.0
      %6348 = vmatprep.subr.mxu0 0.0
      %6349 = vmatpush2.msra.mxu0 0.0
      %6350 = vmatprep.subr.mxu0 0.0
      %6351 = vmatpush2.msra.mxu0 0.0
      %6352 = vmatprep.subr.mxu0 0.0
      %6353 = vmatpush2.msra.mxu0 0.0
      %6354 = vmatprep.subr.mxu0 0.0
      %6355 = vmatpush2.msra.mxu0 0.0
      %6356 = vmatprep.subr.mxu0 0.0
      %6357 = vmatpush2.msra.mxu0 0.0
      %6358 = vmatprep.subr.mxu0 0.0
      %6359 = vmatpush2.msra.mxu0 0.0
      %6360 = vmatprep.subr.mxu0 0.0
      %6361 = vmatpush2.msra.mxu0 0.0
      %6362 = vmatprep.subr.mxu0 0.0
      %6363 = vmatpush2.msra.mxu0 0.0
      %6364 = vmatprep.subr.mxu0 0.0
      %6365 = vmatpush2.msra.mxu0 0.0
      %6366 = vmatprep.subr.mxu0 0.0
      %6367 = vmatpush2.msra.mxu0 0.0
      %6368 = vmatprep.mubr.f32.mxu0 0.0
      %6369 = vmatmul.mubr.f32.gmra.mxu0 %v6290
      %v6370 = vpop.f32.mrf.mxu0
      %v6371 = vadd.f32 0.0, %v6370
      %v6372 = vpop.f32.mrf.mxu0
      %6373 = vmatprep.mubr.f32.mxu0 0.0
      %6374 = vmatmul.mubr.f32.gmra.mxu0 %v6292
      %v6375 = vpop.f32.mrf.mxu0
      %v6376 = vadd.f32 0.0, %v6375
      %v6377 = vpop.f32.mrf.mxu0
      %6378 = vmatprep.mubr.f32.mxu0 0.0
      %6379 = vmatmul.mubr.f32.gmra.mxu0 %v6294
      %v6380 = vpop.f32.mrf.mxu0
      %v6381 = vadd.f32 0.0, %v6380
      %v6382 = vpop.f32.mrf.mxu0
      %6383 = vmatprep.mubr.f32.mxu0 0.0
      %6384 = vmatmul.mubr.f32.gmra.mxu0 %v6296
      %v6385 = vpop.f32.mrf.mxu0
      %v6386 = vadd.f32 0.0, %v6385
      %v6387 = vpop.f32.mrf.mxu0
      %6388 = vmatprep.mubr.f32.mxu0 0.0
      %6389 = vmatmul.mubr.f32.gmra.mxu0 %v6298
      %v6390 = vpop.f32.mrf.mxu0
      %v6391 = vadd.f32 0.0, %v6390
      %v6392 = vpop.f32.mrf.mxu0
      %6393 = vmatprep.mubr.f32.mxu0 0.0
      %6394 = vmatmul.mubr.f32.gmra.mxu0 %v6300
      %v6395 = vpop.f32.mrf.mxu0
      %v6396 = vadd.f32 0.0, %v6395
      %v6397 = vpop.f32.mrf.mxu0
      %6398 = vmatprep.mubr.f32.mxu0 0.0
      %6399 = vmatmul.mubr.f32.gmra.mxu0 %v6302
      %v6400 = vpop.f32.mrf.mxu0
      %v6401 = vadd.f32 0.0, %v6400
      %v6402 = vpop.f32.mrf.mxu0
      %6403 = vdwg.mxu0
      %6404 = vrot.lane.b32.xlu0 %v5116, 64
      %v6405 = vpop.permute.xlu0 %6404
      %6406 = vrot.lane.b32.xlu0 %v5117, 64
      %v6407 = vpop.permute.xlu0 %6406
      %6408 = vrot.lane.b32.xlu0 %v5118, 64
      %v6409 = vpop.permute.xlu0 %6408
      %6410 = vrot.lane.b32.xlu0 %v5119, 64
      %v6411 = vpop.permute.xlu0 %6410
      %6412 = vrot.lane.b32.xlu0 %v5120, 64
      %v6413 = vpop.permute.xlu0 %6412
      %6414 = vrot.lane.b32.xlu0 %v5121, 64
      %v6415 = vpop.permute.xlu0 %6414
      %6416 = vrot.lane.b32.xlu0 %v5122, 64
      %v6417 = vpop.permute.xlu0 %6416
      %v6418 = vsel %vm416, %v6405, 0
      %v6420 = vsel %vm416, %v6407, 0
      %v6422 = vsel %vm416, %v6409, 0
      %v6424 = vsel %vm416, %v6411, 0
      %v6426 = vsel %vm416, %v6413, 0
      %v6428 = vsel %vm416, %v6415, 0
      %v6430 = vsel %vm416, %v6417, 0
      %6432 = vmatprep.subr.mxu0 0.0
      %6433 = vmatpush1.msra.mxu0 0.0
      %6434 = vmatprep.subr.mxu0 0.0
      %6435 = vmatpush1.msra.mxu0 0.0
      %6436 = vmatprep.subr.mxu0 0.0
      %6437 = vmatpush1.msra.mxu0 0.0
      %6438 = vmatprep.subr.mxu0 0.0
      %6439 = vmatpush1.msra.mxu0 0.0
      %6440 = vmatprep.subr.mxu0 0.0
      %6441 = vmatpush1.msra.mxu0 0.0
      %6442 = vmatprep.subr.mxu0 0.0
      %6443 = vmatpush1.msra.mxu0 0.0
      %6444 = vmatprep.subr.mxu0 0.0
      %6445 = vmatpush1.msra.mxu0 0.0
      %6446 = vmatprep.subr.mxu0 0.0
      %6447 = vmatpush1.msra.mxu0 0.0
      %6448 = vmatprep.subr.mxu0 0.0
      %6449 = vmatpush1.msra.mxu0 %v6266
      %6450 = vmatprep.subr.mxu0 0.0
      %6451 = vmatpush1.msra.mxu0 %v6265
      %6452 = vmatprep.subr.mxu0 0.0
      %6453 = vmatpush1.msra.mxu0 %v6264
      %6454 = vmatprep.subr.mxu0 0.0
      %6455 = vmatpush1.msra.mxu0 %v6263
      %6456 = vmatprep.subr.mxu0 0.0
      %6457 = vmatpush1.msra.mxu0 %v6262
      %6458 = vmatprep.subr.mxu0 0.0
      %6459 = vmatpush1.msra.mxu0 %v6261
      %6460 = vmatprep.subr.mxu0 0.0
      %6461 = vmatpush1.msra.mxu0 %v6260
      %6462 = vmatprep.subr.mxu0 0.0
      %6463 = vmatpush1.msra.mxu0 %v6259
      %6464 = vmatprep.subr.mxu0 0.0
      %6465 = vmatpush2.msra.mxu0 0.0
      %6466 = vmatprep.subr.mxu0 0.0
      %6467 = vmatpush2.msra.mxu0 0.0
      %6468 = vmatprep.subr.mxu0 0.0
      %6469 = vmatpush2.msra.mxu0 0.0
      %6470 = vmatprep.subr.mxu0 0.0
      %6471 = vmatpush2.msra.mxu0 0.0
      %6472 = vmatprep.subr.mxu0 0.0
      %6473 = vmatpush2.msra.mxu0 0.0
      %6474 = vmatprep.subr.mxu0 0.0
      %6475 = vmatpush2.msra.mxu0 0.0
      %6476 = vmatprep.subr.mxu0 0.0
      %6477 = vmatpush2.msra.mxu0 0.0
      %6478 = vmatprep.subr.mxu0 0.0
      %6479 = vmatpush2.msra.mxu0 0.0
      %6480 = vmatprep.subr.mxu0 0.0
      %6481 = vmatpush2.msra.mxu0 0.0
      %6482 = vmatprep.subr.mxu0 0.0
      %6483 = vmatpush2.msra.mxu0 0.0
      %6484 = vmatprep.subr.mxu0 0.0
      %6485 = vmatpush2.msra.mxu0 0.0
      %6486 = vmatprep.subr.mxu0 0.0
      %6487 = vmatpush2.msra.mxu0 0.0
      %6488 = vmatprep.subr.mxu0 0.0
      %6489 = vmatpush2.msra.mxu0 0.0
      %6490 = vmatprep.subr.mxu0 0.0
      %6491 = vmatpush2.msra.mxu0 0.0
      %6492 = vmatprep.subr.mxu0 0.0
      %6493 = vmatpush2.msra.mxu0 0.0
      %6494 = vmatprep.subr.mxu0 0.0
      %6495 = vmatpush2.msra.mxu0 0.0
      %6496 = vmatprep.mubr.f32.mxu0 0.0
      %6497 = vmatmul.mubr.f32.gmra.mxu0 %v6418
      %v6498 = vpop.f32.mrf.mxu0
      %v6499 = vadd.f32 %v6371, %v6498
      %v6500 = vpop.f32.mrf.mxu0
      %6501 = vmatprep.mubr.f32.mxu0 0.0
      %6502 = vmatmul.mubr.f32.gmra.mxu0 %v6420
      %v6503 = vpop.f32.mrf.mxu0
      %v6504 = vadd.f32 %v6376, %v6503
      %v6505 = vpop.f32.mrf.mxu0
      %6506 = vmatprep.mubr.f32.mxu0 0.0
      %6507 = vmatmul.mubr.f32.gmra.mxu0 %v6422
      %v6508 = vpop.f32.mrf.mxu0
      %v6509 = vadd.f32 %v6381, %v6508
      %v6510 = vpop.f32.mrf.mxu0
      %6511 = vmatprep.mubr.f32.mxu0 0.0
      %6512 = vmatmul.mubr.f32.gmra.mxu0 %v6424
      %v6513 = vpop.f32.mrf.mxu0
      %v6514 = vadd.f32 %v6386, %v6513
      %v6515 = vpop.f32.mrf.mxu0
      %6516 = vmatprep.mubr.f32.mxu0 0.0
      %6517 = vmatmul.mubr.f32.gmra.mxu0 %v6426
      %v6518 = vpop.f32.mrf.mxu0
      %v6519 = vadd.f32 %v6391, %v6518
      %v6520 = vpop.f32.mrf.mxu0
      %6521 = vmatprep.mubr.f32.mxu0 0.0
      %6522 = vmatmul.mubr.f32.gmra.mxu0 %v6428
      %v6523 = vpop.f32.mrf.mxu0
      %v6524 = vadd.f32 %v6396, %v6523
      %v6525 = vpop.f32.mrf.mxu0
      %6526 = vmatprep.mubr.f32.mxu0 0.0
      %6527 = vmatmul.mubr.f32.gmra.mxu0 %v6430
      %v6528 = vpop.f32.mrf.mxu0
      %v6529 = vadd.f32 %v6401, %v6528
      %v6530 = vpop.f32.mrf.mxu0
      %6531 = vdwg.mxu0
      %s6532 = scalar_lea.vmem %s292, 3008
      %v6533 = vld [vmem:[%s6532] sm:$0xff]
      %v6534 = vld [vmem:[%s6532 + $0x8] sm:$0xff]
      %v6535 = vld [vmem:[%s6532 + $0x10] sm:$0xff]
      %v6536 = vld [vmem:[%s6532 + $0x18] sm:$0xff]
      %v6537 = vld [vmem:[%s6532 + $0x20] sm:$0xff]
      %v6538 = vld [vmem:[%s6532 + $0x28] sm:$0xff]
      %v6539 = vld [vmem:[%s6532 + $0x30] sm:$0xff]
      %v6540 = vld [vmem:[%s6532 + $0x38] sm:$0xff]
      %6541 = vrot.lane.b32.xlu0 %v5406, 64
      %v6542 = vpop.permute.xlu0 %6541
      %6543 = vrot.lane.b32.xlu0 %v5408, 64
      %v6544 = vpop.permute.xlu0 %6543
      %6545 = vrot.lane.b32.xlu0 %v5410, 64
      %v6546 = vpop.permute.xlu0 %6545
      %6547 = vrot.lane.b32.xlu0 %v5412, 64
      %v6548 = vpop.permute.xlu0 %6547
      %6549 = vrot.lane.b32.xlu0 %v5414, 64
      %v6550 = vpop.permute.xlu0 %6549
      %6551 = vrot.lane.b32.xlu0 %v5416, 64
      %v6552 = vpop.permute.xlu0 %6551
      %6553 = vrot.lane.b32.xlu0 %v5418, 64
      %v6554 = vpop.permute.xlu0 %6553
      %v6555 = vsel %vm416, %v6542, 0
      %v6557 = vsel %vm416, %v6544, 0
      %v6559 = vsel %vm416, %v6546, 0
      %v6561 = vsel %vm416, %v6548, 0
      %v6563 = vsel %vm416, %v6550, 0
      %v6565 = vsel %vm416, %v6552, 0
      %v6567 = vsel %vm416, %v6554, 0
      %6569 = vmatprep.subr.mxu0 0.0
      %6570 = vmatpush1.msra.mxu0 0.0
      %6571 = vmatprep.subr.mxu0 0.0
      %6572 = vmatpush1.msra.mxu0 0.0
      %6573 = vmatprep.subr.mxu0 0.0
      %6574 = vmatpush1.msra.mxu0 0.0
      %6575 = vmatprep.subr.mxu0 0.0
      %6576 = vmatpush1.msra.mxu0 0.0
      %6577 = vmatprep.subr.mxu0 0.0
      %6578 = vmatpush1.msra.mxu0 0.0
      %6579 = vmatprep.subr.mxu0 0.0
      %6580 = vmatpush1.msra.mxu0 0.0
      %6581 = vmatprep.subr.mxu0 0.0
      %6582 = vmatpush1.msra.mxu0 0.0
      %6583 = vmatprep.subr.mxu0 0.0
      %6584 = vmatpush1.msra.mxu0 0.0
      %6585 = vmatprep.subr.mxu0 0.0
      %6586 = vmatpush1.msra.mxu0 %v6540
      %6587 = vmatprep.subr.mxu0 0.0
      %6588 = vmatpush1.msra.mxu0 %v6539
      %6589 = vmatprep.subr.mxu0 0.0
      %6590 = vmatpush1.msra.mxu0 %v6538
      %6591 = vmatprep.subr.mxu0 0.0
      %6592 = vmatpush1.msra.mxu0 %v6537
      %6593 = vmatprep.subr.mxu0 0.0
      %6594 = vmatpush1.msra.mxu0 %v6536
      %6595 = vmatprep.subr.mxu0 0.0
      %6596 = vmatpush1.msra.mxu0 %v6535
      %6597 = vmatprep.subr.mxu0 0.0
      %6598 = vmatpush1.msra.mxu0 %v6534
      %6599 = vmatprep.subr.mxu0 0.0
      %6600 = vmatpush1.msra.mxu0 %v6533
      %6601 = vmatprep.subr.mxu0 0.0
      %6602 = vmatpush2.msra.mxu0 0.0
      %6603 = vmatprep.subr.mxu0 0.0
      %6604 = vmatpush2.msra.mxu0 0.0
      %6605 = vmatprep.subr.mxu0 0.0
      %6606 = vmatpush2.msra.mxu0 0.0
      %6607 = vmatprep.subr.mxu0 0.0
      %6608 = vmatpush2.msra.mxu0 0.0
      %6609 = vmatprep.subr.mxu0 0.0
      %6610 = vmatpush2.msra.mxu0 0.0
      %6611 = vmatprep.subr.mxu0 0.0
      %6612 = vmatpush2.msra.mxu0 0.0
      %6613 = vmatprep.subr.mxu0 0.0
      %6614 = vmatpush2.msra.mxu0 0.0
      %6615 = vmatprep.subr.mxu0 0.0
      %6616 = vmatpush2.msra.mxu0 0.0
      %6617 = vmatprep.subr.mxu0 0.0
      %6618 = vmatpush2.msra.mxu0 0.0
      %6619 = vmatprep.subr.mxu0 0.0
      %6620 = vmatpush2.msra.mxu0 0.0
      %6621 = vmatprep.subr.mxu0 0.0
      %6622 = vmatpush2.msra.mxu0 0.0
      %6623 = vmatprep.subr.mxu0 0.0
      %6624 = vmatpush2.msra.mxu0 0.0
      %6625 = vmatprep.subr.mxu0 0.0
      %6626 = vmatpush2.msra.mxu0 0.0
      %6627 = vmatprep.subr.mxu0 0.0
      %6628 = vmatpush2.msra.mxu0 0.0
      %6629 = vmatprep.subr.mxu0 0.0
      %6630 = vmatpush2.msra.mxu0 0.0
      %6631 = vmatprep.subr.mxu0 0.0
      %6632 = vmatpush2.msra.mxu0 0.0
      %6633 = vmatprep.mubr.f32.mxu0 0.0
      %6634 = vmatmul.mubr.f32.gmra.mxu0 %v6555
      %v6635 = vpop.f32.mrf.mxu0
      %v6636 = vadd.f32 0.0, %v6635
      %v6637 = vpop.f32.mrf.mxu0
      %6638 = vmatprep.mubr.f32.mxu0 0.0
      %6639 = vmatmul.mubr.f32.gmra.mxu0 %v6557
      %v6640 = vpop.f32.mrf.mxu0
      %v6641 = vadd.f32 0.0, %v6640
      %v6642 = vpop.f32.mrf.mxu0
      %6643 = vmatprep.mubr.f32.mxu0 0.0
      %6644 = vmatmul.mubr.f32.gmra.mxu0 %v6559
      %v6645 = vpop.f32.mrf.mxu0
      %v6646 = vadd.f32 0.0, %v6645
      %v6647 = vpop.f32.mrf.mxu0
      %6648 = vmatprep.mubr.f32.mxu0 0.0
      %6649 = vmatmul.mubr.f32.gmra.mxu0 %v6561
      %v6650 = vpop.f32.mrf.mxu0
      %v6651 = vadd.f32 0.0, %v6650
      %v6652 = vpop.f32.mrf.mxu0
      %6653 = vmatprep.mubr.f32.mxu0 0.0
      %6654 = vmatmul.mubr.f32.gmra.mxu0 %v6563
      %v6655 = vpop.f32.mrf.mxu0
      %v6656 = vadd.f32 0.0, %v6655
      %v6657 = vpop.f32.mrf.mxu0
      %6658 = vmatprep.mubr.f32.mxu0 0.0
      %6659 = vmatmul.mubr.f32.gmra.mxu0 %v6565
      %v6660 = vpop.f32.mrf.mxu0
      %v6661 = vadd.f32 0.0, %v6660
      %v6662 = vpop.f32.mrf.mxu0
      %6663 = vmatprep.mubr.f32.mxu0 0.0
      %6664 = vmatmul.mubr.f32.gmra.mxu0 %v6567
      %v6665 = vpop.f32.mrf.mxu0
      %v6666 = vadd.f32 0.0, %v6665
      %v6667 = vpop.f32.mrf.mxu0
      %6668 = vdwg.mxu0
      %v6669 = vadd.f32 %v6499, %v6636
      %v6670 = vadd.f32 %v6504, %v6641
      %v6671 = vadd.f32 %v6509, %v6646
      %v6672 = vadd.f32 %v6514, %v6651
      %v6673 = vadd.f32 %v6519, %v6656
      %v6674 = vadd.f32 %v6524, %v6661
      %v6675 = vadd.f32 %v6529, %v6666
      %s6676 = scalar_lea.vmem %s292, 3072
      %v6677 = vld [vmem:[%s6676] sm:$0xff]
      %v6678 = vld [vmem:[%s6676 + $0x8] sm:$0xff]
      %v6679 = vld [vmem:[%s6676 + $0x10] sm:$0xff]
      %v6680 = vld [vmem:[%s6676 + $0x18] sm:$0xff]
      %v6681 = vld [vmem:[%s6676 + $0x20] sm:$0xff]
      %v6682 = vld [vmem:[%s6676 + $0x28] sm:$0xff]
      %v6683 = vld [vmem:[%s6676 + $0x30] sm:$0xff]
      %v6684 = vld [vmem:[%s6676 + $0x38] sm:$0xff]
      %6685 = vrot.lane.b32.xlu0 %v5123, 64
      %v6686 = vpop.permute.xlu0 %6685
      %v6687 = vsel %vm416, %v6686, 0
      %6689 = vmatprep.subr.mxu0 0.0
      %6690 = vmatpush1.msra.mxu0 0.0
      %6691 = vmatprep.subr.mxu0 0.0
      %6692 = vmatpush1.msra.mxu0 0.0
      %6693 = vmatprep.subr.mxu0 0.0
      %6694 = vmatpush1.msra.mxu0 0.0
      %6695 = vmatprep.subr.mxu0 0.0
      %6696 = vmatpush1.msra.mxu0 0.0
      %6697 = vmatprep.subr.mxu0 0.0
      %6698 = vmatpush1.msra.mxu0 0.0
      %6699 = vmatprep.subr.mxu0 0.0
      %6700 = vmatpush1.msra.mxu0 0.0
      %6701 = vmatprep.subr.mxu0 0.0
      %6702 = vmatpush1.msra.mxu0 0.0
      %6703 = vmatprep.subr.mxu0 0.0
      %6704 = vmatpush1.msra.mxu0 0.0
      %6705 = vmatprep.subr.mxu0 0.0
      %6706 = vmatpush1.msra.mxu0 %v6684
      %6707 = vmatprep.subr.mxu0 0.0
      %6708 = vmatpush1.msra.mxu0 %v6683
      %6709 = vmatprep.subr.mxu0 0.0
      %6710 = vmatpush1.msra.mxu0 %v6682
      %6711 = vmatprep.subr.mxu0 0.0
      %6712 = vmatpush1.msra.mxu0 %v6681
      %6713 = vmatprep.subr.mxu0 0.0
      %6714 = vmatpush1.msra.mxu0 %v6680
      %6715 = vmatprep.subr.mxu0 0.0
      %6716 = vmatpush1.msra.mxu0 %v6679
      %6717 = vmatprep.subr.mxu0 0.0
      %6718 = vmatpush1.msra.mxu0 %v6678
      %6719 = vmatprep.subr.mxu0 0.0
      %6720 = vmatpush1.msra.mxu0 %v6677
      %6721 = vmatprep.subr.mxu0 0.0
      %6722 = vmatpush2.msra.mxu0 0.0
      %6723 = vmatprep.subr.mxu0 0.0
      %6724 = vmatpush2.msra.mxu0 0.0
      %6725 = vmatprep.subr.mxu0 0.0
      %6726 = vmatpush2.msra.mxu0 0.0
      %6727 = vmatprep.subr.mxu0 0.0
      %6728 = vmatpush2.msra.mxu0 0.0
      %6729 = vmatprep.subr.mxu0 0.0
      %6730 = vmatpush2.msra.mxu0 0.0
      %6731 = vmatprep.subr.mxu0 0.0
      %6732 = vmatpush2.msra.mxu0 0.0
      %6733 = vmatprep.subr.mxu0 0.0
      %6734 = vmatpush2.msra.mxu0 0.0
      %6735 = vmatprep.subr.mxu0 0.0
      %6736 = vmatpush2.msra.mxu0 0.0
      %6737 = vmatprep.subr.mxu0 0.0
      %6738 = vmatpush2.msra.mxu0 0.0
      %6739 = vmatprep.subr.mxu0 0.0
      %6740 = vmatpush2.msra.mxu0 0.0
      %6741 = vmatprep.subr.mxu0 0.0
      %6742 = vmatpush2.msra.mxu0 0.0
      %6743 = vmatprep.subr.mxu0 0.0
      %6744 = vmatpush2.msra.mxu0 0.0
      %6745 = vmatprep.subr.mxu0 0.0
      %6746 = vmatpush2.msra.mxu0 0.0
      %6747 = vmatprep.subr.mxu0 0.0
      %6748 = vmatpush2.msra.mxu0 0.0
      %6749 = vmatprep.subr.mxu0 0.0
      %6750 = vmatpush2.msra.mxu0 0.0
      %6751 = vmatprep.subr.mxu0 0.0
      %6752 = vmatpush2.msra.mxu0 0.0
      %6753 = vmatprep.mubr.f32.mxu0 0.0
      %6754 = vmatmul.mubr.f32.gmra.mxu0 %v6420
      %v6755 = vpop.f32.mrf.mxu0
      %v6756 = vadd.f32 0.0, %v6755
      %v6757 = vpop.f32.mrf.mxu0
      %6758 = vmatprep.mubr.f32.mxu0 0.0
      %6759 = vmatmul.mubr.f32.gmra.mxu0 %v6422
      %v6760 = vpop.f32.mrf.mxu0
      %v6761 = vadd.f32 0.0, %v6760
      %v6762 = vpop.f32.mrf.mxu0
      %6763 = vmatprep.mubr.f32.mxu0 0.0
      %6764 = vmatmul.mubr.f32.gmra.mxu0 %v6424
      %v6765 = vpop.f32.mrf.mxu0
      %v6766 = vadd.f32 0.0, %v6765
      %v6767 = vpop.f32.mrf.mxu0
      %6768 = vmatprep.mubr.f32.mxu0 0.0
      %6769 = vmatmul.mubr.f32.gmra.mxu0 %v6426
      %v6770 = vpop.f32.mrf.mxu0
      %v6771 = vadd.f32 0.0, %v6770
      %v6772 = vpop.f32.mrf.mxu0
      %6773 = vmatprep.mubr.f32.mxu0 0.0
      %6774 = vmatmul.mubr.f32.gmra.mxu0 %v6428
      %v6775 = vpop.f32.mrf.mxu0
      %v6776 = vadd.f32 0.0, %v6775
      %v6777 = vpop.f32.mrf.mxu0
      %6778 = vmatprep.mubr.f32.mxu0 0.0
      %6779 = vmatmul.mubr.f32.gmra.mxu0 %v6430
      %v6780 = vpop.f32.mrf.mxu0
      %v6781 = vadd.f32 0.0, %v6780
      %v6782 = vpop.f32.mrf.mxu0
      %6783 = vmatprep.mubr.f32.mxu0 0.0
      %6784 = vmatmul.mubr.f32.gmra.mxu0 %v6687
      %v6785 = vpop.f32.mrf.mxu0
      %v6786 = vadd.f32 0.0, %v6785
      %v6787 = vpop.f32.mrf.mxu0
      %6788 = vdwg.mxu0
      %v6789 = vadd.f32 %v6669, %v6756
      %v6790 = vadd.f32 %v6670, %v6761
      %v6791 = vadd.f32 %v6671, %v6766
      %v6792 = vadd.f32 %v6672, %v6771
      %v6793 = vadd.f32 %v6673, %v6776
      %v6794 = vadd.f32 %v6674, %v6781
      %v6795 = vadd.f32 %v6675, %v6786
      %s6796 = scalar_lea.vmem %s292, 3136
      %v6797 = vld [vmem:[%s6796] sm:$0xff]
      %v6798 = vld [vmem:[%s6796 + $0x8] sm:$0xff]
      %v6799 = vld [vmem:[%s6796 + $0x10] sm:$0xff]
      %v6800 = vld [vmem:[%s6796 + $0x18] sm:$0xff]
      %v6801 = vld [vmem:[%s6796 + $0x20] sm:$0xff]
      %v6802 = vld [vmem:[%s6796 + $0x28] sm:$0xff]
      %v6803 = vld [vmem:[%s6796 + $0x30] sm:$0xff]
      %v6804 = vld [vmem:[%s6796 + $0x38] sm:$0xff]
      %6805 = vrot.lane.b32.xlu0 %v5669, 64
      %v6806 = vpop.permute.xlu0 %6805
      %v6807 = vsel %vm416, %v6806, 0
      %6809 = vmatprep.subr.mxu0 0.0
      %6810 = vmatpush1.msra.mxu0 0.0
      %6811 = vmatprep.subr.mxu0 0.0
      %6812 = vmatpush1.msra.mxu0 0.0
      %6813 = vmatprep.subr.mxu0 0.0
      %6814 = vmatpush1.msra.mxu0 0.0
      %6815 = vmatprep.subr.mxu0 0.0
      %6816 = vmatpush1.msra.mxu0 0.0
      %6817 = vmatprep.subr.mxu0 0.0
      %6818 = vmatpush1.msra.mxu0 0.0
      %6819 = vmatprep.subr.mxu0 0.0
      %6820 = vmatpush1.msra.mxu0 0.0
      %6821 = vmatprep.subr.mxu0 0.0
      %6822 = vmatpush1.msra.mxu0 0.0
      %6823 = vmatprep.subr.mxu0 0.0
      %6824 = vmatpush1.msra.mxu0 0.0
      %6825 = vmatprep.subr.mxu0 0.0
      %6826 = vmatpush1.msra.mxu0 %v6804
      %6827 = vmatprep.subr.mxu0 0.0
      %6828 = vmatpush1.msra.mxu0 %v6803
      %6829 = vmatprep.subr.mxu0 0.0
      %6830 = vmatpush1.msra.mxu0 %v6802
      %6831 = vmatprep.subr.mxu0 0.0
      %6832 = vmatpush1.msra.mxu0 %v6801
      %6833 = vmatprep.subr.mxu0 0.0
      %6834 = vmatpush1.msra.mxu0 %v6800
      %6835 = vmatprep.subr.mxu0 0.0
      %6836 = vmatpush1.msra.mxu0 %v6799
      %6837 = vmatprep.subr.mxu0 0.0
      %6838 = vmatpush1.msra.mxu0 %v6798
      %6839 = vmatprep.subr.mxu0 0.0
      %6840 = vmatpush1.msra.mxu0 %v6797
      %6841 = vmatprep.subr.mxu0 0.0
      %6842 = vmatpush2.msra.mxu0 0.0
      %6843 = vmatprep.subr.mxu0 0.0
      %6844 = vmatpush2.msra.mxu0 0.0
      %6845 = vmatprep.subr.mxu0 0.0
      %6846 = vmatpush2.msra.mxu0 0.0
      %6847 = vmatprep.subr.mxu0 0.0
      %6848 = vmatpush2.msra.mxu0 0.0
      %6849 = vmatprep.subr.mxu0 0.0
      %6850 = vmatpush2.msra.mxu0 0.0
      %6851 = vmatprep.subr.mxu0 0.0
      %6852 = vmatpush2.msra.mxu0 0.0
      %6853 = vmatprep.subr.mxu0 0.0
      %6854 = vmatpush2.msra.mxu0 0.0
      %6855 = vmatprep.subr.mxu0 0.0
      %6856 = vmatpush2.msra.mxu0 0.0
      %6857 = vmatprep.subr.mxu0 0.0
      %6858 = vmatpush2.msra.mxu0 0.0
      %6859 = vmatprep.subr.mxu0 0.0
      %6860 = vmatpush2.msra.mxu0 0.0
      %6861 = vmatprep.subr.mxu0 0.0
      %6862 = vmatpush2.msra.mxu0 0.0
      %6863 = vmatprep.subr.mxu0 0.0
      %6864 = vmatpush2.msra.mxu0 0.0
      %6865 = vmatprep.subr.mxu0 0.0
      %6866 = vmatpush2.msra.mxu0 0.0
      %6867 = vmatprep.subr.mxu0 0.0
      %6868 = vmatpush2.msra.mxu0 0.0
      %6869 = vmatprep.subr.mxu0 0.0
      %6870 = vmatpush2.msra.mxu0 0.0
      %6871 = vmatprep.subr.mxu0 0.0
      %6872 = vmatpush2.msra.mxu0 0.0
      %6873 = vmatprep.mubr.f32.mxu0 0.0
      %6874 = vmatmul.mubr.f32.gmra.mxu0 %v6292
      %v6875 = vpop.f32.mrf.mxu0
      %v6876 = vadd.f32 0.0, %v6875
      %v6877 = vpop.f32.mrf.mxu0
      %6878 = vmatprep.mubr.f32.mxu0 0.0
      %6879 = vmatmul.mubr.f32.gmra.mxu0 %v6294
      %v6880 = vpop.f32.mrf.mxu0
      %v6881 = vadd.f32 0.0, %v6880
      %v6882 = vpop.f32.mrf.mxu0
      %6883 = vmatprep.mubr.f32.mxu0 0.0
      %6884 = vmatmul.mubr.f32.gmra.mxu0 %v6296
      %v6885 = vpop.f32.mrf.mxu0
      %v6886 = vadd.f32 0.0, %v6885
      %v6887 = vpop.f32.mrf.mxu0
      %6888 = vmatprep.mubr.f32.mxu0 0.0
      %6889 = vmatmul.mubr.f32.gmra.mxu0 %v6298
      %v6890 = vpop.f32.mrf.mxu0
      %v6891 = vadd.f32 0.0, %v6890
      %v6892 = vpop.f32.mrf.mxu0
      %6893 = vmatprep.mubr.f32.mxu0 0.0
      %6894 = vmatmul.mubr.f32.gmra.mxu0 %v6300
      %v6895 = vpop.f32.mrf.mxu0
      %v6896 = vadd.f32 0.0, %v6895
      %v6897 = vpop.f32.mrf.mxu0
      %6898 = vmatprep.mubr.f32.mxu0 0.0
      %6899 = vmatmul.mubr.f32.gmra.mxu0 %v6302
      %v6900 = vpop.f32.mrf.mxu0
      %v6901 = vadd.f32 0.0, %v6900
      %v6902 = vpop.f32.mrf.mxu0
      %6903 = vmatprep.mubr.f32.mxu0 0.0
      %6904 = vmatmul.mubr.f32.gmra.mxu0 %v6807
      %v6905 = vpop.f32.mrf.mxu0
      %v6906 = vadd.f32 0.0, %v6905
      %v6907 = vpop.f32.mrf.mxu0
      %6908 = vdwg.mxu0
      %v6909 = vadd.f32 %v6789, %v6876
      %v6910 = vadd.f32 %v6790, %v6881
      %v6911 = vadd.f32 %v6791, %v6886
      %v6912 = vadd.f32 %v6792, %v6891
      %v6913 = vadd.f32 %v6793, %v6896
      %v6914 = vadd.f32 %v6794, %v6901
      %v6915 = vadd.f32 %v6795, %v6906
      %s6916 = scalar_lea.vmem %s292, 3200
      %v6917 = vld [vmem:[%s6916] sm:$0xff]
      %v6918 = vld [vmem:[%s6916 + $0x8] sm:$0xff]
      %v6919 = vld [vmem:[%s6916 + $0x10] sm:$0xff]
      %v6920 = vld [vmem:[%s6916 + $0x18] sm:$0xff]
      %v6921 = vld [vmem:[%s6916 + $0x20] sm:$0xff]
      %v6922 = vld [vmem:[%s6916 + $0x28] sm:$0xff]
      %v6923 = vld [vmem:[%s6916 + $0x30] sm:$0xff]
      %v6924 = vld [vmem:[%s6916 + $0x38] sm:$0xff]
      %6925 = vrot.lane.b32.xlu0 %v5789, 64
      %v6926 = vpop.permute.xlu0 %6925
      %v6927 = vsel %vm416, %v6926, 0
      %6929 = vmatprep.subr.mxu0 0.0
      %6930 = vmatpush1.msra.mxu0 0.0
      %6931 = vmatprep.subr.mxu0 0.0
      %6932 = vmatpush1.msra.mxu0 0.0
      %6933 = vmatprep.subr.mxu0 0.0
      %6934 = vmatpush1.msra.mxu0 0.0
      %6935 = vmatprep.subr.mxu0 0.0
      %6936 = vmatpush1.msra.mxu0 0.0
      %6937 = vmatprep.subr.mxu0 0.0
      %6938 = vmatpush1.msra.mxu0 0.0
      %6939 = vmatprep.subr.mxu0 0.0
      %6940 = vmatpush1.msra.mxu0 0.0
      %6941 = vmatprep.subr.mxu0 0.0
      %6942 = vmatpush1.msra.mxu0 0.0
      %6943 = vmatprep.subr.mxu0 0.0
      %6944 = vmatpush1.msra.mxu0 0.0
      %6945 = vmatprep.subr.mxu0 0.0
      %6946 = vmatpush1.msra.mxu0 %v6924
      %6947 = vmatprep.subr.mxu0 0.0
      %6948 = vmatpush1.msra.mxu0 %v6923
      %6949 = vmatprep.subr.mxu0 0.0
      %6950 = vmatpush1.msra.mxu0 %v6922
      %6951 = vmatprep.subr.mxu0 0.0
      %6952 = vmatpush1.msra.mxu0 %v6921
      %6953 = vmatprep.subr.mxu0 0.0
      %6954 = vmatpush1.msra.mxu0 %v6920
      %6955 = vmatprep.subr.mxu0 0.0
      %6956 = vmatpush1.msra.mxu0 %v6919
      %6957 = vmatprep.subr.mxu0 0.0
      %6958 = vmatpush1.msra.mxu0 %v6918
      %6959 = vmatprep.subr.mxu0 0.0
      %6960 = vmatpush1.msra.mxu0 %v6917
      %6961 = vmatprep.subr.mxu0 0.0
      %6962 = vmatpush2.msra.mxu0 0.0
      %6963 = vmatprep.subr.mxu0 0.0
      %6964 = vmatpush2.msra.mxu0 0.0
      %6965 = vmatprep.subr.mxu0 0.0
      %6966 = vmatpush2.msra.mxu0 0.0
      %6967 = vmatprep.subr.mxu0 0.0
      %6968 = vmatpush2.msra.mxu0 0.0
      %6969 = vmatprep.subr.mxu0 0.0
      %6970 = vmatpush2.msra.mxu0 0.0
      %6971 = vmatprep.subr.mxu0 0.0
      %6972 = vmatpush2.msra.mxu0 0.0
      %6973 = vmatprep.subr.mxu0 0.0
      %6974 = vmatpush2.msra.mxu0 0.0
      %6975 = vmatprep.subr.mxu0 0.0
      %6976 = vmatpush2.msra.mxu0 0.0
      %6977 = vmatprep.subr.mxu0 0.0
      %6978 = vmatpush2.msra.mxu0 0.0
      %6979 = vmatprep.subr.mxu0 0.0
      %6980 = vmatpush2.msra.mxu0 0.0
      %6981 = vmatprep.subr.mxu0 0.0
      %6982 = vmatpush2.msra.mxu0 0.0
      %6983 = vmatprep.subr.mxu0 0.0
      %6984 = vmatpush2.msra.mxu0 0.0
      %6985 = vmatprep.subr.mxu0 0.0
      %6986 = vmatpush2.msra.mxu0 0.0
      %6987 = vmatprep.subr.mxu0 0.0
      %6988 = vmatpush2.msra.mxu0 0.0
      %6989 = vmatprep.subr.mxu0 0.0
      %6990 = vmatpush2.msra.mxu0 0.0
      %6991 = vmatprep.subr.mxu0 0.0
      %6992 = vmatpush2.msra.mxu0 0.0
      %6993 = vmatprep.mubr.f32.mxu0 0.0
      %6994 = vmatmul.mubr.f32.gmra.mxu0 %v6557
      %v6995 = vpop.f32.mrf.mxu0
      %v6996 = vadd.f32 0.0, %v6995
      %v6997 = vpop.f32.mrf.mxu0
      %6998 = vmatprep.mubr.f32.mxu0 0.0
      %6999 = vmatmul.mubr.f32.gmra.mxu0 %v6559
      %v7000 = vpop.f32.mrf.mxu0
      %v7001 = vadd.f32 0.0, %v7000
      %v7002 = vpop.f32.mrf.mxu0
      %7003 = vmatprep.mubr.f32.mxu0 0.0
      %7004 = vmatmul.mubr.f32.gmra.mxu0 %v6561
      %v7005 = vpop.f32.mrf.mxu0
      %v7006 = vadd.f32 0.0, %v7005
      %v7007 = vpop.f32.mrf.mxu0
      %7008 = vmatprep.mubr.f32.mxu0 0.0
      %7009 = vmatmul.mubr.f32.gmra.mxu0 %v6563
      %v7010 = vpop.f32.mrf.mxu0
      %v7011 = vadd.f32 0.0, %v7010
      %v7012 = vpop.f32.mrf.mxu0
      %7013 = vmatprep.mubr.f32.mxu0 0.0
      %7014 = vmatmul.mubr.f32.gmra.mxu0 %v6565
      %v7015 = vpop.f32.mrf.mxu0
      %v7016 = vadd.f32 0.0, %v7015
      %v7017 = vpop.f32.mrf.mxu0
      %7018 = vmatprep.mubr.f32.mxu0 0.0
      %7019 = vmatmul.mubr.f32.gmra.mxu0 %v6567
      %v7020 = vpop.f32.mrf.mxu0
      %v7021 = vadd.f32 0.0, %v7020
      %v7022 = vpop.f32.mrf.mxu0
      %7023 = vmatprep.mubr.f32.mxu0 0.0
      %7024 = vmatmul.mubr.f32.gmra.mxu0 %v6927
      %v7025 = vpop.f32.mrf.mxu0
      %v7026 = vadd.f32 0.0, %v7025
      %v7027 = vpop.f32.mrf.mxu0
      %7028 = vdwg.mxu0
      %v7029 = vadd.f32 %v6909, %v6996
      %v7030 = vadd.f32 %v6910, %v7001
      %v7031 = vadd.f32 %v6911, %v7006
      %v7032 = vadd.f32 %v6912, %v7011
      %v7033 = vadd.f32 %v6913, %v7016
      %v7034 = vadd.f32 %v6914, %v7021
      %v7035 = vadd.f32 %v6915, %v7026
      %s7036 = scalar_lea.vmem %s292, 3264
      %v7037 = vld [vmem:[%s7036] sm:$0xff]
      %v7038 = vld [vmem:[%s7036 + $0x8] sm:$0xff]
      %v7039 = vld [vmem:[%s7036 + $0x10] sm:$0xff]
      %v7040 = vld [vmem:[%s7036 + $0x18] sm:$0xff]
      %v7041 = vld [vmem:[%s7036 + $0x20] sm:$0xff]
      %v7042 = vld [vmem:[%s7036 + $0x28] sm:$0xff]
      %v7043 = vld [vmem:[%s7036 + $0x30] sm:$0xff]
      %v7044 = vld [vmem:[%s7036 + $0x38] sm:$0xff]
      %7045 = vrot.lane.b32.xlu0 %v5124, 64
      %v7046 = vpop.permute.xlu0 %7045
      %v7047 = vsel %vm416, %v7046, 0
      %7049 = vmatprep.subr.mxu0 0.0
      %7050 = vmatpush1.msra.mxu0 0.0
      %7051 = vmatprep.subr.mxu0 0.0
      %7052 = vmatpush1.msra.mxu0 0.0
      %7053 = vmatprep.subr.mxu0 0.0
      %7054 = vmatpush1.msra.mxu0 0.0
      %7055 = vmatprep.subr.mxu0 0.0
      %7056 = vmatpush1.msra.mxu0 0.0
      %7057 = vmatprep.subr.mxu0 0.0
      %7058 = vmatpush1.msra.mxu0 0.0
      %7059 = vmatprep.subr.mxu0 0.0
      %7060 = vmatpush1.msra.mxu0 0.0
      %7061 = vmatprep.subr.mxu0 0.0
      %7062 = vmatpush1.msra.mxu0 0.0
      %7063 = vmatprep.subr.mxu0 0.0
      %7064 = vmatpush1.msra.mxu0 0.0
      %7065 = vmatprep.subr.mxu0 0.0
      %7066 = vmatpush1.msra.mxu0 %v7044
      %7067 = vmatprep.subr.mxu0 0.0
      %7068 = vmatpush1.msra.mxu0 %v7043
      %7069 = vmatprep.subr.mxu0 0.0
      %7070 = vmatpush1.msra.mxu0 %v7042
      %7071 = vmatprep.subr.mxu0 0.0
      %7072 = vmatpush1.msra.mxu0 %v7041
      %7073 = vmatprep.subr.mxu0 0.0
      %7074 = vmatpush1.msra.mxu0 %v7040
      %7075 = vmatprep.subr.mxu0 0.0
      %7076 = vmatpush1.msra.mxu0 %v7039
      %7077 = vmatprep.subr.mxu0 0.0
      %7078 = vmatpush1.msra.mxu0 %v7038
      %7079 = vmatprep.subr.mxu0 0.0
      %7080 = vmatpush1.msra.mxu0 %v7037
      %7081 = vmatprep.subr.mxu0 0.0
      %7082 = vmatpush2.msra.mxu0 0.0
      %7083 = vmatprep.subr.mxu0 0.0
      %7084 = vmatpush2.msra.mxu0 0.0
      %7085 = vmatprep.subr.mxu0 0.0
      %7086 = vmatpush2.msra.mxu0 0.0
      %7087 = vmatprep.subr.mxu0 0.0
      %7088 = vmatpush2.msra.mxu0 0.0
      %7089 = vmatprep.subr.mxu0 0.0
      %7090 = vmatpush2.msra.mxu0 0.0
      %7091 = vmatprep.subr.mxu0 0.0
      %7092 = vmatpush2.msra.mxu0 0.0
      %7093 = vmatprep.subr.mxu0 0.0
      %7094 = vmatpush2.msra.mxu0 0.0
      %7095 = vmatprep.subr.mxu0 0.0
      %7096 = vmatpush2.msra.mxu0 0.0
      %7097 = vmatprep.subr.mxu0 0.0
      %7098 = vmatpush2.msra.mxu0 0.0
      %7099 = vmatprep.subr.mxu0 0.0
      %7100 = vmatpush2.msra.mxu0 0.0
      %7101 = vmatprep.subr.mxu0 0.0
      %7102 = vmatpush2.msra.mxu0 0.0
      %7103 = vmatprep.subr.mxu0 0.0
      %7104 = vmatpush2.msra.mxu0 0.0
      %7105 = vmatprep.subr.mxu0 0.0
      %7106 = vmatpush2.msra.mxu0 0.0
      %7107 = vmatprep.subr.mxu0 0.0
      %7108 = vmatpush2.msra.mxu0 0.0
      %7109 = vmatprep.subr.mxu0 0.0
      %7110 = vmatpush2.msra.mxu0 0.0
      %7111 = vmatprep.subr.mxu0 0.0
      %7112 = vmatpush2.msra.mxu0 0.0
      %7113 = vmatprep.mubr.f32.mxu0 0.0
      %7114 = vmatmul.mubr.f32.gmra.mxu0 %v6422
      %v7115 = vpop.f32.mrf.mxu0
      %v7116 = vadd.f32 0.0, %v7115
      %v7117 = vpop.f32.mrf.mxu0
      %7118 = vmatprep.mubr.f32.mxu0 0.0
      %7119 = vmatmul.mubr.f32.gmra.mxu0 %v6424
      %v7120 = vpop.f32.mrf.mxu0
      %v7121 = vadd.f32 0.0, %v7120
      %v7122 = vpop.f32.mrf.mxu0
      %7123 = vmatprep.mubr.f32.mxu0 0.0
      %7124 = vmatmul.mubr.f32.gmra.mxu0 %v6426
      %v7125 = vpop.f32.mrf.mxu0
      %v7126 = vadd.f32 0.0, %v7125
      %v7127 = vpop.f32.mrf.mxu0
      %7128 = vmatprep.mubr.f32.mxu0 0.0
      %7129 = vmatmul.mubr.f32.gmra.mxu0 %v6428
      %v7130 = vpop.f32.mrf.mxu0
      %v7131 = vadd.f32 0.0, %v7130
      %v7132 = vpop.f32.mrf.mxu0
      %7133 = vmatprep.mubr.f32.mxu0 0.0
      %7134 = vmatmul.mubr.f32.gmra.mxu0 %v6430
      %v7135 = vpop.f32.mrf.mxu0
      %v7136 = vadd.f32 0.0, %v7135
      %v7137 = vpop.f32.mrf.mxu0
      %7138 = vmatprep.mubr.f32.mxu0 0.0
      %7139 = vmatmul.mubr.f32.gmra.mxu0 %v6687
      %v7140 = vpop.f32.mrf.mxu0
      %v7141 = vadd.f32 0.0, %v7140
      %v7142 = vpop.f32.mrf.mxu0
      %7143 = vmatprep.mubr.f32.mxu0 0.0
      %7144 = vmatmul.mubr.f32.gmra.mxu0 %v7047
      %v7145 = vpop.f32.mrf.mxu0
      %v7146 = vadd.f32 0.0, %v7145
      %v7147 = vpop.f32.mrf.mxu0
      %7148 = vdwg.mxu0
      %v7149 = vadd.f32 %v7029, %v7116
      %v7150 = vadd.f32 %v7030, %v7121
      %v7151 = vadd.f32 %v7031, %v7126
      %v7152 = vadd.f32 %v7032, %v7131
      %v7153 = vadd.f32 %v7033, %v7136
      %v7154 = vadd.f32 %v7034, %v7141
      %v7155 = vadd.f32 %v7035, %v7146
      %s7156 = scalar_lea.vmem %s292, 3328
      %v7157 = vld [vmem:[%s7156] sm:$0xff]
      %v7158 = vld [vmem:[%s7156 + $0x8] sm:$0xff]
      %v7159 = vld [vmem:[%s7156 + $0x10] sm:$0xff]
      %v7160 = vld [vmem:[%s7156 + $0x18] sm:$0xff]
      %v7161 = vld [vmem:[%s7156 + $0x20] sm:$0xff]
      %v7162 = vld [vmem:[%s7156 + $0x28] sm:$0xff]
      %v7163 = vld [vmem:[%s7156 + $0x30] sm:$0xff]
      %v7164 = vld [vmem:[%s7156 + $0x38] sm:$0xff]
      %7165 = vrot.lane.b32.xlu0 %v6028, 64
      %v7166 = vpop.permute.xlu0 %7165
      %v7167 = vsel %vm416, %v7166, 0
      %7169 = vmatprep.subr.mxu0 0.0
      %7170 = vmatpush1.msra.mxu0 0.0
      %7171 = vmatprep.subr.mxu0 0.0
      %7172 = vmatpush1.msra.mxu0 0.0
      %7173 = vmatprep.subr.mxu0 0.0
      %7174 = vmatpush1.msra.mxu0 0.0
      %7175 = vmatprep.subr.mxu0 0.0
      %7176 = vmatpush1.msra.mxu0 0.0
      %7177 = vmatprep.subr.mxu0 0.0
      %7178 = vmatpush1.msra.mxu0 0.0
      %7179 = vmatprep.subr.mxu0 0.0
      %7180 = vmatpush1.msra.mxu0 0.0
      %7181 = vmatprep.subr.mxu0 0.0
      %7182 = vmatpush1.msra.mxu0 0.0
      %7183 = vmatprep.subr.mxu0 0.0
      %7184 = vmatpush1.msra.mxu0 0.0
      %7185 = vmatprep.subr.mxu0 0.0
      %7186 = vmatpush1.msra.mxu0 %v7164
      %7187 = vmatprep.subr.mxu0 0.0
      %7188 = vmatpush1.msra.mxu0 %v7163
      %7189 = vmatprep.subr.mxu0 0.0
      %7190 = vmatpush1.msra.mxu0 %v7162
      %7191 = vmatprep.subr.mxu0 0.0
      %7192 = vmatpush1.msra.mxu0 %v7161
      %7193 = vmatprep.subr.mxu0 0.0
      %7194 = vmatpush1.msra.mxu0 %v7160
      %7195 = vmatprep.subr.mxu0 0.0
      %7196 = vmatpush1.msra.mxu0 %v7159
      %7197 = vmatprep.subr.mxu0 0.0
      %7198 = vmatpush1.msra.mxu0 %v7158
      %7199 = vmatprep.subr.mxu0 0.0
      %7200 = vmatpush1.msra.mxu0 %v7157
      %7201 = vmatprep.subr.mxu0 0.0
      %7202 = vmatpush2.msra.mxu0 0.0
      %7203 = vmatprep.subr.mxu0 0.0
      %7204 = vmatpush2.msra.mxu0 0.0
      %7205 = vmatprep.subr.mxu0 0.0
      %7206 = vmatpush2.msra.mxu0 0.0
      %7207 = vmatprep.subr.mxu0 0.0
      %7208 = vmatpush2.msra.mxu0 0.0
      %7209 = vmatprep.subr.mxu0 0.0
      %7210 = vmatpush2.msra.mxu0 0.0
      %7211 = vmatprep.subr.mxu0 0.0
      %7212 = vmatpush2.msra.mxu0 0.0
      %7213 = vmatprep.subr.mxu0 0.0
      %7214 = vmatpush2.msra.mxu0 0.0
      %7215 = vmatprep.subr.mxu0 0.0
      %7216 = vmatpush2.msra.mxu0 0.0
      %7217 = vmatprep.subr.mxu0 0.0
      %7218 = vmatpush2.msra.mxu0 0.0
      %7219 = vmatprep.subr.mxu0 0.0
      %7220 = vmatpush2.msra.mxu0 0.0
      %7221 = vmatprep.subr.mxu0 0.0
      %7222 = vmatpush2.msra.mxu0 0.0
      %7223 = vmatprep.subr.mxu0 0.0
      %7224 = vmatpush2.msra.mxu0 0.0
      %7225 = vmatprep.subr.mxu0 0.0
      %7226 = vmatpush2.msra.mxu0 0.0
      %7227 = vmatprep.subr.mxu0 0.0
      %7228 = vmatpush2.msra.mxu0 0.0
      %7229 = vmatprep.subr.mxu0 0.0
      %7230 = vmatpush2.msra.mxu0 0.0
      %7231 = vmatprep.subr.mxu0 0.0
      %7232 = vmatpush2.msra.mxu0 0.0
      %7233 = vmatprep.mubr.f32.mxu0 0.0
      %7234 = vmatmul.mubr.f32.gmra.mxu0 %v6294
      %v7235 = vpop.f32.mrf.mxu0
      %v7236 = vadd.f32 0.0, %v7235
      %v7237 = vpop.f32.mrf.mxu0
      %7238 = vmatprep.mubr.f32.mxu0 0.0
      %7239 = vmatmul.mubr.f32.gmra.mxu0 %v6296
      %v7240 = vpop.f32.mrf.mxu0
      %v7241 = vadd.f32 0.0, %v7240
      %v7242 = vpop.f32.mrf.mxu0
      %7243 = vmatprep.mubr.f32.mxu0 0.0
      %7244 = vmatmul.mubr.f32.gmra.mxu0 %v6298
      %v7245 = vpop.f32.mrf.mxu0
      %v7246 = vadd.f32 0.0, %v7245
      %v7247 = vpop.f32.mrf.mxu0
      %7248 = vmatprep.mubr.f32.mxu0 0.0
      %7249 = vmatmul.mubr.f32.gmra.mxu0 %v6300
      %v7250 = vpop.f32.mrf.mxu0
      %v7251 = vadd.f32 0.0, %v7250
      %v7252 = vpop.f32.mrf.mxu0
      %7253 = vmatprep.mubr.f32.mxu0 0.0
      %7254 = vmatmul.mubr.f32.gmra.mxu0 %v6302
      %v7255 = vpop.f32.mrf.mxu0
      %v7256 = vadd.f32 0.0, %v7255
      %v7257 = vpop.f32.mrf.mxu0
      %7258 = vmatprep.mubr.f32.mxu0 0.0
      %7259 = vmatmul.mubr.f32.gmra.mxu0 %v6807
      %v7260 = vpop.f32.mrf.mxu0
      %v7261 = vadd.f32 0.0, %v7260
      %v7262 = vpop.f32.mrf.mxu0
      %7263 = vmatprep.mubr.f32.mxu0 0.0
      %7264 = vmatmul.mubr.f32.gmra.mxu0 %v7167
      %v7265 = vpop.f32.mrf.mxu0
      %v7266 = vadd.f32 0.0, %v7265
      %v7267 = vpop.f32.mrf.mxu0
      %7268 = vdwg.mxu0
      %v7269 = vadd.f32 %v7149, %v7236
      %v7270 = vadd.f32 %v7150, %v7241
      %v7271 = vadd.f32 %v7151, %v7246
      %v7272 = vadd.f32 %v7152, %v7251
      %v7273 = vadd.f32 %v7153, %v7256
      %v7274 = vadd.f32 %v7154, %v7261
      %v7275 = vadd.f32 %v7155, %v7266
      %s7276 = scalar_lea.vmem %s292, 3392
      %v7277 = vld [vmem:[%s7276] sm:$0xff]
      %v7278 = vld [vmem:[%s7276 + $0x8] sm:$0xff]
      %v7279 = vld [vmem:[%s7276 + $0x10] sm:$0xff]
      %v7280 = vld [vmem:[%s7276 + $0x18] sm:$0xff]
      %v7281 = vld [vmem:[%s7276 + $0x20] sm:$0xff]
      %v7282 = vld [vmem:[%s7276 + $0x28] sm:$0xff]
      %v7283 = vld [vmem:[%s7276 + $0x30] sm:$0xff]
      %v7284 = vld [vmem:[%s7276 + $0x38] sm:$0xff]
      %7285 = vrot.lane.b32.xlu0 %v6148, 64
      %v7286 = vpop.permute.xlu0 %7285
      %v7287 = vsel %vm416, %v7286, 0
      %7289 = vmatprep.subr.mxu0 0.0
      %7290 = vmatpush1.msra.mxu0 0.0
      %7291 = vmatprep.subr.mxu0 0.0
      %7292 = vmatpush1.msra.mxu0 0.0
      %7293 = vmatprep.subr.mxu0 0.0
      %7294 = vmatpush1.msra.mxu0 0.0
      %7295 = vmatprep.subr.mxu0 0.0
      %7296 = vmatpush1.msra.mxu0 0.0
      %7297 = vmatprep.subr.mxu0 0.0
      %7298 = vmatpush1.msra.mxu0 0.0
      %7299 = vmatprep.subr.mxu0 0.0
      %7300 = vmatpush1.msra.mxu0 0.0
      %7301 = vmatprep.subr.mxu0 0.0
      %7302 = vmatpush1.msra.mxu0 0.0
      %7303 = vmatprep.subr.mxu0 0.0
      %7304 = vmatpush1.msra.mxu0 0.0
      %7305 = vmatprep.subr.mxu0 0.0
      %7306 = vmatpush1.msra.mxu0 %v7284
      %7307 = vmatprep.subr.mxu0 0.0
      %7308 = vmatpush1.msra.mxu0 %v7283
      %7309 = vmatprep.subr.mxu0 0.0
      %7310 = vmatpush1.msra.mxu0 %v7282
      %7311 = vmatprep.subr.mxu0 0.0
      %7312 = vmatpush1.msra.mxu0 %v7281
      %7313 = vmatprep.subr.mxu0 0.0
      %7314 = vmatpush1.msra.mxu0 %v7280
      %7315 = vmatprep.subr.mxu0 0.0
      %7316 = vmatpush1.msra.mxu0 %v7279
      %7317 = vmatprep.subr.mxu0 0.0
      %7318 = vmatpush1.msra.mxu0 %v7278
      %7319 = vmatprep.subr.mxu0 0.0
      %7320 = vmatpush1.msra.mxu0 %v7277
      %7321 = vmatprep.subr.mxu0 0.0
      %7322 = vmatpush2.msra.mxu0 0.0
      %7323 = vmatprep.subr.mxu0 0.0
      %7324 = vmatpush2.msra.mxu0 0.0
      %7325 = vmatprep.subr.mxu0 0.0
      %7326 = vmatpush2.msra.mxu0 0.0
      %7327 = vmatprep.subr.mxu0 0.0
      %7328 = vmatpush2.msra.mxu0 0.0
      %7329 = vmatprep.subr.mxu0 0.0
      %7330 = vmatpush2.msra.mxu0 0.0
      %7331 = vmatprep.subr.mxu0 0.0
      %7332 = vmatpush2.msra.mxu0 0.0
      %7333 = vmatprep.subr.mxu0 0.0
      %7334 = vmatpush2.msra.mxu0 0.0
      %7335 = vmatprep.subr.mxu0 0.0
      %7336 = vmatpush2.msra.mxu0 0.0
      %7337 = vmatprep.subr.mxu0 0.0
      %7338 = vmatpush2.msra.mxu0 0.0
      %7339 = vmatprep.subr.mxu0 0.0
      %7340 = vmatpush2.msra.mxu0 0.0
      %7341 = vmatprep.subr.mxu0 0.0
      %7342 = vmatpush2.msra.mxu0 0.0
      %7343 = vmatprep.subr.mxu0 0.0
      %7344 = vmatpush2.msra.mxu0 0.0
      %7345 = vmatprep.subr.mxu0 0.0
      %7346 = vmatpush2.msra.mxu0 0.0
      %7347 = vmatprep.subr.mxu0 0.0
      %7348 = vmatpush2.msra.mxu0 0.0
      %7349 = vmatprep.subr.mxu0 0.0
      %7350 = vmatpush2.msra.mxu0 0.0
      %7351 = vmatprep.subr.mxu0 0.0
      %7352 = vmatpush2.msra.mxu0 0.0
      %7353 = vmatprep.mubr.f32.mxu0 0.0
      %7354 = vmatmul.mubr.f32.gmra.mxu0 %v6559
      %v7355 = vpop.f32.mrf.mxu0
      %v7356 = vadd.f32 0.0, %v7355
      %v7357 = vpop.f32.mrf.mxu0
      %7358 = vmatprep.mubr.f32.mxu0 0.0
      %7359 = vmatmul.mubr.f32.gmra.mxu0 %v6561
      %v7360 = vpop.f32.mrf.mxu0
      %v7361 = vadd.f32 0.0, %v7360
      %v7362 = vpop.f32.mrf.mxu0
      %7363 = vmatprep.mubr.f32.mxu0 0.0
      %7364 = vmatmul.mubr.f32.gmra.mxu0 %v6563
      %v7365 = vpop.f32.mrf.mxu0
      %v7366 = vadd.f32 0.0, %v7365
      %v7367 = vpop.f32.mrf.mxu0
      %7368 = vmatprep.mubr.f32.mxu0 0.0
      %7369 = vmatmul.mubr.f32.gmra.mxu0 %v6565
      %v7370 = vpop.f32.mrf.mxu0
      %v7371 = vadd.f32 0.0, %v7370
      %v7372 = vpop.f32.mrf.mxu0
      %7373 = vmatprep.mubr.f32.mxu0 0.0
      %7374 = vmatmul.mubr.f32.gmra.mxu0 %v6567
      %v7375 = vpop.f32.mrf.mxu0
      %v7376 = vadd.f32 0.0, %v7375
      %v7377 = vpop.f32.mrf.mxu0
      %7378 = vmatprep.mubr.f32.mxu0 0.0
      %7379 = vmatmul.mubr.f32.gmra.mxu0 %v6927
      %v7380 = vpop.f32.mrf.mxu0
      %v7381 = vadd.f32 0.0, %v7380
      %v7382 = vpop.f32.mrf.mxu0
      %7383 = vmatprep.mubr.f32.mxu0 0.0
      %7384 = vmatmul.mubr.f32.gmra.mxu0 %v7287
      %v7385 = vpop.f32.mrf.mxu0
      %v7386 = vadd.f32 0.0, %v7385
      %v7387 = vpop.f32.mrf.mxu0
      %7388 = vdwg.mxu0
      %v7389 = vadd.f32 %v7269, %v7356
      %v7390 = vadd.f32 %v7270, %v7361
      %v7391 = vadd.f32 %v7271, %v7366
      %v7392 = vadd.f32 %v7272, %v7371
      %v7393 = vadd.f32 %v7273, %v7376
      %v7394 = vadd.f32 %v7274, %v7381
      %v7395 = vadd.f32 %v7275, %v7386
      %7403 = vrot.lane.b32.xlu0 %v7389, 64
      %v7404 = vpop.permute.xlu0 %7403
      %7405 = vrot.lane.b32.xlu0 %v7390, 64
      %v7406 = vpop.permute.xlu0 %7405
      %7407 = vrot.lane.b32.xlu0 %v7391, 64
      %v7408 = vpop.permute.xlu0 %7407
      %7409 = vrot.lane.b32.xlu0 %v7392, 64
      %v7410 = vpop.permute.xlu0 %7409
      %7411 = vrot.lane.b32.xlu0 %v7393, 64
      %v7412 = vpop.permute.xlu0 %7411
      %7413 = vrot.lane.b32.xlu0 %v7394, 64
      %v7414 = vpop.permute.xlu0 %7413
      %7415 = vrot.lane.b32.xlu0 %v7395, 64
      %v7416 = vpop.permute.xlu0 %7415
      %v7424 = vsel %vm416, %v6251, %v7404
      %v7425 = vsel %vm416, %v6252, %v7406
      %v7426 = vsel %vm416, %v6253, %v7408
      %v7427 = vsel %vm416, %v6254, %v7410
      %v7428 = vsel %vm416, %v6255, %v7412
      %v7429 = vsel %vm416, %v6256, %v7414
      %v7430 = vsel %vm416, %v6257, %v7416
      %s7431 = scalar_lea.vmem %s303, 112
      %7432 = vst [vmem:[%s7431] sm:$0x7f] %v7424
      %7433 = vst [vmem:[%s7431 + $0x8] sm:$0x7f] %v7425
      %7434 = vst [vmem:[%s7431 + $0x10] sm:$0x7f] %v7426
      %7435 = vst [vmem:[%s7431 + $0x18] sm:$0x7f] %v7427
      %7436 = vst [vmem:[%s7431 + $0x20] sm:$0x7f] %v7428
      %7437 = vst [vmem:[%s7431 + $0x28] sm:$0x7f] %v7429
      %7438 = vst [vmem:[%s7431 + $0x30] sm:$0x7f] %v7430
      %s7439 = scalar_lea.vmem %s275, 168
      %v7440 = vld [vmem:[%s7439] sm:$0x7f]
      %v7441 = vld [vmem:[%s7439 + $0x8] sm:$0x7f]
      %v7442 = vld [vmem:[%s7439 + $0x10] sm:$0x7f]
      %v7443 = vld [vmem:[%s7439 + $0x18] sm:$0x7f]
      %v7444 = vld [vmem:[%s7439 + $0x20] sm:$0x7f]
      %v7445 = vld [vmem:[%s7439 + $0x28] sm:$0x7f]
      %v7446 = vld [vmem:[%s7439 + $0x30] sm:$0x7f]
      %s7447 = scalar_lea.vmem %s280, 3
      %v7448 = vld [vmem:[%s7447] sm:$0x1]
      %v7450 = vlaneseq
      %v7451 = vshrl.u32 %v7450, 7
      %v7452 = vsub.s32 0, %v7451
      %v7453 = vrot.slane %v7448, %v7452
      %v7455 = vmul.f32 %v7440, %v7453
      %v7456 = vmul.f32 %v7441, %v7453
      %v7457 = vmul.f32 %v7442, %v7453
      %v7458 = vmul.f32 %v7443, %v7453
      %v7459 = vmul.f32 %v7444, %v7453
      %v7460 = vmul.f32 %v7445, %v7453
      %v7461 = vmul.f32 %v7446, %v7453
      %s7462 = scalar_lea.vmem %s285, 3
      %v7463 = vld [vmem:[%s7462] sm:$0x1]
      %v7465 = vlaneseq
      %v7466 = vshrl.u32 %v7465, 7
      %v7467 = vsub.s32 0, %v7466
      %v7468 = vrot.slane %v7463, %v7467
      %v7470 = vadd.f32 %v7455, %v7468
      %v7471 = vadd.f32 %v7456, %v7468
      %v7472 = vadd.f32 %v7457, %v7468
      %v7473 = vadd.f32 %v7458, %v7468
      %v7474 = vadd.f32 %v7459, %v7468
      %v7475 = vadd.f32 %v7460, %v7468
      %v7476 = vadd.f32 %v7461, %v7468
      %v7477 = vmax.f32 %v7470, 0.0
      %v7478 = vmax.f32 %v7471, 0.0
      %v7479 = vmax.f32 %v7472, 0.0
      %v7480 = vmax.f32 %v7473, 0.0
      %v7481 = vmax.f32 %v7474, 0.0
      %v7482 = vmax.f32 %v7475, 0.0
      %v7483 = vmax.f32 %v7476, 0.0
      %7484 = vst [vmem:[%s357 + $0x1] sm:$0x7f] %v7477
      %7485 = vst [vmem:[%s357 + $0x9] sm:$0x7f] %v7478
      %7486 = vst [vmem:[%s357 + $0x11] sm:$0x7f] %v7479
      %7487 = vst [vmem:[%s357 + $0x19] sm:$0x7f] %v7480
      %7488 = vst [vmem:[%s357 + $0x21] sm:$0x7f] %v7481
      %7489 = vst [vmem:[%s357 + $0x29] sm:$0x7f] %v7482
      %7490 = vst [vmem:[%s357 + $0x31] sm:$0x7f] %v7483
      %v7491 = vld [vmem:[#allocation2] sm:$0xff]
      %v7492 = vld [vmem:[#allocation2 + $0x8] sm:$0xff]
      %v7493 = vld [vmem:[#allocation2 + $0x10] sm:$0xff]
      %v7494 = vld [vmem:[#allocation2 + $0x18] sm:$0xff]
      %v7495 = vld [vmem:[#allocation2 + $0x20] sm:$0xff]
      %v7496 = vld [vmem:[#allocation2 + $0x28] sm:$0xff]
      %v7497 = vld [vmem:[#allocation2 + $0x30] sm:$0xff]
      %v7498 = vld [vmem:[#allocation2 + $0x38] sm:$0xff]
      %v7499 = vld [vmem:[#allocation2 + $0x40] sm:$0xff]
      %v7500 = vld [vmem:[#allocation2 + $0x48] sm:$0xff]
      %s7501 = scalar_lea.vmem %s292, 3456
      %v7502 = vld [vmem:[%s7501] sm:$0xff]
      %v7503 = vld [vmem:[%s7501 + $0x8] sm:$0xff]
      %v7504 = vld [vmem:[%s7501 + $0x10] sm:$0xff]
      %v7505 = vld [vmem:[%s7501 + $0x18] sm:$0xff]
      %v7506 = vld [vmem:[%s7501 + $0x20] sm:$0xff]
      %v7507 = vld [vmem:[%s7501 + $0x28] sm:$0xff]
      %v7508 = vld [vmem:[%s7501 + $0x30] sm:$0xff]
      %v7509 = vld [vmem:[%s7501 + $0x38] sm:$0xff]
      %s7510 = scalar_lea.vmem %s292, 3520
      %v7511 = vld [vmem:[%s7510] sm:$0xff]
      %v7512 = vld [vmem:[%s7510 + $0x8] sm:$0xff]
      %v7513 = vld [vmem:[%s7510 + $0x10] sm:$0xff]
      %v7514 = vld [vmem:[%s7510 + $0x18] sm:$0xff]
      %v7515 = vld [vmem:[%s7510 + $0x20] sm:$0xff]
      %v7516 = vld [vmem:[%s7510 + $0x28] sm:$0xff]
      %v7517 = vld [vmem:[%s7510 + $0x30] sm:$0xff]
      %v7518 = vld [vmem:[%s7510 + $0x38] sm:$0xff]
      %v7527 = vrot.slane %v7491, 1
      %v7528 = vrot.slane %v7492, 1
      %v7529 = vsel %vm400, %v7527, %v7528
      %v7530 = vrot.slane %v7493, 1
      %v7531 = vsel %vm400, %v7528, %v7530
      %v7532 = vrot.slane %v7494, 1
      %v7533 = vsel %vm400, %v7530, %v7532
      %v7534 = vrot.slane %v7495, 1
      %v7535 = vsel %vm400, %v7532, %v7534
      %v7536 = vrot.slane %v7496, 1
      %v7537 = vsel %vm400, %v7534, %v7536
      %v7538 = vrot.slane %v7497, 1
      %v7539 = vsel %vm400, %v7536, %v7538
      %v7540 = vrot.slane %v7498, 1
      %v7541 = vsel %vm400, %v7538, %v7540
      %v7542 = vsel %vm416, %v7529, 0
      %v7544 = vsel %vm416, %v7531, 0
      %v7546 = vsel %vm416, %v7533, 0
      %v7548 = vsel %vm416, %v7535, 0
      %v7550 = vsel %vm416, %v7537, 0
      %v7552 = vsel %vm416, %v7539, 0
      %v7554 = vsel %vm416, %v7541, 0
      %7556 = vmatprep.subr.mxu0 0.0
      %7557 = vmatpush1.msra.mxu0 0.0
      %7558 = vmatprep.subr.mxu0 0.0
      %7559 = vmatpush1.msra.mxu0 0.0
      %7560 = vmatprep.subr.mxu0 0.0
      %7561 = vmatpush1.msra.mxu0 0.0
      %7562 = vmatprep.subr.mxu0 0.0
      %7563 = vmatpush1.msra.mxu0 0.0
      %7564 = vmatprep.subr.mxu0 0.0
      %7565 = vmatpush1.msra.mxu0 0.0
      %7566 = vmatprep.subr.mxu0 0.0
      %7567 = vmatpush1.msra.mxu0 0.0
      %7568 = vmatprep.subr.mxu0 0.0
      %7569 = vmatpush1.msra.mxu0 0.0
      %7570 = vmatprep.subr.mxu0 0.0
      %7571 = vmatpush1.msra.mxu0 0.0
      %7572 = vmatprep.subr.mxu0 0.0
      %7573 = vmatpush1.msra.mxu0 %v7518
      %7574 = vmatprep.subr.mxu0 0.0
      %7575 = vmatpush1.msra.mxu0 %v7517
      %7576 = vmatprep.subr.mxu0 0.0
      %7577 = vmatpush1.msra.mxu0 %v7516
      %7578 = vmatprep.subr.mxu0 0.0
      %7579 = vmatpush1.msra.mxu0 %v7515
      %7580 = vmatprep.subr.mxu0 0.0
      %7581 = vmatpush1.msra.mxu0 %v7514
      %7582 = vmatprep.subr.mxu0 0.0
      %7583 = vmatpush1.msra.mxu0 %v7513
      %7584 = vmatprep.subr.mxu0 0.0
      %7585 = vmatpush1.msra.mxu0 %v7512
      %7586 = vmatprep.subr.mxu0 0.0
      %7587 = vmatpush1.msra.mxu0 %v7511
      %7588 = vmatprep.subr.mxu0 0.0
      %7589 = vmatpush2.msra.mxu0 0.0
      %7590 = vmatprep.subr.mxu0 0.0
      %7591 = vmatpush2.msra.mxu0 0.0
      %7592 = vmatprep.subr.mxu0 0.0
      %7593 = vmatpush2.msra.mxu0 0.0
      %7594 = vmatprep.subr.mxu0 0.0
      %7595 = vmatpush2.msra.mxu0 0.0
      %7596 = vmatprep.subr.mxu0 0.0
      %7597 = vmatpush2.msra.mxu0 0.0
      %7598 = vmatprep.subr.mxu0 0.0
      %7599 = vmatpush2.msra.mxu0 0.0
      %7600 = vmatprep.subr.mxu0 0.0
      %7601 = vmatpush2.msra.mxu0 0.0
      %7602 = vmatprep.subr.mxu0 0.0
      %7603 = vmatpush2.msra.mxu0 0.0
      %7604 = vmatprep.subr.mxu0 0.0
      %7605 = vmatpush2.msra.mxu0 0.0
      %7606 = vmatprep.subr.mxu0 0.0
      %7607 = vmatpush2.msra.mxu0 0.0
      %7608 = vmatprep.subr.mxu0 0.0
      %7609 = vmatpush2.msra.mxu0 0.0
      %7610 = vmatprep.subr.mxu0 0.0
      %7611 = vmatpush2.msra.mxu0 0.0
      %7612 = vmatprep.subr.mxu0 0.0
      %7613 = vmatpush2.msra.mxu0 0.0
      %7614 = vmatprep.subr.mxu0 0.0
      %7615 = vmatpush2.msra.mxu0 0.0
      %7616 = vmatprep.subr.mxu0 0.0
      %7617 = vmatpush2.msra.mxu0 0.0
      %7618 = vmatprep.subr.mxu0 0.0
      %7619 = vmatpush2.msra.mxu0 0.0
      %7620 = vmatprep.mubr.f32.mxu0 0.0
      %7621 = vmatmul.mubr.f32.gmra.mxu0 %v7542
      %v7622 = vpop.f32.mrf.mxu0
      %v7623 = vadd.f32 0.0, %v7622
      %v7624 = vpop.f32.mrf.mxu0
      %7625 = vmatprep.mubr.f32.mxu0 0.0
      %7626 = vmatmul.mubr.f32.gmra.mxu0 %v7544
      %v7627 = vpop.f32.mrf.mxu0
      %v7628 = vadd.f32 0.0, %v7627
      %v7629 = vpop.f32.mrf.mxu0
      %7630 = vmatprep.mubr.f32.mxu0 0.0
      %7631 = vmatmul.mubr.f32.gmra.mxu0 %v7546
      %v7632 = vpop.f32.mrf.mxu0
      %v7633 = vadd.f32 0.0, %v7632
      %v7634 = vpop.f32.mrf.mxu0
      %7635 = vmatprep.mubr.f32.mxu0 0.0
      %7636 = vmatmul.mubr.f32.gmra.mxu0 %v7548
      %v7637 = vpop.f32.mrf.mxu0
      %v7638 = vadd.f32 0.0, %v7637
      %v7639 = vpop.f32.mrf.mxu0
      %7640 = vmatprep.mubr.f32.mxu0 0.0
      %7641 = vmatmul.mubr.f32.gmra.mxu0 %v7550
      %v7642 = vpop.f32.mrf.mxu0
      %v7643 = vadd.f32 0.0, %v7642
      %v7644 = vpop.f32.mrf.mxu0
      %7645 = vmatprep.mubr.f32.mxu0 0.0
      %7646 = vmatmul.mubr.f32.gmra.mxu0 %v7552
      %v7647 = vpop.f32.mrf.mxu0
      %v7648 = vadd.f32 0.0, %v7647
      %v7649 = vpop.f32.mrf.mxu0
      %7650 = vmatprep.mubr.f32.mxu0 0.0
      %7651 = vmatmul.mubr.f32.gmra.mxu0 %v7554
      %v7652 = vpop.f32.mrf.mxu0
      %v7653 = vadd.f32 0.0, %v7652
      %v7654 = vpop.f32.mrf.mxu0
      %7655 = vdwg.mxu0
      %v7656 = vsel %vm416, %v7491, 0
      %v7658 = vsel %vm416, %v7492, 0
      %v7660 = vsel %vm416, %v7493, 0
      %v7662 = vsel %vm416, %v7494, 0
      %v7664 = vsel %vm416, %v7495, 0
      %v7666 = vsel %vm416, %v7496, 0
      %v7668 = vsel %vm416, %v7497, 0
      %7670 = vmatprep.subr.mxu0 0.0
      %7671 = vmatpush1.msra.mxu0 0.0
      %7672 = vmatprep.subr.mxu0 0.0
      %7673 = vmatpush1.msra.mxu0 0.0
      %7674 = vmatprep.subr.mxu0 0.0
      %7675 = vmatpush1.msra.mxu0 0.0
      %7676 = vmatprep.subr.mxu0 0.0
      %7677 = vmatpush1.msra.mxu0 0.0
      %7678 = vmatprep.subr.mxu0 0.0
      %7679 = vmatpush1.msra.mxu0 0.0
      %7680 = vmatprep.subr.mxu0 0.0
      %7681 = vmatpush1.msra.mxu0 0.0
      %7682 = vmatprep.subr.mxu0 0.0
      %7683 = vmatpush1.msra.mxu0 0.0
      %7684 = vmatprep.subr.mxu0 0.0
      %7685 = vmatpush1.msra.mxu0 0.0
      %7686 = vmatprep.subr.mxu0 0.0
      %7687 = vmatpush1.msra.mxu0 %v7509
      %7688 = vmatprep.subr.mxu0 0.0
      %7689 = vmatpush1.msra.mxu0 %v7508
      %7690 = vmatprep.subr.mxu0 0.0
      %7691 = vmatpush1.msra.mxu0 %v7507
      %7692 = vmatprep.subr.mxu0 0.0
      %7693 = vmatpush1.msra.mxu0 %v7506
      %7694 = vmatprep.subr.mxu0 0.0
      %7695 = vmatpush1.msra.mxu0 %v7505
      %7696 = vmatprep.subr.mxu0 0.0
      %7697 = vmatpush1.msra.mxu0 %v7504
      %7698 = vmatprep.subr.mxu0 0.0
      %7699 = vmatpush1.msra.mxu0 %v7503
      %7700 = vmatprep.subr.mxu0 0.0
      %7701 = vmatpush1.msra.mxu0 %v7502
      %7702 = vmatprep.subr.mxu0 0.0
      %7703 = vmatpush2.msra.mxu0 0.0
      %7704 = vmatprep.subr.mxu0 0.0
      %7705 = vmatpush2.msra.mxu0 0.0
      %7706 = vmatprep.subr.mxu0 0.0
      %7707 = vmatpush2.msra.mxu0 0.0
      %7708 = vmatprep.subr.mxu0 0.0
      %7709 = vmatpush2.msra.mxu0 0.0
      %7710 = vmatprep.subr.mxu0 0.0
      %7711 = vmatpush2.msra.mxu0 0.0
      %7712 = vmatprep.subr.mxu0 0.0
      %7713 = vmatpush2.msra.mxu0 0.0
      %7714 = vmatprep.subr.mxu0 0.0
      %7715 = vmatpush2.msra.mxu0 0.0
      %7716 = vmatprep.subr.mxu0 0.0
      %7717 = vmatpush2.msra.mxu0 0.0
      %7718 = vmatprep.subr.mxu0 0.0
      %7719 = vmatpush2.msra.mxu0 0.0
      %7720 = vmatprep.subr.mxu0 0.0
      %7721 = vmatpush2.msra.mxu0 0.0
      %7722 = vmatprep.subr.mxu0 0.0
      %7723 = vmatpush2.msra.mxu0 0.0
      %7724 = vmatprep.subr.mxu0 0.0
      %7725 = vmatpush2.msra.mxu0 0.0
      %7726 = vmatprep.subr.mxu0 0.0
      %7727 = vmatpush2.msra.mxu0 0.0
      %7728 = vmatprep.subr.mxu0 0.0
      %7729 = vmatpush2.msra.mxu0 0.0
      %7730 = vmatprep.subr.mxu0 0.0
      %7731 = vmatpush2.msra.mxu0 0.0
      %7732 = vmatprep.subr.mxu0 0.0
      %7733 = vmatpush2.msra.mxu0 0.0
      %7734 = vmatprep.mubr.f32.mxu0 0.0
      %7735 = vmatmul.mubr.f32.gmra.mxu0 %v7656
      %v7736 = vpop.f32.mrf.mxu0
      %v7737 = vadd.f32 %v7623, %v7736
      %v7738 = vpop.f32.mrf.mxu0
      %7739 = vmatprep.mubr.f32.mxu0 0.0
      %7740 = vmatmul.mubr.f32.gmra.mxu0 %v7658
      %v7741 = vpop.f32.mrf.mxu0
      %v7742 = vadd.f32 %v7628, %v7741
      %v7743 = vpop.f32.mrf.mxu0
      %7744 = vmatprep.mubr.f32.mxu0 0.0
      %7745 = vmatmul.mubr.f32.gmra.mxu0 %v7660
      %v7746 = vpop.f32.mrf.mxu0
      %v7747 = vadd.f32 %v7633, %v7746
      %v7748 = vpop.f32.mrf.mxu0
      %7749 = vmatprep.mubr.f32.mxu0 0.0
      %7750 = vmatmul.mubr.f32.gmra.mxu0 %v7662
      %v7751 = vpop.f32.mrf.mxu0
      %v7752 = vadd.f32 %v7638, %v7751
      %v7753 = vpop.f32.mrf.mxu0
      %7754 = vmatprep.mubr.f32.mxu0 0.0
      %7755 = vmatmul.mubr.f32.gmra.mxu0 %v7664
      %v7756 = vpop.f32.mrf.mxu0
      %v7757 = vadd.f32 %v7643, %v7756
      %v7758 = vpop.f32.mrf.mxu0
      %7759 = vmatprep.mubr.f32.mxu0 0.0
      %7760 = vmatmul.mubr.f32.gmra.mxu0 %v7666
      %v7761 = vpop.f32.mrf.mxu0
      %v7762 = vadd.f32 %v7648, %v7761
      %v7763 = vpop.f32.mrf.mxu0
      %7764 = vmatprep.mubr.f32.mxu0 0.0
      %7765 = vmatmul.mubr.f32.gmra.mxu0 %v7668
      %v7766 = vpop.f32.mrf.mxu0
      %v7767 = vadd.f32 %v7653, %v7766
      %v7768 = vpop.f32.mrf.mxu0
      %7769 = vdwg.mxu0
      %s7770 = scalar_lea.vmem %s292, 3584
      %v7771 = vld [vmem:[%s7770] sm:$0xff]
      %v7772 = vld [vmem:[%s7770 + $0x8] sm:$0xff]
      %v7773 = vld [vmem:[%s7770 + $0x10] sm:$0xff]
      %v7774 = vld [vmem:[%s7770 + $0x18] sm:$0xff]
      %v7775 = vld [vmem:[%s7770 + $0x20] sm:$0xff]
      %v7776 = vld [vmem:[%s7770 + $0x28] sm:$0xff]
      %v7777 = vld [vmem:[%s7770 + $0x30] sm:$0xff]
      %v7778 = vld [vmem:[%s7770 + $0x38] sm:$0xff]
      %v7779 = vrot.slane %v7491, 2
      %v7780 = vrot.slane %v7492, 2
      %v7781 = vsel %vm654, %v7779, %v7780
      %v7782 = vrot.slane %v7493, 2
      %v7783 = vsel %vm654, %v7780, %v7782
      %v7784 = vrot.slane %v7494, 2
      %v7785 = vsel %vm654, %v7782, %v7784
      %v7786 = vrot.slane %v7495, 2
      %v7787 = vsel %vm654, %v7784, %v7786
      %v7788 = vrot.slane %v7496, 2
      %v7789 = vsel %vm654, %v7786, %v7788
      %v7790 = vrot.slane %v7497, 2
      %v7791 = vsel %vm654, %v7788, %v7790
      %v7792 = vrot.slane %v7498, 2
      %v7793 = vsel %vm654, %v7790, %v7792
      %v7794 = vsel %vm416, %v7781, 0
      %v7796 = vsel %vm416, %v7783, 0
      %v7798 = vsel %vm416, %v7785, 0
      %v7800 = vsel %vm416, %v7787, 0
      %v7802 = vsel %vm416, %v7789, 0
      %v7804 = vsel %vm416, %v7791, 0
      %v7806 = vsel %vm416, %v7793, 0
      %7808 = vmatprep.subr.mxu0 0.0
      %7809 = vmatpush1.msra.mxu0 0.0
      %7810 = vmatprep.subr.mxu0 0.0
      %7811 = vmatpush1.msra.mxu0 0.0
      %7812 = vmatprep.subr.mxu0 0.0
      %7813 = vmatpush1.msra.mxu0 0.0
      %7814 = vmatprep.subr.mxu0 0.0
      %7815 = vmatpush1.msra.mxu0 0.0
      %7816 = vmatprep.subr.mxu0 0.0
      %7817 = vmatpush1.msra.mxu0 0.0
      %7818 = vmatprep.subr.mxu0 0.0
      %7819 = vmatpush1.msra.mxu0 0.0
      %7820 = vmatprep.subr.mxu0 0.0
      %7821 = vmatpush1.msra.mxu0 0.0
      %7822 = vmatprep.subr.mxu0 0.0
      %7823 = vmatpush1.msra.mxu0 0.0
      %7824 = vmatprep.subr.mxu0 0.0
      %7825 = vmatpush1.msra.mxu0 %v7778
      %7826 = vmatprep.subr.mxu0 0.0
      %7827 = vmatpush1.msra.mxu0 %v7777
      %7828 = vmatprep.subr.mxu0 0.0
      %7829 = vmatpush1.msra.mxu0 %v7776
      %7830 = vmatprep.subr.mxu0 0.0
      %7831 = vmatpush1.msra.mxu0 %v7775
      %7832 = vmatprep.subr.mxu0 0.0
      %7833 = vmatpush1.msra.mxu0 %v7774
      %7834 = vmatprep.subr.mxu0 0.0
      %7835 = vmatpush1.msra.mxu0 %v7773
      %7836 = vmatprep.subr.mxu0 0.0
      %7837 = vmatpush1.msra.mxu0 %v7772
      %7838 = vmatprep.subr.mxu0 0.0
      %7839 = vmatpush1.msra.mxu0 %v7771
      %7840 = vmatprep.subr.mxu0 0.0
      %7841 = vmatpush2.msra.mxu0 0.0
      %7842 = vmatprep.subr.mxu0 0.0
      %7843 = vmatpush2.msra.mxu0 0.0
      %7844 = vmatprep.subr.mxu0 0.0
      %7845 = vmatpush2.msra.mxu0 0.0
      %7846 = vmatprep.subr.mxu0 0.0
      %7847 = vmatpush2.msra.mxu0 0.0
      %7848 = vmatprep.subr.mxu0 0.0
      %7849 = vmatpush2.msra.mxu0 0.0
      %7850 = vmatprep.subr.mxu0 0.0
      %7851 = vmatpush2.msra.mxu0 0.0
      %7852 = vmatprep.subr.mxu0 0.0
      %7853 = vmatpush2.msra.mxu0 0.0
      %7854 = vmatprep.subr.mxu0 0.0
      %7855 = vmatpush2.msra.mxu0 0.0
      %7856 = vmatprep.subr.mxu0 0.0
      %7857 = vmatpush2.msra.mxu0 0.0
      %7858 = vmatprep.subr.mxu0 0.0
      %7859 = vmatpush2.msra.mxu0 0.0
      %7860 = vmatprep.subr.mxu0 0.0
      %7861 = vmatpush2.msra.mxu0 0.0
      %7862 = vmatprep.subr.mxu0 0.0
      %7863 = vmatpush2.msra.mxu0 0.0
      %7864 = vmatprep.subr.mxu0 0.0
      %7865 = vmatpush2.msra.mxu0 0.0
      %7866 = vmatprep.subr.mxu0 0.0
      %7867 = vmatpush2.msra.mxu0 0.0
      %7868 = vmatprep.subr.mxu0 0.0
      %7869 = vmatpush2.msra.mxu0 0.0
      %7870 = vmatprep.subr.mxu0 0.0
      %7871 = vmatpush2.msra.mxu0 0.0
      %7872 = vmatprep.mubr.f32.mxu0 0.0
      %7873 = vmatmul.mubr.f32.gmra.mxu0 %v7794
      %v7874 = vpop.f32.mrf.mxu0
      %v7875 = vadd.f32 0.0, %v7874
      %v7876 = vpop.f32.mrf.mxu0
      %7877 = vmatprep.mubr.f32.mxu0 0.0
      %7878 = vmatmul.mubr.f32.gmra.mxu0 %v7796
      %v7879 = vpop.f32.mrf.mxu0
      %v7880 = vadd.f32 0.0, %v7879
      %v7881 = vpop.f32.mrf.mxu0
      %7882 = vmatprep.mubr.f32.mxu0 0.0
      %7883 = vmatmul.mubr.f32.gmra.mxu0 %v7798
      %v7884 = vpop.f32.mrf.mxu0
      %v7885 = vadd.f32 0.0, %v7884
      %v7886 = vpop.f32.mrf.mxu0
      %7887 = vmatprep.mubr.f32.mxu0 0.0
      %7888 = vmatmul.mubr.f32.gmra.mxu0 %v7800
      %v7889 = vpop.f32.mrf.mxu0
      %v7890 = vadd.f32 0.0, %v7889
      %v7891 = vpop.f32.mrf.mxu0
      %7892 = vmatprep.mubr.f32.mxu0 0.0
      %7893 = vmatmul.mubr.f32.gmra.mxu0 %v7802
      %v7894 = vpop.f32.mrf.mxu0
      %v7895 = vadd.f32 0.0, %v7894
      %v7896 = vpop.f32.mrf.mxu0
      %7897 = vmatprep.mubr.f32.mxu0 0.0
      %7898 = vmatmul.mubr.f32.gmra.mxu0 %v7804
      %v7899 = vpop.f32.mrf.mxu0
      %v7900 = vadd.f32 0.0, %v7899
      %v7901 = vpop.f32.mrf.mxu0
      %7902 = vmatprep.mubr.f32.mxu0 0.0
      %7903 = vmatmul.mubr.f32.gmra.mxu0 %v7806
      %v7904 = vpop.f32.mrf.mxu0
      %v7905 = vadd.f32 0.0, %v7904
      %v7906 = vpop.f32.mrf.mxu0
      %7907 = vdwg.mxu0
      %v7908 = vadd.f32 %v7737, %v7875
      %v7909 = vadd.f32 %v7742, %v7880
      %v7910 = vadd.f32 %v7747, %v7885
      %v7911 = vadd.f32 %v7752, %v7890
      %v7912 = vadd.f32 %v7757, %v7895
      %v7913 = vadd.f32 %v7762, %v7900
      %v7914 = vadd.f32 %v7767, %v7905
      %s7915 = scalar_lea.vmem %s292, 3648
      %v7916 = vld [vmem:[%s7915] sm:$0xff]
      %v7917 = vld [vmem:[%s7915 + $0x8] sm:$0xff]
      %v7918 = vld [vmem:[%s7915 + $0x10] sm:$0xff]
      %v7919 = vld [vmem:[%s7915 + $0x18] sm:$0xff]
      %v7920 = vld [vmem:[%s7915 + $0x20] sm:$0xff]
      %v7921 = vld [vmem:[%s7915 + $0x28] sm:$0xff]
      %v7922 = vld [vmem:[%s7915 + $0x30] sm:$0xff]
      %v7923 = vld [vmem:[%s7915 + $0x38] sm:$0xff]
      %v7924 = vsel %vm416, %v7498, 0
      %7926 = vmatprep.subr.mxu0 0.0
      %7927 = vmatpush1.msra.mxu0 0.0
      %7928 = vmatprep.subr.mxu0 0.0
      %7929 = vmatpush1.msra.mxu0 0.0
      %7930 = vmatprep.subr.mxu0 0.0
      %7931 = vmatpush1.msra.mxu0 0.0
      %7932 = vmatprep.subr.mxu0 0.0
      %7933 = vmatpush1.msra.mxu0 0.0
      %7934 = vmatprep.subr.mxu0 0.0
      %7935 = vmatpush1.msra.mxu0 0.0
      %7936 = vmatprep.subr.mxu0 0.0
      %7937 = vmatpush1.msra.mxu0 0.0
      %7938 = vmatprep.subr.mxu0 0.0
      %7939 = vmatpush1.msra.mxu0 0.0
      %7940 = vmatprep.subr.mxu0 0.0
      %7941 = vmatpush1.msra.mxu0 0.0
      %7942 = vmatprep.subr.mxu0 0.0
      %7943 = vmatpush1.msra.mxu0 %v7923
      %7944 = vmatprep.subr.mxu0 0.0
      %7945 = vmatpush1.msra.mxu0 %v7922
      %7946 = vmatprep.subr.mxu0 0.0
      %7947 = vmatpush1.msra.mxu0 %v7921
      %7948 = vmatprep.subr.mxu0 0.0
      %7949 = vmatpush1.msra.mxu0 %v7920
      %7950 = vmatprep.subr.mxu0 0.0
      %7951 = vmatpush1.msra.mxu0 %v7919
      %7952 = vmatprep.subr.mxu0 0.0
      %7953 = vmatpush1.msra.mxu0 %v7918
      %7954 = vmatprep.subr.mxu0 0.0
      %7955 = vmatpush1.msra.mxu0 %v7917
      %7956 = vmatprep.subr.mxu0 0.0
      %7957 = vmatpush1.msra.mxu0 %v7916
      %7958 = vmatprep.subr.mxu0 0.0
      %7959 = vmatpush2.msra.mxu0 0.0
      %7960 = vmatprep.subr.mxu0 0.0
      %7961 = vmatpush2.msra.mxu0 0.0
      %7962 = vmatprep.subr.mxu0 0.0
      %7963 = vmatpush2.msra.mxu0 0.0
      %7964 = vmatprep.subr.mxu0 0.0
      %7965 = vmatpush2.msra.mxu0 0.0
      %7966 = vmatprep.subr.mxu0 0.0
      %7967 = vmatpush2.msra.mxu0 0.0
      %7968 = vmatprep.subr.mxu0 0.0
      %7969 = vmatpush2.msra.mxu0 0.0
      %7970 = vmatprep.subr.mxu0 0.0
      %7971 = vmatpush2.msra.mxu0 0.0
      %7972 = vmatprep.subr.mxu0 0.0
      %7973 = vmatpush2.msra.mxu0 0.0
      %7974 = vmatprep.subr.mxu0 0.0
      %7975 = vmatpush2.msra.mxu0 0.0
      %7976 = vmatprep.subr.mxu0 0.0
      %7977 = vmatpush2.msra.mxu0 0.0
      %7978 = vmatprep.subr.mxu0 0.0
      %7979 = vmatpush2.msra.mxu0 0.0
      %7980 = vmatprep.subr.mxu0 0.0
      %7981 = vmatpush2.msra.mxu0 0.0
      %7982 = vmatprep.subr.mxu0 0.0
      %7983 = vmatpush2.msra.mxu0 0.0
      %7984 = vmatprep.subr.mxu0 0.0
      %7985 = vmatpush2.msra.mxu0 0.0
      %7986 = vmatprep.subr.mxu0 0.0
      %7987 = vmatpush2.msra.mxu0 0.0
      %7988 = vmatprep.subr.mxu0 0.0
      %7989 = vmatpush2.msra.mxu0 0.0
      %7990 = vmatprep.mubr.f32.mxu0 0.0
      %7991 = vmatmul.mubr.f32.gmra.mxu0 %v7658
      %v7992 = vpop.f32.mrf.mxu0
      %v7993 = vadd.f32 0.0, %v7992
      %v7994 = vpop.f32.mrf.mxu0
      %7995 = vmatprep.mubr.f32.mxu0 0.0
      %7996 = vmatmul.mubr.f32.gmra.mxu0 %v7660
      %v7997 = vpop.f32.mrf.mxu0
      %v7998 = vadd.f32 0.0, %v7997
      %v7999 = vpop.f32.mrf.mxu0
      %8000 = vmatprep.mubr.f32.mxu0 0.0
      %8001 = vmatmul.mubr.f32.gmra.mxu0 %v7662
      %v8002 = vpop.f32.mrf.mxu0
      %v8003 = vadd.f32 0.0, %v8002
      %v8004 = vpop.f32.mrf.mxu0
      %8005 = vmatprep.mubr.f32.mxu0 0.0
      %8006 = vmatmul.mubr.f32.gmra.mxu0 %v7664
      %v8007 = vpop.f32.mrf.mxu0
      %v8008 = vadd.f32 0.0, %v8007
      %v8009 = vpop.f32.mrf.mxu0
      %8010 = vmatprep.mubr.f32.mxu0 0.0
      %8011 = vmatmul.mubr.f32.gmra.mxu0 %v7666
      %v8012 = vpop.f32.mrf.mxu0
      %v8013 = vadd.f32 0.0, %v8012
      %v8014 = vpop.f32.mrf.mxu0
      %8015 = vmatprep.mubr.f32.mxu0 0.0
      %8016 = vmatmul.mubr.f32.gmra.mxu0 %v7668
      %v8017 = vpop.f32.mrf.mxu0
      %v8018 = vadd.f32 0.0, %v8017
      %v8019 = vpop.f32.mrf.mxu0
      %8020 = vmatprep.mubr.f32.mxu0 0.0
      %8021 = vmatmul.mubr.f32.gmra.mxu0 %v7924
      %v8022 = vpop.f32.mrf.mxu0
      %v8023 = vadd.f32 0.0, %v8022
      %v8024 = vpop.f32.mrf.mxu0
      %8025 = vdwg.mxu0
      %v8026 = vadd.f32 %v7908, %v7993
      %v8027 = vadd.f32 %v7909, %v7998
      %v8028 = vadd.f32 %v7910, %v8003
      %v8029 = vadd.f32 %v7911, %v8008
      %v8030 = vadd.f32 %v7912, %v8013
      %v8031 = vadd.f32 %v7913, %v8018
      %v8032 = vadd.f32 %v7914, %v8023
      %s8033 = scalar_lea.vmem %s292, 3712
      %v8034 = vld [vmem:[%s8033] sm:$0xff]
      %v8035 = vld [vmem:[%s8033 + $0x8] sm:$0xff]
      %v8036 = vld [vmem:[%s8033 + $0x10] sm:$0xff]
      %v8037 = vld [vmem:[%s8033 + $0x18] sm:$0xff]
      %v8038 = vld [vmem:[%s8033 + $0x20] sm:$0xff]
      %v8039 = vld [vmem:[%s8033 + $0x28] sm:$0xff]
      %v8040 = vld [vmem:[%s8033 + $0x30] sm:$0xff]
      %v8041 = vld [vmem:[%s8033 + $0x38] sm:$0xff]
      %v8043 = vrot.slane %v7499, 1
      %v8044 = vsel %vm400, %v7540, %v8043
      %v8045 = vsel %vm416, %v8044, 0
      %8047 = vmatprep.subr.mxu0 0.0
      %8048 = vmatpush1.msra.mxu0 0.0
      %8049 = vmatprep.subr.mxu0 0.0
      %8050 = vmatpush1.msra.mxu0 0.0
      %8051 = vmatprep.subr.mxu0 0.0
      %8052 = vmatpush1.msra.mxu0 0.0
      %8053 = vmatprep.subr.mxu0 0.0
      %8054 = vmatpush1.msra.mxu0 0.0
      %8055 = vmatprep.subr.mxu0 0.0
      %8056 = vmatpush1.msra.mxu0 0.0
      %8057 = vmatprep.subr.mxu0 0.0
      %8058 = vmatpush1.msra.mxu0 0.0
      %8059 = vmatprep.subr.mxu0 0.0
      %8060 = vmatpush1.msra.mxu0 0.0
      %8061 = vmatprep.subr.mxu0 0.0
      %8062 = vmatpush1.msra.mxu0 0.0
      %8063 = vmatprep.subr.mxu0 0.0
      %8064 = vmatpush1.msra.mxu0 %v8041
      %8065 = vmatprep.subr.mxu0 0.0
      %8066 = vmatpush1.msra.mxu0 %v8040
      %8067 = vmatprep.subr.mxu0 0.0
      %8068 = vmatpush1.msra.mxu0 %v8039
      %8069 = vmatprep.subr.mxu0 0.0
      %8070 = vmatpush1.msra.mxu0 %v8038
      %8071 = vmatprep.subr.mxu0 0.0
      %8072 = vmatpush1.msra.mxu0 %v8037
      %8073 = vmatprep.subr.mxu0 0.0
      %8074 = vmatpush1.msra.mxu0 %v8036
      %8075 = vmatprep.subr.mxu0 0.0
      %8076 = vmatpush1.msra.mxu0 %v8035
      %8077 = vmatprep.subr.mxu0 0.0
      %8078 = vmatpush1.msra.mxu0 %v8034
      %8079 = vmatprep.subr.mxu0 0.0
      %8080 = vmatpush2.msra.mxu0 0.0
      %8081 = vmatprep.subr.mxu0 0.0
      %8082 = vmatpush2.msra.mxu0 0.0
      %8083 = vmatprep.subr.mxu0 0.0
      %8084 = vmatpush2.msra.mxu0 0.0
      %8085 = vmatprep.subr.mxu0 0.0
      %8086 = vmatpush2.msra.mxu0 0.0
      %8087 = vmatprep.subr.mxu0 0.0
      %8088 = vmatpush2.msra.mxu0 0.0
      %8089 = vmatprep.subr.mxu0 0.0
      %8090 = vmatpush2.msra.mxu0 0.0
      %8091 = vmatprep.subr.mxu0 0.0
      %8092 = vmatpush2.msra.mxu0 0.0
      %8093 = vmatprep.subr.mxu0 0.0
      %8094 = vmatpush2.msra.mxu0 0.0
      %8095 = vmatprep.subr.mxu0 0.0
      %8096 = vmatpush2.msra.mxu0 0.0
      %8097 = vmatprep.subr.mxu0 0.0
      %8098 = vmatpush2.msra.mxu0 0.0
      %8099 = vmatprep.subr.mxu0 0.0
      %8100 = vmatpush2.msra.mxu0 0.0
      %8101 = vmatprep.subr.mxu0 0.0
      %8102 = vmatpush2.msra.mxu0 0.0
      %8103 = vmatprep.subr.mxu0 0.0
      %8104 = vmatpush2.msra.mxu0 0.0
      %8105 = vmatprep.subr.mxu0 0.0
      %8106 = vmatpush2.msra.mxu0 0.0
      %8107 = vmatprep.subr.mxu0 0.0
      %8108 = vmatpush2.msra.mxu0 0.0
      %8109 = vmatprep.subr.mxu0 0.0
      %8110 = vmatpush2.msra.mxu0 0.0
      %8111 = vmatprep.mubr.f32.mxu0 0.0
      %8112 = vmatmul.mubr.f32.gmra.mxu0 %v7544
      %v8113 = vpop.f32.mrf.mxu0
      %v8114 = vadd.f32 0.0, %v8113
      %v8115 = vpop.f32.mrf.mxu0
      %8116 = vmatprep.mubr.f32.mxu0 0.0
      %8117 = vmatmul.mubr.f32.gmra.mxu0 %v7546
      %v8118 = vpop.f32.mrf.mxu0
      %v8119 = vadd.f32 0.0, %v8118
      %v8120 = vpop.f32.mrf.mxu0
      %8121 = vmatprep.mubr.f32.mxu0 0.0
      %8122 = vmatmul.mubr.f32.gmra.mxu0 %v7548
      %v8123 = vpop.f32.mrf.mxu0
      %v8124 = vadd.f32 0.0, %v8123
      %v8125 = vpop.f32.mrf.mxu0
      %8126 = vmatprep.mubr.f32.mxu0 0.0
      %8127 = vmatmul.mubr.f32.gmra.mxu0 %v7550
      %v8128 = vpop.f32.mrf.mxu0
      %v8129 = vadd.f32 0.0, %v8128
      %v8130 = vpop.f32.mrf.mxu0
      %8131 = vmatprep.mubr.f32.mxu0 0.0
      %8132 = vmatmul.mubr.f32.gmra.mxu0 %v7552
      %v8133 = vpop.f32.mrf.mxu0
      %v8134 = vadd.f32 0.0, %v8133
      %v8135 = vpop.f32.mrf.mxu0
      %8136 = vmatprep.mubr.f32.mxu0 0.0
      %8137 = vmatmul.mubr.f32.gmra.mxu0 %v7554
      %v8138 = vpop.f32.mrf.mxu0
      %v8139 = vadd.f32 0.0, %v8138
      %v8140 = vpop.f32.mrf.mxu0
      %8141 = vmatprep.mubr.f32.mxu0 0.0
      %8142 = vmatmul.mubr.f32.gmra.mxu0 %v8045
      %v8143 = vpop.f32.mrf.mxu0
      %v8144 = vadd.f32 0.0, %v8143
      %v8145 = vpop.f32.mrf.mxu0
      %8146 = vdwg.mxu0
      %v8147 = vadd.f32 %v8026, %v8114
      %v8148 = vadd.f32 %v8027, %v8119
      %v8149 = vadd.f32 %v8028, %v8124
      %v8150 = vadd.f32 %v8029, %v8129
      %v8151 = vadd.f32 %v8030, %v8134
      %v8152 = vadd.f32 %v8031, %v8139
      %v8153 = vadd.f32 %v8032, %v8144
      %s8154 = scalar_lea.vmem %s292, 3776
      %v8155 = vld [vmem:[%s8154] sm:$0xff]
      %v8156 = vld [vmem:[%s8154 + $0x8] sm:$0xff]
      %v8157 = vld [vmem:[%s8154 + $0x10] sm:$0xff]
      %v8158 = vld [vmem:[%s8154 + $0x18] sm:$0xff]
      %v8159 = vld [vmem:[%s8154 + $0x20] sm:$0xff]
      %v8160 = vld [vmem:[%s8154 + $0x28] sm:$0xff]
      %v8161 = vld [vmem:[%s8154 + $0x30] sm:$0xff]
      %v8162 = vld [vmem:[%s8154 + $0x38] sm:$0xff]
      %v8163 = vrot.slane %v7499, 2
      %v8164 = vsel %vm654, %v7792, %v8163
      %v8165 = vsel %vm416, %v8164, 0
      %8167 = vmatprep.subr.mxu0 0.0
      %8168 = vmatpush1.msra.mxu0 0.0
      %8169 = vmatprep.subr.mxu0 0.0
      %8170 = vmatpush1.msra.mxu0 0.0
      %8171 = vmatprep.subr.mxu0 0.0
      %8172 = vmatpush1.msra.mxu0 0.0
      %8173 = vmatprep.subr.mxu0 0.0
      %8174 = vmatpush1.msra.mxu0 0.0
      %8175 = vmatprep.subr.mxu0 0.0
      %8176 = vmatpush1.msra.mxu0 0.0
      %8177 = vmatprep.subr.mxu0 0.0
      %8178 = vmatpush1.msra.mxu0 0.0
      %8179 = vmatprep.subr.mxu0 0.0
      %8180 = vmatpush1.msra.mxu0 0.0
      %8181 = vmatprep.subr.mxu0 0.0
      %8182 = vmatpush1.msra.mxu0 0.0
      %8183 = vmatprep.subr.mxu0 0.0
      %8184 = vmatpush1.msra.mxu0 %v8162
      %8185 = vmatprep.subr.mxu0 0.0
      %8186 = vmatpush1.msra.mxu0 %v8161
      %8187 = vmatprep.subr.mxu0 0.0
      %8188 = vmatpush1.msra.mxu0 %v8160
      %8189 = vmatprep.subr.mxu0 0.0
      %8190 = vmatpush1.msra.mxu0 %v8159
      %8191 = vmatprep.subr.mxu0 0.0
      %8192 = vmatpush1.msra.mxu0 %v8158
      %8193 = vmatprep.subr.mxu0 0.0
      %8194 = vmatpush1.msra.mxu0 %v8157
      %8195 = vmatprep.subr.mxu0 0.0
      %8196 = vmatpush1.msra.mxu0 %v8156
      %8197 = vmatprep.subr.mxu0 0.0
      %8198 = vmatpush1.msra.mxu0 %v8155
      %8199 = vmatprep.subr.mxu0 0.0
      %8200 = vmatpush2.msra.mxu0 0.0
      %8201 = vmatprep.subr.mxu0 0.0
      %8202 = vmatpush2.msra.mxu0 0.0
      %8203 = vmatprep.subr.mxu0 0.0
      %8204 = vmatpush2.msra.mxu0 0.0
      %8205 = vmatprep.subr.mxu0 0.0
      %8206 = vmatpush2.msra.mxu0 0.0
      %8207 = vmatprep.subr.mxu0 0.0
      %8208 = vmatpush2.msra.mxu0 0.0
      %8209 = vmatprep.subr.mxu0 0.0
      %8210 = vmatpush2.msra.mxu0 0.0
      %8211 = vmatprep.subr.mxu0 0.0
      %8212 = vmatpush2.msra.mxu0 0.0
      %8213 = vmatprep.subr.mxu0 0.0
      %8214 = vmatpush2.msra.mxu0 0.0
      %8215 = vmatprep.subr.mxu0 0.0
      %8216 = vmatpush2.msra.mxu0 0.0
      %8217 = vmatprep.subr.mxu0 0.0
      %8218 = vmatpush2.msra.mxu0 0.0
      %8219 = vmatprep.subr.mxu0 0.0
      %8220 = vmatpush2.msra.mxu0 0.0
      %8221 = vmatprep.subr.mxu0 0.0
      %8222 = vmatpush2.msra.mxu0 0.0
      %8223 = vmatprep.subr.mxu0 0.0
      %8224 = vmatpush2.msra.mxu0 0.0
      %8225 = vmatprep.subr.mxu0 0.0
      %8226 = vmatpush2.msra.mxu0 0.0
      %8227 = vmatprep.subr.mxu0 0.0
      %8228 = vmatpush2.msra.mxu0 0.0
      %8229 = vmatprep.subr.mxu0 0.0
      %8230 = vmatpush2.msra.mxu0 0.0
      %8231 = vmatprep.mubr.f32.mxu0 0.0
      %8232 = vmatmul.mubr.f32.gmra.mxu0 %v7796
      %v8233 = vpop.f32.mrf.mxu0
      %v8234 = vadd.f32 0.0, %v8233
      %v8235 = vpop.f32.mrf.mxu0
      %8236 = vmatprep.mubr.f32.mxu0 0.0
      %8237 = vmatmul.mubr.f32.gmra.mxu0 %v7798
      %v8238 = vpop.f32.mrf.mxu0
      %v8239 = vadd.f32 0.0, %v8238
      %v8240 = vpop.f32.mrf.mxu0
      %8241 = vmatprep.mubr.f32.mxu0 0.0
      %8242 = vmatmul.mubr.f32.gmra.mxu0 %v7800
      %v8243 = vpop.f32.mrf.mxu0
      %v8244 = vadd.f32 0.0, %v8243
      %v8245 = vpop.f32.mrf.mxu0
      %8246 = vmatprep.mubr.f32.mxu0 0.0
      %8247 = vmatmul.mubr.f32.gmra.mxu0 %v7802
      %v8248 = vpop.f32.mrf.mxu0
      %v8249 = vadd.f32 0.0, %v8248
      %v8250 = vpop.f32.mrf.mxu0
      %8251 = vmatprep.mubr.f32.mxu0 0.0
      %8252 = vmatmul.mubr.f32.gmra.mxu0 %v7804
      %v8253 = vpop.f32.mrf.mxu0
      %v8254 = vadd.f32 0.0, %v8253
      %v8255 = vpop.f32.mrf.mxu0
      %8256 = vmatprep.mubr.f32.mxu0 0.0
      %8257 = vmatmul.mubr.f32.gmra.mxu0 %v7806
      %v8258 = vpop.f32.mrf.mxu0
      %v8259 = vadd.f32 0.0, %v8258
      %v8260 = vpop.f32.mrf.mxu0
      %8261 = vmatprep.mubr.f32.mxu0 0.0
      %8262 = vmatmul.mubr.f32.gmra.mxu0 %v8165
      %v8263 = vpop.f32.mrf.mxu0
      %v8264 = vadd.f32 0.0, %v8263
      %v8265 = vpop.f32.mrf.mxu0
      %8266 = vdwg.mxu0
      %v8267 = vadd.f32 %v8147, %v8234
      %v8268 = vadd.f32 %v8148, %v8239
      %v8269 = vadd.f32 %v8149, %v8244
      %v8270 = vadd.f32 %v8150, %v8249
      %v8271 = vadd.f32 %v8151, %v8254
      %v8272 = vadd.f32 %v8152, %v8259
      %v8273 = vadd.f32 %v8153, %v8264
      %s8274 = scalar_lea.vmem %s292, 3840
      %v8275 = vld [vmem:[%s8274] sm:$0xff]
      %v8276 = vld [vmem:[%s8274 + $0x8] sm:$0xff]
      %v8277 = vld [vmem:[%s8274 + $0x10] sm:$0xff]
      %v8278 = vld [vmem:[%s8274 + $0x18] sm:$0xff]
      %v8279 = vld [vmem:[%s8274 + $0x20] sm:$0xff]
      %v8280 = vld [vmem:[%s8274 + $0x28] sm:$0xff]
      %v8281 = vld [vmem:[%s8274 + $0x30] sm:$0xff]
      %v8282 = vld [vmem:[%s8274 + $0x38] sm:$0xff]
      %v8283 = vsel %vm416, %v7499, 0
      %8285 = vmatprep.subr.mxu0 0.0
      %8286 = vmatpush1.msra.mxu0 0.0
      %8287 = vmatprep.subr.mxu0 0.0
      %8288 = vmatpush1.msra.mxu0 0.0
      %8289 = vmatprep.subr.mxu0 0.0
      %8290 = vmatpush1.msra.mxu0 0.0
      %8291 = vmatprep.subr.mxu0 0.0
      %8292 = vmatpush1.msra.mxu0 0.0
      %8293 = vmatprep.subr.mxu0 0.0
      %8294 = vmatpush1.msra.mxu0 0.0
      %8295 = vmatprep.subr.mxu0 0.0
      %8296 = vmatpush1.msra.mxu0 0.0
      %8297 = vmatprep.subr.mxu0 0.0
      %8298 = vmatpush1.msra.mxu0 0.0
      %8299 = vmatprep.subr.mxu0 0.0
      %8300 = vmatpush1.msra.mxu0 0.0
      %8301 = vmatprep.subr.mxu0 0.0
      %8302 = vmatpush1.msra.mxu0 %v8282
      %8303 = vmatprep.subr.mxu0 0.0
      %8304 = vmatpush1.msra.mxu0 %v8281
      %8305 = vmatprep.subr.mxu0 0.0
      %8306 = vmatpush1.msra.mxu0 %v8280
      %8307 = vmatprep.subr.mxu0 0.0
      %8308 = vmatpush1.msra.mxu0 %v8279
      %8309 = vmatprep.subr.mxu0 0.0
      %8310 = vmatpush1.msra.mxu0 %v8278
      %8311 = vmatprep.subr.mxu0 0.0
      %8312 = vmatpush1.msra.mxu0 %v8277
      %8313 = vmatprep.subr.mxu0 0.0
      %8314 = vmatpush1.msra.mxu0 %v8276
      %8315 = vmatprep.subr.mxu0 0.0
      %8316 = vmatpush1.msra.mxu0 %v8275
      %8317 = vmatprep.subr.mxu0 0.0
      %8318 = vmatpush2.msra.mxu0 0.0
      %8319 = vmatprep.subr.mxu0 0.0
      %8320 = vmatpush2.msra.mxu0 0.0
      %8321 = vmatprep.subr.mxu0 0.0
      %8322 = vmatpush2.msra.mxu0 0.0
      %8323 = vmatprep.subr.mxu0 0.0
      %8324 = vmatpush2.msra.mxu0 0.0
      %8325 = vmatprep.subr.mxu0 0.0
      %8326 = vmatpush2.msra.mxu0 0.0
      %8327 = vmatprep.subr.mxu0 0.0
      %8328 = vmatpush2.msra.mxu0 0.0
      %8329 = vmatprep.subr.mxu0 0.0
      %8330 = vmatpush2.msra.mxu0 0.0
      %8331 = vmatprep.subr.mxu0 0.0
      %8332 = vmatpush2.msra.mxu0 0.0
      %8333 = vmatprep.subr.mxu0 0.0
      %8334 = vmatpush2.msra.mxu0 0.0
      %8335 = vmatprep.subr.mxu0 0.0
      %8336 = vmatpush2.msra.mxu0 0.0
      %8337 = vmatprep.subr.mxu0 0.0
      %8338 = vmatpush2.msra.mxu0 0.0
      %8339 = vmatprep.subr.mxu0 0.0
      %8340 = vmatpush2.msra.mxu0 0.0
      %8341 = vmatprep.subr.mxu0 0.0
      %8342 = vmatpush2.msra.mxu0 0.0
      %8343 = vmatprep.subr.mxu0 0.0
      %8344 = vmatpush2.msra.mxu0 0.0
      %8345 = vmatprep.subr.mxu0 0.0
      %8346 = vmatpush2.msra.mxu0 0.0
      %8347 = vmatprep.subr.mxu0 0.0
      %8348 = vmatpush2.msra.mxu0 0.0
      %8349 = vmatprep.mubr.f32.mxu0 0.0
      %8350 = vmatmul.mubr.f32.gmra.mxu0 %v7660
      %v8351 = vpop.f32.mrf.mxu0
      %v8352 = vadd.f32 0.0, %v8351
      %v8353 = vpop.f32.mrf.mxu0
      %8354 = vmatprep.mubr.f32.mxu0 0.0
      %8355 = vmatmul.mubr.f32.gmra.mxu0 %v7662
      %v8356 = vpop.f32.mrf.mxu0
      %v8357 = vadd.f32 0.0, %v8356
      %v8358 = vpop.f32.mrf.mxu0
      %8359 = vmatprep.mubr.f32.mxu0 0.0
      %8360 = vmatmul.mubr.f32.gmra.mxu0 %v7664
      %v8361 = vpop.f32.mrf.mxu0
      %v8362 = vadd.f32 0.0, %v8361
      %v8363 = vpop.f32.mrf.mxu0
      %8364 = vmatprep.mubr.f32.mxu0 0.0
      %8365 = vmatmul.mubr.f32.gmra.mxu0 %v7666
      %v8366 = vpop.f32.mrf.mxu0
      %v8367 = vadd.f32 0.0, %v8366
      %v8368 = vpop.f32.mrf.mxu0
      %8369 = vmatprep.mubr.f32.mxu0 0.0
      %8370 = vmatmul.mubr.f32.gmra.mxu0 %v7668
      %v8371 = vpop.f32.mrf.mxu0
      %v8372 = vadd.f32 0.0, %v8371
      %v8373 = vpop.f32.mrf.mxu0
      %8374 = vmatprep.mubr.f32.mxu0 0.0
      %8375 = vmatmul.mubr.f32.gmra.mxu0 %v7924
      %v8376 = vpop.f32.mrf.mxu0
      %v8377 = vadd.f32 0.0, %v8376
      %v8378 = vpop.f32.mrf.mxu0
      %8379 = vmatprep.mubr.f32.mxu0 0.0
      %8380 = vmatmul.mubr.f32.gmra.mxu0 %v8283
      %v8381 = vpop.f32.mrf.mxu0
      %v8382 = vadd.f32 0.0, %v8381
      %v8383 = vpop.f32.mrf.mxu0
      %8384 = vdwg.mxu0
      %v8385 = vadd.f32 %v8267, %v8352
      %v8386 = vadd.f32 %v8268, %v8357
      %v8387 = vadd.f32 %v8269, %v8362
      %v8388 = vadd.f32 %v8270, %v8367
      %v8389 = vadd.f32 %v8271, %v8372
      %v8390 = vadd.f32 %v8272, %v8377
      %v8391 = vadd.f32 %v8273, %v8382
      %s8392 = scalar_lea.vmem %s292, 3904
      %v8393 = vld [vmem:[%s8392] sm:$0xff]
      %v8394 = vld [vmem:[%s8392 + $0x8] sm:$0xff]
      %v8395 = vld [vmem:[%s8392 + $0x10] sm:$0xff]
      %v8396 = vld [vmem:[%s8392 + $0x18] sm:$0xff]
      %v8397 = vld [vmem:[%s8392 + $0x20] sm:$0xff]
      %v8398 = vld [vmem:[%s8392 + $0x28] sm:$0xff]
      %v8399 = vld [vmem:[%s8392 + $0x30] sm:$0xff]
      %v8400 = vld [vmem:[%s8392 + $0x38] sm:$0xff]
      %v8402 = vrot.slane %v7500, 1
      %v8403 = vsel %vm400, %v8043, %v8402
      %v8404 = vsel %vm416, %v8403, 0
      %8406 = vmatprep.subr.mxu0 0.0
      %8407 = vmatpush1.msra.mxu0 0.0
      %8408 = vmatprep.subr.mxu0 0.0
      %8409 = vmatpush1.msra.mxu0 0.0
      %8410 = vmatprep.subr.mxu0 0.0
      %8411 = vmatpush1.msra.mxu0 0.0
      %8412 = vmatprep.subr.mxu0 0.0
      %8413 = vmatpush1.msra.mxu0 0.0
      %8414 = vmatprep.subr.mxu0 0.0
      %8415 = vmatpush1.msra.mxu0 0.0
      %8416 = vmatprep.subr.mxu0 0.0
      %8417 = vmatpush1.msra.mxu0 0.0
      %8418 = vmatprep.subr.mxu0 0.0
      %8419 = vmatpush1.msra.mxu0 0.0
      %8420 = vmatprep.subr.mxu0 0.0
      %8421 = vmatpush1.msra.mxu0 0.0
      %8422 = vmatprep.subr.mxu0 0.0
      %8423 = vmatpush1.msra.mxu0 %v8400
      %8424 = vmatprep.subr.mxu0 0.0
      %8425 = vmatpush1.msra.mxu0 %v8399
      %8426 = vmatprep.subr.mxu0 0.0
      %8427 = vmatpush1.msra.mxu0 %v8398
      %8428 = vmatprep.subr.mxu0 0.0
      %8429 = vmatpush1.msra.mxu0 %v8397
      %8430 = vmatprep.subr.mxu0 0.0
      %8431 = vmatpush1.msra.mxu0 %v8396
      %8432 = vmatprep.subr.mxu0 0.0
      %8433 = vmatpush1.msra.mxu0 %v8395
      %8434 = vmatprep.subr.mxu0 0.0
      %8435 = vmatpush1.msra.mxu0 %v8394
      %8436 = vmatprep.subr.mxu0 0.0
      %8437 = vmatpush1.msra.mxu0 %v8393
      %8438 = vmatprep.subr.mxu0 0.0
      %8439 = vmatpush2.msra.mxu0 0.0
      %8440 = vmatprep.subr.mxu0 0.0
      %8441 = vmatpush2.msra.mxu0 0.0
      %8442 = vmatprep.subr.mxu0 0.0
      %8443 = vmatpush2.msra.mxu0 0.0
      %8444 = vmatprep.subr.mxu0 0.0
      %8445 = vmatpush2.msra.mxu0 0.0
      %8446 = vmatprep.subr.mxu0 0.0
      %8447 = vmatpush2.msra.mxu0 0.0
      %8448 = vmatprep.subr.mxu0 0.0
      %8449 = vmatpush2.msra.mxu0 0.0
      %8450 = vmatprep.subr.mxu0 0.0
      %8451 = vmatpush2.msra.mxu0 0.0
      %8452 = vmatprep.subr.mxu0 0.0
      %8453 = vmatpush2.msra.mxu0 0.0
      %8454 = vmatprep.subr.mxu0 0.0
      %8455 = vmatpush2.msra.mxu0 0.0
      %8456 = vmatprep.subr.mxu0 0.0
      %8457 = vmatpush2.msra.mxu0 0.0
      %8458 = vmatprep.subr.mxu0 0.0
      %8459 = vmatpush2.msra.mxu0 0.0
      %8460 = vmatprep.subr.mxu0 0.0
      %8461 = vmatpush2.msra.mxu0 0.0
      %8462 = vmatprep.subr.mxu0 0.0
      %8463 = vmatpush2.msra.mxu0 0.0
      %8464 = vmatprep.subr.mxu0 0.0
      %8465 = vmatpush2.msra.mxu0 0.0
      %8466 = vmatprep.subr.mxu0 0.0
      %8467 = vmatpush2.msra.mxu0 0.0
      %8468 = vmatprep.subr.mxu0 0.0
      %8469 = vmatpush2.msra.mxu0 0.0
      %8470 = vmatprep.mubr.f32.mxu0 0.0
      %8471 = vmatmul.mubr.f32.gmra.mxu0 %v7546
      %v8472 = vpop.f32.mrf.mxu0
      %v8473 = vadd.f32 0.0, %v8472
      %v8474 = vpop.f32.mrf.mxu0
      %8475 = vmatprep.mubr.f32.mxu0 0.0
      %8476 = vmatmul.mubr.f32.gmra.mxu0 %v7548
      %v8477 = vpop.f32.mrf.mxu0
      %v8478 = vadd.f32 0.0, %v8477
      %v8479 = vpop.f32.mrf.mxu0
      %8480 = vmatprep.mubr.f32.mxu0 0.0
      %8481 = vmatmul.mubr.f32.gmra.mxu0 %v7550
      %v8482 = vpop.f32.mrf.mxu0
      %v8483 = vadd.f32 0.0, %v8482
      %v8484 = vpop.f32.mrf.mxu0
      %8485 = vmatprep.mubr.f32.mxu0 0.0
      %8486 = vmatmul.mubr.f32.gmra.mxu0 %v7552
      %v8487 = vpop.f32.mrf.mxu0
      %v8488 = vadd.f32 0.0, %v8487
      %v8489 = vpop.f32.mrf.mxu0
      %8490 = vmatprep.mubr.f32.mxu0 0.0
      %8491 = vmatmul.mubr.f32.gmra.mxu0 %v7554
      %v8492 = vpop.f32.mrf.mxu0
      %v8493 = vadd.f32 0.0, %v8492
      %v8494 = vpop.f32.mrf.mxu0
      %8495 = vmatprep.mubr.f32.mxu0 0.0
      %8496 = vmatmul.mubr.f32.gmra.mxu0 %v8045
      %v8497 = vpop.f32.mrf.mxu0
      %v8498 = vadd.f32 0.0, %v8497
      %v8499 = vpop.f32.mrf.mxu0
      %8500 = vmatprep.mubr.f32.mxu0 0.0
      %8501 = vmatmul.mubr.f32.gmra.mxu0 %v8404
      %v8502 = vpop.f32.mrf.mxu0
      %v8503 = vadd.f32 0.0, %v8502
      %v8504 = vpop.f32.mrf.mxu0
      %8505 = vdwg.mxu0
      %v8506 = vadd.f32 %v8385, %v8473
      %v8507 = vadd.f32 %v8386, %v8478
      %v8508 = vadd.f32 %v8387, %v8483
      %v8509 = vadd.f32 %v8388, %v8488
      %v8510 = vadd.f32 %v8389, %v8493
      %v8511 = vadd.f32 %v8390, %v8498
      %v8512 = vadd.f32 %v8391, %v8503
      %s8513 = scalar_lea.vmem %s292, 3968
      %v8514 = vld [vmem:[%s8513] sm:$0xff]
      %v8515 = vld [vmem:[%s8513 + $0x8] sm:$0xff]
      %v8516 = vld [vmem:[%s8513 + $0x10] sm:$0xff]
      %v8517 = vld [vmem:[%s8513 + $0x18] sm:$0xff]
      %v8518 = vld [vmem:[%s8513 + $0x20] sm:$0xff]
      %v8519 = vld [vmem:[%s8513 + $0x28] sm:$0xff]
      %v8520 = vld [vmem:[%s8513 + $0x30] sm:$0xff]
      %v8521 = vld [vmem:[%s8513 + $0x38] sm:$0xff]
      %v8522 = vrot.slane %v7500, 2
      %v8523 = vsel %vm654, %v8163, %v8522
      %v8524 = vsel %vm416, %v8523, 0
      %8526 = vmatprep.subr.mxu0 0.0
      %8527 = vmatpush1.msra.mxu0 0.0
      %8528 = vmatprep.subr.mxu0 0.0
      %8529 = vmatpush1.msra.mxu0 0.0
      %8530 = vmatprep.subr.mxu0 0.0
      %8531 = vmatpush1.msra.mxu0 0.0
      %8532 = vmatprep.subr.mxu0 0.0
      %8533 = vmatpush1.msra.mxu0 0.0
      %8534 = vmatprep.subr.mxu0 0.0
      %8535 = vmatpush1.msra.mxu0 0.0
      %8536 = vmatprep.subr.mxu0 0.0
      %8537 = vmatpush1.msra.mxu0 0.0
      %8538 = vmatprep.subr.mxu0 0.0
      %8539 = vmatpush1.msra.mxu0 0.0
      %8540 = vmatprep.subr.mxu0 0.0
      %8541 = vmatpush1.msra.mxu0 0.0
      %8542 = vmatprep.subr.mxu0 0.0
      %8543 = vmatpush1.msra.mxu0 %v8521
      %8544 = vmatprep.subr.mxu0 0.0
      %8545 = vmatpush1.msra.mxu0 %v8520
      %8546 = vmatprep.subr.mxu0 0.0
      %8547 = vmatpush1.msra.mxu0 %v8519
      %8548 = vmatprep.subr.mxu0 0.0
      %8549 = vmatpush1.msra.mxu0 %v8518
      %8550 = vmatprep.subr.mxu0 0.0
      %8551 = vmatpush1.msra.mxu0 %v8517
      %8552 = vmatprep.subr.mxu0 0.0
      %8553 = vmatpush1.msra.mxu0 %v8516
      %8554 = vmatprep.subr.mxu0 0.0
      %8555 = vmatpush1.msra.mxu0 %v8515
      %8556 = vmatprep.subr.mxu0 0.0
      %8557 = vmatpush1.msra.mxu0 %v8514
      %8558 = vmatprep.subr.mxu0 0.0
      %8559 = vmatpush2.msra.mxu0 0.0
      %8560 = vmatprep.subr.mxu0 0.0
      %8561 = vmatpush2.msra.mxu0 0.0
      %8562 = vmatprep.subr.mxu0 0.0
      %8563 = vmatpush2.msra.mxu0 0.0
      %8564 = vmatprep.subr.mxu0 0.0
      %8565 = vmatpush2.msra.mxu0 0.0
      %8566 = vmatprep.subr.mxu0 0.0
      %8567 = vmatpush2.msra.mxu0 0.0
      %8568 = vmatprep.subr.mxu0 0.0
      %8569 = vmatpush2.msra.mxu0 0.0
      %8570 = vmatprep.subr.mxu0 0.0
      %8571 = vmatpush2.msra.mxu0 0.0
      %8572 = vmatprep.subr.mxu0 0.0
      %8573 = vmatpush2.msra.mxu0 0.0
      %8574 = vmatprep.subr.mxu0 0.0
      %8575 = vmatpush2.msra.mxu0 0.0
      %8576 = vmatprep.subr.mxu0 0.0
      %8577 = vmatpush2.msra.mxu0 0.0
      %8578 = vmatprep.subr.mxu0 0.0
      %8579 = vmatpush2.msra.mxu0 0.0
      %8580 = vmatprep.subr.mxu0 0.0
      %8581 = vmatpush2.msra.mxu0 0.0
      %8582 = vmatprep.subr.mxu0 0.0
      %8583 = vmatpush2.msra.mxu0 0.0
      %8584 = vmatprep.subr.mxu0 0.0
      %8585 = vmatpush2.msra.mxu0 0.0
      %8586 = vmatprep.subr.mxu0 0.0
      %8587 = vmatpush2.msra.mxu0 0.0
      %8588 = vmatprep.subr.mxu0 0.0
      %8589 = vmatpush2.msra.mxu0 0.0
      %8590 = vmatprep.mubr.f32.mxu0 0.0
      %8591 = vmatmul.mubr.f32.gmra.mxu0 %v7798
      %v8592 = vpop.f32.mrf.mxu0
      %v8593 = vadd.f32 0.0, %v8592
      %v8594 = vpop.f32.mrf.mxu0
      %8595 = vmatprep.mubr.f32.mxu0 0.0
      %8596 = vmatmul.mubr.f32.gmra.mxu0 %v7800
      %v8597 = vpop.f32.mrf.mxu0
      %v8598 = vadd.f32 0.0, %v8597
      %v8599 = vpop.f32.mrf.mxu0
      %8600 = vmatprep.mubr.f32.mxu0 0.0
      %8601 = vmatmul.mubr.f32.gmra.mxu0 %v7802
      %v8602 = vpop.f32.mrf.mxu0
      %v8603 = vadd.f32 0.0, %v8602
      %v8604 = vpop.f32.mrf.mxu0
      %8605 = vmatprep.mubr.f32.mxu0 0.0
      %8606 = vmatmul.mubr.f32.gmra.mxu0 %v7804
      %v8607 = vpop.f32.mrf.mxu0
      %v8608 = vadd.f32 0.0, %v8607
      %v8609 = vpop.f32.mrf.mxu0
      %8610 = vmatprep.mubr.f32.mxu0 0.0
      %8611 = vmatmul.mubr.f32.gmra.mxu0 %v7806
      %v8612 = vpop.f32.mrf.mxu0
      %v8613 = vadd.f32 0.0, %v8612
      %v8614 = vpop.f32.mrf.mxu0
      %8615 = vmatprep.mubr.f32.mxu0 0.0
      %8616 = vmatmul.mubr.f32.gmra.mxu0 %v8165
      %v8617 = vpop.f32.mrf.mxu0
      %v8618 = vadd.f32 0.0, %v8617
      %v8619 = vpop.f32.mrf.mxu0
      %8620 = vmatprep.mubr.f32.mxu0 0.0
      %8621 = vmatmul.mubr.f32.gmra.mxu0 %v8524
      %v8622 = vpop.f32.mrf.mxu0
      %v8623 = vadd.f32 0.0, %v8622
      %v8624 = vpop.f32.mrf.mxu0
      %8625 = vdwg.mxu0
      %v8626 = vadd.f32 %v8506, %v8593
      %v8627 = vadd.f32 %v8507, %v8598
      %v8628 = vadd.f32 %v8508, %v8603
      %v8629 = vadd.f32 %v8509, %v8608
      %v8630 = vadd.f32 %v8510, %v8613
      %v8631 = vadd.f32 %v8511, %v8618
      %v8632 = vadd.f32 %v8512, %v8623
      %s8633 = scalar_lea.vmem %s292, 4032
      %v8634 = vld [vmem:[%s8633] sm:$0xff]
      %v8635 = vld [vmem:[%s8633 + $0x8] sm:$0xff]
      %v8636 = vld [vmem:[%s8633 + $0x10] sm:$0xff]
      %v8637 = vld [vmem:[%s8633 + $0x18] sm:$0xff]
      %v8638 = vld [vmem:[%s8633 + $0x20] sm:$0xff]
      %v8639 = vld [vmem:[%s8633 + $0x28] sm:$0xff]
      %v8640 = vld [vmem:[%s8633 + $0x30] sm:$0xff]
      %v8641 = vld [vmem:[%s8633 + $0x38] sm:$0xff]
      %s8642 = scalar_lea.vmem %s292, 4096
      %v8643 = vld [vmem:[%s8642] sm:$0xff]
      %v8644 = vld [vmem:[%s8642 + $0x8] sm:$0xff]
      %v8645 = vld [vmem:[%s8642 + $0x10] sm:$0xff]
      %v8646 = vld [vmem:[%s8642 + $0x18] sm:$0xff]
      %v8647 = vld [vmem:[%s8642 + $0x20] sm:$0xff]
      %v8648 = vld [vmem:[%s8642 + $0x28] sm:$0xff]
      %v8649 = vld [vmem:[%s8642 + $0x30] sm:$0xff]
      %v8650 = vld [vmem:[%s8642 + $0x38] sm:$0xff]
      %8651 = vrot.lane.b32.xlu0 %v7529, 64
      %v8652 = vpop.permute.xlu0 %8651
      %8653 = vrot.lane.b32.xlu0 %v7531, 64
      %v8654 = vpop.permute.xlu0 %8653
      %8655 = vrot.lane.b32.xlu0 %v7533, 64
      %v8656 = vpop.permute.xlu0 %8655
      %8657 = vrot.lane.b32.xlu0 %v7535, 64
      %v8658 = vpop.permute.xlu0 %8657
      %8659 = vrot.lane.b32.xlu0 %v7537, 64
      %v8660 = vpop.permute.xlu0 %8659
      %8661 = vrot.lane.b32.xlu0 %v7539, 64
      %v8662 = vpop.permute.xlu0 %8661
      %8663 = vrot.lane.b32.xlu0 %v7541, 64
      %v8664 = vpop.permute.xlu0 %8663
      %v8665 = vsel %vm416, %v8652, 0
      %v8667 = vsel %vm416, %v8654, 0
      %v8669 = vsel %vm416, %v8656, 0
      %v8671 = vsel %vm416, %v8658, 0
      %v8673 = vsel %vm416, %v8660, 0
      %v8675 = vsel %vm416, %v8662, 0
      %v8677 = vsel %vm416, %v8664, 0
      %8679 = vmatprep.subr.mxu0 0.0
      %8680 = vmatpush1.msra.mxu0 0.0
      %8681 = vmatprep.subr.mxu0 0.0
      %8682 = vmatpush1.msra.mxu0 0.0
      %8683 = vmatprep.subr.mxu0 0.0
      %8684 = vmatpush1.msra.mxu0 0.0
      %8685 = vmatprep.subr.mxu0 0.0
      %8686 = vmatpush1.msra.mxu0 0.0
      %8687 = vmatprep.subr.mxu0 0.0
      %8688 = vmatpush1.msra.mxu0 0.0
      %8689 = vmatprep.subr.mxu0 0.0
      %8690 = vmatpush1.msra.mxu0 0.0
      %8691 = vmatprep.subr.mxu0 0.0
      %8692 = vmatpush1.msra.mxu0 0.0
      %8693 = vmatprep.subr.mxu0 0.0
      %8694 = vmatpush1.msra.mxu0 0.0
      %8695 = vmatprep.subr.mxu0 0.0
      %8696 = vmatpush1.msra.mxu0 %v8650
      %8697 = vmatprep.subr.mxu0 0.0
      %8698 = vmatpush1.msra.mxu0 %v8649
      %8699 = vmatprep.subr.mxu0 0.0
      %8700 = vmatpush1.msra.mxu0 %v8648
      %8701 = vmatprep.subr.mxu0 0.0
      %8702 = vmatpush1.msra.mxu0 %v8647
      %8703 = vmatprep.subr.mxu0 0.0
      %8704 = vmatpush1.msra.mxu0 %v8646
      %8705 = vmatprep.subr.mxu0 0.0
      %8706 = vmatpush1.msra.mxu0 %v8645
      %8707 = vmatprep.subr.mxu0 0.0
      %8708 = vmatpush1.msra.mxu0 %v8644
      %8709 = vmatprep.subr.mxu0 0.0
      %8710 = vmatpush1.msra.mxu0 %v8643
      %8711 = vmatprep.subr.mxu0 0.0
      %8712 = vmatpush2.msra.mxu0 0.0
      %8713 = vmatprep.subr.mxu0 0.0
      %8714 = vmatpush2.msra.mxu0 0.0
      %8715 = vmatprep.subr.mxu0 0.0
      %8716 = vmatpush2.msra.mxu0 0.0
      %8717 = vmatprep.subr.mxu0 0.0
      %8718 = vmatpush2.msra.mxu0 0.0
      %8719 = vmatprep.subr.mxu0 0.0
      %8720 = vmatpush2.msra.mxu0 0.0
      %8721 = vmatprep.subr.mxu0 0.0
      %8722 = vmatpush2.msra.mxu0 0.0
      %8723 = vmatprep.subr.mxu0 0.0
      %8724 = vmatpush2.msra.mxu0 0.0
      %8725 = vmatprep.subr.mxu0 0.0
      %8726 = vmatpush2.msra.mxu0 0.0
      %8727 = vmatprep.subr.mxu0 0.0
      %8728 = vmatpush2.msra.mxu0 0.0
      %8729 = vmatprep.subr.mxu0 0.0
      %8730 = vmatpush2.msra.mxu0 0.0
      %8731 = vmatprep.subr.mxu0 0.0
      %8732 = vmatpush2.msra.mxu0 0.0
      %8733 = vmatprep.subr.mxu0 0.0
      %8734 = vmatpush2.msra.mxu0 0.0
      %8735 = vmatprep.subr.mxu0 0.0
      %8736 = vmatpush2.msra.mxu0 0.0
      %8737 = vmatprep.subr.mxu0 0.0
      %8738 = vmatpush2.msra.mxu0 0.0
      %8739 = vmatprep.subr.mxu0 0.0
      %8740 = vmatpush2.msra.mxu0 0.0
      %8741 = vmatprep.subr.mxu0 0.0
      %8742 = vmatpush2.msra.mxu0 0.0
      %8743 = vmatprep.mubr.f32.mxu0 0.0
      %8744 = vmatmul.mubr.f32.gmra.mxu0 %v8665
      %v8745 = vpop.f32.mrf.mxu0
      %v8746 = vadd.f32 0.0, %v8745
      %v8747 = vpop.f32.mrf.mxu0
      %8748 = vmatprep.mubr.f32.mxu0 0.0
      %8749 = vmatmul.mubr.f32.gmra.mxu0 %v8667
      %v8750 = vpop.f32.mrf.mxu0
      %v8751 = vadd.f32 0.0, %v8750
      %v8752 = vpop.f32.mrf.mxu0
      %8753 = vmatprep.mubr.f32.mxu0 0.0
      %8754 = vmatmul.mubr.f32.gmra.mxu0 %v8669
      %v8755 = vpop.f32.mrf.mxu0
      %v8756 = vadd.f32 0.0, %v8755
      %v8757 = vpop.f32.mrf.mxu0
      %8758 = vmatprep.mubr.f32.mxu0 0.0
      %8759 = vmatmul.mubr.f32.gmra.mxu0 %v8671
      %v8760 = vpop.f32.mrf.mxu0
      %v8761 = vadd.f32 0.0, %v8760
      %v8762 = vpop.f32.mrf.mxu0
      %8763 = vmatprep.mubr.f32.mxu0 0.0
      %8764 = vmatmul.mubr.f32.gmra.mxu0 %v8673
      %v8765 = vpop.f32.mrf.mxu0
      %v8766 = vadd.f32 0.0, %v8765
      %v8767 = vpop.f32.mrf.mxu0
      %8768 = vmatprep.mubr.f32.mxu0 0.0
      %8769 = vmatmul.mubr.f32.gmra.mxu0 %v8675
      %v8770 = vpop.f32.mrf.mxu0
      %v8771 = vadd.f32 0.0, %v8770
      %v8772 = vpop.f32.mrf.mxu0
      %8773 = vmatprep.mubr.f32.mxu0 0.0
      %8774 = vmatmul.mubr.f32.gmra.mxu0 %v8677
      %v8775 = vpop.f32.mrf.mxu0
      %v8776 = vadd.f32 0.0, %v8775
      %v8777 = vpop.f32.mrf.mxu0
      %8778 = vdwg.mxu0
      %8779 = vrot.lane.b32.xlu0 %v7491, 64
      %v8780 = vpop.permute.xlu0 %8779
      %8781 = vrot.lane.b32.xlu0 %v7492, 64
      %v8782 = vpop.permute.xlu0 %8781
      %8783 = vrot.lane.b32.xlu0 %v7493, 64
      %v8784 = vpop.permute.xlu0 %8783
      %8785 = vrot.lane.b32.xlu0 %v7494, 64
      %v8786 = vpop.permute.xlu0 %8785
      %8787 = vrot.lane.b32.xlu0 %v7495, 64
      %v8788 = vpop.permute.xlu0 %8787
      %8789 = vrot.lane.b32.xlu0 %v7496, 64
      %v8790 = vpop.permute.xlu0 %8789
      %8791 = vrot.lane.b32.xlu0 %v7497, 64
      %v8792 = vpop.permute.xlu0 %8791
      %v8793 = vsel %vm416, %v8780, 0
      %v8795 = vsel %vm416, %v8782, 0
      %v8797 = vsel %vm416, %v8784, 0
      %v8799 = vsel %vm416, %v8786, 0
      %v8801 = vsel %vm416, %v8788, 0
      %v8803 = vsel %vm416, %v8790, 0
      %v8805 = vsel %vm416, %v8792, 0
      %8807 = vmatprep.subr.mxu0 0.0
      %8808 = vmatpush1.msra.mxu0 0.0
      %8809 = vmatprep.subr.mxu0 0.0
      %8810 = vmatpush1.msra.mxu0 0.0
      %8811 = vmatprep.subr.mxu0 0.0
      %8812 = vmatpush1.msra.mxu0 0.0
      %8813 = vmatprep.subr.mxu0 0.0
      %8814 = vmatpush1.msra.mxu0 0.0
      %8815 = vmatprep.subr.mxu0 0.0
      %8816 = vmatpush1.msra.mxu0 0.0
      %8817 = vmatprep.subr.mxu0 0.0
      %8818 = vmatpush1.msra.mxu0 0.0
      %8819 = vmatprep.subr.mxu0 0.0
      %8820 = vmatpush1.msra.mxu0 0.0
      %8821 = vmatprep.subr.mxu0 0.0
      %8822 = vmatpush1.msra.mxu0 0.0
      %8823 = vmatprep.subr.mxu0 0.0
      %8824 = vmatpush1.msra.mxu0 %v8641
      %8825 = vmatprep.subr.mxu0 0.0
      %8826 = vmatpush1.msra.mxu0 %v8640
      %8827 = vmatprep.subr.mxu0 0.0
      %8828 = vmatpush1.msra.mxu0 %v8639
      %8829 = vmatprep.subr.mxu0 0.0
      %8830 = vmatpush1.msra.mxu0 %v8638
      %8831 = vmatprep.subr.mxu0 0.0
      %8832 = vmatpush1.msra.mxu0 %v8637
      %8833 = vmatprep.subr.mxu0 0.0
      %8834 = vmatpush1.msra.mxu0 %v8636
      %8835 = vmatprep.subr.mxu0 0.0
      %8836 = vmatpush1.msra.mxu0 %v8635
      %8837 = vmatprep.subr.mxu0 0.0
      %8838 = vmatpush1.msra.mxu0 %v8634
      %8839 = vmatprep.subr.mxu0 0.0
      %8840 = vmatpush2.msra.mxu0 0.0
      %8841 = vmatprep.subr.mxu0 0.0
      %8842 = vmatpush2.msra.mxu0 0.0
      %8843 = vmatprep.subr.mxu0 0.0
      %8844 = vmatpush2.msra.mxu0 0.0
      %8845 = vmatprep.subr.mxu0 0.0
      %8846 = vmatpush2.msra.mxu0 0.0
      %8847 = vmatprep.subr.mxu0 0.0
      %8848 = vmatpush2.msra.mxu0 0.0
      %8849 = vmatprep.subr.mxu0 0.0
      %8850 = vmatpush2.msra.mxu0 0.0
      %8851 = vmatprep.subr.mxu0 0.0
      %8852 = vmatpush2.msra.mxu0 0.0
      %8853 = vmatprep.subr.mxu0 0.0
      %8854 = vmatpush2.msra.mxu0 0.0
      %8855 = vmatprep.subr.mxu0 0.0
      %8856 = vmatpush2.msra.mxu0 0.0
      %8857 = vmatprep.subr.mxu0 0.0
      %8858 = vmatpush2.msra.mxu0 0.0
      %8859 = vmatprep.subr.mxu0 0.0
      %8860 = vmatpush2.msra.mxu0 0.0
      %8861 = vmatprep.subr.mxu0 0.0
      %8862 = vmatpush2.msra.mxu0 0.0
      %8863 = vmatprep.subr.mxu0 0.0
      %8864 = vmatpush2.msra.mxu0 0.0
      %8865 = vmatprep.subr.mxu0 0.0
      %8866 = vmatpush2.msra.mxu0 0.0
      %8867 = vmatprep.subr.mxu0 0.0
      %8868 = vmatpush2.msra.mxu0 0.0
      %8869 = vmatprep.subr.mxu0 0.0
      %8870 = vmatpush2.msra.mxu0 0.0
      %8871 = vmatprep.mubr.f32.mxu0 0.0
      %8872 = vmatmul.mubr.f32.gmra.mxu0 %v8793
      %v8873 = vpop.f32.mrf.mxu0
      %v8874 = vadd.f32 %v8746, %v8873
      %v8875 = vpop.f32.mrf.mxu0
      %8876 = vmatprep.mubr.f32.mxu0 0.0
      %8877 = vmatmul.mubr.f32.gmra.mxu0 %v8795
      %v8878 = vpop.f32.mrf.mxu0
      %v8879 = vadd.f32 %v8751, %v8878
      %v8880 = vpop.f32.mrf.mxu0
      %8881 = vmatprep.mubr.f32.mxu0 0.0
      %8882 = vmatmul.mubr.f32.gmra.mxu0 %v8797
      %v8883 = vpop.f32.mrf.mxu0
      %v8884 = vadd.f32 %v8756, %v8883
      %v8885 = vpop.f32.mrf.mxu0
      %8886 = vmatprep.mubr.f32.mxu0 0.0
      %8887 = vmatmul.mubr.f32.gmra.mxu0 %v8799
      %v8888 = vpop.f32.mrf.mxu0
      %v8889 = vadd.f32 %v8761, %v8888
      %v8890 = vpop.f32.mrf.mxu0
      %8891 = vmatprep.mubr.f32.mxu0 0.0
      %8892 = vmatmul.mubr.f32.gmra.mxu0 %v8801
      %v8893 = vpop.f32.mrf.mxu0
      %v8894 = vadd.f32 %v8766, %v8893
      %v8895 = vpop.f32.mrf.mxu0
      %8896 = vmatprep.mubr.f32.mxu0 0.0
      %8897 = vmatmul.mubr.f32.gmra.mxu0 %v8803
      %v8898 = vpop.f32.mrf.mxu0
      %v8899 = vadd.f32 %v8771, %v8898
      %v8900 = vpop.f32.mrf.mxu0
      %8901 = vmatprep.mubr.f32.mxu0 0.0
      %8902 = vmatmul.mubr.f32.gmra.mxu0 %v8805
      %v8903 = vpop.f32.mrf.mxu0
      %v8904 = vadd.f32 %v8776, %v8903
      %v8905 = vpop.f32.mrf.mxu0
      %8906 = vdwg.mxu0
      %s8907 = scalar_lea.vmem %s292, 4160
      %v8908 = vld [vmem:[%s8907] sm:$0xff]
      %v8909 = vld [vmem:[%s8907 + $0x8] sm:$0xff]
      %v8910 = vld [vmem:[%s8907 + $0x10] sm:$0xff]
      %v8911 = vld [vmem:[%s8907 + $0x18] sm:$0xff]
      %v8912 = vld [vmem:[%s8907 + $0x20] sm:$0xff]
      %v8913 = vld [vmem:[%s8907 + $0x28] sm:$0xff]
      %v8914 = vld [vmem:[%s8907 + $0x30] sm:$0xff]
      %v8915 = vld [vmem:[%s8907 + $0x38] sm:$0xff]
      %8916 = vrot.lane.b32.xlu0 %v7781, 64
      %v8917 = vpop.permute.xlu0 %8916
      %8918 = vrot.lane.b32.xlu0 %v7783, 64
      %v8919 = vpop.permute.xlu0 %8918
      %8920 = vrot.lane.b32.xlu0 %v7785, 64
      %v8921 = vpop.permute.xlu0 %8920
      %8922 = vrot.lane.b32.xlu0 %v7787, 64
      %v8923 = vpop.permute.xlu0 %8922
      %8924 = vrot.lane.b32.xlu0 %v7789, 64
      %v8925 = vpop.permute.xlu0 %8924
      %8926 = vrot.lane.b32.xlu0 %v7791, 64
      %v8927 = vpop.permute.xlu0 %8926
      %8928 = vrot.lane.b32.xlu0 %v7793, 64
      %v8929 = vpop.permute.xlu0 %8928
      %v8930 = vsel %vm416, %v8917, 0
      %v8932 = vsel %vm416, %v8919, 0
      %v8934 = vsel %vm416, %v8921, 0
      %v8936 = vsel %vm416, %v8923, 0
      %v8938 = vsel %vm416, %v8925, 0
      %v8940 = vsel %vm416, %v8927, 0
      %v8942 = vsel %vm416, %v8929, 0
      %8944 = vmatprep.subr.mxu0 0.0
      %8945 = vmatpush1.msra.mxu0 0.0
      %8946 = vmatprep.subr.mxu0 0.0
      %8947 = vmatpush1.msra.mxu0 0.0
      %8948 = vmatprep.subr.mxu0 0.0
      %8949 = vmatpush1.msra.mxu0 0.0
      %8950 = vmatprep.subr.mxu0 0.0
      %8951 = vmatpush1.msra.mxu0 0.0
      %8952 = vmatprep.subr.mxu0 0.0
      %8953 = vmatpush1.msra.mxu0 0.0
      %8954 = vmatprep.subr.mxu0 0.0
      %8955 = vmatpush1.msra.mxu0 0.0
      %8956 = vmatprep.subr.mxu0 0.0
      %8957 = vmatpush1.msra.mxu0 0.0
      %8958 = vmatprep.subr.mxu0 0.0
      %8959 = vmatpush1.msra.mxu0 0.0
      %8960 = vmatprep.subr.mxu0 0.0
      %8961 = vmatpush1.msra.mxu0 %v8915
      %8962 = vmatprep.subr.mxu0 0.0
      %8963 = vmatpush1.msra.mxu0 %v8914
      %8964 = vmatprep.subr.mxu0 0.0
      %8965 = vmatpush1.msra.mxu0 %v8913
      %8966 = vmatprep.subr.mxu0 0.0
      %8967 = vmatpush1.msra.mxu0 %v8912
      %8968 = vmatprep.subr.mxu0 0.0
      %8969 = vmatpush1.msra.mxu0 %v8911
      %8970 = vmatprep.subr.mxu0 0.0
      %8971 = vmatpush1.msra.mxu0 %v8910
      %8972 = vmatprep.subr.mxu0 0.0
      %8973 = vmatpush1.msra.mxu0 %v8909
      %8974 = vmatprep.subr.mxu0 0.0
      %8975 = vmatpush1.msra.mxu0 %v8908
      %8976 = vmatprep.subr.mxu0 0.0
      %8977 = vmatpush2.msra.mxu0 0.0
      %8978 = vmatprep.subr.mxu0 0.0
      %8979 = vmatpush2.msra.mxu0 0.0
      %8980 = vmatprep.subr.mxu0 0.0
      %8981 = vmatpush2.msra.mxu0 0.0
      %8982 = vmatprep.subr.mxu0 0.0
      %8983 = vmatpush2.msra.mxu0 0.0
      %8984 = vmatprep.subr.mxu0 0.0
      %8985 = vmatpush2.msra.mxu0 0.0
      %8986 = vmatprep.subr.mxu0 0.0
      %8987 = vmatpush2.msra.mxu0 0.0
      %8988 = vmatprep.subr.mxu0 0.0
      %8989 = vmatpush2.msra.mxu0 0.0
      %8990 = vmatprep.subr.mxu0 0.0
      %8991 = vmatpush2.msra.mxu0 0.0
      %8992 = vmatprep.subr.mxu0 0.0
      %8993 = vmatpush2.msra.mxu0 0.0
      %8994 = vmatprep.subr.mxu0 0.0
      %8995 = vmatpush2.msra.mxu0 0.0
      %8996 = vmatprep.subr.mxu0 0.0
      %8997 = vmatpush2.msra.mxu0 0.0
      %8998 = vmatprep.subr.mxu0 0.0
      %8999 = vmatpush2.msra.mxu0 0.0
      %9000 = vmatprep.subr.mxu0 0.0
      %9001 = vmatpush2.msra.mxu0 0.0
      %9002 = vmatprep.subr.mxu0 0.0
      %9003 = vmatpush2.msra.mxu0 0.0
      %9004 = vmatprep.subr.mxu0 0.0
      %9005 = vmatpush2.msra.mxu0 0.0
      %9006 = vmatprep.subr.mxu0 0.0
      %9007 = vmatpush2.msra.mxu0 0.0
      %9008 = vmatprep.mubr.f32.mxu0 0.0
      %9009 = vmatmul.mubr.f32.gmra.mxu0 %v8930
      %v9010 = vpop.f32.mrf.mxu0
      %v9011 = vadd.f32 0.0, %v9010
      %v9012 = vpop.f32.mrf.mxu0
      %9013 = vmatprep.mubr.f32.mxu0 0.0
      %9014 = vmatmul.mubr.f32.gmra.mxu0 %v8932
      %v9015 = vpop.f32.mrf.mxu0
      %v9016 = vadd.f32 0.0, %v9015
      %v9017 = vpop.f32.mrf.mxu0
      %9018 = vmatprep.mubr.f32.mxu0 0.0
      %9019 = vmatmul.mubr.f32.gmra.mxu0 %v8934
      %v9020 = vpop.f32.mrf.mxu0
      %v9021 = vadd.f32 0.0, %v9020
      %v9022 = vpop.f32.mrf.mxu0
      %9023 = vmatprep.mubr.f32.mxu0 0.0
      %9024 = vmatmul.mubr.f32.gmra.mxu0 %v8936
      %v9025 = vpop.f32.mrf.mxu0
      %v9026 = vadd.f32 0.0, %v9025
      %v9027 = vpop.f32.mrf.mxu0
      %9028 = vmatprep.mubr.f32.mxu0 0.0
      %9029 = vmatmul.mubr.f32.gmra.mxu0 %v8938
      %v9030 = vpop.f32.mrf.mxu0
      %v9031 = vadd.f32 0.0, %v9030
      %v9032 = vpop.f32.mrf.mxu0
      %9033 = vmatprep.mubr.f32.mxu0 0.0
      %9034 = vmatmul.mubr.f32.gmra.mxu0 %v8940
      %v9035 = vpop.f32.mrf.mxu0
      %v9036 = vadd.f32 0.0, %v9035
      %v9037 = vpop.f32.mrf.mxu0
      %9038 = vmatprep.mubr.f32.mxu0 0.0
      %9039 = vmatmul.mubr.f32.gmra.mxu0 %v8942
      %v9040 = vpop.f32.mrf.mxu0
      %v9041 = vadd.f32 0.0, %v9040
      %v9042 = vpop.f32.mrf.mxu0
      %9043 = vdwg.mxu0
      %v9044 = vadd.f32 %v8874, %v9011
      %v9045 = vadd.f32 %v8879, %v9016
      %v9046 = vadd.f32 %v8884, %v9021
      %v9047 = vadd.f32 %v8889, %v9026
      %v9048 = vadd.f32 %v8894, %v9031
      %v9049 = vadd.f32 %v8899, %v9036
      %v9050 = vadd.f32 %v8904, %v9041
      %s9051 = scalar_lea.vmem %s292, 4224
      %v9052 = vld [vmem:[%s9051] sm:$0xff]
      %v9053 = vld [vmem:[%s9051 + $0x8] sm:$0xff]
      %v9054 = vld [vmem:[%s9051 + $0x10] sm:$0xff]
      %v9055 = vld [vmem:[%s9051 + $0x18] sm:$0xff]
      %v9056 = vld [vmem:[%s9051 + $0x20] sm:$0xff]
      %v9057 = vld [vmem:[%s9051 + $0x28] sm:$0xff]
      %v9058 = vld [vmem:[%s9051 + $0x30] sm:$0xff]
      %v9059 = vld [vmem:[%s9051 + $0x38] sm:$0xff]
      %9060 = vrot.lane.b32.xlu0 %v7498, 64
      %v9061 = vpop.permute.xlu0 %9060
      %v9062 = vsel %vm416, %v9061, 0
      %9064 = vmatprep.subr.mxu0 0.0
      %9065 = vmatpush1.msra.mxu0 0.0
      %9066 = vmatprep.subr.mxu0 0.0
      %9067 = vmatpush1.msra.mxu0 0.0
      %9068 = vmatprep.subr.mxu0 0.0
      %9069 = vmatpush1.msra.mxu0 0.0
      %9070 = vmatprep.subr.mxu0 0.0
      %9071 = vmatpush1.msra.mxu0 0.0
      %9072 = vmatprep.subr.mxu0 0.0
      %9073 = vmatpush1.msra.mxu0 0.0
      %9074 = vmatprep.subr.mxu0 0.0
      %9075 = vmatpush1.msra.mxu0 0.0
      %9076 = vmatprep.subr.mxu0 0.0
      %9077 = vmatpush1.msra.mxu0 0.0
      %9078 = vmatprep.subr.mxu0 0.0
      %9079 = vmatpush1.msra.mxu0 0.0
      %9080 = vmatprep.subr.mxu0 0.0
      %9081 = vmatpush1.msra.mxu0 %v9059
      %9082 = vmatprep.subr.mxu0 0.0
      %9083 = vmatpush1.msra.mxu0 %v9058
      %9084 = vmatprep.subr.mxu0 0.0
      %9085 = vmatpush1.msra.mxu0 %v9057
      %9086 = vmatprep.subr.mxu0 0.0
      %9087 = vmatpush1.msra.mxu0 %v9056
      %9088 = vmatprep.subr.mxu0 0.0
      %9089 = vmatpush1.msra.mxu0 %v9055
      %9090 = vmatprep.subr.mxu0 0.0
      %9091 = vmatpush1.msra.mxu0 %v9054
      %9092 = vmatprep.subr.mxu0 0.0
      %9093 = vmatpush1.msra.mxu0 %v9053
      %9094 = vmatprep.subr.mxu0 0.0
      %9095 = vmatpush1.msra.mxu0 %v9052
      %9096 = vmatprep.subr.mxu0 0.0
      %9097 = vmatpush2.msra.mxu0 0.0
      %9098 = vmatprep.subr.mxu0 0.0
      %9099 = vmatpush2.msra.mxu0 0.0
      %9100 = vmatprep.subr.mxu0 0.0
      %9101 = vmatpush2.msra.mxu0 0.0
      %9102 = vmatprep.subr.mxu0 0.0
      %9103 = vmatpush2.msra.mxu0 0.0
      %9104 = vmatprep.subr.mxu0 0.0
      %9105 = vmatpush2.msra.mxu0 0.0
      %9106 = vmatprep.subr.mxu0 0.0
      %9107 = vmatpush2.msra.mxu0 0.0
      %9108 = vmatprep.subr.mxu0 0.0
      %9109 = vmatpush2.msra.mxu0 0.0
      %9110 = vmatprep.subr.mxu0 0.0
      %9111 = vmatpush2.msra.mxu0 0.0
      %9112 = vmatprep.subr.mxu0 0.0
      %9113 = vmatpush2.msra.mxu0 0.0
      %9114 = vmatprep.subr.mxu0 0.0
      %9115 = vmatpush2.msra.mxu0 0.0
      %9116 = vmatprep.subr.mxu0 0.0
      %9117 = vmatpush2.msra.mxu0 0.0
      %9118 = vmatprep.subr.mxu0 0.0
      %9119 = vmatpush2.msra.mxu0 0.0
      %9120 = vmatprep.subr.mxu0 0.0
      %9121 = vmatpush2.msra.mxu0 0.0
      %9122 = vmatprep.subr.mxu0 0.0
      %9123 = vmatpush2.msra.mxu0 0.0
      %9124 = vmatprep.subr.mxu0 0.0
      %9125 = vmatpush2.msra.mxu0 0.0
      %9126 = vmatprep.subr.mxu0 0.0
      %9127 = vmatpush2.msra.mxu0 0.0
      %9128 = vmatprep.mubr.f32.mxu0 0.0
      %9129 = vmatmul.mubr.f32.gmra.mxu0 %v8795
      %v9130 = vpop.f32.mrf.mxu0
      %v9131 = vadd.f32 0.0, %v9130
      %v9132 = vpop.f32.mrf.mxu0
      %9133 = vmatprep.mubr.f32.mxu0 0.0
      %9134 = vmatmul.mubr.f32.gmra.mxu0 %v8797
      %v9135 = vpop.f32.mrf.mxu0
      %v9136 = vadd.f32 0.0, %v9135
      %v9137 = vpop.f32.mrf.mxu0
      %9138 = vmatprep.mubr.f32.mxu0 0.0
      %9139 = vmatmul.mubr.f32.gmra.mxu0 %v8799
      %v9140 = vpop.f32.mrf.mxu0
      %v9141 = vadd.f32 0.0, %v9140
      %v9142 = vpop.f32.mrf.mxu0
      %9143 = vmatprep.mubr.f32.mxu0 0.0
      %9144 = vmatmul.mubr.f32.gmra.mxu0 %v8801
      %v9145 = vpop.f32.mrf.mxu0
      %v9146 = vadd.f32 0.0, %v9145
      %v9147 = vpop.f32.mrf.mxu0
      %9148 = vmatprep.mubr.f32.mxu0 0.0
      %9149 = vmatmul.mubr.f32.gmra.mxu0 %v8803
      %v9150 = vpop.f32.mrf.mxu0
      %v9151 = vadd.f32 0.0, %v9150
      %v9152 = vpop.f32.mrf.mxu0
      %9153 = vmatprep.mubr.f32.mxu0 0.0
      %9154 = vmatmul.mubr.f32.gmra.mxu0 %v8805
      %v9155 = vpop.f32.mrf.mxu0
      %v9156 = vadd.f32 0.0, %v9155
      %v9157 = vpop.f32.mrf.mxu0
      %9158 = vmatprep.mubr.f32.mxu0 0.0
      %9159 = vmatmul.mubr.f32.gmra.mxu0 %v9062
      %v9160 = vpop.f32.mrf.mxu0
      %v9161 = vadd.f32 0.0, %v9160
      %v9162 = vpop.f32.mrf.mxu0
      %9163 = vdwg.mxu0
      %v9164 = vadd.f32 %v9044, %v9131
      %v9165 = vadd.f32 %v9045, %v9136
      %v9166 = vadd.f32 %v9046, %v9141
      %v9167 = vadd.f32 %v9047, %v9146
      %v9168 = vadd.f32 %v9048, %v9151
      %v9169 = vadd.f32 %v9049, %v9156
      %v9170 = vadd.f32 %v9050, %v9161
      %s9171 = scalar_lea.vmem %s292, 4288
      %v9172 = vld [vmem:[%s9171] sm:$0xff]
      %v9173 = vld [vmem:[%s9171 + $0x8] sm:$0xff]
      %v9174 = vld [vmem:[%s9171 + $0x10] sm:$0xff]
      %v9175 = vld [vmem:[%s9171 + $0x18] sm:$0xff]
      %v9176 = vld [vmem:[%s9171 + $0x20] sm:$0xff]
      %v9177 = vld [vmem:[%s9171 + $0x28] sm:$0xff]
      %v9178 = vld [vmem:[%s9171 + $0x30] sm:$0xff]
      %v9179 = vld [vmem:[%s9171 + $0x38] sm:$0xff]
      %9180 = vrot.lane.b32.xlu0 %v8044, 64
      %v9181 = vpop.permute.xlu0 %9180
      %v9182 = vsel %vm416, %v9181, 0
      %9184 = vmatprep.subr.mxu0 0.0
      %9185 = vmatpush1.msra.mxu0 0.0
      %9186 = vmatprep.subr.mxu0 0.0
      %9187 = vmatpush1.msra.mxu0 0.0
      %9188 = vmatprep.subr.mxu0 0.0
      %9189 = vmatpush1.msra.mxu0 0.0
      %9190 = vmatprep.subr.mxu0 0.0
      %9191 = vmatpush1.msra.mxu0 0.0
      %9192 = vmatprep.subr.mxu0 0.0
      %9193 = vmatpush1.msra.mxu0 0.0
      %9194 = vmatprep.subr.mxu0 0.0
      %9195 = vmatpush1.msra.mxu0 0.0
      %9196 = vmatprep.subr.mxu0 0.0
      %9197 = vmatpush1.msra.mxu0 0.0
      %9198 = vmatprep.subr.mxu0 0.0
      %9199 = vmatpush1.msra.mxu0 0.0
      %9200 = vmatprep.subr.mxu0 0.0
      %9201 = vmatpush1.msra.mxu0 %v9179
      %9202 = vmatprep.subr.mxu0 0.0
      %9203 = vmatpush1.msra.mxu0 %v9178
      %9204 = vmatprep.subr.mxu0 0.0
      %9205 = vmatpush1.msra.mxu0 %v9177
      %9206 = vmatprep.subr.mxu0 0.0
      %9207 = vmatpush1.msra.mxu0 %v9176
      %9208 = vmatprep.subr.mxu0 0.0
      %9209 = vmatpush1.msra.mxu0 %v9175
      %9210 = vmatprep.subr.mxu0 0.0
      %9211 = vmatpush1.msra.mxu0 %v9174
      %9212 = vmatprep.subr.mxu0 0.0
      %9213 = vmatpush1.msra.mxu0 %v9173
      %9214 = vmatprep.subr.mxu0 0.0
      %9215 = vmatpush1.msra.mxu0 %v9172
      %9216 = vmatprep.subr.mxu0 0.0
      %9217 = vmatpush2.msra.mxu0 0.0
      %9218 = vmatprep.subr.mxu0 0.0
      %9219 = vmatpush2.msra.mxu0 0.0
      %9220 = vmatprep.subr.mxu0 0.0
      %9221 = vmatpush2.msra.mxu0 0.0
      %9222 = vmatprep.subr.mxu0 0.0
      %9223 = vmatpush2.msra.mxu0 0.0
      %9224 = vmatprep.subr.mxu0 0.0
      %9225 = vmatpush2.msra.mxu0 0.0
      %9226 = vmatprep.subr.mxu0 0.0
      %9227 = vmatpush2.msra.mxu0 0.0
      %9228 = vmatprep.subr.mxu0 0.0
      %9229 = vmatpush2.msra.mxu0 0.0
      %9230 = vmatprep.subr.mxu0 0.0
      %9231 = vmatpush2.msra.mxu0 0.0
      %9232 = vmatprep.subr.mxu0 0.0
      %9233 = vmatpush2.msra.mxu0 0.0
      %9234 = vmatprep.subr.mxu0 0.0
      %9235 = vmatpush2.msra.mxu0 0.0
      %9236 = vmatprep.subr.mxu0 0.0
      %9237 = vmatpush2.msra.mxu0 0.0
      %9238 = vmatprep.subr.mxu0 0.0
      %9239 = vmatpush2.msra.mxu0 0.0
      %9240 = vmatprep.subr.mxu0 0.0
      %9241 = vmatpush2.msra.mxu0 0.0
      %9242 = vmatprep.subr.mxu0 0.0
      %9243 = vmatpush2.msra.mxu0 0.0
      %9244 = vmatprep.subr.mxu0 0.0
      %9245 = vmatpush2.msra.mxu0 0.0
      %9246 = vmatprep.subr.mxu0 0.0
      %9247 = vmatpush2.msra.mxu0 0.0
      %9248 = vmatprep.mubr.f32.mxu0 0.0
      %9249 = vmatmul.mubr.f32.gmra.mxu0 %v8667
      %v9250 = vpop.f32.mrf.mxu0
      %v9251 = vadd.f32 0.0, %v9250
      %v9252 = vpop.f32.mrf.mxu0
      %9253 = vmatprep.mubr.f32.mxu0 0.0
      %9254 = vmatmul.mubr.f32.gmra.mxu0 %v8669
      %v9255 = vpop.f32.mrf.mxu0
      %v9256 = vadd.f32 0.0, %v9255
      %v9257 = vpop.f32.mrf.mxu0
      %9258 = vmatprep.mubr.f32.mxu0 0.0
      %9259 = vmatmul.mubr.f32.gmra.mxu0 %v8671
      %v9260 = vpop.f32.mrf.mxu0
      %v9261 = vadd.f32 0.0, %v9260
      %v9262 = vpop.f32.mrf.mxu0
      %9263 = vmatprep.mubr.f32.mxu0 0.0
      %9264 = vmatmul.mubr.f32.gmra.mxu0 %v8673
      %v9265 = vpop.f32.mrf.mxu0
      %v9266 = vadd.f32 0.0, %v9265
      %v9267 = vpop.f32.mrf.mxu0
      %9268 = vmatprep.mubr.f32.mxu0 0.0
      %9269 = vmatmul.mubr.f32.gmra.mxu0 %v8675
      %v9270 = vpop.f32.mrf.mxu0
      %v9271 = vadd.f32 0.0, %v9270
      %v9272 = vpop.f32.mrf.mxu0
      %9273 = vmatprep.mubr.f32.mxu0 0.0
      %9274 = vmatmul.mubr.f32.gmra.mxu0 %v8677
      %v9275 = vpop.f32.mrf.mxu0
      %v9276 = vadd.f32 0.0, %v9275
      %v9277 = vpop.f32.mrf.mxu0
      %9278 = vmatprep.mubr.f32.mxu0 0.0
      %9279 = vmatmul.mubr.f32.gmra.mxu0 %v9182
      %v9280 = vpop.f32.mrf.mxu0
      %v9281 = vadd.f32 0.0, %v9280
      %v9282 = vpop.f32.mrf.mxu0
      %9283 = vdwg.mxu0
      %v9284 = vadd.f32 %v9164, %v9251
      %v9285 = vadd.f32 %v9165, %v9256
      %v9286 = vadd.f32 %v9166, %v9261
      %v9287 = vadd.f32 %v9167, %v9266
      %v9288 = vadd.f32 %v9168, %v9271
      %v9289 = vadd.f32 %v9169, %v9276
      %v9290 = vadd.f32 %v9170, %v9281
      %s9291 = scalar_lea.vmem %s292, 4352
      %v9292 = vld [vmem:[%s9291] sm:$0xff]
      %v9293 = vld [vmem:[%s9291 + $0x8] sm:$0xff]
      %v9294 = vld [vmem:[%s9291 + $0x10] sm:$0xff]
      %v9295 = vld [vmem:[%s9291 + $0x18] sm:$0xff]
      %v9296 = vld [vmem:[%s9291 + $0x20] sm:$0xff]
      %v9297 = vld [vmem:[%s9291 + $0x28] sm:$0xff]
      %v9298 = vld [vmem:[%s9291 + $0x30] sm:$0xff]
      %v9299 = vld [vmem:[%s9291 + $0x38] sm:$0xff]
      %9300 = vrot.lane.b32.xlu0 %v8164, 64
      %v9301 = vpop.permute.xlu0 %9300
      %v9302 = vsel %vm416, %v9301, 0
      %9304 = vmatprep.subr.mxu0 0.0
      %9305 = vmatpush1.msra.mxu0 0.0
      %9306 = vmatprep.subr.mxu0 0.0
      %9307 = vmatpush1.msra.mxu0 0.0
      %9308 = vmatprep.subr.mxu0 0.0
      %9309 = vmatpush1.msra.mxu0 0.0
      %9310 = vmatprep.subr.mxu0 0.0
      %9311 = vmatpush1.msra.mxu0 0.0
      %9312 = vmatprep.subr.mxu0 0.0
      %9313 = vmatpush1.msra.mxu0 0.0
      %9314 = vmatprep.subr.mxu0 0.0
      %9315 = vmatpush1.msra.mxu0 0.0
      %9316 = vmatprep.subr.mxu0 0.0
      %9317 = vmatpush1.msra.mxu0 0.0
      %9318 = vmatprep.subr.mxu0 0.0
      %9319 = vmatpush1.msra.mxu0 0.0
      %9320 = vmatprep.subr.mxu0 0.0
      %9321 = vmatpush1.msra.mxu0 %v9299
      %9322 = vmatprep.subr.mxu0 0.0
      %9323 = vmatpush1.msra.mxu0 %v9298
      %9324 = vmatprep.subr.mxu0 0.0
      %9325 = vmatpush1.msra.mxu0 %v9297
      %9326 = vmatprep.subr.mxu0 0.0
      %9327 = vmatpush1.msra.mxu0 %v9296
      %9328 = vmatprep.subr.mxu0 0.0
      %9329 = vmatpush1.msra.mxu0 %v9295
      %9330 = vmatprep.subr.mxu0 0.0
      %9331 = vmatpush1.msra.mxu0 %v9294
      %9332 = vmatprep.subr.mxu0 0.0
      %9333 = vmatpush1.msra.mxu0 %v9293
      %9334 = vmatprep.subr.mxu0 0.0
      %9335 = vmatpush1.msra.mxu0 %v9292
      %9336 = vmatprep.subr.mxu0 0.0
      %9337 = vmatpush2.msra.mxu0 0.0
      %9338 = vmatprep.subr.mxu0 0.0
      %9339 = vmatpush2.msra.mxu0 0.0
      %9340 = vmatprep.subr.mxu0 0.0
      %9341 = vmatpush2.msra.mxu0 0.0
      %9342 = vmatprep.subr.mxu0 0.0
      %9343 = vmatpush2.msra.mxu0 0.0
      %9344 = vmatprep.subr.mxu0 0.0
      %9345 = vmatpush2.msra.mxu0 0.0
      %9346 = vmatprep.subr.mxu0 0.0
      %9347 = vmatpush2.msra.mxu0 0.0
      %9348 = vmatprep.subr.mxu0 0.0
      %9349 = vmatpush2.msra.mxu0 0.0
      %9350 = vmatprep.subr.mxu0 0.0
      %9351 = vmatpush2.msra.mxu0 0.0
      %9352 = vmatprep.subr.mxu0 0.0
      %9353 = vmatpush2.msra.mxu0 0.0
      %9354 = vmatprep.subr.mxu0 0.0
      %9355 = vmatpush2.msra.mxu0 0.0
      %9356 = vmatprep.subr.mxu0 0.0
      %9357 = vmatpush2.msra.mxu0 0.0
      %9358 = vmatprep.subr.mxu0 0.0
      %9359 = vmatpush2.msra.mxu0 0.0
      %9360 = vmatprep.subr.mxu0 0.0
      %9361 = vmatpush2.msra.mxu0 0.0
      %9362 = vmatprep.subr.mxu0 0.0
      %9363 = vmatpush2.msra.mxu0 0.0
      %9364 = vmatprep.subr.mxu0 0.0
      %9365 = vmatpush2.msra.mxu0 0.0
      %9366 = vmatprep.subr.mxu0 0.0
      %9367 = vmatpush2.msra.mxu0 0.0
      %9368 = vmatprep.mubr.f32.mxu0 0.0
      %9369 = vmatmul.mubr.f32.gmra.mxu0 %v8932
      %v9370 = vpop.f32.mrf.mxu0
      %v9371 = vadd.f32 0.0, %v9370
      %v9372 = vpop.f32.mrf.mxu0
      %9373 = vmatprep.mubr.f32.mxu0 0.0
      %9374 = vmatmul.mubr.f32.gmra.mxu0 %v8934
      %v9375 = vpop.f32.mrf.mxu0
      %v9376 = vadd.f32 0.0, %v9375
      %v9377 = vpop.f32.mrf.mxu0
      %9378 = vmatprep.mubr.f32.mxu0 0.0
      %9379 = vmatmul.mubr.f32.gmra.mxu0 %v8936
      %v9380 = vpop.f32.mrf.mxu0
      %v9381 = vadd.f32 0.0, %v9380
      %v9382 = vpop.f32.mrf.mxu0
      %9383 = vmatprep.mubr.f32.mxu0 0.0
      %9384 = vmatmul.mubr.f32.gmra.mxu0 %v8938
      %v9385 = vpop.f32.mrf.mxu0
      %v9386 = vadd.f32 0.0, %v9385
      %v9387 = vpop.f32.mrf.mxu0
      %9388 = vmatprep.mubr.f32.mxu0 0.0
      %9389 = vmatmul.mubr.f32.gmra.mxu0 %v8940
      %v9390 = vpop.f32.mrf.mxu0
      %v9391 = vadd.f32 0.0, %v9390
      %v9392 = vpop.f32.mrf.mxu0
      %9393 = vmatprep.mubr.f32.mxu0 0.0
      %9394 = vmatmul.mubr.f32.gmra.mxu0 %v8942
      %v9395 = vpop.f32.mrf.mxu0
      %v9396 = vadd.f32 0.0, %v9395
      %v9397 = vpop.f32.mrf.mxu0
      %9398 = vmatprep.mubr.f32.mxu0 0.0
      %9399 = vmatmul.mubr.f32.gmra.mxu0 %v9302
      %v9400 = vpop.f32.mrf.mxu0
      %v9401 = vadd.f32 0.0, %v9400
      %v9402 = vpop.f32.mrf.mxu0
      %9403 = vdwg.mxu0
      %v9404 = vadd.f32 %v9284, %v9371
      %v9405 = vadd.f32 %v9285, %v9376
      %v9406 = vadd.f32 %v9286, %v9381
      %v9407 = vadd.f32 %v9287, %v9386
      %v9408 = vadd.f32 %v9288, %v9391
      %v9409 = vadd.f32 %v9289, %v9396
      %v9410 = vadd.f32 %v9290, %v9401
      %s9411 = scalar_lea.vmem %s292, 4416
      %v9412 = vld [vmem:[%s9411] sm:$0xff]
      %v9413 = vld [vmem:[%s9411 + $0x8] sm:$0xff]
      %v9414 = vld [vmem:[%s9411 + $0x10] sm:$0xff]
      %v9415 = vld [vmem:[%s9411 + $0x18] sm:$0xff]
      %v9416 = vld [vmem:[%s9411 + $0x20] sm:$0xff]
      %v9417 = vld [vmem:[%s9411 + $0x28] sm:$0xff]
      %v9418 = vld [vmem:[%s9411 + $0x30] sm:$0xff]
      %v9419 = vld [vmem:[%s9411 + $0x38] sm:$0xff]
      %9420 = vrot.lane.b32.xlu0 %v7499, 64
      %v9421 = vpop.permute.xlu0 %9420
      %v9422 = vsel %vm416, %v9421, 0
      %9424 = vmatprep.subr.mxu0 0.0
      %9425 = vmatpush1.msra.mxu0 0.0
      %9426 = vmatprep.subr.mxu0 0.0
      %9427 = vmatpush1.msra.mxu0 0.0
      %9428 = vmatprep.subr.mxu0 0.0
      %9429 = vmatpush1.msra.mxu0 0.0
      %9430 = vmatprep.subr.mxu0 0.0
      %9431 = vmatpush1.msra.mxu0 0.0
      %9432 = vmatprep.subr.mxu0 0.0
      %9433 = vmatpush1.msra.mxu0 0.0
      %9434 = vmatprep.subr.mxu0 0.0
      %9435 = vmatpush1.msra.mxu0 0.0
      %9436 = vmatprep.subr.mxu0 0.0
      %9437 = vmatpush1.msra.mxu0 0.0
      %9438 = vmatprep.subr.mxu0 0.0
      %9439 = vmatpush1.msra.mxu0 0.0
      %9440 = vmatprep.subr.mxu0 0.0
      %9441 = vmatpush1.msra.mxu0 %v9419
      %9442 = vmatprep.subr.mxu0 0.0
      %9443 = vmatpush1.msra.mxu0 %v9418
      %9444 = vmatprep.subr.mxu0 0.0
      %9445 = vmatpush1.msra.mxu0 %v9417
      %9446 = vmatprep.subr.mxu0 0.0
      %9447 = vmatpush1.msra.mxu0 %v9416
      %9448 = vmatprep.subr.mxu0 0.0
      %9449 = vmatpush1.msra.mxu0 %v9415
      %9450 = vmatprep.subr.mxu0 0.0
      %9451 = vmatpush1.msra.mxu0 %v9414
      %9452 = vmatprep.subr.mxu0 0.0
      %9453 = vmatpush1.msra.mxu0 %v9413
      %9454 = vmatprep.subr.mxu0 0.0
      %9455 = vmatpush1.msra.mxu0 %v9412
      %9456 = vmatprep.subr.mxu0 0.0
      %9457 = vmatpush2.msra.mxu0 0.0
      %9458 = vmatprep.subr.mxu0 0.0
      %9459 = vmatpush2.msra.mxu0 0.0
      %9460 = vmatprep.subr.mxu0 0.0
      %9461 = vmatpush2.msra.mxu0 0.0
      %9462 = vmatprep.subr.mxu0 0.0
      %9463 = vmatpush2.msra.mxu0 0.0
      %9464 = vmatprep.subr.mxu0 0.0
      %9465 = vmatpush2.msra.mxu0 0.0
      %9466 = vmatprep.subr.mxu0 0.0
      %9467 = vmatpush2.msra.mxu0 0.0
      %9468 = vmatprep.subr.mxu0 0.0
      %9469 = vmatpush2.msra.mxu0 0.0
      %9470 = vmatprep.subr.mxu0 0.0
      %9471 = vmatpush2.msra.mxu0 0.0
      %9472 = vmatprep.subr.mxu0 0.0
      %9473 = vmatpush2.msra.mxu0 0.0
      %9474 = vmatprep.subr.mxu0 0.0
      %9475 = vmatpush2.msra.mxu0 0.0
      %9476 = vmatprep.subr.mxu0 0.0
      %9477 = vmatpush2.msra.mxu0 0.0
      %9478 = vmatprep.subr.mxu0 0.0
      %9479 = vmatpush2.msra.mxu0 0.0
      %9480 = vmatprep.subr.mxu0 0.0
      %9481 = vmatpush2.msra.mxu0 0.0
      %9482 = vmatprep.subr.mxu0 0.0
      %9483 = vmatpush2.msra.mxu0 0.0
      %9484 = vmatprep.subr.mxu0 0.0
      %9485 = vmatpush2.msra.mxu0 0.0
      %9486 = vmatprep.subr.mxu0 0.0
      %9487 = vmatpush2.msra.mxu0 0.0
      %9488 = vmatprep.mubr.f32.mxu0 0.0
      %9489 = vmatmul.mubr.f32.gmra.mxu0 %v8797
      %v9490 = vpop.f32.mrf.mxu0
      %v9491 = vadd.f32 0.0, %v9490
      %v9492 = vpop.f32.mrf.mxu0
      %9493 = vmatprep.mubr.f32.mxu0 0.0
      %9494 = vmatmul.mubr.f32.gmra.mxu0 %v8799
      %v9495 = vpop.f32.mrf.mxu0
      %v9496 = vadd.f32 0.0, %v9495
      %v9497 = vpop.f32.mrf.mxu0
      %9498 = vmatprep.mubr.f32.mxu0 0.0
      %9499 = vmatmul.mubr.f32.gmra.mxu0 %v8801
      %v9500 = vpop.f32.mrf.mxu0
      %v9501 = vadd.f32 0.0, %v9500
      %v9502 = vpop.f32.mrf.mxu0
      %9503 = vmatprep.mubr.f32.mxu0 0.0
      %9504 = vmatmul.mubr.f32.gmra.mxu0 %v8803
      %v9505 = vpop.f32.mrf.mxu0
      %v9506 = vadd.f32 0.0, %v9505
      %v9507 = vpop.f32.mrf.mxu0
      %9508 = vmatprep.mubr.f32.mxu0 0.0
      %9509 = vmatmul.mubr.f32.gmra.mxu0 %v8805
      %v9510 = vpop.f32.mrf.mxu0
      %v9511 = vadd.f32 0.0, %v9510
      %v9512 = vpop.f32.mrf.mxu0
      %9513 = vmatprep.mubr.f32.mxu0 0.0
      %9514 = vmatmul.mubr.f32.gmra.mxu0 %v9062
      %v9515 = vpop.f32.mrf.mxu0
      %v9516 = vadd.f32 0.0, %v9515
      %v9517 = vpop.f32.mrf.mxu0
      %9518 = vmatprep.mubr.f32.mxu0 0.0
      %9519 = vmatmul.mubr.f32.gmra.mxu0 %v9422
      %v9520 = vpop.f32.mrf.mxu0
      %v9521 = vadd.f32 0.0, %v9520
      %v9522 = vpop.f32.mrf.mxu0
      %9523 = vdwg.mxu0
      %v9524 = vadd.f32 %v9404, %v9491
      %v9525 = vadd.f32 %v9405, %v9496
      %v9526 = vadd.f32 %v9406, %v9501
      %v9527 = vadd.f32 %v9407, %v9506
      %v9528 = vadd.f32 %v9408, %v9511
      %v9529 = vadd.f32 %v9409, %v9516
      %v9530 = vadd.f32 %v9410, %v9521
      %s9531 = scalar_lea.vmem %s292, 4480
      %v9532 = vld [vmem:[%s9531] sm:$0xff]
      %v9533 = vld [vmem:[%s9531 + $0x8] sm:$0xff]
      %v9534 = vld [vmem:[%s9531 + $0x10] sm:$0xff]
      %v9535 = vld [vmem:[%s9531 + $0x18] sm:$0xff]
      %v9536 = vld [vmem:[%s9531 + $0x20] sm:$0xff]
      %v9537 = vld [vmem:[%s9531 + $0x28] sm:$0xff]
      %v9538 = vld [vmem:[%s9531 + $0x30] sm:$0xff]
      %v9539 = vld [vmem:[%s9531 + $0x38] sm:$0xff]
      %9540 = vrot.lane.b32.xlu0 %v8403, 64
      %v9541 = vpop.permute.xlu0 %9540
      %v9542 = vsel %vm416, %v9541, 0
      %9544 = vmatprep.subr.mxu0 0.0
      %9545 = vmatpush1.msra.mxu0 0.0
      %9546 = vmatprep.subr.mxu0 0.0
      %9547 = vmatpush1.msra.mxu0 0.0
      %9548 = vmatprep.subr.mxu0 0.0
      %9549 = vmatpush1.msra.mxu0 0.0
      %9550 = vmatprep.subr.mxu0 0.0
      %9551 = vmatpush1.msra.mxu0 0.0
      %9552 = vmatprep.subr.mxu0 0.0
      %9553 = vmatpush1.msra.mxu0 0.0
      %9554 = vmatprep.subr.mxu0 0.0
      %9555 = vmatpush1.msra.mxu0 0.0
      %9556 = vmatprep.subr.mxu0 0.0
      %9557 = vmatpush1.msra.mxu0 0.0
      %9558 = vmatprep.subr.mxu0 0.0
      %9559 = vmatpush1.msra.mxu0 0.0
      %9560 = vmatprep.subr.mxu0 0.0
      %9561 = vmatpush1.msra.mxu0 %v9539
      %9562 = vmatprep.subr.mxu0 0.0
      %9563 = vmatpush1.msra.mxu0 %v9538
      %9564 = vmatprep.subr.mxu0 0.0
      %9565 = vmatpush1.msra.mxu0 %v9537
      %9566 = vmatprep.subr.mxu0 0.0
      %9567 = vmatpush1.msra.mxu0 %v9536
      %9568 = vmatprep.subr.mxu0 0.0
      %9569 = vmatpush1.msra.mxu0 %v9535
      %9570 = vmatprep.subr.mxu0 0.0
      %9571 = vmatpush1.msra.mxu0 %v9534
      %9572 = vmatprep.subr.mxu0 0.0
      %9573 = vmatpush1.msra.mxu0 %v9533
      %9574 = vmatprep.subr.mxu0 0.0
      %9575 = vmatpush1.msra.mxu0 %v9532
      %9576 = vmatprep.subr.mxu0 0.0
      %9577 = vmatpush2.msra.mxu0 0.0
      %9578 = vmatprep.subr.mxu0 0.0
      %9579 = vmatpush2.msra.mxu0 0.0
      %9580 = vmatprep.subr.mxu0 0.0
      %9581 = vmatpush2.msra.mxu0 0.0
      %9582 = vmatprep.subr.mxu0 0.0
      %9583 = vmatpush2.msra.mxu0 0.0
      %9584 = vmatprep.subr.mxu0 0.0
      %9585 = vmatpush2.msra.mxu0 0.0
      %9586 = vmatprep.subr.mxu0 0.0
      %9587 = vmatpush2.msra.mxu0 0.0
      %9588 = vmatprep.subr.mxu0 0.0
      %9589 = vmatpush2.msra.mxu0 0.0
      %9590 = vmatprep.subr.mxu0 0.0
      %9591 = vmatpush2.msra.mxu0 0.0
      %9592 = vmatprep.subr.mxu0 0.0
      %9593 = vmatpush2.msra.mxu0 0.0
      %9594 = vmatprep.subr.mxu0 0.0
      %9595 = vmatpush2.msra.mxu0 0.0
      %9596 = vmatprep.subr.mxu0 0.0
      %9597 = vmatpush2.msra.mxu0 0.0
      %9598 = vmatprep.subr.mxu0 0.0
      %9599 = vmatpush2.msra.mxu0 0.0
      %9600 = vmatprep.subr.mxu0 0.0
      %9601 = vmatpush2.msra.mxu0 0.0
      %9602 = vmatprep.subr.mxu0 0.0
      %9603 = vmatpush2.msra.mxu0 0.0
      %9604 = vmatprep.subr.mxu0 0.0
      %9605 = vmatpush2.msra.mxu0 0.0
      %9606 = vmatprep.subr.mxu0 0.0
      %9607 = vmatpush2.msra.mxu0 0.0
      %9608 = vmatprep.mubr.f32.mxu0 0.0
      %9609 = vmatmul.mubr.f32.gmra.mxu0 %v8669
      %v9610 = vpop.f32.mrf.mxu0
      %v9611 = vadd.f32 0.0, %v9610
      %v9612 = vpop.f32.mrf.mxu0
      %9613 = vmatprep.mubr.f32.mxu0 0.0
      %9614 = vmatmul.mubr.f32.gmra.mxu0 %v8671
      %v9615 = vpop.f32.mrf.mxu0
      %v9616 = vadd.f32 0.0, %v9615
      %v9617 = vpop.f32.mrf.mxu0
      %9618 = vmatprep.mubr.f32.mxu0 0.0
      %9619 = vmatmul.mubr.f32.gmra.mxu0 %v8673
      %v9620 = vpop.f32.mrf.mxu0
      %v9621 = vadd.f32 0.0, %v9620
      %v9622 = vpop.f32.mrf.mxu0
      %9623 = vmatprep.mubr.f32.mxu0 0.0
      %9624 = vmatmul.mubr.f32.gmra.mxu0 %v8675
      %v9625 = vpop.f32.mrf.mxu0
      %v9626 = vadd.f32 0.0, %v9625
      %v9627 = vpop.f32.mrf.mxu0
      %9628 = vmatprep.mubr.f32.mxu0 0.0
      %9629 = vmatmul.mubr.f32.gmra.mxu0 %v8677
      %v9630 = vpop.f32.mrf.mxu0
      %v9631 = vadd.f32 0.0, %v9630
      %v9632 = vpop.f32.mrf.mxu0
      %9633 = vmatprep.mubr.f32.mxu0 0.0
      %9634 = vmatmul.mubr.f32.gmra.mxu0 %v9182
      %v9635 = vpop.f32.mrf.mxu0
      %v9636 = vadd.f32 0.0, %v9635
      %v9637 = vpop.f32.mrf.mxu0
      %9638 = vmatprep.mubr.f32.mxu0 0.0
      %9639 = vmatmul.mubr.f32.gmra.mxu0 %v9542
      %v9640 = vpop.f32.mrf.mxu0
      %v9641 = vadd.f32 0.0, %v9640
      %v9642 = vpop.f32.mrf.mxu0
      %9643 = vdwg.mxu0
      %v9644 = vadd.f32 %v9524, %v9611
      %v9645 = vadd.f32 %v9525, %v9616
      %v9646 = vadd.f32 %v9526, %v9621
      %v9647 = vadd.f32 %v9527, %v9626
      %v9648 = vadd.f32 %v9528, %v9631
      %v9649 = vadd.f32 %v9529, %v9636
      %v9650 = vadd.f32 %v9530, %v9641
      %s9651 = scalar_lea.vmem %s292, 4544
      %v9652 = vld [vmem:[%s9651] sm:$0xff]
      %v9653 = vld [vmem:[%s9651 + $0x8] sm:$0xff]
      %v9654 = vld [vmem:[%s9651 + $0x10] sm:$0xff]
      %v9655 = vld [vmem:[%s9651 + $0x18] sm:$0xff]
      %v9656 = vld [vmem:[%s9651 + $0x20] sm:$0xff]
      %v9657 = vld [vmem:[%s9651 + $0x28] sm:$0xff]
      %v9658 = vld [vmem:[%s9651 + $0x30] sm:$0xff]
      %v9659 = vld [vmem:[%s9651 + $0x38] sm:$0xff]
      %9660 = vrot.lane.b32.xlu0 %v8523, 64
      %v9661 = vpop.permute.xlu0 %9660
      %v9662 = vsel %vm416, %v9661, 0
      %9664 = vmatprep.subr.mxu0 0.0
      %9665 = vmatpush1.msra.mxu0 0.0
      %9666 = vmatprep.subr.mxu0 0.0
      %9667 = vmatpush1.msra.mxu0 0.0
      %9668 = vmatprep.subr.mxu0 0.0
      %9669 = vmatpush1.msra.mxu0 0.0
      %9670 = vmatprep.subr.mxu0 0.0
      %9671 = vmatpush1.msra.mxu0 0.0
      %9672 = vmatprep.subr.mxu0 0.0
      %9673 = vmatpush1.msra.mxu0 0.0
      %9674 = vmatprep.subr.mxu0 0.0
      %9675 = vmatpush1.msra.mxu0 0.0
      %9676 = vmatprep.subr.mxu0 0.0
      %9677 = vmatpush1.msra.mxu0 0.0
      %9678 = vmatprep.subr.mxu0 0.0
      %9679 = vmatpush1.msra.mxu0 0.0
      %9680 = vmatprep.subr.mxu0 0.0
      %9681 = vmatpush1.msra.mxu0 %v9659
      %9682 = vmatprep.subr.mxu0 0.0
      %9683 = vmatpush1.msra.mxu0 %v9658
      %9684 = vmatprep.subr.mxu0 0.0
      %9685 = vmatpush1.msra.mxu0 %v9657
      %9686 = vmatprep.subr.mxu0 0.0
      %9687 = vmatpush1.msra.mxu0 %v9656
      %9688 = vmatprep.subr.mxu0 0.0
      %9689 = vmatpush1.msra.mxu0 %v9655
      %9690 = vmatprep.subr.mxu0 0.0
      %9691 = vmatpush1.msra.mxu0 %v9654
      %9692 = vmatprep.subr.mxu0 0.0
      %9693 = vmatpush1.msra.mxu0 %v9653
      %9694 = vmatprep.subr.mxu0 0.0
      %9695 = vmatpush1.msra.mxu0 %v9652
      %9696 = vmatprep.subr.mxu0 0.0
      %9697 = vmatpush2.msra.mxu0 0.0
      %9698 = vmatprep.subr.mxu0 0.0
      %9699 = vmatpush2.msra.mxu0 0.0
      %9700 = vmatprep.subr.mxu0 0.0
      %9701 = vmatpush2.msra.mxu0 0.0
      %9702 = vmatprep.subr.mxu0 0.0
      %9703 = vmatpush2.msra.mxu0 0.0
      %9704 = vmatprep.subr.mxu0 0.0
      %9705 = vmatpush2.msra.mxu0 0.0
      %9706 = vmatprep.subr.mxu0 0.0
      %9707 = vmatpush2.msra.mxu0 0.0
      %9708 = vmatprep.subr.mxu0 0.0
      %9709 = vmatpush2.msra.mxu0 0.0
      %9710 = vmatprep.subr.mxu0 0.0
      %9711 = vmatpush2.msra.mxu0 0.0
      %9712 = vmatprep.subr.mxu0 0.0
      %9713 = vmatpush2.msra.mxu0 0.0
      %9714 = vmatprep.subr.mxu0 0.0
      %9715 = vmatpush2.msra.mxu0 0.0
      %9716 = vmatprep.subr.mxu0 0.0
      %9717 = vmatpush2.msra.mxu0 0.0
      %9718 = vmatprep.subr.mxu0 0.0
      %9719 = vmatpush2.msra.mxu0 0.0
      %9720 = vmatprep.subr.mxu0 0.0
      %9721 = vmatpush2.msra.mxu0 0.0
      %9722 = vmatprep.subr.mxu0 0.0
      %9723 = vmatpush2.msra.mxu0 0.0
      %9724 = vmatprep.subr.mxu0 0.0
      %9725 = vmatpush2.msra.mxu0 0.0
      %9726 = vmatprep.subr.mxu0 0.0
      %9727 = vmatpush2.msra.mxu0 0.0
      %9728 = vmatprep.mubr.f32.mxu0 0.0
      %9729 = vmatmul.mubr.f32.gmra.mxu0 %v8934
      %v9730 = vpop.f32.mrf.mxu0
      %v9731 = vadd.f32 0.0, %v9730
      %v9732 = vpop.f32.mrf.mxu0
      %9733 = vmatprep.mubr.f32.mxu0 0.0
      %9734 = vmatmul.mubr.f32.gmra.mxu0 %v8936
      %v9735 = vpop.f32.mrf.mxu0
      %v9736 = vadd.f32 0.0, %v9735
      %v9737 = vpop.f32.mrf.mxu0
      %9738 = vmatprep.mubr.f32.mxu0 0.0
      %9739 = vmatmul.mubr.f32.gmra.mxu0 %v8938
      %v9740 = vpop.f32.mrf.mxu0
      %v9741 = vadd.f32 0.0, %v9740
      %v9742 = vpop.f32.mrf.mxu0
      %9743 = vmatprep.mubr.f32.mxu0 0.0
      %9744 = vmatmul.mubr.f32.gmra.mxu0 %v8940
      %v9745 = vpop.f32.mrf.mxu0
      %v9746 = vadd.f32 0.0, %v9745
      %v9747 = vpop.f32.mrf.mxu0
      %9748 = vmatprep.mubr.f32.mxu0 0.0
      %9749 = vmatmul.mubr.f32.gmra.mxu0 %v8942
      %v9750 = vpop.f32.mrf.mxu0
      %v9751 = vadd.f32 0.0, %v9750
      %v9752 = vpop.f32.mrf.mxu0
      %9753 = vmatprep.mubr.f32.mxu0 0.0
      %9754 = vmatmul.mubr.f32.gmra.mxu0 %v9302
      %v9755 = vpop.f32.mrf.mxu0
      %v9756 = vadd.f32 0.0, %v9755
      %v9757 = vpop.f32.mrf.mxu0
      %9758 = vmatprep.mubr.f32.mxu0 0.0
      %9759 = vmatmul.mubr.f32.gmra.mxu0 %v9662
      %v9760 = vpop.f32.mrf.mxu0
      %v9761 = vadd.f32 0.0, %v9760
      %v9762 = vpop.f32.mrf.mxu0
      %9763 = vdwg.mxu0
      %v9764 = vadd.f32 %v9644, %v9731
      %v9765 = vadd.f32 %v9645, %v9736
      %v9766 = vadd.f32 %v9646, %v9741
      %v9767 = vadd.f32 %v9647, %v9746
      %v9768 = vadd.f32 %v9648, %v9751
      %v9769 = vadd.f32 %v9649, %v9756
      %v9770 = vadd.f32 %v9650, %v9761
      %9778 = vrot.lane.b32.xlu0 %v9764, 64
      %v9779 = vpop.permute.xlu0 %9778
      %9780 = vrot.lane.b32.xlu0 %v9765, 64
      %v9781 = vpop.permute.xlu0 %9780
      %9782 = vrot.lane.b32.xlu0 %v9766, 64
      %v9783 = vpop.permute.xlu0 %9782
      %9784 = vrot.lane.b32.xlu0 %v9767, 64
      %v9785 = vpop.permute.xlu0 %9784
      %9786 = vrot.lane.b32.xlu0 %v9768, 64
      %v9787 = vpop.permute.xlu0 %9786
      %9788 = vrot.lane.b32.xlu0 %v9769, 64
      %v9789 = vpop.permute.xlu0 %9788
      %9790 = vrot.lane.b32.xlu0 %v9770, 64
      %v9791 = vpop.permute.xlu0 %9790
      %v9799 = vsel %vm416, %v8626, %v9779
      %v9800 = vsel %vm416, %v8627, %v9781
      %v9801 = vsel %vm416, %v8628, %v9783
      %v9802 = vsel %vm416, %v8629, %v9785
      %v9803 = vsel %vm416, %v8630, %v9787
      %v9804 = vsel %vm416, %v8631, %v9789
      %v9805 = vsel %vm416, %v8632, %v9791
      %s9806 = scalar_lea.vmem %s303, 168
      %9807 = vst [vmem:[%s9806] sm:$0x7f] %v9799
      %9808 = vst [vmem:[%s9806 + $0x8] sm:$0x7f] %v9800
      %9809 = vst [vmem:[%s9806 + $0x10] sm:$0x7f] %v9801
      %9810 = vst [vmem:[%s9806 + $0x18] sm:$0x7f] %v9802
      %9811 = vst [vmem:[%s9806 + $0x20] sm:$0x7f] %v9803
      %9812 = vst [vmem:[%s9806 + $0x28] sm:$0x7f] %v9804
      %9813 = vst [vmem:[%s9806 + $0x30] sm:$0x7f] %v9805
      %s9814 = smul.u32 4, %s20
      %p9815 = scmp.lt.s32.totalorder %s19, 0
      %s9816 = scalar_select %p9815, %s19, 0
      %p9817 = scmp.lt.s32.totalorder %s9814, 15
      %s9818 = scalar_select %p9817, %s9814, 15
      %s9819 = smul.addr %s9818, 7
      %s9820 = smul.addr %s9816, 112
      %s9821 = sadd.s32 %s9819, %s9820
      %s9822 = smul.addr %s9821, 8
      %s9823 = scalar_lea.vmem %s4, %s9822
      // Predicated region
      $region37: #{bn_relu_grouped_conv.1} parent=35 // pred_check
        %p9824 = pneg %p153
      $region38: #{bn_relu_grouped_conv.1} parent=35 // pred_check_branch
        %9826 = sbr.rel (%p9824) target = $region40
      $region39: #{bn_relu_grouped_conv.1} parent=35 // pred_region
        %s9827 = smul.u32 4, %s20
      $region40: #{bn_relu_grouped_conv.1} parent=35 // pred_fallthru
        _
    $region36: #{bn_relu_grouped_conv.1} parent=5 // pred_fallthru
      _
    %p9828 = scmp.le.s32.totalorder 2, %s10
    // Predicated region
    $region41: #{bn_relu_grouped_conv.1} parent=5 // pred_check
      %p9829 = pneg %p9828
    $region42: #{bn_relu_grouped_conv.1} parent=5 // pred_check_branch
      %9831 = sbr.rel (%p9829) target = $region44
    $region43: #{bn_relu_grouped_conv.1} parent=5 // pred_region
      %s9832 = ssub.s32 %s10, 2
      // Predicated region
      $region45: #{bn_relu_grouped_conv.1} parent=43 // pred_check
        %p9833 = pneg %p159
      $region46: #{bn_relu_grouped_conv.1} parent=43 // pred_check_branch
        %9835 = sbr.rel (%p9833) target = $region48
      $region47: #{bn_relu_grouped_conv.1} parent=43 // pred_region
        %s9836 = smul.u32 4, %s22
        %p9837 = scmp.lt.s32.totalorder %s21, 0
        %s9838 = scalar_select %p9837, %s21, 0
        %p9839 = scmp.lt.s32.totalorder %s9836, 15
        %s9840 = scalar_select %p9839, %s9836, 15
        %s9841 = smul.addr %s9840, 7
        %s9842 = smul.addr %s9838, 112
        %s9843 = sadd.s32 %s9841, %s9842
        %s9844 = smul.addr %s9843, 8
        %s9845 = scalar_lea.vmem %s4, %s9844
      $region48: #{bn_relu_grouped_conv.1} parent=43 // pred_fallthru
        _
    $region44: #{bn_relu_grouped_conv.1} parent=5 // pred_fallthru
      _
  $region6: #{bn_relu_grouped_conv.1} parent=0 // loop_footer
    %s14 = sadd.s32 1, %s10
  $region7: #{bn_relu_grouped_conv.1} parent=0 // loop_footer_branch
    %9 = sbr.rel target = $region3
  $region8: #{bn_relu_grouped_conv.1} parent=0 // loop_exit
    _

</llo_original>
